<compile_context>
chip_gen: v7x
topology: tpu7x:2x2x1
jax: 0.10.0
libtpu: 0.0.40
codegen_flags: <defaults>
</compile_context>

<pallas_src>
import functools
import math

import jax
import jax.numpy as jnp
from jax import lax
from jax.experimental import pallas as pl
from jax.experimental.pallas import tpu as pltpu

_BN_EPS = 1e-5
_BN_SCALE = 1.0 / math.sqrt(1.0 + _BN_EPS)      # BatchNorm2d, eval, default stats


def _gelu(x):
    # TODO(synk): tanh approximation of torch's exact-erf GELU.
    c = math.sqrt(2.0 / math.pi)
    return 0.5 * x * (1.0 + jnp.tanh(c * (x + 0.044715 * x * x * x)))


def _layer_norm(x, eps=1e-5):
    mu = jnp.mean(x, axis=-1, keepdims=True)
    var = jnp.mean((x - mu) ** 2, axis=-1, keepdims=True)
    return (x - mu) * lax.rsqrt(var + eps)       # default weight=1, bias=0


# --------------------------- fused forward kernel ---------------------------

def _rmgcn_kernel(x_ref, w_emb_ref, pe_ref,
                  wqkv_ref, bqkv_ref, wo_ref, bo_ref,
                  w1_ref, b1_ref, w2_ref, b2_ref,
                  gwx_ref, gbx_ref, gwh_zr_ref, gwh_n_ref,
                  f1_ref, f1b_ref, f2_ref, f2b_ref,
                  at_ref, skw_ref, skb_ref, mw_ref, mb_ref,
                  e1w_ref, e1b_ref, e2w_ref, e2b_ref,
                  o_ref, *, n_heads):
    # static shapes derived from the refs
    NL = x_ref.shape[0]
    N = at_ref.shape[1]
    L = NL // N
    C = w_emb_ref.shape[1]
    Hdk = wo_ref.shape[0]
    dk = Hdk // n_heads
    HC = gwh_n_ref.shape[0]                      # head * C (lane-stacked GRU width)
    head = HC // C
    nlayers = skw_ref.shape[0]
    n_sup = at_ref.shape[0]
    nprop = mw_ref.shape[1] // C
    order = (nprop - 1) // n_sup
    scale = 1.0 / math.sqrt(dk)

    # ---- embedding: [val|time] conv + start_conv folded into one matmul; ----
    # ---- bias is pre-folded into the positional-embedding slab.          ----
    h = jnp.dot(x_ref[...], w_emb_ref[...],
                preferred_element_type=jnp.float32) + pe_ref[...]       # (L*N, C)

    # ---- timeAttentionLayer: all nodes at once via a block-causal mask ----
    qkv = jnp.dot(h, wqkv_ref[...],
                  preferred_element_type=jnp.float32) + bqkv_ref[...]   # (L*N, 3*Hdk)
    ri = lax.broadcasted_iota(jnp.int32, (NL, NL), 0)
    ci = lax.broadcasted_iota(jnp.int32, (NL, NL), 1)
    # rows are ordered (l, n): same node <=> equal (row % N); causal <=> col<=row
    mask = (ri % N == ci % N) & (ci <= ri)
    heads_out = []
    for hh in range(n_heads):
        q = qkv[:, hh * dk:(hh + 1) * dk]
        k = qkv[:, Hdk + hh * dk:Hdk + (hh + 1) * dk]
        v = qkv[:, 2 * Hdk + hh * dk:2 * Hdk + (hh + 1) * dk]
        s = lax.dot_general(q, k, (((1,), (1,)), ((), ())),
                            preferred_element_type=jnp.float32) * scale
        s = jnp.where(mask, s, -1e30)
        m = jnp.max(s, axis=-1, keepdims=True)
        e = jnp.exp(s - m)
        p = e / jnp.sum(e, axis=-1, keepdims=True)
        heads_out.append(jnp.dot(p, v, preferred_element_type=jnp.float32))
    o_heads = jnp.concatenate(heads_out, axis=-1)                       # (L*N, Hdk)
    new_x = jnp.dot(o_heads, wo_ref[...],
                    preferred_element_type=jnp.float32) + bo_ref[...]
    xa = _layer_norm(h + new_x)                  # norm1 (dropout = identity, eval)
    y = jnp.dot(xa, w1_ref[...], preferred_element_type=jnp.float32) + b1_ref[...]
    y = _gelu(y)
    y = jnp.dot(y, w2_ref[...], preferred_element_type=jnp.float32) + b2_ref[...]
    xa = _layer_norm(xa + y)                     # norm2
    xa = _layer_norm(xa)                         # outer timeAttention LayerNorm

    # ---- GRU heads (lane-stacked) with hoisted x-side projection ----
    xg = jnp.dot(xa, gwx_ref[...],
                 preferred_element_type=jnp.float32) + gbx_ref[...]     # (L*N, 3*HC)
    w_zr = gwh_zr_ref[...]                       # (HC, 2*HC) block-diag per head
    w_n = gwh_n_ref[...]                         # (HC, HC)   block-diag per head
    hstate = jnp.zeros((N, HC), jnp.float32)
    for t in range(L):                           # rows of timestep t are contiguous
        xg_t = xg[t * N:(t + 1) * N, :]
        xz = xg_t[:, :HC]
        xr = xg_t[:, HC:2 * HC]
        xn = xg_t[:, 2 * HC:]
        hzr = jnp.dot(hstate, w_zr, preferred_element_type=jnp.float32)
        zg = jax.nn.sigmoid(xz + hzr[:, :HC])
        rg = jax.nn.sigmoid(xr + hzr[:, HC:])
        ng = jnp.tanh(xn + jnp.dot(rg * hstate, w_n,
                                   preferred_element_type=jnp.float32))
        hstate = (1.0 - zg) * ng + zg * hstate

    # linear_p per head (block-diag), then sum over heads + bn_t (eval)
    y1 = jnp.dot(hstate, f1_ref[...],
                 preferred_element_type=jnp.float32) + f1b_ref[...]
    y2 = jnp.dot(_gelu(y1), f2_ref[...],
                 preferred_element_type=jnp.float32) + f2b_ref[...]
    skip_t = y2[:, :C]
    for i in range(1, head):
        skip_t = skip_t + y2[:, i * C:(i + 1) * C]
    x = skip_t * _BN_SCALE                                              # (N, C)

    # ---- GCN blocks*layers + skip convs + end convs ----
    skip = jnp.zeros((N, skw_ref.shape[-1]), jnp.float32)
    for i in range(nlayers):
        residual = x
        skip = skip + jnp.dot(residual, skw_ref[i],
                              preferred_element_type=jnp.float32)
        props = [residual]
        for si in range(n_sup):
            a_t = at_ref[si]                     # A^T for row-layout propagation
            x1 = jnp.dot(a_t, residual, preferred_element_type=jnp.float32)
            props.append(x1)
            for _ in range(2, order + 1):
                x1 = jnp.dot(a_t, x1, preferred_element_type=jnp.float32)
                props.append(x1)
        hcat = jnp.concatenate(props, axis=-1)   # (N, nprop*C)
        hm = jnp.dot(hcat, mw_ref[i],
                     preferred_element_type=jnp.float32) + mb_ref[i]
        x = (hm + residual) * _BN_SCALE          # + residual, bn[i] (eval)

    skip = skip + skb_ref[...]                   # pre-summed skip-conv biases
    ez = _gelu(skip)
    ez = _gelu(jnp.dot(ez, e1w_ref[...],
                       preferred_element_type=jnp.float32) + e1b_ref[...])
    # write the output already transposed: (out_dim, N)
    o_ref[...] = lax.dot_general(e2w_ref[...], ez, (((1,), (1,)), ((), ())),
                                 preferred_element_type=jnp.float32) + e2b_ref[...]


def fused_forward(x_cl, kp, n_heads):
    B, R, Ci = x_cl.shape
    C = kp['w_emb'].shape[1]
    Hdk = kp['wo'].shape[0]
    dff = kp['w1'].shape[1]
    HC = kp['gru_wh_n'].shape[0]
    S, N, _ = kp['a_t'].shape
    nlayers, _, skip_ch = kp['skip_w'].shape
    npropC = kp['mlp_w'].shape[1]
    end_ch = kp['e1w'].shape[1]
    out_dim = kp['e2w'].shape[0]

    c2 = lambda b: (0, 0)
    c3 = lambda b: (0, 0, 0)
    kernel = functools.partial(_rmgcn_kernel, n_heads=n_heads)
    return pl.pallas_call(
        kernel,
        out_shape=jax.ShapeDtypeStruct((B, out_dim, N), jnp.float32),
        grid=(B,),
        in_specs=[
            pl.BlockSpec((None, R, Ci), lambda b: (b, 0, 0)),
            pl.BlockSpec((Ci, C), c2),
            pl.BlockSpec((R, C), c2),
            pl.BlockSpec((C, 3 * Hdk), c2), pl.BlockSpec((1, 3 * Hdk), c2),
            pl.BlockSpec((Hdk, C), c2), pl.BlockSpec((1, C), c2),
            pl.BlockSpec((C, dff), c2), pl.BlockSpec((1, dff), c2),
            pl.BlockSpec((dff, C), c2), pl.BlockSpec((1, C), c2),
            pl.BlockSpec((C, 3 * HC), c2), pl.BlockSpec((1, 3 * HC), c2),
            pl.BlockSpec((HC, 2 * HC), c2), pl.BlockSpec((HC, HC), c2),
            pl.BlockSpec((HC, HC), c2), pl.BlockSpec((1, HC), c2),
            pl.BlockSpec((HC, HC), c2), pl.BlockSpec((1, HC), c2),
            pl.BlockSpec((S, N, N), c3),
            pl.BlockSpec((nlayers, C, skip_ch), c3),
            pl.BlockSpec((1, skip_ch), c2),
            pl.BlockSpec((nlayers, npropC, C), c3),
            pl.BlockSpec((nlayers, 1, C), c3),
            pl.BlockSpec((skip_ch, end_ch), c2), pl.BlockSpec((1, end_ch), c2),
            pl.BlockSpec((out_dim, end_ch), c2), pl.BlockSpec((out_dim, 1), c2),
        ],
        out_specs=pl.BlockSpec((None, out_dim, N), lambda b: (b, 0, 0)),
        compiler_params=pltpu.CompilerParams(dimension_semantics=("parallel",)),
    )(x_cl, kp['w_emb'], kp['pe'],
      kp['wqkv'], kp['bqkv'], kp['wo'], kp['bo'],
      kp['w1'], kp['b1'], kp['w2'], kp['b2'],
      kp['gru_wx'], kp['gru_bx'], kp['gru_wh_zr'], kp['gru_wh_n'],
      kp['ff1'], kp['ff1b'], kp['ff2'], kp['ff2b'],
      kp['a_t'], kp['skip_w'], kp['skip_b_sum'], kp['mlp_w'], kp['mlp_b'],
      kp['e1w'], kp['e1b'], kp['e2w'], kp['e2b'])


# ------------------------------ parameters ----------------------------------

def init_params(key, cfg):
    keys = iter(jax.random.split(key, 64))

    def nrm(shape, scale=0.1):
        return (scale * jax.random.normal(next(keys), shape)).astype(jnp.float32)

    C = cfg['residual_channels']
    N = cfg['num_nodes']
    H = cfg['n_heads']
    dff = 4 * C
    dk = dv = C                                  # d_keys = d_values = d_model
    p = {}
    p['val_feature'] = (nrm((C // 2, 1)), nrm((C // 2,)))
    p['time_feature'] = (nrm((C // 2, 5)), nrm((C // 2,)))
    p['start_conv'] = (nrm((C, C)), nrm((C,)))
    p['nodevec1'] = nrm((N, 10), 1.0)
    p['nodevec2'] = nrm((10, N), 1.0)
    p['attn'] = {
        'wq': nrm((H * dk, C)), 'bq': nrm((H * dk,)),
        'wk': nrm((H * dk, C)), 'bk': nrm((H * dk,)),
        'wv': nrm((H * dv, C)), 'bv': nrm((H * dv,)),
        'wo': nrm((C, H * dv)), 'bo': nrm((C,)),
        'conv1': (nrm((dff, C)), nrm((dff,))),
        'conv2': (nrm((C, dff)), nrm((C,))),
    }
    p['gru'] = []
    p['linear_p'] = []
    for _ in range(cfg['head']):
        p['gru'].append({'w_zr': nrm((2 * C, 2 * C)), 'b_zr': nrm((2 * C,)),
                         'w_n': nrm((2 * C, C)), 'b_n': nrm((C,))})
        p['linear_p'].append({'conv1': (nrm((C, C)), nrm((C,))),
                              'conv2': (nrm((C, C)), nrm((C,)))})
    nlayers = cfg['blocks'] * cfg['layers']
    c_in_gcn = (cfg['order'] * cfg['supports_len'] + 1) * C
    p['skip_convs'] = [(nrm((cfg['skip_channels'], C)), nrm((cfg['skip_channels'],)))
                       for _ in range(nlayers)]
    p['gconv_mlp'] = [(nrm((C, c_in_gcn)), nrm((C,))) for _ in range(nlayers)]
    p['end_conv_1'] = (nrm((cfg['end_channels'], cfg['skip_channels'])),
                       nrm((cfg['end_channels'],)))
    p['end_conv_2'] = (nrm((cfg['out_dim'], cfg['end_channels'])),
                       nrm((cfg['out_dim'],)))
    return p


def positional_embedding_rows(C, L, N):
    # TODO(synk): PositionalEmbedding source not provided; sin/cos over time.
    pos = jnp.arange(L, dtype=jnp.float32)[:, None]
    div = jnp.exp(jnp.arange(0, C, 2, dtype=jnp.float32)
                  * -(math.log(10000.0) / C))[None, :]
    pe = jnp.zeros((L, C), jnp.float32)
    pe = pe.at[:, 0::2].set(jnp.sin(pos * div))
    pe = pe.at[:, 1::2].set(jnp.cos(pos * div))
    return jnp.repeat(pe, N, axis=0)             # rows ordered (l, n)


def pack_params(p, supports, cfg):
    """One-time conversion of torch-layout params to fused-kernel layouts."""
    C = cfg['residual_channels']
    N = cfg['num_nodes']
    L = cfg['seq_len']
    head = cfg['head']
    kp = {}

    # --- embedding: fold [val|time] conv and start_conv into one matmul;
    #     bias folded into the positional-embedding slab.
    wv, bv = p['val_feature']
    wg, bg = p['time_feature']
    w_in = jnp.zeros((8, C), jnp.float32)        # input channels padded 7 -> 8
    w_in = w_in.at[0:1, :C // 2].set(wv.T)       # ch 0 -> val_feature
    w_in = w_in.at[1:6, C // 2:].set(wg.T)       # ch 1..5 -> time_feature (ch 6 unused)
    b_in = jnp.concatenate([bv, bg])
    ws, bs = p['start_conv']
    kp['w_emb'] = w_in @ ws.T                                    # (8, C)
    b_emb = b_in @ ws.T + bs
    kp['pe'] = positional_embedding_rows(C, L, N) + b_emb[None, :]   # (L*N, C)

    # --- attention: fused QKV projection, lane-dense 384-wide
    a = p['attn']
    kp['wqkv'] = jnp.concatenate([a['wq'].T, a['wk'].T, a['wv'].T], axis=1)
    kp['bqkv'] = jnp.concatenate([a['bq'], a['bk'], a['bv']])[None, :]
    kp['wo'] = a['wo'].T
    kp['bo'] = a['bo'][None, :]
    kp['w1'] = a['conv1'][0].T
    kp['b1'] = a['conv1'][1][None, :]
    kp['w2'] = a['conv2'][0].T
    kp['b2'] = a['conv2'][1][None, :]

    # --- GRU heads, lane-stacked; x-side gate weights fused into one matrix
    bd = jax.scipy.linalg.block_diag
    Wz_x = [g['w_zr'][:C, :C] for g in p['gru']]
    Wr_x = [g['w_zr'][:C, C:] for g in p['gru']]
    Wn_x = [g['w_n'][:C, :] for g in p['gru']]
    kp['gru_wx'] = jnp.concatenate(
        [jnp.concatenate(Wz_x, axis=1),
         jnp.concatenate(Wr_x, axis=1),
         jnp.concatenate(Wn_x, axis=1)], axis=1)                 # (C, 3*head*C)
    kp['gru_bx'] = jnp.concatenate(
        [g['b_zr'][:C] for g in p['gru']]
        + [g['b_zr'][C:] for g in p['gru']]
        + [g['b_n'] for g in p['gru']])[None, :]                 # (1, 3*head*C)
    Wz_h = bd(*[g['w_zr'][C:, :C] for g in p['gru']])
    Wr_h = bd(*[g['w_zr'][C:, C:] for g in p['gru']])
    kp['gru_wh_zr'] = jnp.concatenate([Wz_h, Wr_h], axis=1)      # (head*C, 2*head*C)
    kp['gru_wh_n'] = bd(*[g['w_n'][C:, :] for g in p['gru']])    # (head*C, head*C)
    kp['ff1'] = bd(*[lp['conv1'][0].T for lp in p['linear_p']])
    kp['ff1b'] = jnp.concatenate([lp['conv1'][1] for lp in p['linear_p']])[None, :]
    kp['ff2'] = bd(*[lp['conv2'][0].T for lp in p['linear_p']])
    kp['ff2b'] = jnp.concatenate([lp['conv2'][1] for lp in p['linear_p']])[None, :]

    # --- adaptive adjacency (parameter-only) + static supports, transposed
    adp = jax.nn.softmax(jax.nn.relu(p['nodevec1'] @ p['nodevec2']), axis=1)
    sup_all = [s.astype(jnp.float32) for s in supports] + [adp]
    kp['a_t'] = jnp.stack([s.T for s in sup_all])                # (S, N, N)

    # --- GCN stack + end convs (skip biases pre-summed, mlp kept fused)
    kp['skip_w'] = jnp.stack([w.T for w, _ in p['skip_convs']])  # (nlayers, C, skip)
    kp['skip_b_sum'] = sum(b for _, b in p['skip_convs'])[None, :]
    kp['mlp_w'] = jnp.stack([w.T for w, _ in p['gconv_mlp']])    # (nlayers, nprop*C, C)
    kp['mlp_b'] = jnp.stack([b[None, :] for _, b in p['gconv_mlp']])
    e1w, e1b = p['end_conv_1']
    e2w, e2b = p['end_conv_2']
    kp['e1w'] = e1w.T
    kp['e1b'] = e1b[None, :]
    kp['e2w'] = e2w                                              # (out_dim, end_ch)
    kp['e2b'] = e2b[:, None]                                     # (out_dim, 1)
    return kp


# ------------------------------ RMGCN forward --------------------------------

def rmgcn_forward(x, kp, cfg):
    B, Cin, N, L = x.shape
    # time-major channel-last slab: rows ordered (l, n); pad channels 7 -> 8.
    x_cl = jnp.transpose(x, (0, 3, 2, 1))                        # (B, L, N, Cin)
    x_cl = jnp.pad(x_cl, ((0, 0), (0, 0), (0, 0), (0, 8 - Cin)))
    x_cl = x_cl.reshape(B, L * N, 8)
    out = fused_forward(x_cl, kp, cfg['n_heads'])                # (B, out_dim, N)
    return out[..., None]                                        # (B, out_dim, N, 1)


# ---------------------------------- main -------------------------------------

if __name__ == "__main__":
    cfg = dict(num_nodes=8, in_dim=7, seq_len=12, residual_channels=32,
               skip_channels=64, end_channels=128, out_dim=12,
               blocks=2, layers=2, head=2, n_heads=4, order=2,
               supports_len=3)

    key = jax.random.PRNGKey(0)
    kx, kparam, ka, kb = jax.random.split(key, 4)
    B = 2
    x = jax.random.normal(
        kx, (B, cfg['in_dim'], cfg['num_nodes'], cfg['seq_len']), jnp.float32)
    A_f = jax.nn.softmax(
        jax.random.normal(ka, (cfg['num_nodes'], cfg['num_nodes'])), axis=1)
    A_b = jax.nn.softmax(
        jax.random.normal(kb, (cfg['num_nodes'], cfg['num_nodes'])), axis=1)

    params = init_params(kparam, cfg)
    kp = pack_params(params, [A_f, A_b], cfg)

    fwd = jax.jit(functools.partial(rmgcn_forward, cfg=cfg))
    out = jax.block_until_ready(fwd(x, kp))

    assert out.shape == (B, cfg['out_dim'], cfg['num_nodes'], 1)
    assert bool(jnp.all(jnp.isfinite(out)))
    print("KERNEL_OK")
</pallas_src>

<mosaic_0001>
module attributes {stable_mosaic.version = 11 : i64} {
  func.func @_rmgcn_kernel(%arg0: i32, %arg1: memref<1x96x8xf32, #tpu.memory_space<vmem>>, %arg2: memref<8x32xf32, #tpu.memory_space<vmem>>, %arg3: memref<96x32xf32, #tpu.memory_space<vmem>>, %arg4: memref<32x384xf32, #tpu.memory_space<vmem>>, %arg5: memref<1x384xf32, #tpu.memory_space<vmem>>, %arg6: memref<128x32xf32, #tpu.memory_space<vmem>>, %arg7: memref<1x32xf32, #tpu.memory_space<vmem>>, %arg8: memref<32x128xf32, #tpu.memory_space<vmem>>, %arg9: memref<1x128xf32, #tpu.memory_space<vmem>>, %arg10: memref<128x32xf32, #tpu.memory_space<vmem>>, %arg11: memref<1x32xf32, #tpu.memory_space<vmem>>, %arg12: memref<32x192xf32, #tpu.memory_space<vmem>>, %arg13: memref<1x192xf32, #tpu.memory_space<vmem>>, %arg14: memref<64x128xf32, #tpu.memory_space<vmem>>, %arg15: memref<64x64xf32, #tpu.memory_space<vmem>>, %arg16: memref<64x64xf32, #tpu.memory_space<vmem>>, %arg17: memref<1x64xf32, #tpu.memory_space<vmem>>, %arg18: memref<64x64xf32, #tpu.memory_space<vmem>>, %arg19: memref<1x64xf32, #tpu.memory_space<vmem>>, %arg20: memref<3x8x8xf32, #tpu.memory_space<vmem>>, %arg21: memref<4x32x64xf32, #tpu.memory_space<vmem>>, %arg22: memref<1x64xf32, #tpu.memory_space<vmem>>, %arg23: memref<4x224x32xf32, #tpu.memory_space<vmem>>, %arg24: memref<4x1x32xf32, #tpu.memory_space<vmem>>, %arg25: memref<64x128xf32, #tpu.memory_space<vmem>>, %arg26: memref<1x128xf32, #tpu.memory_space<vmem>>, %arg27: memref<12x128xf32, #tpu.memory_space<vmem>>, %arg28: memref<12x1xf32, #tpu.memory_space<vmem>>, %arg29: memref<1x12x8xf32, #tpu.memory_space<vmem>>) attributes {dimension_semantics = [#tpu.dimension_semantics<parallel>], iteration_bounds = array<i64: 2>, scalar_prefetch = 0 : i64, scratch_operands = 0 : i64, tpu.core_type = #tpu.core_type<tc>, window_params = [{transform_indices = @transform_0, window_bounds = array<i64: 1, 96, 8>}, {pipeline_mode = #tpu.pipeline_mode<synchronous>, transform_indices = @transform_1, window_bounds = array<i64: 8, 32>}, {pipeline_mode = #tpu.pipeline_mode<synchronous>, transform_indices = @transform_2, window_bounds = array<i64: 96, 32>}, {pipeline_mode = #tpu.pipeline_mode<synchronous>, transform_indices = @transform_3, window_bounds = array<i64: 32, 384>}, {pipeline_mode = #tpu.pipeline_mode<synchronous>, transform_indices = @transform_4, window_bounds = array<i64: 1, 384>}, {pipeline_mode = #tpu.pipeline_mode<synchronous>, transform_indices = @transform_5, window_bounds = array<i64: 128, 32>}, {pipeline_mode = #tpu.pipeline_mode<synchronous>, transform_indices = @transform_6, window_bounds = array<i64: 1, 32>}, {pipeline_mode = #tpu.pipeline_mode<synchronous>, transform_indices = @transform_7, window_bounds = array<i64: 32, 128>}, {pipeline_mode = #tpu.pipeline_mode<synchronous>, transform_indices = @transform_8, window_bounds = array<i64: 1, 128>}, {pipeline_mode = #tpu.pipeline_mode<synchronous>, transform_indices = @transform_9, window_bounds = array<i64: 128, 32>}, {pipeline_mode = #tpu.pipeline_mode<synchronous>, transform_indices = @transform_10, window_bounds = array<i64: 1, 32>}, {pipeline_mode = #tpu.pipeline_mode<synchronous>, transform_indices = @transform_11, window_bounds = array<i64: 32, 192>}, {pipeline_mode = #tpu.pipeline_mode<synchronous>, transform_indices = @transform_12, window_bounds = array<i64: 1, 192>}, {pipeline_mode = #tpu.pipeline_mode<synchronous>, transform_indices = @transform_13, window_bounds = array<i64: 64, 128>}, {pipeline_mode = #tpu.pipeline_mode<synchronous>, transform_indices = @transform_14, window_bounds = array<i64: 64, 64>}, {pipeline_mode = #tpu.pipeline_mode<synchronous>, transform_indices = @transform_15, window_bounds = array<i64: 64, 64>}, {pipeline_mode = #tpu.pipeline_mode<synchronous>, transform_indices = @transform_16, window_bounds = array<i64: 1, 64>}, {pipeline_mode = #tpu.pipeline_mode<synchronous>, transform_indices = @transform_17, window_bounds = array<i64: 64, 64>}, {pipeline_mode = #tpu.pipeline_mode<synchronous>, transform_indices = @transform_18, window_bounds = array<i64: 1, 64>}, {pipeline_mode = #tpu.pipeline_mode<synchronous>, transform_indices = @transform_19, window_bounds = array<i64: 3, 8, 8>}, {pipeline_mode = #tpu.pipeline_mode<synchronous>, transform_indices = @transform_20, window_bounds = array<i64: 4, 32, 64>}, {pipeline_mode = #tpu.pipeline_mode<synchronous>, transform_indices = @transform_21, window_bounds = array<i64: 1, 64>}, {pipeline_mode = #tpu.pipeline_mode<synchronous>, transform_indices = @transform_22, window_bounds = array<i64: 4, 224, 32>}, {pipeline_mode = #tpu.pipeline_mode<synchronous>, transform_indices = @transform_23, window_bounds = array<i64: 4, 1, 32>}, {pipeline_mode = #tpu.pipeline_mode<synchronous>, transform_indices = @transform_24, window_bounds = array<i64: 64, 128>}, {pipeline_mode = #tpu.pipeline_mode<synchronous>, transform_indices = @transform_25, window_bounds = array<i64: 1, 128>}, {pipeline_mode = #tpu.pipeline_mode<synchronous>, transform_indices = @transform_26, window_bounds = array<i64: 12, 128>}, {pipeline_mode = #tpu.pipeline_mode<synchronous>, transform_indices = @transform_27, window_bounds = array<i64: 12, 1>}, {transform_indices = @transform_28, window_bounds = array<i64: 1, 12, 8>}]} {
    %c0 = arith.constant 0 : index
    %c0_0 = arith.constant 0 : index
    %c0_1 = arith.constant 0 : index
    %0 = vector.load %arg1[%c0, %c0_0, %c0_1] : memref<1x96x8xf32, #tpu.memory_space<vmem>>, vector<1x96x8xf32>
    %1 = vector.shape_cast %0 : vector<1x96x8xf32> to vector<96x8xf32>
    %c0_2 = arith.constant 0 : index
    %c0_3 = arith.constant 0 : index
    %2 = vector.load %arg2[%c0_2, %c0_3] : memref<8x32xf32, #tpu.memory_space<vmem>>, vector<8x32xf32>
    %cst = arith.constant dense<0.000000e+00> : vector<96x32xf32>
    %3 = tpu.matmul %1, %2, %cst {dimension_numbers = #tpu.dot_dimension_numbers<[1], [0], [0], [1], [0, 0, 1, 1], [], []>} : vector<96x8xf32>, vector<8x32xf32>, vector<96x32xf32> -> vector<96x32xf32>
    %c0_4 = arith.constant 0 : index
    %c0_5 = arith.constant 0 : index
    %4 = vector.load %arg3[%c0_4, %c0_5] : memref<96x32xf32, #tpu.memory_space<vmem>>, vector<96x32xf32>
    %5 = arith.addf %3, %4 : vector<96x32xf32>
    %c0_6 = arith.constant 0 : index
    %c0_7 = arith.constant 0 : index
    %6 = vector.load %arg4[%c0_6, %c0_7] : memref<32x384xf32, #tpu.memory_space<vmem>>, vector<32x384xf32>
    %cst_8 = arith.constant dense<0.000000e+00> : vector<96x384xf32>
    %7 = tpu.matmul %5, %6, %cst_8 {dimension_numbers = #tpu.dot_dimension_numbers<[1], [0], [0], [1], [0, 0, 1, 1], [], []>} : vector<96x32xf32>, vector<32x384xf32>, vector<96x384xf32> -> vector<96x384xf32>
    %c0_9 = arith.constant 0 : index
    %c0_10 = arith.constant 0 : index
    %8 = vector.load %arg5[%c0_9, %c0_10] : memref<1x384xf32, #tpu.memory_space<vmem>>, vector<1x384xf32>
    %9 = vector.broadcast %8 : vector<1x384xf32> to vector<96x384xf32>
    %10 = arith.addf %7, %9 : vector<96x384xf32>
    %11 = tpu.iota {dimensions = array<i32: 0>} : vector<96x96xi32>
    %12 = tpu.iota {dimensions = array<i32: 1>} : vector<96x96xi32>
    %c8_i32 = arith.constant 8 : i32
    %c0_i32 = arith.constant 0 : i32
    %13 = arith.cmpi eq, %c8_i32, %c0_i32 : i32
    %c1_i32 = arith.constant 1 : i32
    %14 = arith.select %13, %c1_i32, %c8_i32 : i32
    %15 = vector.broadcast %14 : i32 to vector<96x96xi32>
    %16 = arith.remsi %11, %15 : vector<96x96xi32>
    %c0_i32_11 = arith.constant 0 : i32
    %17 = vector.broadcast %c0_i32_11 : i32 to vector<96x96xi32>
    %18 = arith.cmpi ne, %16, %17 : vector<96x96xi32>
    %c0_i32_12 = arith.constant 0 : i32
    %19 = vector.broadcast %c0_i32_12 : i32 to vector<96x96xi32>
    %20 = arith.cmpi slt, %16, %19 : vector<96x96xi32>
    %c0_i32_13 = arith.constant 0 : i32
    %21 = arith.cmpi slt, %14, %c0_i32_13 : i32
    %22 = vector.broadcast %21 : i1 to vector<96x96xi1>
    %23 = vector.broadcast %22 : vector<96x96xi1> to vector<96x96xi1>
    %24 = arith.xori %20, %23 : vector<96x96xi1>
    %25 = arith.andi %24, %18 : vector<96x96xi1>
    %26 = vector.broadcast %14 : i32 to vector<96x96xi32>
    %27 = arith.addi %16, %26 : vector<96x96xi32>
    %28 = arith.select %25, %27, %16 : vector<96x96xi1>, vector<96x96xi32>
    %c8_i32_14 = arith.constant 8 : i32
    %c0_i32_15 = arith.constant 0 : i32
    %29 = arith.cmpi eq, %c8_i32_14, %c0_i32_15 : i32
    %c1_i32_16 = arith.constant 1 : i32
    %30 = arith.select %29, %c1_i32_16, %c8_i32_14 : i32
    %31 = vector.broadcast %30 : i32 to vector<96x96xi32>
    %32 = arith.remsi %12, %31 : vector<96x96xi32>
    %c0_i32_17 = arith.constant 0 : i32
    %33 = vector.broadcast %c0_i32_17 : i32 to vector<96x96xi32>
    %34 = arith.cmpi ne, %32, %33 : vector<96x96xi32>
    %c0_i32_18 = arith.constant 0 : i32
    %35 = vector.broadcast %c0_i32_18 : i32 to vector<96x96xi32>
    %36 = arith.cmpi slt, %32, %35 : vector<96x96xi32>
    %c0_i32_19 = arith.constant 0 : i32
    %37 = arith.cmpi slt, %30, %c0_i32_19 : i32
    %38 = vector.broadcast %37 : i1 to vector<96x96xi1>
    %39 = vector.broadcast %38 : vector<96x96xi1> to vector<96x96xi1>
    %40 = arith.xori %36, %39 : vector<96x96xi1>
    %41 = arith.andi %40, %34 : vector<96x96xi1>
    %42 = vector.broadcast %30 : i32 to vector<96x96xi32>
    %43 = arith.addi %32, %42 : vector<96x96xi32>
    %44 = arith.select %41, %43, %32 : vector<96x96xi1>, vector<96x96xi32>
    %45 = arith.cmpi eq, %28, %44 : vector<96x96xi32>
    %46 = arith.cmpi sle, %12, %11 : vector<96x96xi32>
    %47 = arith.andi %45, %46 : vector<96x96xi1>
    %48 = vector.extract_strided_slice %10 {offsets = [0, 0], sizes = [96, 32], strides = [1, 1]} : vector<96x384xf32> to vector<96x32xf32>
    %49 = vector.extract_strided_slice %10 {offsets = [0, 128], sizes = [96, 32], strides = [1, 1]} : vector<96x384xf32> to vector<96x32xf32>
    %50 = vector.extract_strided_slice %10 {offsets = [0, 256], sizes = [96, 32], strides = [1, 1]} : vector<96x384xf32> to vector<96x32xf32>
    %cst_20 = arith.constant dense<0.000000e+00> : vector<96x96xf32>
    %51 = tpu.matmul %48, %49, %cst_20 {dimension_numbers = #tpu.dot_dimension_numbers<[1], [1], [0], [0], [0, 0, 1, 0], [], []>} : vector<96x32xf32>, vector<96x32xf32>, vector<96x96xf32> -> vector<96x96xf32>
    %cst_21 = arith.constant 0.176776692 : f32
    %52 = vector.broadcast %cst_21 : f32 to vector<96x96xf32>
    %53 = arith.mulf %51, %52 : vector<96x96xf32>
    %cst_22 = arith.constant -1.000000e+30 : f32
    %54 = vector.broadcast %cst_22 : f32 to vector<96x96xf32>
    %55 = arith.select %47, %53, %54 : vector<96x96xi1>, vector<96x96xf32>
    %cst_23 = arith.constant dense<0xFF800000> : vector<96xf32>
    %56 = vector.multi_reduction <maximumf>, %55, %cst_23 [1] : vector<96x96xf32> to vector<96xf32>
    %57 = vector.shape_cast %56 : vector<96xf32> to vector<96x1xf32>
    %58 = vector.broadcast %57 : vector<96x1xf32> to vector<96x96xf32>
    %59 = arith.subf %55, %58 : vector<96x96xf32>
    %60 = math.exp %59 : vector<96x96xf32>
    %cst_24 = arith.constant dense<0.000000e+00> : vector<96xf32>
    %61 = vector.multi_reduction <add>, %60, %cst_24 [1] : vector<96x96xf32> to vector<96xf32>
    %62 = vector.shape_cast %61 : vector<96xf32> to vector<96x1xf32>
    %63 = vector.broadcast %62 : vector<96x1xf32> to vector<96x96xf32>
    %64 = arith.divf %60, %63 : vector<96x96xf32>
    %cst_25 = arith.constant dense<0.000000e+00> : vector<96x32xf32>
    %65 = tpu.matmul %64, %50, %cst_25 {dimension_numbers = #tpu.dot_dimension_numbers<[1], [0], [0], [1], [0, 0, 1, 1], [], []>} : vector<96x96xf32>, vector<96x32xf32>, vector<96x32xf32> -> vector<96x32xf32>
    %66 = vector.extract_strided_slice %10 {offsets = [0, 32], sizes = [96, 32], strides = [1, 1]} : vector<96x384xf32> to vector<96x32xf32>
    %67 = vector.extract_strided_slice %10 {offsets = [0, 160], sizes = [96, 32], strides = [1, 1]} : vector<96x384xf32> to vector<96x32xf32>
    %68 = vector.extract_strided_slice %10 {offsets = [0, 288], sizes = [96, 32], strides = [1, 1]} : vector<96x384xf32> to vector<96x32xf32>
    %cst_26 = arith.constant dense<0.000000e+00> : vector<96x96xf32>
    %69 = tpu.matmul %66, %67, %cst_26 {dimension_numbers = #tpu.dot_dimension_numbers<[1], [1], [0], [0], [0, 0, 1, 0], [], []>} : vector<96x32xf32>, vector<96x32xf32>, vector<96x96xf32> -> vector<96x96xf32>
    %cst_27 = arith.constant 0.176776692 : f32
    %70 = vector.broadcast %cst_27 : f32 to vector<96x96xf32>
    %71 = arith.mulf %69, %70 : vector<96x96xf32>
    %cst_28 = arith.constant -1.000000e+30 : f32
    %72 = vector.broadcast %cst_28 : f32 to vector<96x96xf32>
    %73 = arith.select %47, %71, %72 : vector<96x96xi1>, vector<96x96xf32>
    %cst_29 = arith.constant dense<0xFF800000> : vector<96xf32>
    %74 = vector.multi_reduction <maximumf>, %73, %cst_29 [1] : vector<96x96xf32> to vector<96xf32>
    %75 = vector.shape_cast %74 : vector<96xf32> to vector<96x1xf32>
    %76 = vector.broadcast %75 : vector<96x1xf32> to vector<96x96xf32>
    %77 = arith.subf %73, %76 : vector<96x96xf32>
    %78 = math.exp %77 : vector<96x96xf32>
    %cst_30 = arith.constant dense<0.000000e+00> : vector<96xf32>
    %79 = vector.multi_reduction <add>, %78, %cst_30 [1] : vector<96x96xf32> to vector<96xf32>
    %80 = vector.shape_cast %79 : vector<96xf32> to vector<96x1xf32>
    %81 = vector.broadcast %80 : vector<96x1xf32> to vector<96x96xf32>
    %82 = arith.divf %78, %81 : vector<96x96xf32>
    %cst_31 = arith.constant dense<0.000000e+00> : vector<96x32xf32>
    %83 = tpu.matmul %82, %68, %cst_31 {dimension_numbers = #tpu.dot_dimension_numbers<[1], [0], [0], [1], [0, 0, 1, 1], [], []>} : vector<96x96xf32>, vector<96x32xf32>, vector<96x32xf32> -> vector<96x32xf32>
    %84 = vector.extract_strided_slice %10 {offsets = [0, 64], sizes = [96, 32], strides = [1, 1]} : vector<96x384xf32> to vector<96x32xf32>
    %85 = vector.extract_strided_slice %10 {offsets = [0, 192], sizes = [96, 32], strides = [1, 1]} : vector<96x384xf32> to vector<96x32xf32>
    %86 = vector.extract_strided_slice %10 {offsets = [0, 320], sizes = [96, 32], strides = [1, 1]} : vector<96x384xf32> to vector<96x32xf32>
    %cst_32 = arith.constant dense<0.000000e+00> : vector<96x96xf32>
    %87 = tpu.matmul %84, %85, %cst_32 {dimension_numbers = #tpu.dot_dimension_numbers<[1], [1], [0], [0], [0, 0, 1, 0], [], []>} : vector<96x32xf32>, vector<96x32xf32>, vector<96x96xf32> -> vector<96x96xf32>
    %cst_33 = arith.constant 0.176776692 : f32
    %88 = vector.broadcast %cst_33 : f32 to vector<96x96xf32>
    %89 = arith.mulf %87, %88 : vector<96x96xf32>
    %cst_34 = arith.constant -1.000000e+30 : f32
    %90 = vector.broadcast %cst_34 : f32 to vector<96x96xf32>
    %91 = arith.select %47, %89, %90 : vector<96x96xi1>, vector<96x96xf32>
    %cst_35 = arith.constant dense<0xFF800000> : vector<96xf32>
    %92 = vector.multi_reduction <maximumf>, %91, %cst_35 [1] : vector<96x96xf32> to vector<96xf32>
    %93 = vector.shape_cast %92 : vector<96xf32> to vector<96x1xf32>
    %94 = vector.broadcast %93 : vector<96x1xf32> to vector<96x96xf32>
    %95 = arith.subf %91, %94 : vector<96x96xf32>
    %96 = math.exp %95 : vector<96x96xf32>
    %cst_36 = arith.constant dense<0.000000e+00> : vector<96xf32>
    %97 = vector.multi_reduction <add>, %96, %cst_36 [1] : vector<96x96xf32> to vector<96xf32>
    %98 = vector.shape_cast %97 : vector<96xf32> to vector<96x1xf32>
    %99 = vector.broadcast %98 : vector<96x1xf32> to vector<96x96xf32>
    %100 = arith.divf %96, %99 : vector<96x96xf32>
    %cst_37 = arith.constant dense<0.000000e+00> : vector<96x32xf32>
    %101 = tpu.matmul %100, %86, %cst_37 {dimension_numbers = #tpu.dot_dimension_numbers<[1], [0], [0], [1], [0, 0, 1, 1], [], []>} : vector<96x96xf32>, vector<96x32xf32>, vector<96x32xf32> -> vector<96x32xf32>
    %102 = vector.extract_strided_slice %10 {offsets = [0, 96], sizes = [96, 32], strides = [1, 1]} : vector<96x384xf32> to vector<96x32xf32>
    %103 = vector.extract_strided_slice %10 {offsets = [0, 224], sizes = [96, 32], strides = [1, 1]} : vector<96x384xf32> to vector<96x32xf32>
    %104 = vector.extract_strided_slice %10 {offsets = [0, 352], sizes = [96, 32], strides = [1, 1]} : vector<96x384xf32> to vector<96x32xf32>
    %cst_38 = arith.constant dense<0.000000e+00> : vector<96x96xf32>
    %105 = tpu.matmul %102, %103, %cst_38 {dimension_numbers = #tpu.dot_dimension_numbers<[1], [1], [0], [0], [0, 0, 1, 0], [], []>} : vector<96x32xf32>, vector<96x32xf32>, vector<96x96xf32> -> vector<96x96xf32>
    %cst_39 = arith.constant 0.176776692 : f32
    %106 = vector.broadcast %cst_39 : f32 to vector<96x96xf32>
    %107 = arith.mulf %105, %106 : vector<96x96xf32>
    %cst_40 = arith.constant -1.000000e+30 : f32
    %108 = vector.broadcast %cst_40 : f32 to vector<96x96xf32>
    %109 = arith.select %47, %107, %108 : vector<96x96xi1>, vector<96x96xf32>
    %cst_41 = arith.constant dense<0xFF800000> : vector<96xf32>
    %110 = vector.multi_reduction <maximumf>, %109, %cst_41 [1] : vector<96x96xf32> to vector<96xf32>
    %111 = vector.shape_cast %110 : vector<96xf32> to vector<96x1xf32>
    %112 = vector.broadcast %111 : vector<96x1xf32> to vector<96x96xf32>
    %113 = arith.subf %109, %112 : vector<96x96xf32>
    %114 = math.exp %113 : vector<96x96xf32>
    %cst_42 = arith.constant dense<0.000000e+00> : vector<96xf32>
    %115 = vector.multi_reduction <add>, %114, %cst_42 [1] : vector<96x96xf32> to vector<96xf32>
    %116 = vector.shape_cast %115 : vector<96xf32> to vector<96x1xf32>
    %117 = vector.broadcast %116 : vector<96x1xf32> to vector<96x96xf32>
    %118 = arith.divf %114, %117 : vector<96x96xf32>
    %cst_43 = arith.constant dense<0.000000e+00> : vector<96x32xf32>
    %119 = tpu.matmul %118, %104, %cst_43 {dimension_numbers = #tpu.dot_dimension_numbers<[1], [0], [0], [1], [0, 0, 1, 1], [], []>} : vector<96x96xf32>, vector<96x32xf32>, vector<96x32xf32> -> vector<96x32xf32>
    %120 = tpu.concatenate %65, %83, %101, %119 in 1 : vector<96x32xf32>, vector<96x32xf32>, vector<96x32xf32>, vector<96x32xf32> -> vector<96x128xf32>
    %c0_44 = arith.constant 0 : index
    %c0_45 = arith.constant 0 : index
    %121 = vector.load %arg6[%c0_44, %c0_45] : memref<128x32xf32, #tpu.memory_space<vmem>>, vector<128x32xf32>
    %cst_46 = arith.constant dense<0.000000e+00> : vector<96x32xf32>
    %122 = tpu.matmul %120, %121, %cst_46 {dimension_numbers = #tpu.dot_dimension_numbers<[1], [0], [0], [1], [0, 0, 1, 1], [], []>} : vector<96x128xf32>, vector<128x32xf32>, vector<96x32xf32> -> vector<96x32xf32>
    %c0_47 = arith.constant 0 : index
    %c0_48 = arith.constant 0 : index
    %123 = vector.load %arg7[%c0_47, %c0_48] : memref<1x32xf32, #tpu.memory_space<vmem>>, vector<1x32xf32>
    %124 = vector.broadcast %123 : vector<1x32xf32> to vector<96x32xf32>
    %125 = arith.addf %122, %124 : vector<96x32xf32>
    %126 = arith.addf %5, %125 : vector<96x32xf32>
    %cst_49 = arith.constant dense<0.000000e+00> : vector<96xf32>
    %127 = vector.multi_reduction <add>, %126, %cst_49 [1] : vector<96x32xf32> to vector<96xf32>
    %128 = vector.shape_cast %127 : vector<96xf32> to vector<96x1xf32>
    %cst_50 = arith.constant 3.200000e+01 : f32
    %129 = vector.broadcast %cst_50 : f32 to vector<96x1xf32>
    %130 = arith.divf %128, %129 : vector<96x1xf32>
    %131 = vector.broadcast %130 : vector<96x1xf32> to vector<96x32xf32>
    %132 = arith.subf %126, %131 : vector<96x32xf32>
    %133 = arith.mulf %132, %132 : vector<96x32xf32>
    %cst_51 = arith.constant dense<0.000000e+00> : vector<96xf32>
    %134 = vector.multi_reduction <add>, %133, %cst_51 [1] : vector<96x32xf32> to vector<96xf32>
    %135 = vector.shape_cast %134 : vector<96xf32> to vector<96x1xf32>
    %cst_52 = arith.constant 3.200000e+01 : f32
    %136 = vector.broadcast %cst_52 : f32 to vector<96x1xf32>
    %137 = arith.divf %135, %136 : vector<96x1xf32>
    %138 = vector.broadcast %130 : vector<96x1xf32> to vector<96x32xf32>
    %139 = arith.subf %126, %138 : vector<96x32xf32>
    %cst_53 = arith.constant 9.99999974E-6 : f32
    %140 = vector.broadcast %cst_53 : f32 to vector<96x1xf32>
    %141 = arith.addf %137, %140 : vector<96x1xf32>
    %142 = math.rsqrt %141 : vector<96x1xf32>
    %143 = vector.broadcast %142 : vector<96x1xf32> to vector<96x32xf32>
    %144 = arith.mulf %139, %143 : vector<96x32xf32>
    %c0_54 = arith.constant 0 : index
    %c0_55 = arith.constant 0 : index
    %145 = vector.load %arg8[%c0_54, %c0_55] : memref<32x128xf32, #tpu.memory_space<vmem>>, vector<32x128xf32>
    %cst_56 = arith.constant dense<0.000000e+00> : vector<96x128xf32>
    %146 = tpu.matmul %144, %145, %cst_56 {dimension_numbers = #tpu.dot_dimension_numbers<[1], [0], [0], [1], [0, 0, 1, 1], [], []>} : vector<96x32xf32>, vector<32x128xf32>, vector<96x128xf32> -> vector<96x128xf32>
    %c0_57 = arith.constant 0 : index
    %c0_58 = arith.constant 0 : index
    %147 = vector.load %arg9[%c0_57, %c0_58] : memref<1x128xf32, #tpu.memory_space<vmem>>, vector<1x128xf32>
    %148 = vector.broadcast %147 : vector<1x128xf32> to vector<96x128xf32>
    %149 = arith.addf %146, %148 : vector<96x128xf32>
    %cst_59 = arith.constant 5.000000e-01 : f32
    %150 = vector.broadcast %cst_59 : f32 to vector<96x128xf32>
    %151 = arith.mulf %150, %149 : vector<96x128xf32>
    %cst_60 = arith.constant 4.471500e-02 : f32
    %152 = vector.broadcast %cst_60 : f32 to vector<96x128xf32>
    %153 = arith.mulf %152, %149 : vector<96x128xf32>
    %154 = arith.mulf %153, %149 : vector<96x128xf32>
    %155 = arith.mulf %154, %149 : vector<96x128xf32>
    %156 = arith.addf %149, %155 : vector<96x128xf32>
    %cst_61 = arith.constant 0.797884583 : f32
    %157 = vector.broadcast %cst_61 : f32 to vector<96x128xf32>
    %158 = arith.mulf %157, %156 : vector<96x128xf32>
    %159 = math.tanh %158 : vector<96x128xf32>
    %cst_62 = arith.constant 1.000000e+00 : f32
    %160 = vector.broadcast %cst_62 : f32 to vector<96x128xf32>
    %161 = arith.addf %160, %159 : vector<96x128xf32>
    %162 = arith.mulf %151, %161 : vector<96x128xf32>
    %c0_63 = arith.constant 0 : index
    %c0_64 = arith.constant 0 : index
    %163 = vector.load %arg10[%c0_63, %c0_64] : memref<128x32xf32, #tpu.memory_space<vmem>>, vector<128x32xf32>
    %cst_65 = arith.constant dense<0.000000e+00> : vector<96x32xf32>
    %164 = tpu.matmul %162, %163, %cst_65 {dimension_numbers = #tpu.dot_dimension_numbers<[1], [0], [0], [1], [0, 0, 1, 1], [], []>} : vector<96x128xf32>, vector<128x32xf32>, vector<96x32xf32> -> vector<96x32xf32>
    %c0_66 = arith.constant 0 : index
    %c0_67 = arith.constant 0 : index
    %165 = vector.load %arg11[%c0_66, %c0_67] : memref<1x32xf32, #tpu.memory_space<vmem>>, vector<1x32xf32>
    %166 = vector.broadcast %165 : vector<1x32xf32> to vector<96x32xf32>
    %167 = arith.addf %164, %166 : vector<96x32xf32>
    %168 = arith.addf %144, %167 : vector<96x32xf32>
    %cst_68 = arith.constant dense<0.000000e+00> : vector<96xf32>
    %169 = vector.multi_reduction <add>, %168, %cst_68 [1] : vector<96x32xf32> to vector<96xf32>
    %170 = vector.shape_cast %169 : vector<96xf32> to vector<96x1xf32>
    %cst_69 = arith.constant 3.200000e+01 : f32
    %171 = vector.broadcast %cst_69 : f32 to vector<96x1xf32>
    %172 = arith.divf %170, %171 : vector<96x1xf32>
    %173 = vector.broadcast %172 : vector<96x1xf32> to vector<96x32xf32>
    %174 = arith.subf %168, %173 : vector<96x32xf32>
    %175 = arith.mulf %174, %174 : vector<96x32xf32>
    %cst_70 = arith.constant dense<0.000000e+00> : vector<96xf32>
    %176 = vector.multi_reduction <add>, %175, %cst_70 [1] : vector<96x32xf32> to vector<96xf32>
    %177 = vector.shape_cast %176 : vector<96xf32> to vector<96x1xf32>
    %cst_71 = arith.constant 3.200000e+01 : f32
    %178 = vector.broadcast %cst_71 : f32 to vector<96x1xf32>
    %179 = arith.divf %177, %178 : vector<96x1xf32>
    %180 = vector.broadcast %172 : vector<96x1xf32> to vector<96x32xf32>
    %181 = arith.subf %168, %180 : vector<96x32xf32>
    %cst_72 = arith.constant 9.99999974E-6 : f32
    %182 = vector.broadcast %cst_72 : f32 to vector<96x1xf32>
    %183 = arith.addf %179, %182 : vector<96x1xf32>
    %184 = math.rsqrt %183 : vector<96x1xf32>
    %185 = vector.broadcast %184 : vector<96x1xf32> to vector<96x32xf32>
    %186 = arith.mulf %181, %185 : vector<96x32xf32>
    %cst_73 = arith.constant dense<0.000000e+00> : vector<96xf32>
    %187 = vector.multi_reduction <add>, %186, %cst_73 [1] : vector<96x32xf32> to vector<96xf32>
    %188 = vector.shape_cast %187 : vector<96xf32> to vector<96x1xf32>
    %cst_74 = arith.constant 3.200000e+01 : f32
    %189 = vector.broadcast %cst_74 : f32 to vector<96x1xf32>
    %190 = arith.divf %188, %189 : vector<96x1xf32>
    %191 = vector.broadcast %190 : vector<96x1xf32> to vector<96x32xf32>
    %192 = arith.subf %186, %191 : vector<96x32xf32>
    %193 = arith.mulf %192, %192 : vector<96x32xf32>
    %cst_75 = arith.constant dense<0.000000e+00> : vector<96xf32>
    %194 = vector.multi_reduction <add>, %193, %cst_75 [1] : vector<96x32xf32> to vector<96xf32>
    %195 = vector.shape_cast %194 : vector<96xf32> to vector<96x1xf32>
    %cst_76 = arith.constant 3.200000e+01 : f32
    %196 = vector.broadcast %cst_76 : f32 to vector<96x1xf32>
    %197 = arith.divf %195, %196 : vector<96x1xf32>
    %198 = vector.broadcast %190 : vector<96x1xf32> to vector<96x32xf32>
    %199 = arith.subf %186, %198 : vector<96x32xf32>
    %cst_77 = arith.constant 9.99999974E-6 : f32
    %200 = vector.broadcast %cst_77 : f32 to vector<96x1xf32>
    %201 = arith.addf %197, %200 : vector<96x1xf32>
    %202 = math.rsqrt %201 : vector<96x1xf32>
    %203 = vector.broadcast %202 : vector<96x1xf32> to vector<96x32xf32>
    %204 = arith.mulf %199, %203 : vector<96x32xf32>
    %c0_78 = arith.constant 0 : index
    %c0_79 = arith.constant 0 : index
    %205 = vector.load %arg12[%c0_78, %c0_79] : memref<32x192xf32, #tpu.memory_space<vmem>>, vector<32x192xf32>
    %cst_80 = arith.constant dense<0.000000e+00> : vector<96x192xf32>
    %206 = tpu.matmul %204, %205, %cst_80 {dimension_numbers = #tpu.dot_dimension_numbers<[1], [0], [0], [1], [0, 0, 1, 1], [], []>} : vector<96x32xf32>, vector<32x192xf32>, vector<96x192xf32> -> vector<96x192xf32>
    %c0_81 = arith.constant 0 : index
    %c0_82 = arith.constant 0 : index
    %207 = vector.load %arg13[%c0_81, %c0_82] : memref<1x192xf32, #tpu.memory_space<vmem>>, vector<1x192xf32>
    %208 = vector.broadcast %207 : vector<1x192xf32> to vector<96x192xf32>
    %209 = arith.addf %206, %208 : vector<96x192xf32>
    %c0_83 = arith.constant 0 : index
    %c0_84 = arith.constant 0 : index
    %210 = vector.load %arg14[%c0_83, %c0_84] : memref<64x128xf32, #tpu.memory_space<vmem>>, vector<64x128xf32>
    %c0_85 = arith.constant 0 : index
    %c0_86 = arith.constant 0 : index
    %211 = vector.load %arg15[%c0_85, %c0_86] : memref<64x64xf32, #tpu.memory_space<vmem>>, vector<64x64xf32>
    %cst_87 = arith.constant 0.000000e+00 : f32
    %212 = vector.broadcast %cst_87 : f32 to vector<8x64xf32>
    %213 = vector.extract_strided_slice %209 {offsets = [0, 0], sizes = [8, 192], strides = [1, 1]} : vector<96x192xf32> to vector<8x192xf32>
    %214 = vector.extract_strided_slice %213 {offsets = [0, 0], sizes = [8, 64], strides = [1, 1]} : vector<8x192xf32> to vector<8x64xf32>
    %215 = vector.extract_strided_slice %213 {offsets = [0, 64], sizes = [8, 64], strides = [1, 1]} : vector<8x192xf32> to vector<8x64xf32>
    %216 = vector.extract_strided_slice %213 {offsets = [0, 128], sizes = [8, 64], strides = [1, 1]} : vector<8x192xf32> to vector<8x64xf32>
    %cst_88 = arith.constant dense<0.000000e+00> : vector<8x128xf32>
    %217 = tpu.matmul %212, %210, %cst_88 {dimension_numbers = #tpu.dot_dimension_numbers<[1], [0], [0], [1], [0, 0, 1, 1], [], []>} : vector<8x64xf32>, vector<64x128xf32>, vector<8x128xf32> -> vector<8x128xf32>
    %218 = vector.extract_strided_slice %217 {offsets = [0, 0], sizes = [8, 64], strides = [1, 1]} : vector<8x128xf32> to vector<8x64xf32>
    %219 = arith.addf %214, %218 : vector<8x64xf32>
    %220 = arith.negf %219 : vector<8x64xf32>
    %221 = math.exp %220 : vector<8x64xf32>
    %cst_89 = arith.constant 1.000000e+00 : f32
    %222 = vector.broadcast %cst_89 : f32 to vector<8x64xf32>
    %223 = arith.addf %222, %221 : vector<8x64xf32>
    %224 = arith.divf %222, %223 : vector<8x64xf32>
    %225 = vector.extract_strided_slice %217 {offsets = [0, 64], sizes = [8, 64], strides = [1, 1]} : vector<8x128xf32> to vector<8x64xf32>
    %226 = arith.addf %215, %225 : vector<8x64xf32>
    %227 = arith.negf %226 : vector<8x64xf32>
    %228 = math.exp %227 : vector<8x64xf32>
    %cst_90 = arith.constant 1.000000e+00 : f32
    %229 = vector.broadcast %cst_90 : f32 to vector<8x64xf32>
    %230 = arith.addf %229, %228 : vector<8x64xf32>
    %231 = arith.divf %229, %230 : vector<8x64xf32>
    %232 = arith.mulf %231, %212 : vector<8x64xf32>
    %cst_91 = arith.constant dense<0.000000e+00> : vector<8x64xf32>
    %233 = tpu.matmul %232, %211, %cst_91 {dimension_numbers = #tpu.dot_dimension_numbers<[1], [0], [0], [1], [0, 0, 1, 1], [], []>} : vector<8x64xf32>, vector<64x64xf32>, vector<8x64xf32> -> vector<8x64xf32>
    %234 = arith.addf %216, %233 : vector<8x64xf32>
    %235 = math.tanh %234 : vector<8x64xf32>
    %cst_92 = arith.constant 1.000000e+00 : f32
    %236 = vector.broadcast %cst_92 : f32 to vector<8x64xf32>
    %237 = arith.subf %236, %224 : vector<8x64xf32>
    %238 = arith.mulf %237, %235 : vector<8x64xf32>
    %239 = arith.mulf %224, %212 : vector<8x64xf32>
    %240 = arith.addf %238, %239 : vector<8x64xf32>
    %241 = vector.extract_strided_slice %209 {offsets = [8, 0], sizes = [8, 192], strides = [1, 1]} : vector<96x192xf32> to vector<8x192xf32>
    %242 = vector.extract_strided_slice %241 {offsets = [0, 0], sizes = [8, 64], strides = [1, 1]} : vector<8x192xf32> to vector<8x64xf32>
    %243 = vector.extract_strided_slice %241 {offsets = [0, 64], sizes = [8, 64], strides = [1, 1]} : vector<8x192xf32> to vector<8x64xf32>
    %244 = vector.extract_strided_slice %241 {offsets = [0, 128], sizes = [8, 64], strides = [1, 1]} : vector<8x192xf32> to vector<8x64xf32>
    %cst_93 = arith.constant dense<0.000000e+00> : vector<8x128xf32>
    %245 = tpu.matmul %240, %210, %cst_93 {dimension_numbers = #tpu.dot_dimension_numbers<[1], [0], [0], [1], [0, 0, 1, 1], [], []>} : vector<8x64xf32>, vector<64x128xf32>, vector<8x128xf32> -> vector<8x128xf32>
    %246 = vector.extract_strided_slice %245 {offsets = [0, 0], sizes = [8, 64], strides = [1, 1]} : vector<8x128xf32> to vector<8x64xf32>
    %247 = arith.addf %242, %246 : vector<8x64xf32>
    %248 = arith.negf %247 : vector<8x64xf32>
    %249 = math.exp %248 : vector<8x64xf32>
    %cst_94 = arith.constant 1.000000e+00 : f32
    %250 = vector.broadcast %cst_94 : f32 to vector<8x64xf32>
    %251 = arith.addf %250, %249 : vector<8x64xf32>
    %252 = arith.divf %250, %251 : vector<8x64xf32>
    %253 = vector.extract_strided_slice %245 {offsets = [0, 64], sizes = [8, 64], strides = [1, 1]} : vector<8x128xf32> to vector<8x64xf32>
    %254 = arith.addf %243, %253 : vector<8x64xf32>
    %255 = arith.negf %254 : vector<8x64xf32>
    %256 = math.exp %255 : vector<8x64xf32>
    %cst_95 = arith.constant 1.000000e+00 : f32
    %257 = vector.broadcast %cst_95 : f32 to vector<8x64xf32>
    %258 = arith.addf %257, %256 : vector<8x64xf32>
    %259 = arith.divf %257, %258 : vector<8x64xf32>
    %260 = arith.mulf %259, %240 : vector<8x64xf32>
    %cst_96 = arith.constant dense<0.000000e+00> : vector<8x64xf32>
    %261 = tpu.matmul %260, %211, %cst_96 {dimension_numbers = #tpu.dot_dimension_numbers<[1], [0], [0], [1], [0, 0, 1, 1], [], []>} : vector<8x64xf32>, vector<64x64xf32>, vector<8x64xf32> -> vector<8x64xf32>
    %262 = arith.addf %244, %261 : vector<8x64xf32>
    %263 = math.tanh %262 : vector<8x64xf32>
    %cst_97 = arith.constant 1.000000e+00 : f32
    %264 = vector.broadcast %cst_97 : f32 to vector<8x64xf32>
    %265 = arith.subf %264, %252 : vector<8x64xf32>
    %266 = arith.mulf %265, %263 : vector<8x64xf32>
    %267 = arith.mulf %252, %240 : vector<8x64xf32>
    %268 = arith.addf %266, %267 : vector<8x64xf32>
    %269 = vector.extract_strided_slice %209 {offsets = [16, 0], sizes = [8, 192], strides = [1, 1]} : vector<96x192xf32> to vector<8x192xf32>
    %270 = vector.extract_strided_slice %269 {offsets = [0, 0], sizes = [8, 64], strides = [1, 1]} : vector<8x192xf32> to vector<8x64xf32>
    %271 = vector.extract_strided_slice %269 {offsets = [0, 64], sizes = [8, 64], strides = [1, 1]} : vector<8x192xf32> to vector<8x64xf32>
    %272 = vector.extract_strided_slice %269 {offsets = [0, 128], sizes = [8, 64], strides = [1, 1]} : vector<8x192xf32> to vector<8x64xf32>
    %cst_98 = arith.constant dense<0.000000e+00> : vector<8x128xf32>
    %273 = tpu.matmul %268, %210, %cst_98 {dimension_numbers = #tpu.dot_dimension_numbers<[1], [0], [0], [1], [0, 0, 1, 1], [], []>} : vector<8x64xf32>, vector<64x128xf32>, vector<8x128xf32> -> vector<8x128xf32>
    %274 = vector.extract_strided_slice %273 {offsets = [0, 0], sizes = [8, 64], strides = [1, 1]} : vector<8x128xf32> to vector<8x64xf32>
    %275 = arith.addf %270, %274 : vector<8x64xf32>
    %276 = arith.negf %275 : vector<8x64xf32>
    %277 = math.exp %276 : vector<8x64xf32>
    %cst_99 = arith.constant 1.000000e+00 : f32
    %278 = vector.broadcast %cst_99 : f32 to vector<8x64xf32>
    %279 = arith.addf %278, %277 : vector<8x64xf32>
    %280 = arith.divf %278, %279 : vector<8x64xf32>
    %281 = vector.extract_strided_slice %273 {offsets = [0, 64], sizes = [8, 64], strides = [1, 1]} : vector<8x128xf32> to vector<8x64xf32>
    %282 = arith.addf %271, %281 : vector<8x64xf32>
    %283 = arith.negf %282 : vector<8x64xf32>
    %284 = math.exp %283 : vector<8x64xf32>
    %cst_100 = arith.constant 1.000000e+00 : f32
    %285 = vector.broadcast %cst_100 : f32 to vector<8x64xf32>
    %286 = arith.addf %285, %284 : vector<8x64xf32>
    %287 = arith.divf %285, %286 : vector<8x64xf32>
    %288 = arith.mulf %287, %268 : vector<8x64xf32>
    %cst_101 = arith.constant dense<0.000000e+00> : vector<8x64xf32>
    %289 = tpu.matmul %288, %211, %cst_101 {dimension_numbers = #tpu.dot_dimension_numbers<[1], [0], [0], [1], [0, 0, 1, 1], [], []>} : vector<8x64xf32>, vector<64x64xf32>, vector<8x64xf32> -> vector<8x64xf32>
    %290 = arith.addf %272, %289 : vector<8x64xf32>
    %291 = math.tanh %290 : vector<8x64xf32>
    %cst_102 = arith.constant 1.000000e+00 : f32
    %292 = vector.broadcast %cst_102 : f32 to vector<8x64xf32>
    %293 = arith.subf %292, %280 : vector<8x64xf32>
    %294 = arith.mulf %293, %291 : vector<8x64xf32>
    %295 = arith.mulf %280, %268 : vector<8x64xf32>
    %296 = arith.addf %294, %295 : vector<8x64xf32>
    %297 = vector.extract_strided_slice %209 {offsets = [24, 0], sizes = [8, 192], strides = [1, 1]} : vector<96x192xf32> to vector<8x192xf32>
    %298 = vector.extract_strided_slice %297 {offsets = [0, 0], sizes = [8, 64], strides = [1, 1]} : vector<8x192xf32> to vector<8x64xf32>
    %299 = vector.extract_strided_slice %297 {offsets = [0, 64], sizes = [8, 64], strides = [1, 1]} : vector<8x192xf32> to vector<8x64xf32>
    %300 = vector.extract_strided_slice %297 {offsets = [0, 128], sizes = [8, 64], strides = [1, 1]} : vector<8x192xf32> to vector<8x64xf32>
    %cst_103 = arith.constant dense<0.000000e+00> : vector<8x128xf32>
    %301 = tpu.matmul %296, %210, %cst_103 {dimension_numbers = #tpu.dot_dimension_numbers<[1], [0], [0], [1], [0, 0, 1, 1], [], []>} : vector<8x64xf32>, vector<64x128xf32>, vector<8x128xf32> -> vector<8x128xf32>
    %302 = vector.extract_strided_slice %301 {offsets = [0, 0], sizes = [8, 64], strides = [1, 1]} : vector<8x128xf32> to vector<8x64xf32>
    %303 = arith.addf %298, %302 : vector<8x64xf32>
    %304 = arith.negf %303 : vector<8x64xf32>
    %305 = math.exp %304 : vector<8x64xf32>
    %cst_104 = arith.constant 1.000000e+00 : f32
    %306 = vector.broadcast %cst_104 : f32 to vector<8x64xf32>
    %307 = arith.addf %306, %305 : vector<8x64xf32>
    %308 = arith.divf %306, %307 : vector<8x64xf32>
    %309 = vector.extract_strided_slice %301 {offsets = [0, 64], sizes = [8, 64], strides = [1, 1]} : vector<8x128xf32> to vector<8x64xf32>
    %310 = arith.addf %299, %309 : vector<8x64xf32>
    %311 = arith.negf %310 : vector<8x64xf32>
    %312 = math.exp %311 : vector<8x64xf32>
    %cst_105 = arith.constant 1.000000e+00 : f32
    %313 = vector.broadcast %cst_105 : f32 to vector<8x64xf32>
    %314 = arith.addf %313, %312 : vector<8x64xf32>
    %315 = arith.divf %313, %314 : vector<8x64xf32>
    %316 = arith.mulf %315, %296 : vector<8x64xf32>
    %cst_106 = arith.constant dense<0.000000e+00> : vector<8x64xf32>
    %317 = tpu.matmul %316, %211, %cst_106 {dimension_numbers = #tpu.dot_dimension_numbers<[1], [0], [0], [1], [0, 0, 1, 1], [], []>} : vector<8x64xf32>, vector<64x64xf32>, vector<8x64xf32> -> vector<8x64xf32>
    %318 = arith.addf %300, %317 : vector<8x64xf32>
    %319 = math.tanh %318 : vector<8x64xf32>
    %cst_107 = arith.constant 1.000000e+00 : f32
    %320 = vector.broadcast %cst_107 : f32 to vector<8x64xf32>
    %321 = arith.subf %320, %308 : vector<8x64xf32>
    %322 = arith.mulf %321, %319 : vector<8x64xf32>
    %323 = arith.mulf %308, %296 : vector<8x64xf32>
    %324 = arith.addf %322, %323 : vector<8x64xf32>
    %325 = vector.extract_strided_slice %209 {offsets = [32, 0], sizes = [8, 192], strides = [1, 1]} : vector<96x192xf32> to vector<8x192xf32>
    %326 = vector.extract_strided_slice %325 {offsets = [0, 0], sizes = [8, 64], strides = [1, 1]} : vector<8x192xf32> to vector<8x64xf32>
    %327 = vector.extract_strided_slice %325 {offsets = [0, 64], sizes = [8, 64], strides = [1, 1]} : vector<8x192xf32> to vector<8x64xf32>
    %328 = vector.extract_strided_slice %325 {offsets = [0, 128], sizes = [8, 64], strides = [1, 1]} : vector<8x192xf32> to vector<8x64xf32>
    %cst_108 = arith.constant dense<0.000000e+00> : vector<8x128xf32>
    %329 = tpu.matmul %324, %210, %cst_108 {dimension_numbers = #tpu.dot_dimension_numbers<[1], [0], [0], [1], [0, 0, 1, 1], [], []>} : vector<8x64xf32>, vector<64x128xf32>, vector<8x128xf32> -> vector<8x128xf32>
    %330 = vector.extract_strided_slice %329 {offsets = [0, 0], sizes = [8, 64], strides = [1, 1]} : vector<8x128xf32> to vector<8x64xf32>
    %331 = arith.addf %326, %330 : vector<8x64xf32>
    %332 = arith.negf %331 : vector<8x64xf32>
    %333 = math.exp %332 : vector<8x64xf32>
    %cst_109 = arith.constant 1.000000e+00 : f32
    %334 = vector.broadcast %cst_109 : f32 to vector<8x64xf32>
    %335 = arith.addf %334, %333 : vector<8x64xf32>
    %336 = arith.divf %334, %335 : vector<8x64xf32>
    %337 = vector.extract_strided_slice %329 {offsets = [0, 64], sizes = [8, 64], strides = [1, 1]} : vector<8x128xf32> to vector<8x64xf32>
    %338 = arith.addf %327, %337 : vector<8x64xf32>
    %339 = arith.negf %338 : vector<8x64xf32>
    %340 = math.exp %339 : vector<8x64xf32>
    %cst_110 = arith.constant 1.000000e+00 : f32
    %341 = vector.broadcast %cst_110 : f32 to vector<8x64xf32>
    %342 = arith.addf %341, %340 : vector<8x64xf32>
    %343 = arith.divf %341, %342 : vector<8x64xf32>
    %344 = arith.mulf %343, %324 : vector<8x64xf32>
    %cst_111 = arith.constant dense<0.000000e+00> : vector<8x64xf32>
    %345 = tpu.matmul %344, %211, %cst_111 {dimension_numbers = #tpu.dot_dimension_numbers<[1], [0], [0], [1], [0, 0, 1, 1], [], []>} : vector<8x64xf32>, vector<64x64xf32>, vector<8x64xf32> -> vector<8x64xf32>
    %346 = arith.addf %328, %345 : vector<8x64xf32>
    %347 = math.tanh %346 : vector<8x64xf32>
    %cst_112 = arith.constant 1.000000e+00 : f32
    %348 = vector.broadcast %cst_112 : f32 to vector<8x64xf32>
    %349 = arith.subf %348, %336 : vector<8x64xf32>
    %350 = arith.mulf %349, %347 : vector<8x64xf32>
    %351 = arith.mulf %336, %324 : vector<8x64xf32>
    %352 = arith.addf %350, %351 : vector<8x64xf32>
    %353 = vector.extract_strided_slice %209 {offsets = [40, 0], sizes = [8, 192], strides = [1, 1]} : vector<96x192xf32> to vector<8x192xf32>
    %354 = vector.extract_strided_slice %353 {offsets = [0, 0], sizes = [8, 64], strides = [1, 1]} : vector<8x192xf32> to vector<8x64xf32>
    %355 = vector.extract_strided_slice %353 {offsets = [0, 64], sizes = [8, 64], strides = [1, 1]} : vector<8x192xf32> to vector<8x64xf32>
    %356 = vector.extract_strided_slice %353 {offsets = [0, 128], sizes = [8, 64], strides = [1, 1]} : vector<8x192xf32> to vector<8x64xf32>
    %cst_113 = arith.constant dense<0.000000e+00> : vector<8x128xf32>
    %357 = tpu.matmul %352, %210, %cst_113 {dimension_numbers = #tpu.dot_dimension_numbers<[1], [0], [0], [1], [0, 0, 1, 1], [], []>} : vector<8x64xf32>, vector<64x128xf32>, vector<8x128xf32> -> vector<8x128xf32>
    %358 = vector.extract_strided_slice %357 {offsets = [0, 0], sizes = [8, 64], strides = [1, 1]} : vector<8x128xf32> to vector<8x64xf32>
    %359 = arith.addf %354, %358 : vector<8x64xf32>
    %360 = arith.negf %359 : vector<8x64xf32>
    %361 = math.exp %360 : vector<8x64xf32>
    %cst_114 = arith.constant 1.000000e+00 : f32
    %362 = vector.broadcast %cst_114 : f32 to vector<8x64xf32>
    %363 = arith.addf %362, %361 : vector<8x64xf32>
    %364 = arith.divf %362, %363 : vector<8x64xf32>
    %365 = vector.extract_strided_slice %357 {offsets = [0, 64], sizes = [8, 64], strides = [1, 1]} : vector<8x128xf32> to vector<8x64xf32>
    %366 = arith.addf %355, %365 : vector<8x64xf32>
    %367 = arith.negf %366 : vector<8x64xf32>
    %368 = math.exp %367 : vector<8x64xf32>
    %cst_115 = arith.constant 1.000000e+00 : f32
    %369 = vector.broadcast %cst_115 : f32 to vector<8x64xf32>
    %370 = arith.addf %369, %368 : vector<8x64xf32>
    %371 = arith.divf %369, %370 : vector<8x64xf32>
    %372 = arith.mulf %371, %352 : vector<8x64xf32>
    %cst_116 = arith.constant dense<0.000000e+00> : vector<8x64xf32>
    %373 = tpu.matmul %372, %211, %cst_116 {dimension_numbers = #tpu.dot_dimension_numbers<[1], [0], [0], [1], [0, 0, 1, 1], [], []>} : vector<8x64xf32>, vector<64x64xf32>, vector<8x64xf32> -> vector<8x64xf32>
    %374 = arith.addf %356, %373 : vector<8x64xf32>
    %375 = math.tanh %374 : vector<8x64xf32>
    %cst_117 = arith.constant 1.000000e+00 : f32
    %376 = vector.broadcast %cst_117 : f32 to vector<8x64xf32>
    %377 = arith.subf %376, %364 : vector<8x64xf32>
    %378 = arith.mulf %377, %375 : vector<8x64xf32>
    %379 = arith.mulf %364, %352 : vector<8x64xf32>
    %380 = arith.addf %378, %379 : vector<8x64xf32>
    %381 = vector.extract_strided_slice %209 {offsets = [48, 0], sizes = [8, 192], strides = [1, 1]} : vector<96x192xf32> to vector<8x192xf32>
    %382 = vector.extract_strided_slice %381 {offsets = [0, 0], sizes = [8, 64], strides = [1, 1]} : vector<8x192xf32> to vector<8x64xf32>
    %383 = vector.extract_strided_slice %381 {offsets = [0, 64], sizes = [8, 64], strides = [1, 1]} : vector<8x192xf32> to vector<8x64xf32>
    %384 = vector.extract_strided_slice %381 {offsets = [0, 128], sizes = [8, 64], strides = [1, 1]} : vector<8x192xf32> to vector<8x64xf32>
    %cst_118 = arith.constant dense<0.000000e+00> : vector<8x128xf32>
    %385 = tpu.matmul %380, %210, %cst_118 {dimension_numbers = #tpu.dot_dimension_numbers<[1], [0], [0], [1], [0, 0, 1, 1], [], []>} : vector<8x64xf32>, vector<64x128xf32>, vector<8x128xf32> -> vector<8x128xf32>
    %386 = vector.extract_strided_slice %385 {offsets = [0, 0], sizes = [8, 64], strides = [1, 1]} : vector<8x128xf32> to vector<8x64xf32>
    %387 = arith.addf %382, %386 : vector<8x64xf32>
    %388 = arith.negf %387 : vector<8x64xf32>
    %389 = math.exp %388 : vector<8x64xf32>
    %cst_119 = arith.constant 1.000000e+00 : f32
    %390 = vector.broadcast %cst_119 : f32 to vector<8x64xf32>
    %391 = arith.addf %390, %389 : vector<8x64xf32>
    %392 = arith.divf %390, %391 : vector<8x64xf32>
    %393 = vector.extract_strided_slice %385 {offsets = [0, 64], sizes = [8, 64], strides = [1, 1]} : vector<8x128xf32> to vector<8x64xf32>
    %394 = arith.addf %383, %393 : vector<8x64xf32>
    %395 = arith.negf %394 : vector<8x64xf32>
    %396 = math.exp %395 : vector<8x64xf32>
    %cst_120 = arith.constant 1.000000e+00 : f32
    %397 = vector.broadcast %cst_120 : f32 to vector<8x64xf32>
    %398 = arith.addf %397, %396 : vector<8x64xf32>
    %399 = arith.divf %397, %398 : vector<8x64xf32>
    %400 = arith.mulf %399, %380 : vector<8x64xf32>
    %cst_121 = arith.constant dense<0.000000e+00> : vector<8x64xf32>
    %401 = tpu.matmul %400, %211, %cst_121 {dimension_numbers = #tpu.dot_dimension_numbers<[1], [0], [0], [1], [0, 0, 1, 1], [], []>} : vector<8x64xf32>, vector<64x64xf32>, vector<8x64xf32> -> vector<8x64xf32>
    %402 = arith.addf %384, %401 : vector<8x64xf32>
    %403 = math.tanh %402 : vector<8x64xf32>
    %cst_122 = arith.constant 1.000000e+00 : f32
    %404 = vector.broadcast %cst_122 : f32 to vector<8x64xf32>
    %405 = arith.subf %404, %392 : vector<8x64xf32>
    %406 = arith.mulf %405, %403 : vector<8x64xf32>
    %407 = arith.mulf %392, %380 : vector<8x64xf32>
    %408 = arith.addf %406, %407 : vector<8x64xf32>
    %409 = vector.extract_strided_slice %209 {offsets = [56, 0], sizes = [8, 192], strides = [1, 1]} : vector<96x192xf32> to vector<8x192xf32>
    %410 = vector.extract_strided_slice %409 {offsets = [0, 0], sizes = [8, 64], strides = [1, 1]} : vector<8x192xf32> to vector<8x64xf32>
    %411 = vector.extract_strided_slice %409 {offsets = [0, 64], sizes = [8, 64], strides = [1, 1]} : vector<8x192xf32> to vector<8x64xf32>
    %412 = vector.extract_strided_slice %409 {offsets = [0, 128], sizes = [8, 64], strides = [1, 1]} : vector<8x192xf32> to vector<8x64xf32>
    %cst_123 = arith.constant dense<0.000000e+00> : vector<8x128xf32>
    %413 = tpu.matmul %408, %210, %cst_123 {dimension_numbers = #tpu.dot_dimension_numbers<[1], [0], [0], [1], [0, 0, 1, 1], [], []>} : vector<8x64xf32>, vector<64x128xf32>, vector<8x128xf32> -> vector<8x128xf32>
    %414 = vector.extract_strided_slice %413 {offsets = [0, 0], sizes = [8, 64], strides = [1, 1]} : vector<8x128xf32> to vector<8x64xf32>
    %415 = arith.addf %410, %414 : vector<8x64xf32>
    %416 = arith.negf %415 : vector<8x64xf32>
    %417 = math.exp %416 : vector<8x64xf32>
    %cst_124 = arith.constant 1.000000e+00 : f32
    %418 = vector.broadcast %cst_124 : f32 to vector<8x64xf32>
    %419 = arith.addf %418, %417 : vector<8x64xf32>
    %420 = arith.divf %418, %419 : vector<8x64xf32>
    %421 = vector.extract_strided_slice %413 {offsets = [0, 64], sizes = [8, 64], strides = [1, 1]} : vector<8x128xf32> to vector<8x64xf32>
    %422 = arith.addf %411, %421 : vector<8x64xf32>
    %423 = arith.negf %422 : vector<8x64xf32>
    %424 = math.exp %423 : vector<8x64xf32>
    %cst_125 = arith.constant 1.000000e+00 : f32
    %425 = vector.broadcast %cst_125 : f32 to vector<8x64xf32>
    %426 = arith.addf %425, %424 : vector<8x64xf32>
    %427 = arith.divf %425, %426 : vector<8x64xf32>
    %428 = arith.mulf %427, %408 : vector<8x64xf32>
    %cst_126 = arith.constant dense<0.000000e+00> : vector<8x64xf32>
    %429 = tpu.matmul %428, %211, %cst_126 {dimension_numbers = #tpu.dot_dimension_numbers<[1], [0], [0], [1], [0, 0, 1, 1], [], []>} : vector<8x64xf32>, vector<64x64xf32>, vector<8x64xf32> -> vector<8x64xf32>
    %430 = arith.addf %412, %429 : vector<8x64xf32>
    %431 = math.tanh %430 : vector<8x64xf32>
    %cst_127 = arith.constant 1.000000e+00 : f32
    %432 = vector.broadcast %cst_127 : f32 to vector<8x64xf32>
    %433 = arith.subf %432, %420 : vector<8x64xf32>
    %434 = arith.mulf %433, %431 : vector<8x64xf32>
    %435 = arith.mulf %420, %408 : vector<8x64xf32>
    %436 = arith.addf %434, %435 : vector<8x64xf32>
    %437 = vector.extract_strided_slice %209 {offsets = [64, 0], sizes = [8, 192], strides = [1, 1]} : vector<96x192xf32> to vector<8x192xf32>
    %438 = vector.extract_strided_slice %437 {offsets = [0, 0], sizes = [8, 64], strides = [1, 1]} : vector<8x192xf32> to vector<8x64xf32>
    %439 = vector.extract_strided_slice %437 {offsets = [0, 64], sizes = [8, 64], strides = [1, 1]} : vector<8x192xf32> to vector<8x64xf32>
    %440 = vector.extract_strided_slice %437 {offsets = [0, 128], sizes = [8, 64], strides = [1, 1]} : vector<8x192xf32> to vector<8x64xf32>
    %cst_128 = arith.constant dense<0.000000e+00> : vector<8x128xf32>
    %441 = tpu.matmul %436, %210, %cst_128 {dimension_numbers = #tpu.dot_dimension_numbers<[1], [0], [0], [1], [0, 0, 1, 1], [], []>} : vector<8x64xf32>, vector<64x128xf32>, vector<8x128xf32> -> vector<8x128xf32>
    %442 = vector.extract_strided_slice %441 {offsets = [0, 0], sizes = [8, 64], strides = [1, 1]} : vector<8x128xf32> to vector<8x64xf32>
    %443 = arith.addf %438, %442 : vector<8x64xf32>
    %444 = arith.negf %443 : vector<8x64xf32>
    %445 = math.exp %444 : vector<8x64xf32>
    %cst_129 = arith.constant 1.000000e+00 : f32
    %446 = vector.broadcast %cst_129 : f32 to vector<8x64xf32>
    %447 = arith.addf %446, %445 : vector<8x64xf32>
    %448 = arith.divf %446, %447 : vector<8x64xf32>
    %449 = vector.extract_strided_slice %441 {offsets = [0, 64], sizes = [8, 64], strides = [1, 1]} : vector<8x128xf32> to vector<8x64xf32>
    %450 = arith.addf %439, %449 : vector<8x64xf32>
    %451 = arith.negf %450 : vector<8x64xf32>
    %452 = math.exp %451 : vector<8x64xf32>
    %cst_130 = arith.constant 1.000000e+00 : f32
    %453 = vector.broadcast %cst_130 : f32 to vector<8x64xf32>
    %454 = arith.addf %453, %452 : vector<8x64xf32>
    %455 = arith.divf %453, %454 : vector<8x64xf32>
    %456 = arith.mulf %455, %436 : vector<8x64xf32>
    %cst_131 = arith.constant dense<0.000000e+00> : vector<8x64xf32>
    %457 = tpu.matmul %456, %211, %cst_131 {dimension_numbers = #tpu.dot_dimension_numbers<[1], [0], [0], [1], [0, 0, 1, 1], [], []>} : vector<8x64xf32>, vector<64x64xf32>, vector<8x64xf32> -> vector<8x64xf32>
    %458 = arith.addf %440, %457 : vector<8x64xf32>
    %459 = math.tanh %458 : vector<8x64xf32>
    %cst_132 = arith.constant 1.000000e+00 : f32
    %460 = vector.broadcast %cst_132 : f32 to vector<8x64xf32>
    %461 = arith.subf %460, %448 : vector<8x64xf32>
    %462 = arith.mulf %461, %459 : vector<8x64xf32>
    %463 = arith.mulf %448, %436 : vector<8x64xf32>
    %464 = arith.addf %462, %463 : vector<8x64xf32>
    %465 = vector.extract_strided_slice %209 {offsets = [72, 0], sizes = [8, 192], strides = [1, 1]} : vector<96x192xf32> to vector<8x192xf32>
    %466 = vector.extract_strided_slice %465 {offsets = [0, 0], sizes = [8, 64], strides = [1, 1]} : vector<8x192xf32> to vector<8x64xf32>
    %467 = vector.extract_strided_slice %465 {offsets = [0, 64], sizes = [8, 64], strides = [1, 1]} : vector<8x192xf32> to vector<8x64xf32>
    %468 = vector.extract_strided_slice %465 {offsets = [0, 128], sizes = [8, 64], strides = [1, 1]} : vector<8x192xf32> to vector<8x64xf32>
    %cst_133 = arith.constant dense<0.000000e+00> : vector<8x128xf32>
    %469 = tpu.matmul %464, %210, %cst_133 {dimension_numbers = #tpu.dot_dimension_numbers<[1], [0], [0], [1], [0, 0, 1, 1], [], []>} : vector<8x64xf32>, vector<64x128xf32>, vector<8x128xf32> -> vector<8x128xf32>
    %470 = vector.extract_strided_slice %469 {offsets = [0, 0], sizes = [8, 64], strides = [1, 1]} : vector<8x128xf32> to vector<8x64xf32>
    %471 = arith.addf %466, %470 : vector<8x64xf32>
    %472 = arith.negf %471 : vector<8x64xf32>
    %473 = math.exp %472 : vector<8x64xf32>
    %cst_134 = arith.constant 1.000000e+00 : f32
    %474 = vector.broadcast %cst_134 : f32 to vector<8x64xf32>
    %475 = arith.addf %474, %473 : vector<8x64xf32>
    %476 = arith.divf %474, %475 : vector<8x64xf32>
    %477 = vector.extract_strided_slice %469 {offsets = [0, 64], sizes = [8, 64], strides = [1, 1]} : vector<8x128xf32> to vector<8x64xf32>
    %478 = arith.addf %467, %477 : vector<8x64xf32>
    %479 = arith.negf %478 : vector<8x64xf32>
    %480 = math.exp %479 : vector<8x64xf32>
    %cst_135 = arith.constant 1.000000e+00 : f32
    %481 = vector.broadcast %cst_135 : f32 to vector<8x64xf32>
    %482 = arith.addf %481, %480 : vector<8x64xf32>
    %483 = arith.divf %481, %482 : vector<8x64xf32>
    %484 = arith.mulf %483, %464 : vector<8x64xf32>
    %cst_136 = arith.constant dense<0.000000e+00> : vector<8x64xf32>
    %485 = tpu.matmul %484, %211, %cst_136 {dimension_numbers = #tpu.dot_dimension_numbers<[1], [0], [0], [1], [0, 0, 1, 1], [], []>} : vector<8x64xf32>, vector<64x64xf32>, vector<8x64xf32> -> vector<8x64xf32>
    %486 = arith.addf %468, %485 : vector<8x64xf32>
    %487 = math.tanh %486 : vector<8x64xf32>
    %cst_137 = arith.constant 1.000000e+00 : f32
    %488 = vector.broadcast %cst_137 : f32 to vector<8x64xf32>
    %489 = arith.subf %488, %476 : vector<8x64xf32>
    %490 = arith.mulf %489, %487 : vector<8x64xf32>
    %491 = arith.mulf %476, %464 : vector<8x64xf32>
    %492 = arith.addf %490, %491 : vector<8x64xf32>
    %493 = vector.extract_strided_slice %209 {offsets = [80, 0], sizes = [8, 192], strides = [1, 1]} : vector<96x192xf32> to vector<8x192xf32>
    %494 = vector.extract_strided_slice %493 {offsets = [0, 0], sizes = [8, 64], strides = [1, 1]} : vector<8x192xf32> to vector<8x64xf32>
    %495 = vector.extract_strided_slice %493 {offsets = [0, 64], sizes = [8, 64], strides = [1, 1]} : vector<8x192xf32> to vector<8x64xf32>
    %496 = vector.extract_strided_slice %493 {offsets = [0, 128], sizes = [8, 64], strides = [1, 1]} : vector<8x192xf32> to vector<8x64xf32>
    %cst_138 = arith.constant dense<0.000000e+00> : vector<8x128xf32>
    %497 = tpu.matmul %492, %210, %cst_138 {dimension_numbers = #tpu.dot_dimension_numbers<[1], [0], [0], [1], [0, 0, 1, 1], [], []>} : vector<8x64xf32>, vector<64x128xf32>, vector<8x128xf32> -> vector<8x128xf32>
    %498 = vector.extract_strided_slice %497 {offsets = [0, 0], sizes = [8, 64], strides = [1, 1]} : vector<8x128xf32> to vector<8x64xf32>
    %499 = arith.addf %494, %498 : vector<8x64xf32>
    %500 = arith.negf %499 : vector<8x64xf32>
    %501 = math.exp %500 : vector<8x64xf32>
    %cst_139 = arith.constant 1.000000e+00 : f32
    %502 = vector.broadcast %cst_139 : f32 to vector<8x64xf32>
    %503 = arith.addf %502, %501 : vector<8x64xf32>
    %504 = arith.divf %502, %503 : vector<8x64xf32>
    %505 = vector.extract_strided_slice %497 {offsets = [0, 64], sizes = [8, 64], strides = [1, 1]} : vector<8x128xf32> to vector<8x64xf32>
    %506 = arith.addf %495, %505 : vector<8x64xf32>
    %507 = arith.negf %506 : vector<8x64xf32>
    %508 = math.exp %507 : vector<8x64xf32>
    %cst_140 = arith.constant 1.000000e+00 : f32
    %509 = vector.broadcast %cst_140 : f32 to vector<8x64xf32>
    %510 = arith.addf %509, %508 : vector<8x64xf32>
    %511 = arith.divf %509, %510 : vector<8x64xf32>
    %512 = arith.mulf %511, %492 : vector<8x64xf32>
    %cst_141 = arith.constant dense<0.000000e+00> : vector<8x64xf32>
    %513 = tpu.matmul %512, %211, %cst_141 {dimension_numbers = #tpu.dot_dimension_numbers<[1], [0], [0], [1], [0, 0, 1, 1], [], []>} : vector<8x64xf32>, vector<64x64xf32>, vector<8x64xf32> -> vector<8x64xf32>
    %514 = arith.addf %496, %513 : vector<8x64xf32>
    %515 = math.tanh %514 : vector<8x64xf32>
    %cst_142 = arith.constant 1.000000e+00 : f32
    %516 = vector.broadcast %cst_142 : f32 to vector<8x64xf32>
    %517 = arith.subf %516, %504 : vector<8x64xf32>
    %518 = arith.mulf %517, %515 : vector<8x64xf32>
    %519 = arith.mulf %504, %492 : vector<8x64xf32>
    %520 = arith.addf %518, %519 : vector<8x64xf32>
    %521 = vector.extract_strided_slice %209 {offsets = [88, 0], sizes = [8, 192], strides = [1, 1]} : vector<96x192xf32> to vector<8x192xf32>
    %522 = vector.extract_strided_slice %521 {offsets = [0, 0], sizes = [8, 64], strides = [1, 1]} : vector<8x192xf32> to vector<8x64xf32>
    %523 = vector.extract_strided_slice %521 {offsets = [0, 64], sizes = [8, 64], strides = [1, 1]} : vector<8x192xf32> to vector<8x64xf32>
    %524 = vector.extract_strided_slice %521 {offsets = [0, 128], sizes = [8, 64], strides = [1, 1]} : vector<8x192xf32> to vector<8x64xf32>
    %cst_143 = arith.constant dense<0.000000e+00> : vector<8x128xf32>
    %525 = tpu.matmul %520, %210, %cst_143 {dimension_numbers = #tpu.dot_dimension_numbers<[1], [0], [0], [1], [0, 0, 1, 1], [], []>} : vector<8x64xf32>, vector<64x128xf32>, vector<8x128xf32> -> vector<8x128xf32>
    %526 = vector.extract_strided_slice %525 {offsets = [0, 0], sizes = [8, 64], strides = [1, 1]} : vector<8x128xf32> to vector<8x64xf32>
    %527 = arith.addf %522, %526 : vector<8x64xf32>
    %528 = arith.negf %527 : vector<8x64xf32>
    %529 = math.exp %528 : vector<8x64xf32>
    %cst_144 = arith.constant 1.000000e+00 : f32
    %530 = vector.broadcast %cst_144 : f32 to vector<8x64xf32>
    %531 = arith.addf %530, %529 : vector<8x64xf32>
    %532 = arith.divf %530, %531 : vector<8x64xf32>
    %533 = vector.extract_strided_slice %525 {offsets = [0, 64], sizes = [8, 64], strides = [1, 1]} : vector<8x128xf32> to vector<8x64xf32>
    %534 = arith.addf %523, %533 : vector<8x64xf32>
    %535 = arith.negf %534 : vector<8x64xf32>
    %536 = math.exp %535 : vector<8x64xf32>
    %cst_145 = arith.constant 1.000000e+00 : f32
    %537 = vector.broadcast %cst_145 : f32 to vector<8x64xf32>
    %538 = arith.addf %537, %536 : vector<8x64xf32>
    %539 = arith.divf %537, %538 : vector<8x64xf32>
    %540 = arith.mulf %539, %520 : vector<8x64xf32>
    %cst_146 = arith.constant dense<0.000000e+00> : vector<8x64xf32>
    %541 = tpu.matmul %540, %211, %cst_146 {dimension_numbers = #tpu.dot_dimension_numbers<[1], [0], [0], [1], [0, 0, 1, 1], [], []>} : vector<8x64xf32>, vector<64x64xf32>, vector<8x64xf32> -> vector<8x64xf32>
    %542 = arith.addf %524, %541 : vector<8x64xf32>
    %543 = math.tanh %542 : vector<8x64xf32>
    %cst_147 = arith.constant 1.000000e+00 : f32
    %544 = vector.broadcast %cst_147 : f32 to vector<8x64xf32>
    %545 = arith.subf %544, %532 : vector<8x64xf32>
    %546 = arith.mulf %545, %543 : vector<8x64xf32>
    %547 = arith.mulf %532, %520 : vector<8x64xf32>
    %548 = arith.addf %546, %547 : vector<8x64xf32>
    %c0_148 = arith.constant 0 : index
    %c0_149 = arith.constant 0 : index
    %549 = vector.load %arg16[%c0_148, %c0_149] : memref<64x64xf32, #tpu.memory_space<vmem>>, vector<64x64xf32>
    %cst_150 = arith.constant dense<0.000000e+00> : vector<8x64xf32>
    %550 = tpu.matmul %548, %549, %cst_150 {dimension_numbers = #tpu.dot_dimension_numbers<[1], [0], [0], [1], [0, 0, 1, 1], [], []>} : vector<8x64xf32>, vector<64x64xf32>, vector<8x64xf32> -> vector<8x64xf32>
    %c0_151 = arith.constant 0 : index
    %c0_152 = arith.constant 0 : index
    %551 = vector.load %arg17[%c0_151, %c0_152] : memref<1x64xf32, #tpu.memory_space<vmem>>, vector<1x64xf32>
    %552 = vector.broadcast %551 : vector<1x64xf32> to vector<8x64xf32>
    %553 = arith.addf %550, %552 : vector<8x64xf32>
    %cst_153 = arith.constant 5.000000e-01 : f32
    %554 = vector.broadcast %cst_153 : f32 to vector<8x64xf32>
    %555 = arith.mulf %554, %553 : vector<8x64xf32>
    %cst_154 = arith.constant 4.471500e-02 : f32
    %556 = vector.broadcast %cst_154 : f32 to vector<8x64xf32>
    %557 = arith.mulf %556, %553 : vector<8x64xf32>
    %558 = arith.mulf %557, %553 : vector<8x64xf32>
    %559 = arith.mulf %558, %553 : vector<8x64xf32>
    %560 = arith.addf %553, %559 : vector<8x64xf32>
    %cst_155 = arith.constant 0.797884583 : f32
    %561 = vector.broadcast %cst_155 : f32 to vector<8x64xf32>
    %562 = arith.mulf %561, %560 : vector<8x64xf32>
    %563 = math.tanh %562 : vector<8x64xf32>
    %cst_156 = arith.constant 1.000000e+00 : f32
    %564 = vector.broadcast %cst_156 : f32 to vector<8x64xf32>
    %565 = arith.addf %564, %563 : vector<8x64xf32>
    %566 = arith.mulf %555, %565 : vector<8x64xf32>
    %c0_157 = arith.constant 0 : index
    %c0_158 = arith.constant 0 : index
    %567 = vector.load %arg18[%c0_157, %c0_158] : memref<64x64xf32, #tpu.memory_space<vmem>>, vector<64x64xf32>
    %cst_159 = arith.constant dense<0.000000e+00> : vector<8x64xf32>
    %568 = tpu.matmul %566, %567, %cst_159 {dimension_numbers = #tpu.dot_dimension_numbers<[1], [0], [0], [1], [0, 0, 1, 1], [], []>} : vector<8x64xf32>, vector<64x64xf32>, vector<8x64xf32> -> vector<8x64xf32>
    %c0_160 = arith.constant 0 : index
    %c0_161 = arith.constant 0 : index
    %569 = vector.load %arg19[%c0_160, %c0_161] : memref<1x64xf32, #tpu.memory_space<vmem>>, vector<1x64xf32>
    %570 = vector.broadcast %569 : vector<1x64xf32> to vector<8x64xf32>
    %571 = arith.addf %568, %570 : vector<8x64xf32>
    %572 = vector.extract_strided_slice %571 {offsets = [0, 0], sizes = [8, 32], strides = [1, 1]} : vector<8x64xf32> to vector<8x32xf32>
    %573 = vector.extract_strided_slice %571 {offsets = [0, 32], sizes = [8, 32], strides = [1, 1]} : vector<8x64xf32> to vector<8x32xf32>
    %574 = arith.addf %572, %573 : vector<8x32xf32>
    %cst_162 = arith.constant 0.999994993 : f32
    %575 = vector.broadcast %cst_162 : f32 to vector<8x32xf32>
    %576 = arith.mulf %574, %575 : vector<8x32xf32>
    %cst_163 = arith.constant 0.000000e+00 : f32
    %577 = vector.broadcast %cst_163 : f32 to vector<8x64xf32>
    %c0_164 = arith.constant 0 : index
    %c0_165 = arith.constant 0 : index
    %c0_166 = arith.constant 0 : index
    %578 = vector.load %arg21[%c0_164, %c0_165, %c0_166] : memref<4x32x64xf32, #tpu.memory_space<vmem>>, vector<1x32x64xf32>
    %579 = vector.shape_cast %578 : vector<1x32x64xf32> to vector<32x64xf32>
    %cst_167 = arith.constant dense<0.000000e+00> : vector<8x64xf32>
    %580 = tpu.matmul %576, %579, %cst_167 {dimension_numbers = #tpu.dot_dimension_numbers<[1], [0], [0], [1], [0, 0, 1, 1], [], []>} : vector<8x32xf32>, vector<32x64xf32>, vector<8x64xf32> -> vector<8x64xf32>
    %581 = arith.addf %577, %580 : vector<8x64xf32>
    %c0_168 = arith.constant 0 : index
    %c0_169 = arith.constant 0 : index
    %c0_170 = arith.constant 0 : index
    %582 = vector.load %arg20[%c0_168, %c0_169, %c0_170] : memref<3x8x8xf32, #tpu.memory_space<vmem>>, vector<1x8x8xf32>
    %583 = vector.shape_cast %582 : vector<1x8x8xf32> to vector<8x8xf32>
    %cst_171 = arith.constant dense<0.000000e+00> : vector<8x32xf32>
    %584 = tpu.matmul %583, %576, %cst_171 {dimension_numbers = #tpu.dot_dimension_numbers<[1], [0], [0], [1], [0, 0, 1, 1], [], []>} : vector<8x8xf32>, vector<8x32xf32>, vector<8x32xf32> -> vector<8x32xf32>
    %cst_172 = arith.constant dense<0.000000e+00> : vector<8x32xf32>
    %585 = tpu.matmul %583, %584, %cst_172 {dimension_numbers = #tpu.dot_dimension_numbers<[1], [0], [0], [1], [0, 0, 1, 1], [], []>} : vector<8x8xf32>, vector<8x32xf32>, vector<8x32xf32> -> vector<8x32xf32>
    %c1 = arith.constant 1 : index
    %c0_173 = arith.constant 0 : index
    %c0_174 = arith.constant 0 : index
    %586 = vector.load %arg20[%c1, %c0_173, %c0_174] : memref<3x8x8xf32, #tpu.memory_space<vmem>>, vector<1x8x8xf32>
    %587 = vector.shape_cast %586 : vector<1x8x8xf32> to vector<8x8xf32>
    %cst_175 = arith.constant dense<0.000000e+00> : vector<8x32xf32>
    %588 = tpu.matmul %587, %576, %cst_175 {dimension_numbers = #tpu.dot_dimension_numbers<[1], [0], [0], [1], [0, 0, 1, 1], [], []>} : vector<8x8xf32>, vector<8x32xf32>, vector<8x32xf32> -> vector<8x32xf32>
    %cst_176 = arith.constant dense<0.000000e+00> : vector<8x32xf32>
    %589 = tpu.matmul %587, %588, %cst_176 {dimension_numbers = #tpu.dot_dimension_numbers<[1], [0], [0], [1], [0, 0, 1, 1], [], []>} : vector<8x8xf32>, vector<8x32xf32>, vector<8x32xf32> -> vector<8x32xf32>
    %c2 = arith.constant 2 : index
    %c0_177 = arith.constant 0 : index
    %c0_178 = arith.constant 0 : index
    %590 = vector.load %arg20[%c2, %c0_177, %c0_178] : memref<3x8x8xf32, #tpu.memory_space<vmem>>, vector<1x8x8xf32>
    %591 = vector.shape_cast %590 : vector<1x8x8xf32> to vector<8x8xf32>
    %cst_179 = arith.constant dense<0.000000e+00> : vector<8x32xf32>
    %592 = tpu.matmul %591, %576, %cst_179 {dimension_numbers = #tpu.dot_dimension_numbers<[1], [0], [0], [1], [0, 0, 1, 1], [], []>} : vector<8x8xf32>, vector<8x32xf32>, vector<8x32xf32> -> vector<8x32xf32>
    %cst_180 = arith.constant dense<0.000000e+00> : vector<8x32xf32>
    %593 = tpu.matmul %591, %592, %cst_180 {dimension_numbers = #tpu.dot_dimension_numbers<[1], [0], [0], [1], [0, 0, 1, 1], [], []>} : vector<8x8xf32>, vector<8x32xf32>, vector<8x32xf32> -> vector<8x32xf32>
    %594 = tpu.concatenate %576, %584, %585, %588, %589, %592, %593 in 1 : vector<8x32xf32>, vector<8x32xf32>, vector<8x32xf32>, vector<8x32xf32>, vector<8x32xf32>, vector<8x32xf32>, vector<8x32xf32> -> vector<8x224xf32>
    %c0_181 = arith.constant 0 : index
    %c0_182 = arith.constant 0 : index
    %c0_183 = arith.constant 0 : index
    %595 = vector.load %arg23[%c0_181, %c0_182, %c0_183] : memref<4x224x32xf32, #tpu.memory_space<vmem>>, vector<1x224x32xf32>
    %596 = vector.shape_cast %595 : vector<1x224x32xf32> to vector<224x32xf32>
    %cst_184 = arith.constant dense<0.000000e+00> : vector<8x32xf32>
    %597 = tpu.matmul %594, %596, %cst_184 {dimension_numbers = #tpu.dot_dimension_numbers<[1], [0], [0], [1], [0, 0, 1, 1], [], []>} : vector<8x224xf32>, vector<224x32xf32>, vector<8x32xf32> -> vector<8x32xf32>
    %c0_185 = arith.constant 0 : index
    %c0_186 = arith.constant 0 : index
    %c0_187 = arith.constant 0 : index
    %598 = vector.load %arg24[%c0_185, %c0_186, %c0_187] : memref<4x1x32xf32, #tpu.memory_space<vmem>>, vector<1x1x32xf32>
    %599 = vector.shape_cast %598 : vector<1x1x32xf32> to vector<1x32xf32>
    %600 = vector.broadcast %599 : vector<1x32xf32> to vector<8x32xf32>
    %601 = arith.addf %597, %600 : vector<8x32xf32>
    %602 = arith.addf %601, %576 : vector<8x32xf32>
    %cst_188 = arith.constant 0.999994993 : f32
    %603 = vector.broadcast %cst_188 : f32 to vector<8x32xf32>
    %604 = arith.mulf %602, %603 : vector<8x32xf32>
    %c1_189 = arith.constant 1 : index
    %c0_190 = arith.constant 0 : index
    %c0_191 = arith.constant 0 : index
    %605 = vector.load %arg21[%c1_189, %c0_190, %c0_191] : memref<4x32x64xf32, #tpu.memory_space<vmem>>, vector<1x32x64xf32>
    %606 = vector.shape_cast %605 : vector<1x32x64xf32> to vector<32x64xf32>
    %cst_192 = arith.constant dense<0.000000e+00> : vector<8x64xf32>
    %607 = tpu.matmul %604, %606, %cst_192 {dimension_numbers = #tpu.dot_dimension_numbers<[1], [0], [0], [1], [0, 0, 1, 1], [], []>} : vector<8x32xf32>, vector<32x64xf32>, vector<8x64xf32> -> vector<8x64xf32>
    %608 = arith.addf %581, %607 : vector<8x64xf32>
    %c0_193 = arith.constant 0 : index
    %c0_194 = arith.constant 0 : index
    %c0_195 = arith.constant 0 : index
    %609 = vector.load %arg20[%c0_193, %c0_194, %c0_195] : memref<3x8x8xf32, #tpu.memory_space<vmem>>, vector<1x8x8xf32>
    %610 = vector.shape_cast %609 : vector<1x8x8xf32> to vector<8x8xf32>
    %cst_196 = arith.constant dense<0.000000e+00> : vector<8x32xf32>
    %611 = tpu.matmul %610, %604, %cst_196 {dimension_numbers = #tpu.dot_dimension_numbers<[1], [0], [0], [1], [0, 0, 1, 1], [], []>} : vector<8x8xf32>, vector<8x32xf32>, vector<8x32xf32> -> vector<8x32xf32>
    %cst_197 = arith.constant dense<0.000000e+00> : vector<8x32xf32>
    %612 = tpu.matmul %610, %611, %cst_197 {dimension_numbers = #tpu.dot_dimension_numbers<[1], [0], [0], [1], [0, 0, 1, 1], [], []>} : vector<8x8xf32>, vector<8x32xf32>, vector<8x32xf32> -> vector<8x32xf32>
    %c1_198 = arith.constant 1 : index
    %c0_199 = arith.constant 0 : index
    %c0_200 = arith.constant 0 : index
    %613 = vector.load %arg20[%c1_198, %c0_199, %c0_200] : memref<3x8x8xf32, #tpu.memory_space<vmem>>, vector<1x8x8xf32>
    %614 = vector.shape_cast %613 : vector<1x8x8xf32> to vector<8x8xf32>
    %cst_201 = arith.constant dense<0.000000e+00> : vector<8x32xf32>
    %615 = tpu.matmul %614, %604, %cst_201 {dimension_numbers = #tpu.dot_dimension_numbers<[1], [0], [0], [1], [0, 0, 1, 1], [], []>} : vector<8x8xf32>, vector<8x32xf32>, vector<8x32xf32> -> vector<8x32xf32>
    %cst_202 = arith.constant dense<0.000000e+00> : vector<8x32xf32>
    %616 = tpu.matmul %614, %615, %cst_202 {dimension_numbers = #tpu.dot_dimension_numbers<[1], [0], [0], [1], [0, 0, 1, 1], [], []>} : vector<8x8xf32>, vector<8x32xf32>, vector<8x32xf32> -> vector<8x32xf32>
    %c2_203 = arith.constant 2 : index
    %c0_204 = arith.constant 0 : index
    %c0_205 = arith.constant 0 : index
    %617 = vector.load %arg20[%c2_203, %c0_204, %c0_205] : memref<3x8x8xf32, #tpu.memory_space<vmem>>, vector<1x8x8xf32>
    %618 = vector.shape_cast %617 : vector<1x8x8xf32> to vector<8x8xf32>
    %cst_206 = arith.constant dense<0.000000e+00> : vector<8x32xf32>
    %619 = tpu.matmul %618, %604, %cst_206 {dimension_numbers = #tpu.dot_dimension_numbers<[1], [0], [0], [1], [0, 0, 1, 1], [], []>} : vector<8x8xf32>, vector<8x32xf32>, vector<8x32xf32> -> vector<8x32xf32>
    %cst_207 = arith.constant dense<0.000000e+00> : vector<8x32xf32>
    %620 = tpu.matmul %618, %619, %cst_207 {dimension_numbers = #tpu.dot_dimension_numbers<[1], [0], [0], [1], [0, 0, 1, 1], [], []>} : vector<8x8xf32>, vector<8x32xf32>, vector<8x32xf32> -> vector<8x32xf32>
    %621 = tpu.concatenate %604, %611, %612, %615, %616, %619, %620 in 1 : vector<8x32xf32>, vector<8x32xf32>, vector<8x32xf32>, vector<8x32xf32>, vector<8x32xf32>, vector<8x32xf32>, vector<8x32xf32> -> vector<8x224xf32>
    %c1_208 = arith.constant 1 : index
    %c0_209 = arith.constant 0 : index
    %c0_210 = arith.constant 0 : index
    %622 = vector.load %arg23[%c1_208, %c0_209, %c0_210] : memref<4x224x32xf32, #tpu.memory_space<vmem>>, vector<1x224x32xf32>
    %623 = vector.shape_cast %622 : vector<1x224x32xf32> to vector<224x32xf32>
    %cst_211 = arith.constant dense<0.000000e+00> : vector<8x32xf32>
    %624 = tpu.matmul %621, %623, %cst_211 {dimension_numbers = #tpu.dot_dimension_numbers<[1], [0], [0], [1], [0, 0, 1, 1], [], []>} : vector<8x224xf32>, vector<224x32xf32>, vector<8x32xf32> -> vector<8x32xf32>
    %c1_212 = arith.constant 1 : index
    %c0_213 = arith.constant 0 : index
    %c0_214 = arith.constant 0 : index
    %625 = vector.load %arg24[%c1_212, %c0_213, %c0_214] : memref<4x1x32xf32, #tpu.memory_space<vmem>>, vector<1x1x32xf32>
    %626 = vector.shape_cast %625 : vector<1x1x32xf32> to vector<1x32xf32>
    %627 = vector.broadcast %626 : vector<1x32xf32> to vector<8x32xf32>
    %628 = arith.addf %624, %627 : vector<8x32xf32>
    %629 = arith.addf %628, %604 : vector<8x32xf32>
    %cst_215 = arith.constant 0.999994993 : f32
    %630 = vector.broadcast %cst_215 : f32 to vector<8x32xf32>
    %631 = arith.mulf %629, %630 : vector<8x32xf32>
    %c2_216 = arith.constant 2 : index
    %c0_217 = arith.constant 0 : index
    %c0_218 = arith.constant 0 : index
    %632 = vector.load %arg21[%c2_216, %c0_217, %c0_218] : memref<4x32x64xf32, #tpu.memory_space<vmem>>, vector<1x32x64xf32>
    %633 = vector.shape_cast %632 : vector<1x32x64xf32> to vector<32x64xf32>
    %cst_219 = arith.constant dense<0.000000e+00> : vector<8x64xf32>
    %634 = tpu.matmul %631, %633, %cst_219 {dimension_numbers = #tpu.dot_dimension_numbers<[1], [0], [0], [1], [0, 0, 1, 1], [], []>} : vector<8x32xf32>, vector<32x64xf32>, vector<8x64xf32> -> vector<8x64xf32>
    %635 = arith.addf %608, %634 : vector<8x64xf32>
    %c0_220 = arith.constant 0 : index
    %c0_221 = arith.constant 0 : index
    %c0_222 = arith.constant 0 : index
    %636 = vector.load %arg20[%c0_220, %c0_221, %c0_222] : memref<3x8x8xf32, #tpu.memory_space<vmem>>, vector<1x8x8xf32>
    %637 = vector.shape_cast %636 : vector<1x8x8xf32> to vector<8x8xf32>
    %cst_223 = arith.constant dense<0.000000e+00> : vector<8x32xf32>
    %638 = tpu.matmul %637, %631, %cst_223 {dimension_numbers = #tpu.dot_dimension_numbers<[1], [0], [0], [1], [0, 0, 1, 1], [], []>} : vector<8x8xf32>, vector<8x32xf32>, vector<8x32xf32> -> vector<8x32xf32>
    %cst_224 = arith.constant dense<0.000000e+00> : vector<8x32xf32>
    %639 = tpu.matmul %637, %638, %cst_224 {dimension_numbers = #tpu.dot_dimension_numbers<[1], [0], [0], [1], [0, 0, 1, 1], [], []>} : vector<8x8xf32>, vector<8x32xf32>, vector<8x32xf32> -> vector<8x32xf32>
    %c1_225 = arith.constant 1 : index
    %c0_226 = arith.constant 0 : index
    %c0_227 = arith.constant 0 : index
    %640 = vector.load %arg20[%c1_225, %c0_226, %c0_227] : memref<3x8x8xf32, #tpu.memory_space<vmem>>, vector<1x8x8xf32>
    %641 = vector.shape_cast %640 : vector<1x8x8xf32> to vector<8x8xf32>
    %cst_228 = arith.constant dense<0.000000e+00> : vector<8x32xf32>
    %642 = tpu.matmul %641, %631, %cst_228 {dimension_numbers = #tpu.dot_dimension_numbers<[1], [0], [0], [1], [0, 0, 1, 1], [], []>} : vector<8x8xf32>, vector<8x32xf32>, vector<8x32xf32> -> vector<8x32xf32>
    %cst_229 = arith.constant dense<0.000000e+00> : vector<8x32xf32>
    %643 = tpu.matmul %641, %642, %cst_229 {dimension_numbers = #tpu.dot_dimension_numbers<[1], [0], [0], [1], [0, 0, 1, 1], [], []>} : vector<8x8xf32>, vector<8x32xf32>, vector<8x32xf32> -> vector<8x32xf32>
    %c2_230 = arith.constant 2 : index
    %c0_231 = arith.constant 0 : index
    %c0_232 = arith.constant 0 : index
    %644 = vector.load %arg20[%c2_230, %c0_231, %c0_232] : memref<3x8x8xf32, #tpu.memory_space<vmem>>, vector<1x8x8xf32>
    %645 = vector.shape_cast %644 : vector<1x8x8xf32> to vector<8x8xf32>
    %cst_233 = arith.constant dense<0.000000e+00> : vector<8x32xf32>
    %646 = tpu.matmul %645, %631, %cst_233 {dimension_numbers = #tpu.dot_dimension_numbers<[1], [0], [0], [1], [0, 0, 1, 1], [], []>} : vector<8x8xf32>, vector<8x32xf32>, vector<8x32xf32> -> vector<8x32xf32>
    %cst_234 = arith.constant dense<0.000000e+00> : vector<8x32xf32>
    %647 = tpu.matmul %645, %646, %cst_234 {dimension_numbers = #tpu.dot_dimension_numbers<[1], [0], [0], [1], [0, 0, 1, 1], [], []>} : vector<8x8xf32>, vector<8x32xf32>, vector<8x32xf32> -> vector<8x32xf32>
    %648 = tpu.concatenate %631, %638, %639, %642, %643, %646, %647 in 1 : vector<8x32xf32>, vector<8x32xf32>, vector<8x32xf32>, vector<8x32xf32>, vector<8x32xf32>, vector<8x32xf32>, vector<8x32xf32> -> vector<8x224xf32>
    %c2_235 = arith.constant 2 : index
    %c0_236 = arith.constant 0 : index
    %c0_237 = arith.constant 0 : index
    %649 = vector.load %arg23[%c2_235, %c0_236, %c0_237] : memref<4x224x32xf32, #tpu.memory_space<vmem>>, vector<1x224x32xf32>
    %650 = vector.shape_cast %649 : vector<1x224x32xf32> to vector<224x32xf32>
    %cst_238 = arith.constant dense<0.000000e+00> : vector<8x32xf32>
    %651 = tpu.matmul %648, %650, %cst_238 {dimension_numbers = #tpu.dot_dimension_numbers<[1], [0], [0], [1], [0, 0, 1, 1], [], []>} : vector<8x224xf32>, vector<224x32xf32>, vector<8x32xf32> -> vector<8x32xf32>
    %c2_239 = arith.constant 2 : index
    %c0_240 = arith.constant 0 : index
    %c0_241 = arith.constant 0 : index
    %652 = vector.load %arg24[%c2_239, %c0_240, %c0_241] : memref<4x1x32xf32, #tpu.memory_space<vmem>>, vector<1x1x32xf32>
    %653 = vector.shape_cast %652 : vector<1x1x32xf32> to vector<1x32xf32>
    %654 = vector.broadcast %653 : vector<1x32xf32> to vector<8x32xf32>
    %655 = arith.addf %651, %654 : vector<8x32xf32>
    %656 = arith.addf %655, %631 : vector<8x32xf32>
    %cst_242 = arith.constant 0.999994993 : f32
    %657 = vector.broadcast %cst_242 : f32 to vector<8x32xf32>
    %658 = arith.mulf %656, %657 : vector<8x32xf32>
    %c3 = arith.constant 3 : index
    %c0_243 = arith.constant 0 : index
    %c0_244 = arith.constant 0 : index
    %659 = vector.load %arg21[%c3, %c0_243, %c0_244] : memref<4x32x64xf32, #tpu.memory_space<vmem>>, vector<1x32x64xf32>
    %660 = vector.shape_cast %659 : vector<1x32x64xf32> to vector<32x64xf32>
    %cst_245 = arith.constant dense<0.000000e+00> : vector<8x64xf32>
    %661 = tpu.matmul %658, %660, %cst_245 {dimension_numbers = #tpu.dot_dimension_numbers<[1], [0], [0], [1], [0, 0, 1, 1], [], []>} : vector<8x32xf32>, vector<32x64xf32>, vector<8x64xf32> -> vector<8x64xf32>
    %662 = arith.addf %635, %661 : vector<8x64xf32>
    %c0_246 = arith.constant 0 : index
    %c0_247 = arith.constant 0 : index
    %663 = vector.load %arg22[%c0_246, %c0_247] : memref<1x64xf32, #tpu.memory_space<vmem>>, vector<1x64xf32>
    %664 = vector.broadcast %663 : vector<1x64xf32> to vector<8x64xf32>
    %665 = arith.addf %662, %664 : vector<8x64xf32>
    %cst_248 = arith.constant 5.000000e-01 : f32
    %666 = vector.broadcast %cst_248 : f32 to vector<8x64xf32>
    %667 = arith.mulf %666, %665 : vector<8x64xf32>
    %cst_249 = arith.constant 4.471500e-02 : f32
    %668 = vector.broadcast %cst_249 : f32 to vector<8x64xf32>
    %669 = arith.mulf %668, %665 : vector<8x64xf32>
    %670 = arith.mulf %669, %665 : vector<8x64xf32>
    %671 = arith.mulf %670, %665 : vector<8x64xf32>
    %672 = arith.addf %665, %671 : vector<8x64xf32>
    %cst_250 = arith.constant 0.797884583 : f32
    %673 = vector.broadcast %cst_250 : f32 to vector<8x64xf32>
    %674 = arith.mulf %673, %672 : vector<8x64xf32>
    %675 = math.tanh %674 : vector<8x64xf32>
    %cst_251 = arith.constant 1.000000e+00 : f32
    %676 = vector.broadcast %cst_251 : f32 to vector<8x64xf32>
    %677 = arith.addf %676, %675 : vector<8x64xf32>
    %678 = arith.mulf %667, %677 : vector<8x64xf32>
    %c0_252 = arith.constant 0 : index
    %c0_253 = arith.constant 0 : index
    %679 = vector.load %arg25[%c0_252, %c0_253] : memref<64x128xf32, #tpu.memory_space<vmem>>, vector<64x128xf32>
    %cst_254 = arith.constant dense<0.000000e+00> : vector<8x128xf32>
    %680 = tpu.matmul %678, %679, %cst_254 {dimension_numbers = #tpu.dot_dimension_numbers<[1], [0], [0], [1], [0, 0, 1, 1], [], []>} : vector<8x64xf32>, vector<64x128xf32>, vector<8x128xf32> -> vector<8x128xf32>
    %c0_255 = arith.constant 0 : index
    %c0_256 = arith.constant 0 : index
    %681 = vector.load %arg26[%c0_255, %c0_256] : memref<1x128xf32, #tpu.memory_space<vmem>>, vector<1x128xf32>
    %682 = vector.broadcast %681 : vector<1x128xf32> to vector<8x128xf32>
    %683 = arith.addf %680, %682 : vector<8x128xf32>
    %cst_257 = arith.constant 5.000000e-01 : f32
    %684 = vector.broadcast %cst_257 : f32 to vector<8x128xf32>
    %685 = arith.mulf %684, %683 : vector<8x128xf32>
    %cst_258 = arith.constant 4.471500e-02 : f32
    %686 = vector.broadcast %cst_258 : f32 to vector<8x128xf32>
    %687 = arith.mulf %686, %683 : vector<8x128xf32>
    %688 = arith.mulf %687, %683 : vector<8x128xf32>
    %689 = arith.mulf %688, %683 : vector<8x128xf32>
    %690 = arith.addf %683, %689 : vector<8x128xf32>
    %cst_259 = arith.constant 0.797884583 : f32
    %691 = vector.broadcast %cst_259 : f32 to vector<8x128xf32>
    %692 = arith.mulf %691, %690 : vector<8x128xf32>
    %693 = math.tanh %692 : vector<8x128xf32>
    %cst_260 = arith.constant 1.000000e+00 : f32
    %694 = vector.broadcast %cst_260 : f32 to vector<8x128xf32>
    %695 = arith.addf %694, %693 : vector<8x128xf32>
    %696 = arith.mulf %685, %695 : vector<8x128xf32>
    %c0_261 = arith.constant 0 : index
    %c0_262 = arith.constant 0 : index
    %697 = vector.load %arg27[%c0_261, %c0_262] : memref<12x128xf32, #tpu.memory_space<vmem>>, vector<12x128xf32>
    %cst_263 = arith.constant dense<0.000000e+00> : vector<12x8xf32>
    %698 = tpu.matmul %697, %696, %cst_263 {dimension_numbers = #tpu.dot_dimension_numbers<[1], [1], [0], [0], [0, 0, 1, 0], [], []>} : vector<12x128xf32>, vector<8x128xf32>, vector<12x8xf32> -> vector<12x8xf32>
    %c0_264 = arith.constant 0 : index
    %c0_265 = arith.constant 0 : index
    %699 = vector.load %arg28[%c0_264, %c0_265] : memref<12x1xf32, #tpu.memory_space<vmem>>, vector<12x1xf32>
    %700 = vector.broadcast %699 : vector<12x1xf32> to vector<12x8xf32>
    %701 = arith.addf %698, %700 : vector<12x8xf32>
    %c0_266 = arith.constant 0 : index
    %c0_267 = arith.constant 0 : index
    %c0_268 = arith.constant 0 : index
    %702 = vector.load %arg29[%c0_266, %c0_267, %c0_268] : memref<1x12x8xf32, #tpu.memory_space<vmem>>, vector<1x12x8xf32>
    %703 = vector.shape_cast %702 : vector<1x12x8xf32> to vector<12x8xf32>
    %704 = vector.shape_cast %701 : vector<12x8xf32> to vector<1x12x8xf32>
    tpu.vector_store %arg29[%c0_266, %c0_267, %c0_268], %704 {strides = array<i32>} : memref<1x12x8xf32, #tpu.memory_space<vmem>>, vector<1x12x8xf32>,
    return
  }
  func.func @transform_0(%arg0: i32) -> (i32, i32, i32) {
    %c0_i32 = arith.constant 0 : i32
    %c0_i32_0 = arith.constant 0 : i32
    %c0_i32_1 = arith.constant 0 : i32
    return %arg0, %c0_i32, %c0_i32_0 : i32, i32, i32
  }
  func.func @transform_1(%arg0: i32) -> (i32, i32) {
    %c0_i32 = arith.constant 0 : i32
    %c0_i32_0 = arith.constant 0 : i32
    %c0_i32_1 = arith.constant 0 : i32
    return %c0_i32, %c0_i32_0 : i32, i32
  }
  func.func @transform_2(%arg0: i32) -> (i32, i32) {
    %c0_i32 = arith.constant 0 : i32
    %c0_i32_0 = arith.constant 0 : i32
    %c0_i32_1 = arith.constant 0 : i32
    return %c0_i32, %c0_i32_0 : i32, i32
  }
  func.func @transform_3(%arg0: i32) -> (i32, i32) {
    %c0_i32 = arith.constant 0 : i32
    %c0_i32_0 = arith.constant 0 : i32
    %c0_i32_1 = arith.constant 0 : i32
    return %c0_i32, %c0_i32_0 : i32, i32
  }
  func.func @transform_4(%arg0: i32) -> (i32, i32) {
    %c0_i32 = arith.constant 0 : i32
    %c0_i32_0 = arith.constant 0 : i32
    %c0_i32_1 = arith.constant 0 : i32
    return %c0_i32, %c0_i32_0 : i32, i32
  }
  func.func @transform_5(%arg0: i32) -> (i32, i32) {
    %c0_i32 = arith.constant 0 : i32
    %c0_i32_0 = arith.constant 0 : i32
    %c0_i32_1 = arith.constant 0 : i32
    return %c0_i32, %c0_i32_0 : i32, i32
  }
  func.func @transform_6(%arg0: i32) -> (i32, i32) {
    %c0_i32 = arith.constant 0 : i32
    %c0_i32_0 = arith.constant 0 : i32
    %c0_i32_1 = arith.constant 0 : i32
    return %c0_i32, %c0_i32_0 : i32, i32
  }
  func.func @transform_7(%arg0: i32) -> (i32, i32) {
    %c0_i32 = arith.constant 0 : i32
    %c0_i32_0 = arith.constant 0 : i32
    %c0_i32_1 = arith.constant 0 : i32
    return %c0_i32, %c0_i32_0 : i32, i32
  }
  func.func @transform_8(%arg0: i32) -> (i32, i32) {
    %c0_i32 = arith.constant 0 : i32
    %c0_i32_0 = arith.constant 0 : i32
    %c0_i32_1 = arith.constant 0 : i32
    return %c0_i32, %c0_i32_0 : i32, i32
  }
  func.func @transform_9(%arg0: i32) -> (i32, i32) {
    %c0_i32 = arith.constant 0 : i32
    %c0_i32_0 = arith.constant 0 : i32
    %c0_i32_1 = arith.constant 0 : i32
    return %c0_i32, %c0_i32_0 : i32, i32
  }
  func.func @transform_10(%arg0: i32) -> (i32, i32) {
    %c0_i32 = arith.constant 0 : i32
    %c0_i32_0 = arith.constant 0 : i32
    %c0_i32_1 = arith.constant 0 : i32
    return %c0_i32, %c0_i32_0 : i32, i32
  }
  func.func @transform_11(%arg0: i32) -> (i32, i32) {
    %c0_i32 = arith.constant 0 : i32
    %c0_i32_0 = arith.constant 0 : i32
    %c0_i32_1 = arith.constant 0 : i32
    return %c0_i32, %c0_i32_0 : i32, i32
  }
  func.func @transform_12(%arg0: i32) -> (i32, i32) {
    %c0_i32 = arith.constant 0 : i32
    %c0_i32_0 = arith.constant 0 : i32
    %c0_i32_1 = arith.constant 0 : i32
    return %c0_i32, %c0_i32_0 : i32, i32
  }
  func.func @transform_13(%arg0: i32) -> (i32, i32) {
    %c0_i32 = arith.constant 0 : i32
    %c0_i32_0 = arith.constant 0 : i32
    %c0_i32_1 = arith.constant 0 : i32
    return %c0_i32, %c0_i32_0 : i32, i32
  }
  func.func @transform_14(%arg0: i32) -> (i32, i32) {
    %c0_i32 = arith.constant 0 : i32
    %c0_i32_0 = arith.constant 0 : i32
    %c0_i32_1 = arith.constant 0 : i32
    return %c0_i32, %c0_i32_0 : i32, i32
  }
  func.func @transform_15(%arg0: i32) -> (i32, i32) {
    %c0_i32 = arith.constant 0 : i32
    %c0_i32_0 = arith.constant 0 : i32
    %c0_i32_1 = arith.constant 0 : i32
    return %c0_i32, %c0_i32_0 : i32, i32
  }
  func.func @transform_16(%arg0: i32) -> (i32, i32) {
    %c0_i32 = arith.constant 0 : i32
    %c0_i32_0 = arith.constant 0 : i32
    %c0_i32_1 = arith.constant 0 : i32
    return %c0_i32, %c0_i32_0 : i32, i32
  }
  func.func @transform_17(%arg0: i32) -> (i32, i32) {
    %c0_i32 = arith.constant 0 : i32
    %c0_i32_0 = arith.constant 0 : i32
    %c0_i32_1 = arith.constant 0 : i32
    return %c0_i32, %c0_i32_0 : i32, i32
  }
  func.func @transform_18(%arg0: i32) -> (i32, i32) {
    %c0_i32 = arith.constant 0 : i32
    %c0_i32_0 = arith.constant 0 : i32
    %c0_i32_1 = arith.constant 0 : i32
    return %c0_i32, %c0_i32_0 : i32, i32
  }
  func.func @transform_19(%arg0: i32) -> (i32, i32, i32) {
    %c0_i32 = arith.constant 0 : i32
    %c0_i32_0 = arith.constant 0 : i32
    %c0_i32_1 = arith.constant 0 : i32
    %c0_i32_2 = arith.constant 0 : i32
    return %c0_i32, %c0_i32_0, %c0_i32_1 : i32, i32, i32
  }
  func.func @transform_20(%arg0: i32) -> (i32, i32, i32) {
    %c0_i32 = arith.constant 0 : i32
    %c0_i32_0 = arith.constant 0 : i32
    %c0_i32_1 = arith.constant 0 : i32
    %c0_i32_2 = arith.constant 0 : i32
    return %c0_i32, %c0_i32_0, %c0_i32_1 : i32, i32, i32
  }
  func.func @transform_21(%arg0: i32) -> (i32, i32) {
    %c0_i32 = arith.constant 0 : i32
    %c0_i32_0 = arith.constant 0 : i32
    %c0_i32_1 = arith.constant 0 : i32
    return %c0_i32, %c0_i32_0 : i32, i32
  }
  func.func @transform_22(%arg0: i32) -> (i32, i32, i32) {
    %c0_i32 = arith.constant 0 : i32
    %c0_i32_0 = arith.constant 0 : i32
    %c0_i32_1 = arith.constant 0 : i32
    %c0_i32_2 = arith.constant 0 : i32
    return %c0_i32, %c0_i32_0, %c0_i32_1 : i32, i32, i32
  }
  func.func @transform_23(%arg0: i32) -> (i32, i32, i32) {
    %c0_i32 = arith.constant 0 : i32
    %c0_i32_0 = arith.constant 0 : i32
    %c0_i32_1 = arith.constant 0 : i32
    %c0_i32_2 = arith.constant 0 : i32
    return %c0_i32, %c0_i32_0, %c0_i32_1 : i32, i32, i32
  }
  func.func @transform_24(%arg0: i32) -> (i32, i32) {
    %c0_i32 = arith.constant 0 : i32
    %c0_i32_0 = arith.constant 0 : i32
    %c0_i32_1 = arith.constant 0 : i32
    return %c0_i32, %c0_i32_0 : i32, i32
  }
  func.func @transform_25(%arg0: i32) -> (i32, i32) {
    %c0_i32 = arith.constant 0 : i32
    %c0_i32_0 = arith.constant 0 : i32
    %c0_i32_1 = arith.constant 0 : i32
    return %c0_i32, %c0_i32_0 : i32, i32
  }
  func.func @transform_26(%arg0: i32) -> (i32, i32) {
    %c0_i32 = arith.constant 0 : i32
    %c0_i32_0 = arith.constant 0 : i32
    %c0_i32_1 = arith.constant 0 : i32
    return %c0_i32, %c0_i32_0 : i32, i32
  }
  func.func @transform_27(%arg0: i32) -> (i32, i32) {
    %c0_i32 = arith.constant 0 : i32
    %c0_i32_0 = arith.constant 0 : i32
    %c0_i32_1 = arith.constant 0 : i32
    return %c0_i32, %c0_i32_0 : i32, i32
  }
  func.func @transform_28(%arg0: i32) -> (i32, i32, i32) {
    %c0_i32 = arith.constant 0 : i32
    %c0_i32_0 = arith.constant 0 : i32
    %c0_i32_1 = arith.constant 0 : i32
    return %arg0, %c0_i32, %c0_i32_0 : i32, i32, i32
  }
}

</mosaic_0001>

<llo_original>
// kernel: rmgcn_forward.1
$region0: #{rmgcn_forward.1}
  #allocation0 [shape = 'u32[]', space=smem, size = 0x4, offset = 0x4, fixed_abs, tag = 'smem constant byte address 0x4 - core index']
  #allocation1 [shape = 'u32[144,128]{1,0:T(1,128)}', space=vmem, size = 0x12000, scoped, tag = 'internal scratch']
  %s0 = inlined_call_operand.vmem [shape: f32[2,96,8], index: 0, kind: input, shape index: {}]
  %s1 = inlined_call_operand.vmem [shape: f32[8,32], index: 1, kind: input, shape index: {}]
  %s2 = inlined_call_operand.vmem [shape: f32[96,32], index: 2, kind: input, shape index: {}]
  %s3 = inlined_call_operand.vmem [shape: f32[32,384], index: 3, kind: input, shape index: {}]
  %s4 = inlined_call_operand.vmem [shape: f32[1,384], index: 4, kind: input, shape index: {}]
  %s5 = inlined_call_operand.vmem [shape: f32[128,32], index: 5, kind: input, shape index: {}]
  %s6 = inlined_call_operand.vmem [shape: f32[1,32], index: 6, kind: input, shape index: {}]
  %s7 = inlined_call_operand.vmem [shape: f32[32,128], index: 7, kind: input, shape index: {}]
  %s8 = inlined_call_operand.vmem [shape: f32[1,128], index: 8, kind: input, shape index: {}]
  %s9 = inlined_call_operand.vmem [shape: f32[128,32], index: 9, kind: input, shape index: {}]
  %s10 = inlined_call_operand.vmem [shape: f32[1,32], index: 10, kind: input, shape index: {}]
  %s11 = inlined_call_operand.vmem [shape: f32[32,192], index: 11, kind: input, shape index: {}]
  %s12 = inlined_call_operand.vmem [shape: f32[1,192], index: 12, kind: input, shape index: {}]
  %s13 = inlined_call_operand.vmem [shape: f32[64,128], index: 13, kind: input, shape index: {}]
  %s14 = inlined_call_operand.vmem [shape: f32[64,64], index: 14, kind: input, shape index: {}]
  %s15 = inlined_call_operand.vmem [shape: f32[64,64], index: 15, kind: input, shape index: {}]
  %s16 = inlined_call_operand.vmem [shape: f32[1,64], index: 16, kind: input, shape index: {}]
  %s17 = inlined_call_operand.vmem [shape: f32[64,64], index: 17, kind: input, shape index: {}]
  %s18 = inlined_call_operand.vmem [shape: f32[1,64], index: 18, kind: input, shape index: {}]
  %s19 = inlined_call_operand.vmem [shape: f32[3,8,8], index: 19, kind: input, shape index: {}]
  %s20 = inlined_call_operand.vmem [shape: f32[4,32,64], index: 20, kind: input, shape index: {}]
  %s21 = inlined_call_operand.vmem [shape: f32[1,64], index: 21, kind: input, shape index: {}]
  %s22 = inlined_call_operand.vmem [shape: f32[4,224,32], index: 22, kind: input, shape index: {}]
  %s23 = inlined_call_operand.vmem [shape: f32[4,1,32], index: 23, kind: input, shape index: {}]
  %s24 = inlined_call_operand.vmem [shape: f32[64,128], index: 24, kind: input, shape index: {}]
  %s25 = inlined_call_operand.vmem [shape: f32[1,128], index: 25, kind: input, shape index: {}]
  %s26 = inlined_call_operand.vmem [shape: f32[12,128], index: 26, kind: input, shape index: {}]
  %s27 = inlined_call_operand.vmem [shape: f32[12,1], index: 27, kind: input, shape index: {}]
  %s28 = inlined_call_operand.vmem [shape: f32[2,12,8], index: 28, kind: output, shape index: {}]
  %s29 = sld [smem:[#allocation0]]
  $region145: #{rmgcn_forward.1} parent=0
    _
  %s31 = ssub.s32 1, %s29
  %s32 = scalar_select 0, %s31, %s29
  loop: start=0, step=1, limit=4
  $region2: #{rmgcn_forward.1} parent=0 // loop_pre_header
    _
  $region3: #{rmgcn_forward.1} parent=0 // loop_header
    %s34 = sphi 0, %s38
    %p35 = scmp.ge.s32.totalorder %s34, 4
    %s44 = sphi 0, %s46
    %s47 = sphi 0, %s44
    %s48 = sphi 0, %s47
    %s64 = sphi 0, %s48
    %s68 = sphi 0, %s68
    %s70 = sphi 0, %s68
    %s71 = sphi 0, %s70
    %s85 = sphi 0, %s71
    %s89 = sphi 0, %s89
    %s91 = sphi 0, %s89
    %s92 = sphi 0, %s91
    %s106 = sphi 0, %s92
    %s110 = sphi 0, %s110
    %s112 = sphi 0, %s110
    %s113 = sphi 0, %s112
    %s127 = sphi 0, %s113
    %s131 = sphi 0, %s131
    %s133 = sphi 0, %s131
    %s134 = sphi 0, %s133
    %s148 = sphi 0, %s134
    %s152 = sphi 0, %s152
    %s154 = sphi 0, %s152
    %s155 = sphi 0, %s154
    %s169 = sphi 0, %s155
    %s173 = sphi 0, %s173
    %s175 = sphi 0, %s173
    %s176 = sphi 0, %s175
    %s190 = sphi 0, %s176
    %s194 = sphi 0, %s194
    %s196 = sphi 0, %s194
    %s197 = sphi 0, %s196
    %s211 = sphi 0, %s197
    %s215 = sphi 0, %s215
    %s217 = sphi 0, %s215
    %s218 = sphi 0, %s217
    %s232 = sphi 0, %s218
    %s236 = sphi 0, %s236
    %s238 = sphi 0, %s236
    %s239 = sphi 0, %s238
    %s253 = sphi 0, %s239
    %s257 = sphi 0, %s257
    %s259 = sphi 0, %s257
    %s260 = sphi 0, %s259
    %s274 = sphi 0, %s260
    %s278 = sphi 0, %s278
    %s280 = sphi 0, %s278
    %s281 = sphi 0, %s280
    %s295 = sphi 0, %s281
    %s299 = sphi 0, %s299
    %s301 = sphi 0, %s299
    %s302 = sphi 0, %s301
    %s316 = sphi 0, %s302
    %s320 = sphi 0, %s320
    %s322 = sphi 0, %s320
    %s323 = sphi 0, %s322
    %s337 = sphi 0, %s323
    %s341 = sphi 0, %s341
    %s343 = sphi 0, %s341
    %s344 = sphi 0, %s343
    %s358 = sphi 0, %s344
    %s362 = sphi 0, %s362
    %s364 = sphi 0, %s362
    %s365 = sphi 0, %s364
    %s379 = sphi 0, %s365
    %s383 = sphi 0, %s383
    %s385 = sphi 0, %s383
    %s386 = sphi 0, %s385
    %s400 = sphi 0, %s386
    %s404 = sphi 0, %s404
    %s406 = sphi 0, %s404
    %s407 = sphi 0, %s406
    %s421 = sphi 0, %s407
    %s425 = sphi 0, %s425
    %s427 = sphi 0, %s425
    %s428 = sphi 0, %s427
    %s442 = sphi 0, %s428
    %s446 = sphi 0, %s446
    %s448 = sphi 0, %s446
    %s449 = sphi 0, %s448
    %s463 = sphi 0, %s449
    %s467 = sphi 0, %s467
    %s469 = sphi 0, %s467
    %s470 = sphi 0, %s469
    %s484 = sphi 0, %s470
    %s488 = sphi 0, %s488
    %s490 = sphi 0, %s488
    %s491 = sphi 0, %s490
    %s505 = sphi 0, %s491
    %s509 = sphi 0, %s509
    %s511 = sphi 0, %s509
    %s512 = sphi 0, %s511
    %s526 = sphi 0, %s512
    %s530 = sphi 0, %s530
    %s532 = sphi 0, %s530
    %s533 = sphi 0, %s532
    %s547 = sphi 0, %s533
    %s551 = sphi 0, %s551
    %s553 = sphi 0, %s551
    %s554 = sphi 0, %s553
    %s568 = sphi 0, %s554
    %s572 = sphi 0, %s572
    %s574 = sphi 0, %s572
    %s575 = sphi 0, %s574
    %s589 = sphi 0, %s575
    %s593 = sphi 0, %s593
    %s595 = sphi 0, %s593
    %s596 = sphi 0, %s595
    %s610 = sphi 0, %s596
    %s614 = sphi 0, %s614
    %s616 = sphi 0, %s614
    %s617 = sphi 0, %s616
    %s631 = sphi 0, %s617
    %s637 = sphi 0, %s639
    %s640 = sphi 0, %s637
    %s641 = sphi 0, %s640
    %s657 = sphi 0, %s641
  $region4: #{rmgcn_forward.1} parent=0 // loop_header_branch
    %37 = sbr.rel (%p35) target = $region8
  $region5: #{rmgcn_forward.1} parent=0 // loop_body
    %s39 = ssub.s32 %s34, 1
    %s40 = ssub.s32 %s34, 2
    %s41 = sadd.s32 %s34, 1
    %s42 = ssub.s32 %s34, %s41
    %p43 = scmp.eq.s32.totalorder %s42, 0
    %s45 = sadd.s32 %s44, 1
    %s46 = scalar_select %p43, %s44, %s45
    %p49 = pneg %p43
    %p50 = scmp.eq.s32.totalorder %s34, 1
    %p51 = por %p49, %p50
    %p52 = scmp.ne.s32.totalorder %s44, %s47
    %p53 = scmp.eq.s32.totalorder %s34, 0
    %p54 = por %p52, %p53
    %p55 = scmp.ne.s32.totalorder %s44, %s47
    %p56 = scmp.eq.s32.totalorder %s39, 1
    %p57 = por %p55, %p56
    %p58 = scmp.ne.s32.totalorder %s47, %s48
    %p59 = scmp.eq.s32.totalorder %s39, 0
    %p60 = por %p58, %p59
    %p61 = scmp.ne.s32.totalorder %s47, %s48
    %p62 = scmp.eq.s32.totalorder %s40, 1
    %p63 = por %p61, %p62
    %p65 = scmp.ne.s32.totalorder %s48, %s64
    %p66 = scmp.eq.s32.totalorder %s40, 0
    %p67 = por %p65, %p66
    %s69 = sadd.s32 %s68, 1
    %p72 = scmp.eq.s32.totalorder %s34, 1
    %p73 = scmp.ne.s32.totalorder %s68, %s70
    %p74 = scmp.eq.s32.totalorder %s34, 0
    %p75 = por %p73, %p74
    %p76 = scmp.ne.s32.totalorder %s68, %s70
    %p77 = scmp.eq.s32.totalorder %s39, 1
    %p78 = por %p76, %p77
    %p79 = scmp.ne.s32.totalorder %s70, %s71
    %p80 = scmp.eq.s32.totalorder %s39, 0
    %p81 = por %p79, %p80
    %p82 = scmp.ne.s32.totalorder %s70, %s71
    %p83 = scmp.eq.s32.totalorder %s40, 1
    %p84 = por %p82, %p83
    %p86 = scmp.ne.s32.totalorder %s71, %s85
    %p87 = scmp.eq.s32.totalorder %s40, 0
    %p88 = por %p86, %p87
    %s90 = sadd.s32 %s89, 1
    %p93 = scmp.eq.s32.totalorder %s34, 1
    %p94 = scmp.ne.s32.totalorder %s89, %s91
    %p95 = scmp.eq.s32.totalorder %s34, 0
    %p96 = por %p94, %p95
    %p97 = scmp.ne.s32.totalorder %s89, %s91
    %p98 = scmp.eq.s32.totalorder %s39, 1
    %p99 = por %p97, %p98
    %p100 = scmp.ne.s32.totalorder %s91, %s92
    %p101 = scmp.eq.s32.totalorder %s39, 0
    %p102 = por %p100, %p101
    %p103 = scmp.ne.s32.totalorder %s91, %s92
    %p104 = scmp.eq.s32.totalorder %s40, 1
    %p105 = por %p103, %p104
    %p107 = scmp.ne.s32.totalorder %s92, %s106
    %p108 = scmp.eq.s32.totalorder %s40, 0
    %p109 = por %p107, %p108
    %s111 = sadd.s32 %s110, 1
    %p114 = scmp.eq.s32.totalorder %s34, 1
    %p115 = scmp.ne.s32.totalorder %s110, %s112
    %p116 = scmp.eq.s32.totalorder %s34, 0
    %p117 = por %p115, %p116
    %p118 = scmp.ne.s32.totalorder %s110, %s112
    %p119 = scmp.eq.s32.totalorder %s39, 1
    %p120 = por %p118, %p119
    %p121 = scmp.ne.s32.totalorder %s112, %s113
    %p122 = scmp.eq.s32.totalorder %s39, 0
    %p123 = por %p121, %p122
    %p124 = scmp.ne.s32.totalorder %s112, %s113
    %p125 = scmp.eq.s32.totalorder %s40, 1
    %p126 = por %p124, %p125
    %p128 = scmp.ne.s32.totalorder %s113, %s127
    %p129 = scmp.eq.s32.totalorder %s40, 0
    %p130 = por %p128, %p129
    %s132 = sadd.s32 %s131, 1
    %p135 = scmp.eq.s32.totalorder %s34, 1
    %p136 = scmp.ne.s32.totalorder %s131, %s133
    %p137 = scmp.eq.s32.totalorder %s34, 0
    %p138 = por %p136, %p137
    %p139 = scmp.ne.s32.totalorder %s131, %s133
    %p140 = scmp.eq.s32.totalorder %s39, 1
    %p141 = por %p139, %p140
    %p142 = scmp.ne.s32.totalorder %s133, %s134
    %p143 = scmp.eq.s32.totalorder %s39, 0
    %p144 = por %p142, %p143
    %p145 = scmp.ne.s32.totalorder %s133, %s134
    %p146 = scmp.eq.s32.totalorder %s40, 1
    %p147 = por %p145, %p146
    %p149 = scmp.ne.s32.totalorder %s134, %s148
    %p150 = scmp.eq.s32.totalorder %s40, 0
    %p151 = por %p149, %p150
    %s153 = sadd.s32 %s152, 1
    %p156 = scmp.eq.s32.totalorder %s34, 1
    %p157 = scmp.ne.s32.totalorder %s152, %s154
    %p158 = scmp.eq.s32.totalorder %s34, 0
    %p159 = por %p157, %p158
    %p160 = scmp.ne.s32.totalorder %s152, %s154
    %p161 = scmp.eq.s32.totalorder %s39, 1
    %p162 = por %p160, %p161
    %p163 = scmp.ne.s32.totalorder %s154, %s155
    %p164 = scmp.eq.s32.totalorder %s39, 0
    %p165 = por %p163, %p164
    %p166 = scmp.ne.s32.totalorder %s154, %s155
    %p167 = scmp.eq.s32.totalorder %s40, 1
    %p168 = por %p166, %p167
    %p170 = scmp.ne.s32.totalorder %s155, %s169
    %p171 = scmp.eq.s32.totalorder %s40, 0
    %p172 = por %p170, %p171
    %s174 = sadd.s32 %s173, 1
    %p177 = scmp.eq.s32.totalorder %s34, 1
    %p178 = scmp.ne.s32.totalorder %s173, %s175
    %p179 = scmp.eq.s32.totalorder %s34, 0
    %p180 = por %p178, %p179
    %p181 = scmp.ne.s32.totalorder %s173, %s175
    %p182 = scmp.eq.s32.totalorder %s39, 1
    %p183 = por %p181, %p182
    %p184 = scmp.ne.s32.totalorder %s175, %s176
    %p185 = scmp.eq.s32.totalorder %s39, 0
    %p186 = por %p184, %p185
    %p187 = scmp.ne.s32.totalorder %s175, %s176
    %p188 = scmp.eq.s32.totalorder %s40, 1
    %p189 = por %p187, %p188
    %p191 = scmp.ne.s32.totalorder %s176, %s190
    %p192 = scmp.eq.s32.totalorder %s40, 0
    %p193 = por %p191, %p192
    %s195 = sadd.s32 %s194, 1
    %p198 = scmp.eq.s32.totalorder %s34, 1
    %p199 = scmp.ne.s32.totalorder %s194, %s196
    %p200 = scmp.eq.s32.totalorder %s34, 0
    %p201 = por %p199, %p200
    %p202 = scmp.ne.s32.totalorder %s194, %s196
    %p203 = scmp.eq.s32.totalorder %s39, 1
    %p204 = por %p202, %p203
    %p205 = scmp.ne.s32.totalorder %s196, %s197
    %p206 = scmp.eq.s32.totalorder %s39, 0
    %p207 = por %p205, %p206
    %p208 = scmp.ne.s32.totalorder %s196, %s197
    %p209 = scmp.eq.s32.totalorder %s40, 1
    %p210 = por %p208, %p209
    %p212 = scmp.ne.s32.totalorder %s197, %s211
    %p213 = scmp.eq.s32.totalorder %s40, 0
    %p214 = por %p212, %p213
    %s216 = sadd.s32 %s215, 1
    %p219 = scmp.eq.s32.totalorder %s34, 1
    %p220 = scmp.ne.s32.totalorder %s215, %s217
    %p221 = scmp.eq.s32.totalorder %s34, 0
    %p222 = por %p220, %p221
    %p223 = scmp.ne.s32.totalorder %s215, %s217
    %p224 = scmp.eq.s32.totalorder %s39, 1
    %p225 = por %p223, %p224
    %p226 = scmp.ne.s32.totalorder %s217, %s218
    %p227 = scmp.eq.s32.totalorder %s39, 0
    %p228 = por %p226, %p227
    %p229 = scmp.ne.s32.totalorder %s217, %s218
    %p230 = scmp.eq.s32.totalorder %s40, 1
    %p231 = por %p229, %p230
    %p233 = scmp.ne.s32.totalorder %s218, %s232
    %p234 = scmp.eq.s32.totalorder %s40, 0
    %p235 = por %p233, %p234
    %s237 = sadd.s32 %s236, 1
    %p240 = scmp.eq.s32.totalorder %s34, 1
    %p241 = scmp.ne.s32.totalorder %s236, %s238
    %p242 = scmp.eq.s32.totalorder %s34, 0
    %p243 = por %p241, %p242
    %p244 = scmp.ne.s32.totalorder %s236, %s238
    %p245 = scmp.eq.s32.totalorder %s39, 1
    %p246 = por %p244, %p245
    %p247 = scmp.ne.s32.totalorder %s238, %s239
    %p248 = scmp.eq.s32.totalorder %s39, 0
    %p249 = por %p247, %p248
    %p250 = scmp.ne.s32.totalorder %s238, %s239
    %p251 = scmp.eq.s32.totalorder %s40, 1
    %p252 = por %p250, %p251
    %p254 = scmp.ne.s32.totalorder %s239, %s253
    %p255 = scmp.eq.s32.totalorder %s40, 0
    %p256 = por %p254, %p255
    %s258 = sadd.s32 %s257, 1
    %p261 = scmp.eq.s32.totalorder %s34, 1
    %p262 = scmp.ne.s32.totalorder %s257, %s259
    %p263 = scmp.eq.s32.totalorder %s34, 0
    %p264 = por %p262, %p263
    %p265 = scmp.ne.s32.totalorder %s257, %s259
    %p266 = scmp.eq.s32.totalorder %s39, 1
    %p267 = por %p265, %p266
    %p268 = scmp.ne.s32.totalorder %s259, %s260
    %p269 = scmp.eq.s32.totalorder %s39, 0
    %p270 = por %p268, %p269
    %p271 = scmp.ne.s32.totalorder %s259, %s260
    %p272 = scmp.eq.s32.totalorder %s40, 1
    %p273 = por %p271, %p272
    %p275 = scmp.ne.s32.totalorder %s260, %s274
    %p276 = scmp.eq.s32.totalorder %s40, 0
    %p277 = por %p275, %p276
    %s279 = sadd.s32 %s278, 1
    %p282 = scmp.eq.s32.totalorder %s34, 1
    %p283 = scmp.ne.s32.totalorder %s278, %s280
    %p284 = scmp.eq.s32.totalorder %s34, 0
    %p285 = por %p283, %p284
    %p286 = scmp.ne.s32.totalorder %s278, %s280
    %p287 = scmp.eq.s32.totalorder %s39, 1
    %p288 = por %p286, %p287
    %p289 = scmp.ne.s32.totalorder %s280, %s281
    %p290 = scmp.eq.s32.totalorder %s39, 0
    %p291 = por %p289, %p290
    %p292 = scmp.ne.s32.totalorder %s280, %s281
    %p293 = scmp.eq.s32.totalorder %s40, 1
    %p294 = por %p292, %p293
    %p296 = scmp.ne.s32.totalorder %s281, %s295
    %p297 = scmp.eq.s32.totalorder %s40, 0
    %p298 = por %p296, %p297
    %s300 = sadd.s32 %s299, 1
    %p303 = scmp.eq.s32.totalorder %s34, 1
    %p304 = scmp.ne.s32.totalorder %s299, %s301
    %p305 = scmp.eq.s32.totalorder %s34, 0
    %p306 = por %p304, %p305
    %p307 = scmp.ne.s32.totalorder %s299, %s301
    %p308 = scmp.eq.s32.totalorder %s39, 1
    %p309 = por %p307, %p308
    %p310 = scmp.ne.s32.totalorder %s301, %s302
    %p311 = scmp.eq.s32.totalorder %s39, 0
    %p312 = por %p310, %p311
    %p313 = scmp.ne.s32.totalorder %s301, %s302
    %p314 = scmp.eq.s32.totalorder %s40, 1
    %p315 = por %p313, %p314
    %p317 = scmp.ne.s32.totalorder %s302, %s316
    %p318 = scmp.eq.s32.totalorder %s40, 0
    %p319 = por %p317, %p318
    %s321 = sadd.s32 %s320, 1
    %p324 = scmp.eq.s32.totalorder %s34, 1
    %p325 = scmp.ne.s32.totalorder %s320, %s322
    %p326 = scmp.eq.s32.totalorder %s34, 0
    %p327 = por %p325, %p326
    %p328 = scmp.ne.s32.totalorder %s320, %s322
    %p329 = scmp.eq.s32.totalorder %s39, 1
    %p330 = por %p328, %p329
    %p331 = scmp.ne.s32.totalorder %s322, %s323
    %p332 = scmp.eq.s32.totalorder %s39, 0
    %p333 = por %p331, %p332
    %p334 = scmp.ne.s32.totalorder %s322, %s323
    %p335 = scmp.eq.s32.totalorder %s40, 1
    %p336 = por %p334, %p335
    %p338 = scmp.ne.s32.totalorder %s323, %s337
    %p339 = scmp.eq.s32.totalorder %s40, 0
    %p340 = por %p338, %p339
    %s342 = sadd.s32 %s341, 1
    %p345 = scmp.eq.s32.totalorder %s34, 1
    %p346 = scmp.ne.s32.totalorder %s341, %s343
    %p347 = scmp.eq.s32.totalorder %s34, 0
    %p348 = por %p346, %p347
    %p349 = scmp.ne.s32.totalorder %s341, %s343
    %p350 = scmp.eq.s32.totalorder %s39, 1
    %p351 = por %p349, %p350
    %p352 = scmp.ne.s32.totalorder %s343, %s344
    %p353 = scmp.eq.s32.totalorder %s39, 0
    %p354 = por %p352, %p353
    %p355 = scmp.ne.s32.totalorder %s343, %s344
    %p356 = scmp.eq.s32.totalorder %s40, 1
    %p357 = por %p355, %p356
    %p359 = scmp.ne.s32.totalorder %s344, %s358
    %p360 = scmp.eq.s32.totalorder %s40, 0
    %p361 = por %p359, %p360
    %s363 = sadd.s32 %s362, 1
    %p366 = scmp.eq.s32.totalorder %s34, 1
    %p367 = scmp.ne.s32.totalorder %s362, %s364
    %p368 = scmp.eq.s32.totalorder %s34, 0
    %p369 = por %p367, %p368
    %p370 = scmp.ne.s32.totalorder %s362, %s364
    %p371 = scmp.eq.s32.totalorder %s39, 1
    %p372 = por %p370, %p371
    %p373 = scmp.ne.s32.totalorder %s364, %s365
    %p374 = scmp.eq.s32.totalorder %s39, 0
    %p375 = por %p373, %p374
    %p376 = scmp.ne.s32.totalorder %s364, %s365
    %p377 = scmp.eq.s32.totalorder %s40, 1
    %p378 = por %p376, %p377
    %p380 = scmp.ne.s32.totalorder %s365, %s379
    %p381 = scmp.eq.s32.totalorder %s40, 0
    %p382 = por %p380, %p381
    %s384 = sadd.s32 %s383, 1
    %p387 = scmp.eq.s32.totalorder %s34, 1
    %p388 = scmp.ne.s32.totalorder %s383, %s385
    %p389 = scmp.eq.s32.totalorder %s34, 0
    %p390 = por %p388, %p389
    %p391 = scmp.ne.s32.totalorder %s383, %s385
    %p392 = scmp.eq.s32.totalorder %s39, 1
    %p393 = por %p391, %p392
    %p394 = scmp.ne.s32.totalorder %s385, %s386
    %p395 = scmp.eq.s32.totalorder %s39, 0
    %p396 = por %p394, %p395
    %p397 = scmp.ne.s32.totalorder %s385, %s386
    %p398 = scmp.eq.s32.totalorder %s40, 1
    %p399 = por %p397, %p398
    %p401 = scmp.ne.s32.totalorder %s386, %s400
    %p402 = scmp.eq.s32.totalorder %s40, 0
    %p403 = por %p401, %p402
    %s405 = sadd.s32 %s404, 1
    %p408 = scmp.eq.s32.totalorder %s34, 1
    %p409 = scmp.ne.s32.totalorder %s404, %s406
    %p410 = scmp.eq.s32.totalorder %s34, 0
    %p411 = por %p409, %p410
    %p412 = scmp.ne.s32.totalorder %s404, %s406
    %p413 = scmp.eq.s32.totalorder %s39, 1
    %p414 = por %p412, %p413
    %p415 = scmp.ne.s32.totalorder %s406, %s407
    %p416 = scmp.eq.s32.totalorder %s39, 0
    %p417 = por %p415, %p416
    %p418 = scmp.ne.s32.totalorder %s406, %s407
    %p419 = scmp.eq.s32.totalorder %s40, 1
    %p420 = por %p418, %p419
    %p422 = scmp.ne.s32.totalorder %s407, %s421
    %p423 = scmp.eq.s32.totalorder %s40, 0
    %p424 = por %p422, %p423
    %s426 = sadd.s32 %s425, 1
    %p429 = scmp.eq.s32.totalorder %s34, 1
    %p430 = scmp.ne.s32.totalorder %s425, %s427
    %p431 = scmp.eq.s32.totalorder %s34, 0
    %p432 = por %p430, %p431
    %p433 = scmp.ne.s32.totalorder %s425, %s427
    %p434 = scmp.eq.s32.totalorder %s39, 1
    %p435 = por %p433, %p434
    %p436 = scmp.ne.s32.totalorder %s427, %s428
    %p437 = scmp.eq.s32.totalorder %s39, 0
    %p438 = por %p436, %p437
    %p439 = scmp.ne.s32.totalorder %s427, %s428
    %p440 = scmp.eq.s32.totalorder %s40, 1
    %p441 = por %p439, %p440
    %p443 = scmp.ne.s32.totalorder %s428, %s442
    %p444 = scmp.eq.s32.totalorder %s40, 0
    %p445 = por %p443, %p444
    %s447 = sadd.s32 %s446, 1
    %p450 = scmp.eq.s32.totalorder %s34, 1
    %p451 = scmp.ne.s32.totalorder %s446, %s448
    %p452 = scmp.eq.s32.totalorder %s34, 0
    %p453 = por %p451, %p452
    %p454 = scmp.ne.s32.totalorder %s446, %s448
    %p455 = scmp.eq.s32.totalorder %s39, 1
    %p456 = por %p454, %p455
    %p457 = scmp.ne.s32.totalorder %s448, %s449
    %p458 = scmp.eq.s32.totalorder %s39, 0
    %p459 = por %p457, %p458
    %p460 = scmp.ne.s32.totalorder %s448, %s449
    %p461 = scmp.eq.s32.totalorder %s40, 1
    %p462 = por %p460, %p461
    %p464 = scmp.ne.s32.totalorder %s449, %s463
    %p465 = scmp.eq.s32.totalorder %s40, 0
    %p466 = por %p464, %p465
    %s468 = sadd.s32 %s467, 1
    %p471 = scmp.eq.s32.totalorder %s34, 1
    %p472 = scmp.ne.s32.totalorder %s467, %s469
    %p473 = scmp.eq.s32.totalorder %s34, 0
    %p474 = por %p472, %p473
    %p475 = scmp.ne.s32.totalorder %s467, %s469
    %p476 = scmp.eq.s32.totalorder %s39, 1
    %p477 = por %p475, %p476
    %p478 = scmp.ne.s32.totalorder %s469, %s470
    %p479 = scmp.eq.s32.totalorder %s39, 0
    %p480 = por %p478, %p479
    %p481 = scmp.ne.s32.totalorder %s469, %s470
    %p482 = scmp.eq.s32.totalorder %s40, 1
    %p483 = por %p481, %p482
    %p485 = scmp.ne.s32.totalorder %s470, %s484
    %p486 = scmp.eq.s32.totalorder %s40, 0
    %p487 = por %p485, %p486
    %s489 = sadd.s32 %s488, 1
    %p492 = scmp.eq.s32.totalorder %s34, 1
    %p493 = scmp.ne.s32.totalorder %s488, %s490
    %p494 = scmp.eq.s32.totalorder %s34, 0
    %p495 = por %p493, %p494
    %p496 = scmp.ne.s32.totalorder %s488, %s490
    %p497 = scmp.eq.s32.totalorder %s39, 1
    %p498 = por %p496, %p497
    %p499 = scmp.ne.s32.totalorder %s490, %s491
    %p500 = scmp.eq.s32.totalorder %s39, 0
    %p501 = por %p499, %p500
    %p502 = scmp.ne.s32.totalorder %s490, %s491
    %p503 = scmp.eq.s32.totalorder %s40, 1
    %p504 = por %p502, %p503
    %p506 = scmp.ne.s32.totalorder %s491, %s505
    %p507 = scmp.eq.s32.totalorder %s40, 0
    %p508 = por %p506, %p507
    %s510 = sadd.s32 %s509, 1
    %p513 = scmp.eq.s32.totalorder %s34, 1
    %p514 = scmp.ne.s32.totalorder %s509, %s511
    %p515 = scmp.eq.s32.totalorder %s34, 0
    %p516 = por %p514, %p515
    %p517 = scmp.ne.s32.totalorder %s509, %s511
    %p518 = scmp.eq.s32.totalorder %s39, 1
    %p519 = por %p517, %p518
    %p520 = scmp.ne.s32.totalorder %s511, %s512
    %p521 = scmp.eq.s32.totalorder %s39, 0
    %p522 = por %p520, %p521
    %p523 = scmp.ne.s32.totalorder %s511, %s512
    %p524 = scmp.eq.s32.totalorder %s40, 1
    %p525 = por %p523, %p524
    %p527 = scmp.ne.s32.totalorder %s512, %s526
    %p528 = scmp.eq.s32.totalorder %s40, 0
    %p529 = por %p527, %p528
    %s531 = sadd.s32 %s530, 1
    %p534 = scmp.eq.s32.totalorder %s34, 1
    %p535 = scmp.ne.s32.totalorder %s530, %s532
    %p536 = scmp.eq.s32.totalorder %s34, 0
    %p537 = por %p535, %p536
    %p538 = scmp.ne.s32.totalorder %s530, %s532
    %p539 = scmp.eq.s32.totalorder %s39, 1
    %p540 = por %p538, %p539
    %p541 = scmp.ne.s32.totalorder %s532, %s533
    %p542 = scmp.eq.s32.totalorder %s39, 0
    %p543 = por %p541, %p542
    %p544 = scmp.ne.s32.totalorder %s532, %s533
    %p545 = scmp.eq.s32.totalorder %s40, 1
    %p546 = por %p544, %p545
    %p548 = scmp.ne.s32.totalorder %s533, %s547
    %p549 = scmp.eq.s32.totalorder %s40, 0
    %p550 = por %p548, %p549
    %s552 = sadd.s32 %s551, 1
    %p555 = scmp.eq.s32.totalorder %s34, 1
    %p556 = scmp.ne.s32.totalorder %s551, %s553
    %p557 = scmp.eq.s32.totalorder %s34, 0
    %p558 = por %p556, %p557
    %p559 = scmp.ne.s32.totalorder %s551, %s553
    %p560 = scmp.eq.s32.totalorder %s39, 1
    %p561 = por %p559, %p560
    %p562 = scmp.ne.s32.totalorder %s553, %s554
    %p563 = scmp.eq.s32.totalorder %s39, 0
    %p564 = por %p562, %p563
    %p565 = scmp.ne.s32.totalorder %s553, %s554
    %p566 = scmp.eq.s32.totalorder %s40, 1
    %p567 = por %p565, %p566
    %p569 = scmp.ne.s32.totalorder %s554, %s568
    %p570 = scmp.eq.s32.totalorder %s40, 0
    %p571 = por %p569, %p570
    %s573 = sadd.s32 %s572, 1
    %p576 = scmp.eq.s32.totalorder %s34, 1
    %p577 = scmp.ne.s32.totalorder %s572, %s574
    %p578 = scmp.eq.s32.totalorder %s34, 0
    %p579 = por %p577, %p578
    %p580 = scmp.ne.s32.totalorder %s572, %s574
    %p581 = scmp.eq.s32.totalorder %s39, 1
    %p582 = por %p580, %p581
    %p583 = scmp.ne.s32.totalorder %s574, %s575
    %p584 = scmp.eq.s32.totalorder %s39, 0
    %p585 = por %p583, %p584
    %p586 = scmp.ne.s32.totalorder %s574, %s575
    %p587 = scmp.eq.s32.totalorder %s40, 1
    %p588 = por %p586, %p587
    %p590 = scmp.ne.s32.totalorder %s575, %s589
    %p591 = scmp.eq.s32.totalorder %s40, 0
    %p592 = por %p590, %p591
    %s594 = sadd.s32 %s593, 1
    %p597 = scmp.eq.s32.totalorder %s34, 1
    %p598 = scmp.ne.s32.totalorder %s593, %s595
    %p599 = scmp.eq.s32.totalorder %s34, 0
    %p600 = por %p598, %p599
    %p601 = scmp.ne.s32.totalorder %s593, %s595
    %p602 = scmp.eq.s32.totalorder %s39, 1
    %p603 = por %p601, %p602
    %p604 = scmp.ne.s32.totalorder %s595, %s596
    %p605 = scmp.eq.s32.totalorder %s39, 0
    %p606 = por %p604, %p605
    %p607 = scmp.ne.s32.totalorder %s595, %s596
    %p608 = scmp.eq.s32.totalorder %s40, 1
    %p609 = por %p607, %p608
    %p611 = scmp.ne.s32.totalorder %s596, %s610
    %p612 = scmp.eq.s32.totalorder %s40, 0
    %p613 = por %p611, %p612
    %s615 = sadd.s32 %s614, 1
    %p618 = scmp.eq.s32.totalorder %s34, 1
    %p619 = scmp.ne.s32.totalorder %s614, %s616
    %p620 = scmp.eq.s32.totalorder %s34, 0
    %p621 = por %p619, %p620
    %p622 = scmp.ne.s32.totalorder %s614, %s616
    %p623 = scmp.eq.s32.totalorder %s39, 1
    %p624 = por %p622, %p623
    %p625 = scmp.ne.s32.totalorder %s616, %s617
    %p626 = scmp.eq.s32.totalorder %s39, 0
    %p627 = por %p625, %p626
    %p628 = scmp.ne.s32.totalorder %s616, %s617
    %p629 = scmp.eq.s32.totalorder %s40, 1
    %p630 = por %p628, %p629
    %p632 = scmp.ne.s32.totalorder %s617, %s631
    %p633 = scmp.eq.s32.totalorder %s40, 0
    %p634 = por %p632, %p633
    %s635 = ssub.s32 %s34, %s41
    %p636 = scmp.eq.s32.totalorder %s635, 0
    %s638 = sadd.s32 %s637, 1
    %s639 = scalar_select %p636, %s637, %s638
    %p642 = pneg %p636
    %p643 = scmp.eq.s32.totalorder %s34, 1
    %p644 = por %p642, %p643
    %p645 = scmp.ne.s32.totalorder %s637, %s640
    %p646 = scmp.eq.s32.totalorder %s34, 0
    %p647 = por %p645, %p646
    %p648 = scmp.ne.s32.totalorder %s637, %s640
    %p649 = scmp.eq.s32.totalorder %s39, 1
    %p650 = por %p648, %p649
    %p651 = scmp.ne.s32.totalorder %s640, %s641
    %p652 = scmp.eq.s32.totalorder %s39, 0
    %p653 = por %p651, %p652
    %p654 = scmp.ne.s32.totalorder %s640, %s641
    %p655 = scmp.eq.s32.totalorder %s40, 1
    %p656 = por %p654, %p655
    %p658 = scmp.ne.s32.totalorder %s641, %s657
    %p659 = scmp.eq.s32.totalorder %s40, 0
    %p660 = por %p658, %p659
    %p661 = scmp.le.s32.totalorder 1, %s34
    %p662 = scmp.lt.s32.totalorder %s34, 3
    %p663 = pnand %p661, %p662
    %p664 = pneg %p663
    // Predicated region
    $region9: #{rmgcn_forward.1} parent=5 // pred_check
      _
    $region10: #{rmgcn_forward.1} parent=5 // pred_check_branch
      %666 = sbr.rel (%p663) target = $region12
    $region11: #{rmgcn_forward.1} parent=5 // pred_region
      %s667 = ssub.s32 %s34, 1
      // Predicated region
      $region13: #{rmgcn_forward.1} parent=11 // pred_check
        %p668 = pneg %p81
      $region14: #{rmgcn_forward.1} parent=11 // pred_check_branch
        %670 = sbr.rel (%p668) target = $region16
      $region15: #{rmgcn_forward.1} parent=11 // pred_region
        _
      $region16: #{rmgcn_forward.1} parent=11 // pred_fallthru
        _
      // Predicated region
      $region17: #{rmgcn_forward.1} parent=11 // pred_check
        %p671 = pneg %p102
      $region18: #{rmgcn_forward.1} parent=11 // pred_check_branch
        %673 = sbr.rel (%p671) target = $region20
      $region19: #{rmgcn_forward.1} parent=11 // pred_region
        _
      $region20: #{rmgcn_forward.1} parent=11 // pred_fallthru
        _
      // Predicated region
      $region21: #{rmgcn_forward.1} parent=11 // pred_check
        %p674 = pneg %p123
      $region22: #{rmgcn_forward.1} parent=11 // pred_check_branch
        %676 = sbr.rel (%p674) target = $region24
      $region23: #{rmgcn_forward.1} parent=11 // pred_region
        _
      $region24: #{rmgcn_forward.1} parent=11 // pred_fallthru
        _
      // Predicated region
      $region25: #{rmgcn_forward.1} parent=11 // pred_check
        %p677 = pneg %p144
      $region26: #{rmgcn_forward.1} parent=11 // pred_check_branch
        %679 = sbr.rel (%p677) target = $region28
      $region27: #{rmgcn_forward.1} parent=11 // pred_region
        _
      $region28: #{rmgcn_forward.1} parent=11 // pred_fallthru
        _
      // Predicated region
      $region29: #{rmgcn_forward.1} parent=11 // pred_check
        %p680 = pneg %p165
      $region30: #{rmgcn_forward.1} parent=11 // pred_check_branch
        %682 = sbr.rel (%p680) target = $region32
      $region31: #{rmgcn_forward.1} parent=11 // pred_region
        _
      $region32: #{rmgcn_forward.1} parent=11 // pred_fallthru
        _
      // Predicated region
      $region33: #{rmgcn_forward.1} parent=11 // pred_check
        %p683 = pneg %p186
      $region34: #{rmgcn_forward.1} parent=11 // pred_check_branch
        %685 = sbr.rel (%p683) target = $region36
      $region35: #{rmgcn_forward.1} parent=11 // pred_region
        _
      $region36: #{rmgcn_forward.1} parent=11 // pred_fallthru
        _
      // Predicated region
      $region37: #{rmgcn_forward.1} parent=11 // pred_check
        %p686 = pneg %p207
      $region38: #{rmgcn_forward.1} parent=11 // pred_check_branch
        %688 = sbr.rel (%p686) target = $region40
      $region39: #{rmgcn_forward.1} parent=11 // pred_region
        _
      $region40: #{rmgcn_forward.1} parent=11 // pred_fallthru
        _
      // Predicated region
      $region41: #{rmgcn_forward.1} parent=11 // pred_check
        %p689 = pneg %p228
      $region42: #{rmgcn_forward.1} parent=11 // pred_check_branch
        %691 = sbr.rel (%p689) target = $region44
      $region43: #{rmgcn_forward.1} parent=11 // pred_region
        _
      $region44: #{rmgcn_forward.1} parent=11 // pred_fallthru
        _
      // Predicated region
      $region45: #{rmgcn_forward.1} parent=11 // pred_check
        %p692 = pneg %p249
      $region46: #{rmgcn_forward.1} parent=11 // pred_check_branch
        %694 = sbr.rel (%p692) target = $region48
      $region47: #{rmgcn_forward.1} parent=11 // pred_region
        _
      $region48: #{rmgcn_forward.1} parent=11 // pred_fallthru
        _
      // Predicated region
      $region49: #{rmgcn_forward.1} parent=11 // pred_check
        %p695 = pneg %p270
      $region50: #{rmgcn_forward.1} parent=11 // pred_check_branch
        %697 = sbr.rel (%p695) target = $region52
      $region51: #{rmgcn_forward.1} parent=11 // pred_region
        _
      $region52: #{rmgcn_forward.1} parent=11 // pred_fallthru
        _
      // Predicated region
      $region53: #{rmgcn_forward.1} parent=11 // pred_check
        %p698 = pneg %p291
      $region54: #{rmgcn_forward.1} parent=11 // pred_check_branch
        %700 = sbr.rel (%p698) target = $region56
      $region55: #{rmgcn_forward.1} parent=11 // pred_region
        _
      $region56: #{rmgcn_forward.1} parent=11 // pred_fallthru
        _
      // Predicated region
      $region57: #{rmgcn_forward.1} parent=11 // pred_check
        %p701 = pneg %p312
      $region58: #{rmgcn_forward.1} parent=11 // pred_check_branch
        %703 = sbr.rel (%p701) target = $region60
      $region59: #{rmgcn_forward.1} parent=11 // pred_region
        _
      $region60: #{rmgcn_forward.1} parent=11 // pred_fallthru
        _
      // Predicated region
      $region61: #{rmgcn_forward.1} parent=11 // pred_check
        %p704 = pneg %p333
      $region62: #{rmgcn_forward.1} parent=11 // pred_check_branch
        %706 = sbr.rel (%p704) target = $region64
      $region63: #{rmgcn_forward.1} parent=11 // pred_region
        _
      $region64: #{rmgcn_forward.1} parent=11 // pred_fallthru
        _
      // Predicated region
      $region65: #{rmgcn_forward.1} parent=11 // pred_check
        %p707 = pneg %p354
      $region66: #{rmgcn_forward.1} parent=11 // pred_check_branch
        %709 = sbr.rel (%p707) target = $region68
      $region67: #{rmgcn_forward.1} parent=11 // pred_region
        _
      $region68: #{rmgcn_forward.1} parent=11 // pred_fallthru
        _
      // Predicated region
      $region69: #{rmgcn_forward.1} parent=11 // pred_check
        %p710 = pneg %p375
      $region70: #{rmgcn_forward.1} parent=11 // pred_check_branch
        %712 = sbr.rel (%p710) target = $region72
      $region71: #{rmgcn_forward.1} parent=11 // pred_region
        _
      $region72: #{rmgcn_forward.1} parent=11 // pred_fallthru
        _
      // Predicated region
      $region73: #{rmgcn_forward.1} parent=11 // pred_check
        %p713 = pneg %p396
      $region74: #{rmgcn_forward.1} parent=11 // pred_check_branch
        %715 = sbr.rel (%p713) target = $region76
      $region75: #{rmgcn_forward.1} parent=11 // pred_region
        _
      $region76: #{rmgcn_forward.1} parent=11 // pred_fallthru
        _
      // Predicated region
      $region77: #{rmgcn_forward.1} parent=11 // pred_check
        %p716 = pneg %p417
      $region78: #{rmgcn_forward.1} parent=11 // pred_check_branch
        %718 = sbr.rel (%p716) target = $region80
      $region79: #{rmgcn_forward.1} parent=11 // pred_region
        _
      $region80: #{rmgcn_forward.1} parent=11 // pred_fallthru
        _
      // Predicated region
      $region81: #{rmgcn_forward.1} parent=11 // pred_check
        %p719 = pneg %p438
      $region82: #{rmgcn_forward.1} parent=11 // pred_check_branch
        %721 = sbr.rel (%p719) target = $region84
      $region83: #{rmgcn_forward.1} parent=11 // pred_region
        _
      $region84: #{rmgcn_forward.1} parent=11 // pred_fallthru
        _
      // Predicated region
      $region85: #{rmgcn_forward.1} parent=11 // pred_check
        %p722 = pneg %p459
      $region86: #{rmgcn_forward.1} parent=11 // pred_check_branch
        %724 = sbr.rel (%p722) target = $region88
      $region87: #{rmgcn_forward.1} parent=11 // pred_region
        _
      $region88: #{rmgcn_forward.1} parent=11 // pred_fallthru
        _
      // Predicated region
      $region89: #{rmgcn_forward.1} parent=11 // pred_check
        %p725 = pneg %p480
      $region90: #{rmgcn_forward.1} parent=11 // pred_check_branch
        %727 = sbr.rel (%p725) target = $region92
      $region91: #{rmgcn_forward.1} parent=11 // pred_region
        _
      $region92: #{rmgcn_forward.1} parent=11 // pred_fallthru
        _
      // Predicated region
      $region93: #{rmgcn_forward.1} parent=11 // pred_check
        %p728 = pneg %p501
      $region94: #{rmgcn_forward.1} parent=11 // pred_check_branch
        %730 = sbr.rel (%p728) target = $region96
      $region95: #{rmgcn_forward.1} parent=11 // pred_region
        _
      $region96: #{rmgcn_forward.1} parent=11 // pred_fallthru
        _
      // Predicated region
      $region97: #{rmgcn_forward.1} parent=11 // pred_check
        %p731 = pneg %p522
      $region98: #{rmgcn_forward.1} parent=11 // pred_check_branch
        %733 = sbr.rel (%p731) target = $region100
      $region99: #{rmgcn_forward.1} parent=11 // pred_region
        _
      $region100: #{rmgcn_forward.1} parent=11 // pred_fallthru
        _
      // Predicated region
      $region101: #{rmgcn_forward.1} parent=11 // pred_check
        %p734 = pneg %p543
      $region102: #{rmgcn_forward.1} parent=11 // pred_check_branch
        %736 = sbr.rel (%p734) target = $region104
      $region103: #{rmgcn_forward.1} parent=11 // pred_region
        _
      $region104: #{rmgcn_forward.1} parent=11 // pred_fallthru
        _
      // Predicated region
      $region105: #{rmgcn_forward.1} parent=11 // pred_check
        %p737 = pneg %p564
      $region106: #{rmgcn_forward.1} parent=11 // pred_check_branch
        %739 = sbr.rel (%p737) target = $region108
      $region107: #{rmgcn_forward.1} parent=11 // pred_region
        _
      $region108: #{rmgcn_forward.1} parent=11 // pred_fallthru
        _
      // Predicated region
      $region109: #{rmgcn_forward.1} parent=11 // pred_check
        %p740 = pneg %p585
      $region110: #{rmgcn_forward.1} parent=11 // pred_check_branch
        %742 = sbr.rel (%p740) target = $region112
      $region111: #{rmgcn_forward.1} parent=11 // pred_region
        _
      $region112: #{rmgcn_forward.1} parent=11 // pred_fallthru
        _
      // Predicated region
      $region113: #{rmgcn_forward.1} parent=11 // pred_check
        %p743 = pneg %p606
      $region114: #{rmgcn_forward.1} parent=11 // pred_check_branch
        %745 = sbr.rel (%p743) target = $region116
      $region115: #{rmgcn_forward.1} parent=11 // pred_region
        _
      $region116: #{rmgcn_forward.1} parent=11 // pred_fallthru
        _
      // Predicated region
      $region117: #{rmgcn_forward.1} parent=11 // pred_check
        %p746 = pneg %p627
      $region118: #{rmgcn_forward.1} parent=11 // pred_check_branch
        %748 = sbr.rel (%p746) target = $region120
      $region119: #{rmgcn_forward.1} parent=11 // pred_region
        _
      $region120: #{rmgcn_forward.1} parent=11 // pred_fallthru
        _
    $region12: #{rmgcn_forward.1} parent=5 // pred_fallthru
      _
    %p749 = scmp.lt.s32.totalorder %s34, 2
    // Predicated region
    $region121: #{rmgcn_forward.1} parent=5 // pred_check
      %p750 = pneg %p749
    $region122: #{rmgcn_forward.1} parent=5 // pred_check_branch
      %752 = sbr.rel (%p750) target = $region124
    $region123: #{rmgcn_forward.1} parent=5 // pred_region
      // Predicated region
      $region125: #{rmgcn_forward.1} parent=123 // pred_check
        %p753 = pneg %p54
      $region126: #{rmgcn_forward.1} parent=123 // pred_check_branch
        %755 = sbr.rel (%p753) target = $region128
      $region127: #{rmgcn_forward.1} parent=123 // pred_region
        %p756 = scmp.lt.s32.totalorder %s34, 1
        %s757 = scalar_select %p756, %s34, 1
        %s758 = smul.addr %s757, 12
        %s759 = smul.addr %s758, 8
        %s760 = scalar_lea.vmem %s0, %s759
      $region128: #{rmgcn_forward.1} parent=123 // pred_fallthru
        _
    $region124: #{rmgcn_forward.1} parent=5 // pred_fallthru
      _
    %p761 = scmp.le.s32.totalorder 1, %s34
    %p762 = scmp.lt.s32.totalorder %s34, 3
    %p763 = pnand %p761, %p762
    %p764 = pneg %p763
    // Predicated region
    $region129: #{rmgcn_forward.1} parent=5 // pred_check
      _
    $region130: #{rmgcn_forward.1} parent=5 // pred_check_branch
      %766 = sbr.rel (%p763) target = $region132
    $region131: #{rmgcn_forward.1} parent=5 // pred_region
      %s767 = ssub.s32 %s34, 1
      %p768 = scmp.lt.s32.totalorder %s39, 1
      %s769 = scalar_select %p768, %s39, 1
      %s770 = smul.addr %s769, 12
      %s771 = smul.addr %s770, 8
      %s772 = scalar_lea.vmem %s0, %s771
      %p773 = pneg %p60
      %p774 = pneg %p57
      %p775 = pneg %p81
      %p776 = pneg %p78
      %p777 = pneg %p102
      %p778 = pneg %p99
      %p779 = pneg %p123
      %p780 = pneg %p120
      %p781 = pneg %p144
      %p782 = pneg %p141
      %p783 = pneg %p165
      %p784 = pneg %p162
      %p785 = pneg %p186
      %p786 = pneg %p183
      %p787 = pneg %p207
      %p788 = pneg %p204
      %p789 = pneg %p228
      %p790 = pneg %p225
      %p791 = pneg %p249
      %p792 = pneg %p246
      %p793 = pneg %p270
      %p794 = pneg %p267
      %p795 = pneg %p291
      %p796 = pneg %p288
      %p797 = pneg %p312
      %p798 = pneg %p309
      %p799 = pneg %p333
      %p800 = pneg %p330
      %p801 = pneg %p354
      %p802 = pneg %p351
      %p803 = pneg %p375
      %p804 = pneg %p372
      %p805 = pneg %p396
      %p806 = pneg %p393
      %p807 = pneg %p417
      %p808 = pneg %p414
      %p809 = pneg %p438
      %p810 = pneg %p435
      %p811 = pneg %p459
      %p812 = pneg %p456
      %p813 = pneg %p480
      %p814 = pneg %p477
      %p815 = pneg %p501
      %p816 = pneg %p498
      %p817 = pneg %p522
      %p818 = pneg %p519
      %p819 = pneg %p543
      %p820 = pneg %p540
      %p821 = pneg %p564
      %p822 = pneg %p561
      %p823 = pneg %p585
      %p824 = pneg %p582
      %p825 = pneg %p606
      %p826 = pneg %p603
      %p827 = pneg %p627
      %p828 = pneg %p624
      %p829 = pneg %p653
      %p830 = pneg %p650
      %p831 = scmp.lt.s32.totalorder %s39, 1
      %s832 = scalar_select %p831, %s39, 1
      %s833 = smul.addr %s832, 2
      %s834 = smul.addr %s833, 8
      %s835 = scalar_lea.vmem %s28, %s834
      %p836 = scmp.lt.s32.totalorder %s39, 1
      %s837 = scalar_select %p836, %s39, 1
      %s838 = smul.addr %s837, 12
      %s839 = smul.addr %s838, 8
      %s840 = scalar_lea.vmem %s0, %s839
      %p841 = scmp.lt.s32.totalorder %s39, 1
      %s842 = scalar_select %p841, %s39, 1
      %s843 = smul.addr %s842, 2
      %s844 = smul.addr %s843, 8
      %s845 = scalar_lea.vmem %s28, %s844
      %v846 = vld [vmem:[%s840] sm:$0xff]
      %v847 = vld [vmem:[%s840 + $0x8] sm:$0xff]
      %v848 = vld [vmem:[%s840 + $0x10] sm:$0xff]
      %v849 = vld [vmem:[%s840 + $0x18] sm:$0xff]
      %v850 = vld [vmem:[%s840 + $0x20] sm:$0xff]
      %v851 = vld [vmem:[%s840 + $0x28] sm:$0xff]
      %v852 = vld [vmem:[%s840 + $0x30] sm:$0xff]
      %v853 = vld [vmem:[%s840 + $0x38] sm:$0xff]
      %v854 = vld [vmem:[%s840 + $0x40] sm:$0xff]
      %v855 = vld [vmem:[%s840 + $0x48] sm:$0xff]
      %v856 = vld [vmem:[%s840 + $0x50] sm:$0xff]
      %v857 = vld [vmem:[%s840 + $0x58] sm:$0xff]
      %v858 = vld [vmem:[%s1] sm:$0xff]
      %v859 = vld [vmem:[%s2] sm:$0xff]
      %v860 = vld [vmem:[%s2 + $0x8] sm:$0xff]
      %v861 = vld [vmem:[%s2 + $0x10] sm:$0xff]
      %v862 = vld [vmem:[%s2 + $0x18] sm:$0xff]
      %v863 = vld [vmem:[%s2 + $0x20] sm:$0xff]
      %v864 = vld [vmem:[%s2 + $0x28] sm:$0xff]
      %v865 = vld [vmem:[%s2 + $0x30] sm:$0xff]
      %v866 = vld [vmem:[%s2 + $0x38] sm:$0xff]
      %v867 = vld [vmem:[%s2 + $0x40] sm:$0xff]
      %v868 = vld [vmem:[%s2 + $0x48] sm:$0xff]
      %v869 = vld [vmem:[%s2 + $0x50] sm:$0xff]
      %v870 = vld [vmem:[%s2 + $0x58] sm:$0xff]
      %vm871 = vcmask 64512
      %v873 = vsel %vm871, %v846, 0
      %v876 = vsel %vm871, %v847, 0
      %v879 = vsel %vm871, %v848, 0
      %v882 = vsel %vm871, %v849, 0
      %v885 = vsel %vm871, %v850, 0
      %v888 = vsel %vm871, %v851, 0
      %v891 = vsel %vm871, %v852, 0
      %v894 = vsel %vm871, %v853, 0
      %v897 = vsel %vm871, %v854, 0
      %v900 = vsel %vm871, %v855, 0
      %v903 = vsel %vm871, %v856, 0
      %v906 = vsel %vm871, %v857, 0
      %908 = vmatprep.subr.mxu0 0.0
      %909 = vmatpush1.msra.mxu0 %v858
      %910 = vmatprep.subr.mxu0 0.0
      %911 = vmatpush1.msra.mxu0 0.0
      %912 = vmatprep.subr.mxu0 0.0
      %913 = vmatpush1.msra.mxu0 0.0
      %914 = vmatprep.subr.mxu0 0.0
      %915 = vmatpush1.msra.mxu0 0.0
      %916 = vmatprep.subr.mxu0 0.0
      %917 = vmatpush1.msra.mxu0 0.0
      %918 = vmatprep.subr.mxu0 0.0
      %919 = vmatpush1.msra.mxu0 0.0
      %920 = vmatprep.subr.mxu0 0.0
      %921 = vmatpush1.msra.mxu0 0.0
      %922 = vmatprep.subr.mxu0 0.0
      %923 = vmatpush1.msra.mxu0 0.0
      %924 = vmatprep.subr.mxu0 0.0
      %925 = vmatpush1.msra.mxu0 0.0
      %926 = vmatprep.subr.mxu0 0.0
      %927 = vmatpush1.msra.mxu0 0.0
      %928 = vmatprep.subr.mxu0 0.0
      %929 = vmatpush1.msra.mxu0 0.0
      %930 = vmatprep.subr.mxu0 0.0
      %931 = vmatpush1.msra.mxu0 0.0
      %932 = vmatprep.subr.mxu0 0.0
      %933 = vmatpush1.msra.mxu0 0.0
      %934 = vmatprep.subr.mxu0 0.0
      %935 = vmatpush1.msra.mxu0 0.0
      %936 = vmatprep.subr.mxu0 0.0
      %937 = vmatpush1.msra.mxu0 0.0
      %938 = vmatprep.subr.mxu0 0.0
      %939 = vmatpush1.msra.mxu0 0.0
      %940 = vmatprep.subr.mxu0 0.0
      %941 = vmatpush1.msra.mxu0 0.0
      %942 = vmatprep.subr.mxu0 0.0
      %943 = vmatpush1.msra.mxu0 0.0
      %944 = vmatprep.subr.mxu0 0.0
      %945 = vmatpush1.msra.mxu0 0.0
      %946 = vmatprep.subr.mxu0 0.0
      %947 = vmatpush1.msra.mxu0 0.0
      %948 = vmatprep.subr.mxu0 0.0
      %949 = vmatpush1.msra.mxu0 0.0
      %950 = vmatprep.subr.mxu0 0.0
      %951 = vmatpush1.msra.mxu0 0.0
      %952 = vmatprep.subr.mxu0 0.0
      %953 = vmatpush1.msra.mxu0 0.0
      %954 = vmatprep.subr.mxu0 0.0
      %955 = vmatpush1.msra.mxu0 0.0
      %956 = vmatprep.subr.mxu0 0.0
      %957 = vmatpush1.msra.mxu0 0.0
      %958 = vmatprep.subr.mxu0 0.0
      %959 = vmatpush1.msra.mxu0 0.0
      %960 = vmatprep.subr.mxu0 0.0
      %961 = vmatpush1.msra.mxu0 0.0
      %962 = vmatprep.subr.mxu0 0.0
      %963 = vmatpush1.msra.mxu0 0.0
      %964 = vmatprep.subr.mxu0 0.0
      %965 = vmatpush1.msra.mxu0 0.0
      %966 = vmatprep.subr.mxu0 0.0
      %967 = vmatpush1.msra.mxu0 0.0
      %968 = vmatprep.subr.mxu0 0.0
      %969 = vmatpush1.msra.mxu0 0.0
      %970 = vmatprep.subr.mxu0 0.0
      %971 = vmatpush1.msra.mxu0 0.0
      %972 = vmatprep.mubr.f32.mxu0 0.0
      %973 = vmatmul.mubr.f32.gmra.mrb[0].mxu0 %v873
      %v974 = vpop.f32.mrb[0].mxu0
      %v975 = vadd.f32 %v859, %v974
      %v976 = vpop.f32.mrb[0].mxu0
      %977 = vmatprep.mubr.f32.mxu0 0.0
      %978 = vmatmul.mubr.f32.gmra.mrb[0].mxu0 %v876
      %v979 = vpop.f32.mrb[0].mxu0
      %v980 = vadd.f32 %v860, %v979
      %v981 = vpop.f32.mrb[0].mxu0
      %982 = vmatprep.mubr.f32.mxu0 0.0
      %983 = vmatmul.mubr.f32.gmra.mrb[0].mxu0 %v879
      %v984 = vpop.f32.mrb[0].mxu0
      %v985 = vadd.f32 %v861, %v984
      %v986 = vpop.f32.mrb[0].mxu0
      %987 = vmatprep.mubr.f32.mxu0 0.0
      %988 = vmatmul.mubr.f32.gmra.mrb[0].mxu0 %v882
      %v989 = vpop.f32.mrb[0].mxu0
      %v990 = vadd.f32 %v862, %v989
      %v991 = vpop.f32.mrb[0].mxu0
      %992 = vmatprep.mubr.f32.mxu0 0.0
      %993 = vmatmul.mubr.f32.gmra.mrb[0].mxu0 %v885
      %v994 = vpop.f32.mrb[0].mxu0
      %v995 = vadd.f32 %v863, %v994
      %v996 = vpop.f32.mrb[0].mxu0
      %997 = vmatprep.mubr.f32.mxu0 0.0
      %998 = vmatmul.mubr.f32.gmra.mrb[0].mxu0 %v888
      %v999 = vpop.f32.mrb[0].mxu0
      %v1000 = vadd.f32 %v864, %v999
      %v1001 = vpop.f32.mrb[0].mxu0
      %1002 = vmatprep.mubr.f32.mxu0 0.0
      %1003 = vmatmul.mubr.f32.gmra.mrb[0].mxu0 %v891
      %v1004 = vpop.f32.mrb[0].mxu0
      %v1005 = vadd.f32 %v865, %v1004
      %v1006 = vpop.f32.mrb[0].mxu0
      %1007 = vmatprep.mubr.f32.mxu0 0.0
      %1008 = vmatmul.mubr.f32.gmra.mrb[0].mxu0 %v894
      %v1009 = vpop.f32.mrb[0].mxu0
      %v1010 = vadd.f32 %v866, %v1009
      %v1011 = vpop.f32.mrb[0].mxu0
      %1012 = vmatprep.mubr.f32.mxu0 0.0
      %1013 = vmatmul.mubr.f32.gmra.mrb[0].mxu0 %v897
      %v1014 = vpop.f32.mrb[0].mxu0
      %v1015 = vadd.f32 %v867, %v1014
      %v1016 = vpop.f32.mrb[0].mxu0
      %1017 = vmatprep.mubr.f32.mxu0 0.0
      %1018 = vmatmul.mubr.f32.gmra.mrb[0].mxu0 %v900
      %v1019 = vpop.f32.mrb[0].mxu0
      %v1020 = vadd.f32 %v868, %v1019
      %v1021 = vpop.f32.mrb[0].mxu0
      %1022 = vmatprep.mubr.f32.mxu0 0.0
      %1023 = vmatmul.mubr.f32.gmra.mrb[0].mxu0 %v903
      %v1024 = vpop.f32.mrb[0].mxu0
      %v1025 = vadd.f32 %v869, %v1024
      %v1026 = vpop.f32.mrb[0].mxu0
      %1027 = vmatprep.mubr.f32.mxu0 0.0
      %1028 = vmatmul.mubr.f32.gmra.mrb[0].mxu0 %v906
      %v1029 = vpop.f32.mrb[0].mxu0
      %v1030 = vadd.f32 %v870, %v1029
      %v1031 = vpop.f32.mrb[0].mxu0
      %1032 = vdwg.mxu0
      %v1033 = vld [vmem:[%s3] sm:$0xff]
      %v1034 = vld [vmem:[%s3 + $0x8] sm:$0xff]
      %v1035 = vld [vmem:[%s3 + $0x10] sm:$0xff]
      %v1036 = vld [vmem:[%s3 + $0x18] sm:$0xff]
      %v1037 = vld [vmem:[%s3 + $0x20] sm:$0xff]
      %v1038 = vld [vmem:[%s3 + $0x28] sm:$0xff]
      %v1039 = vld [vmem:[%s3 + $0x30] sm:$0xff]
      %v1040 = vld [vmem:[%s3 + $0x38] sm:$0xff]
      %v1041 = vld [vmem:[%s3 + $0x40] sm:$0xff]
      %v1042 = vld [vmem:[%s3 + $0x48] sm:$0xff]
      %v1043 = vld [vmem:[%s3 + $0x50] sm:$0xff]
      %v1044 = vld [vmem:[%s3 + $0x58] sm:$0xff]
      %v1045 = vld [vmem:[%s4] sm:$0x7]
      %v1047 = vlaneseq
      %v1048 = vshrl.u32 %v1047, 7
      %v1049 = vsub.s32 0, %v1048
      %v1050 = vrot.slane %v1045, %v1049
      %v1051 = vlaneseq
      %v1052 = vshrl.u32 %v1051, 7
      %v1053 = vsub.s32 1, %v1052
      %v1054 = vrot.slane %v1045, %v1053
      %v1055 = vlaneseq
      %v1056 = vshrl.u32 %v1055, 7
      %v1057 = vsub.s32 2, %v1056
      %v1058 = vrot.slane %v1045, %v1057
      %vm1062 = vcmask 261120
      %v1064 = vsel %vm1062, %v975, 0
      %v1067 = vsel %vm1062, %v980, 0
      %v1070 = vsel %vm1062, %v985, 0
      %v1073 = vsel %vm1062, %v990, 0
      %v1076 = vsel %vm1062, %v995, 0
      %v1079 = vsel %vm1062, %v1000, 0
      %v1082 = vsel %vm1062, %v1005, 0
      %v1085 = vsel %vm1062, %v1010, 0
      %v1088 = vsel %vm1062, %v1015, 0
      %v1091 = vsel %vm1062, %v1020, 0
      %v1094 = vsel %vm1062, %v1025, 0
      %v1097 = vsel %vm1062, %v1030, 0
      %1099 = vmatprep.subr.mxu0 %v1034
      %1100 = vmatpush1.msra.mxu0 %v1033
      %1101 = vmatprep.subr.mxu0 %v1037
      %1102 = vmatpush1.msra.mxu0 %v1036
      %1103 = vmatprep.subr.mxu0 %v1040
      %1104 = vmatpush1.msra.mxu0 %v1039
      %1105 = vmatprep.subr.mxu0 %v1043
      %1106 = vmatpush1.msra.mxu0 %v1042
      %1107 = vmatprep.subr.mxu0 0.0
      %1108 = vmatpush1.msra.mxu0 0.0
      %1109 = vmatprep.subr.mxu0 0.0
      %1110 = vmatpush1.msra.mxu0 0.0
      %1111 = vmatprep.subr.mxu0 0.0
      %1112 = vmatpush1.msra.mxu0 0.0
      %1113 = vmatprep.subr.mxu0 0.0
      %1114 = vmatpush1.msra.mxu0 0.0
      %1115 = vmatprep.subr.mxu0 0.0
      %1116 = vmatpush1.msra.mxu0 0.0
      %1117 = vmatprep.subr.mxu0 0.0
      %1118 = vmatpush1.msra.mxu0 0.0
      %1119 = vmatprep.subr.mxu0 0.0
      %1120 = vmatpush1.msra.mxu0 0.0
      %1121 = vmatprep.subr.mxu0 0.0
      %1122 = vmatpush1.msra.mxu0 0.0
      %1123 = vmatprep.subr.mxu0 0.0
      %1124 = vmatpush1.msra.mxu0 0.0
      %1125 = vmatprep.subr.mxu0 0.0
      %1126 = vmatpush1.msra.mxu0 0.0
      %1127 = vmatprep.subr.mxu0 0.0
      %1128 = vmatpush1.msra.mxu0 0.0
      %1129 = vmatprep.subr.mxu0 0.0
      %1130 = vmatpush1.msra.mxu0 0.0
      %1131 = vmatprep.subr.mxu0 0.0
      %1132 = vmatpush1.msra.mxu0 0.0
      %1133 = vmatprep.subr.mxu0 0.0
      %1134 = vmatpush1.msra.mxu0 0.0
      %1135 = vmatprep.subr.mxu0 0.0
      %1136 = vmatpush1.msra.mxu0 0.0
      %1137 = vmatprep.subr.mxu0 0.0
      %1138 = vmatpush1.msra.mxu0 0.0
      %1139 = vmatprep.subr.mxu0 0.0
      %1140 = vmatpush1.msra.mxu0 0.0
      %1141 = vmatprep.subr.mxu0 0.0
      %1142 = vmatpush1.msra.mxu0 0.0
      %1143 = vmatprep.subr.mxu0 0.0
      %1144 = vmatpush1.msra.mxu0 0.0
      %1145 = vmatprep.subr.mxu0 0.0
      %1146 = vmatpush1.msra.mxu0 0.0
      %1147 = vmatprep.subr.mxu0 0.0
      %1148 = vmatpush1.msra.mxu0 0.0
      %1149 = vmatprep.subr.mxu0 0.0
      %1150 = vmatpush1.msra.mxu0 0.0
      %1151 = vmatprep.subr.mxu0 0.0
      %1152 = vmatpush1.msra.mxu0 0.0
      %1153 = vmatprep.subr.mxu0 0.0
      %1154 = vmatpush1.msra.mxu0 0.0
      %1155 = vmatprep.subr.mxu0 0.0
      %1156 = vmatpush1.msra.mxu0 0.0
      %1157 = vmatprep.subr.mxu0 0.0
      %1158 = vmatpush1.msra.mxu0 0.0
      %1159 = vmatprep.subr.mxu0 0.0
      %1160 = vmatpush1.msra.mxu0 0.0
      %1161 = vmatprep.subr.mxu0 0.0
      %1162 = vmatpush1.msra.mxu0 0.0
      %1163 = vmatprep.mubr.f32.mxu0 0.0
      %1164 = vmatmul.mubr.f32.gmra.mrb[0].mxu0 %v1064
      %v1165 = vpop.f32.mrb[0].mxu0
      %v1166 = vadd.f32 %v1050, %v1165
      %v1167 = vpop.f32.mrb[0].mxu0
      %v1168 = vadd.f32 %v1054, %v1167
      %1169 = vmatprep.mubr.f32.mxu0 0.0
      %1170 = vmatmul.mubr.f32.gmra.mrb[0].mxu0 %v1067
      %v1171 = vpop.f32.mrb[0].mxu0
      %v1172 = vadd.f32 %v1050, %v1171
      %v1173 = vpop.f32.mrb[0].mxu0
      %v1174 = vadd.f32 %v1054, %v1173
      %1175 = vmatprep.mubr.f32.mxu0 0.0
      %1176 = vmatmul.mubr.f32.gmra.mrb[0].mxu0 %v1070
      %v1177 = vpop.f32.mrb[0].mxu0
      %v1178 = vadd.f32 %v1050, %v1177
      %v1179 = vpop.f32.mrb[0].mxu0
      %v1180 = vadd.f32 %v1054, %v1179
      %1181 = vmatprep.mubr.f32.mxu0 0.0
      %1182 = vmatmul.mubr.f32.gmra.mrb[0].mxu0 %v1073
      %v1183 = vpop.f32.mrb[0].mxu0
      %v1184 = vadd.f32 %v1050, %v1183
      %v1185 = vpop.f32.mrb[0].mxu0
      %v1186 = vadd.f32 %v1054, %v1185
      %1187 = vmatprep.mubr.f32.mxu0 0.0
      %1188 = vmatmul.mubr.f32.gmra.mrb[0].mxu0 %v1076
      %v1189 = vpop.f32.mrb[0].mxu0
      %v1190 = vadd.f32 %v1050, %v1189
      %v1191 = vpop.f32.mrb[0].mxu0
      %v1192 = vadd.f32 %v1054, %v1191
      %1193 = vmatprep.mubr.f32.mxu0 0.0
      %1194 = vmatmul.mubr.f32.gmra.mrb[0].mxu0 %v1079
      %v1195 = vpop.f32.mrb[0].mxu0
      %v1196 = vadd.f32 %v1050, %v1195
      %v1197 = vpop.f32.mrb[0].mxu0
      %v1198 = vadd.f32 %v1054, %v1197
      %1199 = vmatprep.mubr.f32.mxu0 0.0
      %1200 = vmatmul.mubr.f32.gmra.mrb[0].mxu0 %v1082
      %v1201 = vpop.f32.mrb[0].mxu0
      %v1202 = vadd.f32 %v1050, %v1201
      %v1203 = vpop.f32.mrb[0].mxu0
      %v1204 = vadd.f32 %v1054, %v1203
      %1205 = vmatprep.mubr.f32.mxu0 0.0
      %1206 = vmatmul.mubr.f32.gmra.mrb[0].mxu0 %v1085
      %v1207 = vpop.f32.mrb[0].mxu0
      %v1208 = vadd.f32 %v1050, %v1207
      %v1209 = vpop.f32.mrb[0].mxu0
      %v1210 = vadd.f32 %v1054, %v1209
      %1211 = vmatprep.mubr.f32.mxu0 0.0
      %1212 = vmatmul.mubr.f32.gmra.mrb[0].mxu0 %v1088
      %v1213 = vpop.f32.mrb[0].mxu0
      %v1214 = vadd.f32 %v1050, %v1213
      %v1215 = vpop.f32.mrb[0].mxu0
      %v1216 = vadd.f32 %v1054, %v1215
      %1217 = vmatprep.mubr.f32.mxu0 0.0
      %1218 = vmatmul.mubr.f32.gmra.mrb[0].mxu0 %v1091
      %v1219 = vpop.f32.mrb[0].mxu0
      %v1220 = vadd.f32 %v1050, %v1219
      %v1221 = vpop.f32.mrb[0].mxu0
      %v1222 = vadd.f32 %v1054, %v1221
      %1223 = vmatprep.mubr.f32.mxu0 0.0
      %1224 = vmatmul.mubr.f32.gmra.mrb[0].mxu0 %v1094
      %v1225 = vpop.f32.mrb[0].mxu0
      %v1226 = vadd.f32 %v1050, %v1225
      %v1227 = vpop.f32.mrb[0].mxu0
      %v1228 = vadd.f32 %v1054, %v1227
      %1229 = vmatprep.mubr.f32.mxu0 0.0
      %1230 = vmatmul.mubr.f32.gmra.mrb[0].mxu0 %v1097
      %v1231 = vpop.f32.mrb[0].mxu0
      %v1232 = vadd.f32 %v1050, %v1231
      %v1233 = vpop.f32.mrb[0].mxu0
      %v1234 = vadd.f32 %v1054, %v1233
      %1235 = vdwg.mxu0
      %1236 = vmatprep.subr.mxu0 0.0
      %1237 = vmatpush1.msra.mxu0 %v1035
      %1238 = vmatprep.subr.mxu0 0.0
      %1239 = vmatpush1.msra.mxu0 %v1038
      %1240 = vmatprep.subr.mxu0 0.0
      %1241 = vmatpush1.msra.mxu0 %v1041
      %1242 = vmatprep.subr.mxu0 0.0
      %1243 = vmatpush1.msra.mxu0 %v1044
      %1244 = vmatprep.subr.mxu0 0.0
      %1245 = vmatpush1.msra.mxu0 0.0
      %1246 = vmatprep.subr.mxu0 0.0
      %1247 = vmatpush1.msra.mxu0 0.0
      %1248 = vmatprep.subr.mxu0 0.0
      %1249 = vmatpush1.msra.mxu0 0.0
      %1250 = vmatprep.subr.mxu0 0.0
      %1251 = vmatpush1.msra.mxu0 0.0
      %1252 = vmatprep.subr.mxu0 0.0
      %1253 = vmatpush1.msra.mxu0 0.0
      %1254 = vmatprep.subr.mxu0 0.0
      %1255 = vmatpush1.msra.mxu0 0.0
      %1256 = vmatprep.subr.mxu0 0.0
      %1257 = vmatpush1.msra.mxu0 0.0
      %1258 = vmatprep.subr.mxu0 0.0
      %1259 = vmatpush1.msra.mxu0 0.0
      %1260 = vmatprep.subr.mxu0 0.0
      %1261 = vmatpush1.msra.mxu0 0.0
      %1262 = vmatprep.subr.mxu0 0.0
      %1263 = vmatpush1.msra.mxu0 0.0
      %1264 = vmatprep.subr.mxu0 0.0
      %1265 = vmatpush1.msra.mxu0 0.0
      %1266 = vmatprep.subr.mxu0 0.0
      %1267 = vmatpush1.msra.mxu0 0.0
      %1268 = vmatprep.subr.mxu0 0.0
      %1269 = vmatpush1.msra.mxu0 0.0
      %1270 = vmatprep.subr.mxu0 0.0
      %1271 = vmatpush1.msra.mxu0 0.0
      %1272 = vmatprep.subr.mxu0 0.0
      %1273 = vmatpush1.msra.mxu0 0.0
      %1274 = vmatprep.subr.mxu0 0.0
      %1275 = vmatpush1.msra.mxu0 0.0
      %1276 = vmatprep.subr.mxu0 0.0
      %1277 = vmatpush1.msra.mxu0 0.0
      %1278 = vmatprep.subr.mxu0 0.0
      %1279 = vmatpush1.msra.mxu0 0.0
      %1280 = vmatprep.subr.mxu0 0.0
      %1281 = vmatpush1.msra.mxu0 0.0
      %1282 = vmatprep.subr.mxu0 0.0
      %1283 = vmatpush1.msra.mxu0 0.0
      %1284 = vmatprep.subr.mxu0 0.0
      %1285 = vmatpush1.msra.mxu0 0.0
      %1286 = vmatprep.subr.mxu0 0.0
      %1287 = vmatpush1.msra.mxu0 0.0
      %1288 = vmatprep.subr.mxu0 0.0
      %1289 = vmatpush1.msra.mxu0 0.0
      %1290 = vmatprep.subr.mxu0 0.0
      %1291 = vmatpush1.msra.mxu0 0.0
      %1292 = vmatprep.subr.mxu0 0.0
      %1293 = vmatpush1.msra.mxu0 0.0
      %1294 = vmatprep.subr.mxu0 0.0
      %1295 = vmatpush1.msra.mxu0 0.0
      %1296 = vmatprep.subr.mxu0 0.0
      %1297 = vmatpush1.msra.mxu0 0.0
      %1298 = vmatprep.subr.mxu0 0.0
      %1299 = vmatpush1.msra.mxu0 0.0
      %1300 = vmatprep.mubr.f32.mxu0 0.0
      %1301 = vmatmul.mubr.f32.gmra.mrb[0].mxu0 %v1064
      %v1302 = vpop.f32.mrb[0].mxu0
      %v1303 = vadd.f32 %v1058, %v1302
      %v1304 = vpop.f32.mrb[0].mxu0
      %1305 = vmatprep.mubr.f32.mxu0 0.0
      %1306 = vmatmul.mubr.f32.gmra.mrb[0].mxu0 %v1067
      %v1307 = vpop.f32.mrb[0].mxu0
      %v1308 = vadd.f32 %v1058, %v1307
      %v1309 = vpop.f32.mrb[0].mxu0
      %1310 = vmatprep.mubr.f32.mxu0 0.0
      %1311 = vmatmul.mubr.f32.gmra.mrb[0].mxu0 %v1070
      %v1312 = vpop.f32.mrb[0].mxu0
      %v1313 = vadd.f32 %v1058, %v1312
      %v1314 = vpop.f32.mrb[0].mxu0
      %1315 = vmatprep.mubr.f32.mxu0 0.0
      %1316 = vmatmul.mubr.f32.gmra.mrb[0].mxu0 %v1073
      %v1317 = vpop.f32.mrb[0].mxu0
      %v1318 = vadd.f32 %v1058, %v1317
      %v1319 = vpop.f32.mrb[0].mxu0
      %1320 = vmatprep.mubr.f32.mxu0 0.0
      %1321 = vmatmul.mubr.f32.gmra.mrb[0].mxu0 %v1076
      %v1322 = vpop.f32.mrb[0].mxu0
      %v1323 = vadd.f32 %v1058, %v1322
      %v1324 = vpop.f32.mrb[0].mxu0
      %1325 = vmatprep.mubr.f32.mxu0 0.0
      %1326 = vmatmul.mubr.f32.gmra.mrb[0].mxu0 %v1079
      %v1327 = vpop.f32.mrb[0].mxu0
      %v1328 = vadd.f32 %v1058, %v1327
      %v1329 = vpop.f32.mrb[0].mxu0
      %1330 = vmatprep.mubr.f32.mxu0 0.0
      %1331 = vmatmul.mubr.f32.gmra.mrb[0].mxu0 %v1082
      %v1332 = vpop.f32.mrb[0].mxu0
      %v1333 = vadd.f32 %v1058, %v1332
      %v1334 = vpop.f32.mrb[0].mxu0
      %1335 = vmatprep.mubr.f32.mxu0 0.0
      %1336 = vmatmul.mubr.f32.gmra.mrb[0].mxu0 %v1085
      %v1337 = vpop.f32.mrb[0].mxu0
      %v1338 = vadd.f32 %v1058, %v1337
      %v1339 = vpop.f32.mrb[0].mxu0
      %1340 = vmatprep.mubr.f32.mxu0 0.0
      %1341 = vmatmul.mubr.f32.gmra.mrb[0].mxu0 %v1088
      %v1342 = vpop.f32.mrb[0].mxu0
      %v1343 = vadd.f32 %v1058, %v1342
      %v1344 = vpop.f32.mrb[0].mxu0
      %1345 = vmatprep.mubr.f32.mxu0 0.0
      %1346 = vmatmul.mubr.f32.gmra.mrb[0].mxu0 %v1091
      %v1347 = vpop.f32.mrb[0].mxu0
      %v1348 = vadd.f32 %v1058, %v1347
      %v1349 = vpop.f32.mrb[0].mxu0
      %1350 = vmatprep.mubr.f32.mxu0 0.0
      %1351 = vmatmul.mubr.f32.gmra.mrb[0].mxu0 %v1094
      %v1352 = vpop.f32.mrb[0].mxu0
      %v1353 = vadd.f32 %v1058, %v1352
      %v1354 = vpop.f32.mrb[0].mxu0
      %1355 = vmatprep.mubr.f32.mxu0 0.0
      %1356 = vmatmul.mubr.f32.gmra.mrb[0].mxu0 %v1097
      %v1357 = vpop.f32.mrb[0].mxu0
      %v1358 = vadd.f32 %v1058, %v1357
      %v1359 = vpop.f32.mrb[0].mxu0
      %1360 = vdwg.mxu0
      %v1361 = vlaneseq
      %v1362 = vshrl.u32 %v1361, 7
      %v1363 = vadd.s32 %v1362, 8
      %v1364 = vadd.s32 %v1362, 16
      %v1365 = vadd.s32 %v1362, 24
      %v1366 = vadd.s32 %v1362, 32
      %v1367 = vadd.s32 %v1362, 40
      %v1368 = vadd.s32 %v1362, 48
      %v1369 = vadd.s32 %v1362, 56
      %v1370 = vadd.s32 %v1362, 64
      %v1371 = vadd.s32 %v1362, 72
      %v1372 = vadd.s32 %v1362, 80
      %v1373 = vadd.s32 %v1362, 88
      %v1374 = vlaneseq
      %v1375 = vand.u32 %v1374, 127
      %vm1376 = vcmp.lt.s32.totalorder %v1362, 0
      %v1377 = vsub.s32 0, %v1362
      %v1378 = vsel %vm1376, %v1377, %v1362
      %v1379 = vshrl.u32 %v1378, 3
      %v1380 = vand.u32 %v1378, 7
      %v1381 = vsub.s32 0, %v1380
      %v1382 = vsel %vm1376, %v1381, %v1380
      %vm1383 = vcmp.lt.s32.totalorder %v1363, 0
      %v1384 = vsub.s32 0, %v1363
      %v1385 = vsel %vm1383, %v1384, %v1363
      %v1386 = vshrl.u32 %v1385, 3
      %v1387 = vand.u32 %v1385, 7
      %v1388 = vsub.s32 0, %v1387
      %v1389 = vsel %vm1383, %v1388, %v1387
      %vm1390 = vcmp.lt.s32.totalorder %v1364, 0
      %v1391 = vsub.s32 0, %v1364
      %v1392 = vsel %vm1390, %v1391, %v1364
      %v1393 = vshrl.u32 %v1392, 3
      %v1394 = vand.u32 %v1392, 7
      %v1395 = vsub.s32 0, %v1394
      %v1396 = vsel %vm1390, %v1395, %v1394
      %vm1397 = vcmp.lt.s32.totalorder %v1365, 0
      %v1398 = vsub.s32 0, %v1365
      %v1399 = vsel %vm1397, %v1398, %v1365
      %v1400 = vshrl.u32 %v1399, 3
      %v1401 = vand.u32 %v1399, 7
      %v1402 = vsub.s32 0, %v1401
      %v1403 = vsel %vm1397, %v1402, %v1401
      %vm1404 = vcmp.lt.s32.totalorder %v1366, 0
      %v1405 = vsub.s32 0, %v1366
      %v1406 = vsel %vm1404, %v1405, %v1366
      %v1407 = vshrl.u32 %v1406, 3
      %v1408 = vand.u32 %v1406, 7
      %v1409 = vsub.s32 0, %v1408
      %v1410 = vsel %vm1404, %v1409, %v1408
      %vm1411 = vcmp.lt.s32.totalorder %v1367, 0
      %v1412 = vsub.s32 0, %v1367
      %v1413 = vsel %vm1411, %v1412, %v1367
      %v1414 = vshrl.u32 %v1413, 3
      %v1415 = vand.u32 %v1413, 7
      %v1416 = vsub.s32 0, %v1415
      %v1417 = vsel %vm1411, %v1416, %v1415
      %vm1418 = vcmp.lt.s32.totalorder %v1368, 0
      %v1419 = vsub.s32 0, %v1368
      %v1420 = vsel %vm1418, %v1419, %v1368
      %v1421 = vshrl.u32 %v1420, 3
      %v1422 = vand.u32 %v1420, 7
      %v1423 = vsub.s32 0, %v1422
      %v1424 = vsel %vm1418, %v1423, %v1422
      %vm1425 = vcmp.lt.s32.totalorder %v1369, 0
      %v1426 = vsub.s32 0, %v1369
      %v1427 = vsel %vm1425, %v1426, %v1369
      %v1428 = vshrl.u32 %v1427, 3
      %v1429 = vand.u32 %v1427, 7
      %v1430 = vsub.s32 0, %v1429
      %v1431 = vsel %vm1425, %v1430, %v1429
      %vm1432 = vcmp.lt.s32.totalorder %v1370, 0
      %v1433 = vsub.s32 0, %v1370
      %v1434 = vsel %vm1432, %v1433, %v1370
      %v1435 = vshrl.u32 %v1434, 3
      %v1436 = vand.u32 %v1434, 7
      %v1437 = vsub.s32 0, %v1436
      %v1438 = vsel %vm1432, %v1437, %v1436
      %vm1439 = vcmp.lt.s32.totalorder %v1371, 0
      %v1440 = vsub.s32 0, %v1371
      %v1441 = vsel %vm1439, %v1440, %v1371
      %v1442 = vshrl.u32 %v1441, 3
      %v1443 = vand.u32 %v1441, 7
      %v1444 = vsub.s32 0, %v1443
      %v1445 = vsel %vm1439, %v1444, %v1443
      %vm1446 = vcmp.lt.s32.totalorder %v1372, 0
      %v1447 = vsub.s32 0, %v1372
      %v1448 = vsel %vm1446, %v1447, %v1372
      %v1449 = vshrl.u32 %v1448, 3
      %v1450 = vand.u32 %v1448, 7
      %v1451 = vsub.s32 0, %v1450
      %v1452 = vsel %vm1446, %v1451, %v1450
      %vm1453 = vcmp.lt.s32.totalorder %v1373, 0
      %v1454 = vsub.s32 0, %v1373
      %v1455 = vsel %vm1453, %v1454, %v1373
      %v1456 = vshrl.u32 %v1455, 3
      %v1457 = vand.u32 %v1455, 7
      %v1458 = vsub.s32 0, %v1457
      %v1459 = vsel %vm1453, %v1458, %v1457
      %vm1460 = vcmp.ne.s32.totalorder %v1382, 0
      %vm1461 = vcmp.ne.s32.totalorder %v1389, 0
      %vm1462 = vcmp.ne.s32.totalorder %v1396, 0
      %vm1463 = vcmp.ne.s32.totalorder %v1403, 0
      %vm1464 = vcmp.ne.s32.totalorder %v1410, 0
      %vm1465 = vcmp.ne.s32.totalorder %v1417, 0
      %vm1466 = vcmp.ne.s32.totalorder %v1424, 0
      %vm1467 = vcmp.ne.s32.totalorder %v1431, 0
      %vm1468 = vcmp.ne.s32.totalorder %v1438, 0
      %vm1469 = vcmp.ne.s32.totalorder %v1445, 0
      %vm1470 = vcmp.ne.s32.totalorder %v1452, 0
      %vm1471 = vcmp.ne.s32.totalorder %v1459, 0
      %vm1472 = vcmp.lt.s32.totalorder %v1382, 0
      %vm1473 = vcmp.lt.s32.totalorder %v1389, 0
      %vm1474 = vcmp.lt.s32.totalorder %v1396, 0
      %vm1475 = vcmp.lt.s32.totalorder %v1403, 0
      %vm1476 = vcmp.lt.s32.totalorder %v1410, 0
      %vm1477 = vcmp.lt.s32.totalorder %v1417, 0
      %vm1478 = vcmp.lt.s32.totalorder %v1424, 0
      %vm1479 = vcmp.lt.s32.totalorder %v1431, 0
      %vm1480 = vcmp.lt.s32.totalorder %v1438, 0
      %vm1481 = vcmp.lt.s32.totalorder %v1445, 0
      %vm1482 = vcmp.lt.s32.totalorder %v1452, 0
      %vm1483 = vcmp.lt.s32.totalorder %v1459, 0
      %vm1484 = vmand %vm1472, %vm1460
      %vm1485 = vmand %vm1473, %vm1461
      %vm1486 = vmand %vm1474, %vm1462
      %vm1487 = vmand %vm1475, %vm1463
      %vm1488 = vmand %vm1476, %vm1464
      %vm1489 = vmand %vm1477, %vm1465
      %vm1490 = vmand %vm1478, %vm1466
      %vm1491 = vmand %vm1479, %vm1467
      %vm1492 = vmand %vm1480, %vm1468
      %vm1493 = vmand %vm1481, %vm1469
      %vm1494 = vmand %vm1482, %vm1470
      %vm1495 = vmand %vm1483, %vm1471
      %v1496 = vadd.s32 %v1382, 8
      %v1497 = vadd.s32 %v1389, 8
      %v1498 = vadd.s32 %v1396, 8
      %v1499 = vadd.s32 %v1403, 8
      %v1500 = vadd.s32 %v1410, 8
      %v1501 = vadd.s32 %v1417, 8
      %v1502 = vadd.s32 %v1424, 8
      %v1503 = vadd.s32 %v1431, 8
      %v1504 = vadd.s32 %v1438, 8
      %v1505 = vadd.s32 %v1445, 8
      %v1506 = vadd.s32 %v1452, 8
      %v1507 = vadd.s32 %v1459, 8
      %v1508 = vsel %vm1484, %v1496, %v1382
      %v1509 = vsel %vm1485, %v1497, %v1389
      %v1510 = vsel %vm1486, %v1498, %v1396
      %v1511 = vsel %vm1487, %v1499, %v1403
      %v1512 = vsel %vm1488, %v1500, %v1410
      %v1513 = vsel %vm1489, %v1501, %v1417
      %v1514 = vsel %vm1490, %v1502, %v1424
      %v1515 = vsel %vm1491, %v1503, %v1431
      %v1516 = vsel %vm1492, %v1504, %v1438
      %v1517 = vsel %vm1493, %v1505, %v1445
      %v1518 = vsel %vm1494, %v1506, %v1452
      %v1519 = vsel %vm1495, %v1507, %v1459
      %vm1520 = vcmp.lt.s32.totalorder %v1375, 0
      %v1521 = vsub.s32 0, %v1375
      %v1522 = vsel %vm1520, %v1521, %v1375
      %v1523 = vshrl.u32 %v1522, 3
      %v1524 = vand.u32 %v1522, 7
      %v1525 = vsub.s32 0, %v1524
      %v1526 = vsel %vm1520, %v1525, %v1524
      %vm1527 = vcmp.ne.s32.totalorder %v1526, 0
      %vm1528 = vcmp.lt.s32.totalorder %v1526, 0
      %vm1529 = vmand %vm1528, %vm1527
      %v1530 = vadd.s32 %v1526, 8
      %v1531 = vsel %vm1529, %v1530, %v1526
      %vm1532 = vcmp.eq.s32.totalorder %v1508, %v1531
      %vm1533 = vcmp.eq.s32.totalorder %v1509, %v1531
      %vm1534 = vcmp.eq.s32.totalorder %v1510, %v1531
      %vm1535 = vcmp.eq.s32.totalorder %v1511, %v1531
      %vm1536 = vcmp.eq.s32.totalorder %v1512, %v1531
      %vm1537 = vcmp.eq.s32.totalorder %v1513, %v1531
      %vm1538 = vcmp.eq.s32.totalorder %v1514, %v1531
      %vm1539 = vcmp.eq.s32.totalorder %v1515, %v1531
      %vm1540 = vcmp.eq.s32.totalorder %v1516, %v1531
      %vm1541 = vcmp.eq.s32.totalorder %v1517, %v1531
      %vm1542 = vcmp.eq.s32.totalorder %v1518, %v1531
      %vm1543 = vcmp.eq.s32.totalorder %v1519, %v1531
      %vm1544 = vcmp.le.s32.totalorder %v1375, %v1362
      %vm1545 = vcmp.le.s32.totalorder %v1375, %v1363
      %vm1546 = vcmp.le.s32.totalorder %v1375, %v1364
      %vm1547 = vcmp.le.s32.totalorder %v1375, %v1365
      %vm1548 = vcmp.le.s32.totalorder %v1375, %v1366
      %vm1549 = vcmp.le.s32.totalorder %v1375, %v1367
      %vm1550 = vcmp.le.s32.totalorder %v1375, %v1368
      %vm1551 = vcmp.le.s32.totalorder %v1375, %v1369
      %vm1552 = vcmp.le.s32.totalorder %v1375, %v1370
      %vm1553 = vcmp.le.s32.totalorder %v1375, %v1371
      %vm1554 = vcmp.le.s32.totalorder %v1375, %v1372
      %vm1555 = vcmp.le.s32.totalorder %v1375, %v1373
      %vm1556 = vmand %vm1532, %vm1544
      %vm1557 = vmand %vm1533, %vm1545
      %vm1558 = vmand %vm1534, %vm1546
      %vm1559 = vmand %vm1535, %vm1547
      %vm1560 = vmand %vm1536, %vm1548
      %vm1561 = vmand %vm1537, %vm1549
      %vm1562 = vmand %vm1538, %vm1550
      %vm1563 = vmand %vm1539, %vm1551
      %vm1564 = vmand %vm1540, %vm1552
      %vm1565 = vmand %vm1541, %vm1553
      %vm1566 = vmand %vm1542, %vm1554
      %vm1567 = vmand %vm1543, %vm1555
      %v1569 = vsel %vm1062, %v1166, 0
      %v1572 = vsel %vm1062, %v1172, 0
      %v1575 = vsel %vm1062, %v1178, 0
      %v1578 = vsel %vm1062, %v1184, 0
      %v1581 = vsel %vm1062, %v1190, 0
      %v1584 = vsel %vm1062, %v1196, 0
      %v1587 = vsel %vm1062, %v1202, 0
      %v1590 = vsel %vm1062, %v1208, 0
      %v1593 = vsel %vm1062, %v1214, 0
      %v1596 = vsel %vm1062, %v1220, 0
      %v1599 = vsel %vm1062, %v1226, 0
      %v1602 = vsel %vm1062, %v1232, 0
      %v1605 = vsel %vm1062, %v1168, 0
      %v1608 = vsel %vm1062, %v1174, 0
      %v1611 = vsel %vm1062, %v1180, 0
      %v1614 = vsel %vm1062, %v1186, 0
      %v1617 = vsel %vm1062, %v1192, 0
      %v1620 = vsel %vm1062, %v1198, 0
      %v1623 = vsel %vm1062, %v1204, 0
      %v1626 = vsel %vm1062, %v1210, 0
      %v1629 = vsel %vm1062, %v1216, 0
      %v1632 = vsel %vm1062, %v1222, 0
      %v1635 = vsel %vm1062, %v1228, 0
      %v1638 = vsel %vm1062, %v1234, 0
      %1640 = vmatprep.subr.mxu0 0.0
      %1641 = vmatpush1.xpose.msra.mxu0 %v1605
      %1642 = vmatprep.subr.mxu0 0.0
      %1643 = vmatpush1.xpose.msra.mxu0 %v1608
      %1644 = vmatprep.subr.mxu0 0.0
      %1645 = vmatpush1.xpose.msra.mxu0 %v1611
      %1646 = vmatprep.subr.mxu0 0.0
      %1647 = vmatpush1.xpose.msra.mxu0 %v1614
      %1648 = vmatprep.subr.mxu0 0.0
      %1649 = vmatpush1.xpose.msra.mxu0 %v1617
      %1650 = vmatprep.subr.mxu0 0.0
      %1651 = vmatpush1.xpose.msra.mxu0 %v1620
      %1652 = vmatprep.subr.mxu0 0.0
      %1653 = vmatpush1.xpose.msra.mxu0 %v1623
      %1654 = vmatprep.subr.mxu0 0.0
      %1655 = vmatpush1.xpose.msra.mxu0 %v1626
      %1656 = vmatprep.subr.mxu0 0.0
      %1657 = vmatpush1.xpose.msra.mxu0 %v1629
      %1658 = vmatprep.subr.mxu0 0.0
      %1659 = vmatpush1.xpose.msra.mxu0 %v1632
      %1660 = vmatprep.subr.mxu0 0.0
      %1661 = vmatpush1.xpose.msra.mxu0 %v1635
      %1662 = vmatprep.subr.mxu0 0.0
      %1663 = vmatpush1.xpose.msra.mxu0 %v1638
      %1664 = vmatprep.subr.mxu0 0.0
      %1665 = vmatpush1.xpose.msra.mxu0 0.0
      %1666 = vmatprep.subr.mxu0 0.0
      %1667 = vmatpush1.xpose.msra.mxu0 0.0
      %1668 = vmatprep.subr.mxu0 0.0
      %1669 = vmatpush1.xpose.msra.mxu0 0.0
      %1670 = vmatprep.subr.mxu0 0.0
      %1671 = vmatpush1.xpose.msra.mxu0 0.0
      %1672 = vmatprep.subr.mxu0 0.0
      %1673 = vmatpush1.xpose.msra.mxu0 0.0
      %1674 = vmatprep.subr.mxu0 0.0
      %1675 = vmatpush1.xpose.msra.mxu0 0.0
      %1676 = vmatprep.subr.mxu0 0.0
      %1677 = vmatpush1.xpose.msra.mxu0 0.0
      %1678 = vmatprep.subr.mxu0 0.0
      %1679 = vmatpush1.xpose.msra.mxu0 0.0
      %1680 = vmatprep.subr.mxu0 0.0
      %1681 = vmatpush1.xpose.msra.mxu0 0.0
      %1682 = vmatprep.subr.mxu0 0.0
      %1683 = vmatpush1.xpose.msra.mxu0 0.0
      %1684 = vmatprep.subr.mxu0 0.0
      %1685 = vmatpush1.xpose.msra.mxu0 0.0
      %1686 = vmatprep.subr.mxu0 0.0
      %1687 = vmatpush1.xpose.msra.mxu0 0.0
      %1688 = vmatprep.subr.mxu0 0.0
      %1689 = vmatpush1.xpose.msra.mxu0 0.0
      %1690 = vmatprep.subr.mxu0 0.0
      %1691 = vmatpush1.xpose.msra.mxu0 0.0
      %1692 = vmatprep.subr.mxu0 0.0
      %1693 = vmatpush1.xpose.msra.mxu0 0.0
      %1694 = vmatprep.subr.mxu0 0.0
      %1695 = vmatpush1.xpose.msra.mxu0 0.0
      %1696 = vmatprep.subr.mxu0 0.0
      %1697 = vmatpush1.xpose.msra.mxu0 0.0
      %1698 = vmatprep.subr.mxu0 0.0
      %1699 = vmatpush1.xpose.msra.mxu0 0.0
      %1700 = vmatprep.subr.mxu0 0.0
      %1701 = vmatpush1.xpose.msra.mxu0 0.0
      %1702 = vmatprep.subr.mxu0 0.0
      %1703 = vmatpush1.xpose.msra.mxu0 0.0
      %1704 = vmatprep.mubr.f32.mxu0 0.0
      %1705 = vmatmul.mubr.f32.gmra.mrb[0].mxu0 %v1569
      %v1706 = vpop.f32.mrb[0].mxu0
      %v1707 = vadd.f32 0.0, %v1706
      %v1708 = vpop.f32.mrb[0].mxu0
      %1709 = vmatprep.mubr.f32.mxu0 0.0
      %1710 = vmatmul.mubr.f32.gmra.mrb[0].mxu0 %v1572
      %v1711 = vpop.f32.mrb[0].mxu0
      %v1712 = vadd.f32 0.0, %v1711
      %v1713 = vpop.f32.mrb[0].mxu0
      %1714 = vmatprep.mubr.f32.mxu0 0.0
      %1715 = vmatmul.mubr.f32.gmra.mrb[0].mxu0 %v1575
      %v1716 = vpop.f32.mrb[0].mxu0
      %v1717 = vadd.f32 0.0, %v1716
      %v1718 = vpop.f32.mrb[0].mxu0
      %1719 = vmatprep.mubr.f32.mxu0 0.0
      %1720 = vmatmul.mubr.f32.gmra.mrb[0].mxu0 %v1578
      %v1721 = vpop.f32.mrb[0].mxu0
      %v1722 = vadd.f32 0.0, %v1721
      %v1723 = vpop.f32.mrb[0].mxu0
      %1724 = vmatprep.mubr.f32.mxu0 0.0
      %1725 = vmatmul.mubr.f32.gmra.mrb[0].mxu0 %v1581
      %v1726 = vpop.f32.mrb[0].mxu0
      %v1727 = vadd.f32 0.0, %v1726
      %v1728 = vpop.f32.mrb[0].mxu0
      %1729 = vmatprep.mubr.f32.mxu0 0.0
      %1730 = vmatmul.mubr.f32.gmra.mrb[0].mxu0 %v1584
      %v1731 = vpop.f32.mrb[0].mxu0
      %v1732 = vadd.f32 0.0, %v1731
      %v1733 = vpop.f32.mrb[0].mxu0
      %1734 = vmatprep.mubr.f32.mxu0 0.0
      %1735 = vmatmul.mubr.f32.gmra.mrb[0].mxu0 %v1587
      %v1736 = vpop.f32.mrb[0].mxu0
      %v1737 = vadd.f32 0.0, %v1736
      %v1738 = vpop.f32.mrb[0].mxu0
      %1739 = vmatprep.mubr.f32.mxu0 0.0
      %1740 = vmatmul.mubr.f32.gmra.mrb[0].mxu0 %v1590
      %v1741 = vpop.f32.mrb[0].mxu0
      %v1742 = vadd.f32 0.0, %v1741
      %v1743 = vpop.f32.mrb[0].mxu0
      %1744 = vmatprep.mubr.f32.mxu0 0.0
      %1745 = vmatmul.mubr.f32.gmra.mrb[0].mxu0 %v1593
      %v1746 = vpop.f32.mrb[0].mxu0
      %v1747 = vadd.f32 0.0, %v1746
      %v1748 = vpop.f32.mrb[0].mxu0
      %1749 = vmatprep.mubr.f32.mxu0 0.0
      %1750 = vmatmul.mubr.f32.gmra.mrb[0].mxu0 %v1596
      %v1751 = vpop.f32.mrb[0].mxu0
      %v1752 = vadd.f32 0.0, %v1751
      %v1753 = vpop.f32.mrb[0].mxu0
      %1754 = vmatprep.mubr.f32.mxu0 0.0
      %1755 = vmatmul.mubr.f32.gmra.mrb[0].mxu0 %v1599
      %v1756 = vpop.f32.mrb[0].mxu0
      %v1757 = vadd.f32 0.0, %v1756
      %v1758 = vpop.f32.mrb[0].mxu0
      %1759 = vmatprep.mubr.f32.mxu0 0.0
      %1760 = vmatmul.mubr.f32.gmra.mrb[0].mxu0 %v1602
      %v1761 = vpop.f32.mrb[0].mxu0
      %v1762 = vadd.f32 0.0, %v1761
      %v1763 = vpop.f32.mrb[0].mxu0
      %1764 = vdwg.mxu0
      %v1765 = vmul.f32 %v1707, 0.17677669
      %v1766 = vmul.f32 %v1712, 0.17677669
      %v1767 = vmul.f32 %v1717, 0.17677669
      %v1768 = vmul.f32 %v1722, 0.17677669
      %v1769 = vmul.f32 %v1727, 0.17677669
      %v1770 = vmul.f32 %v1732, 0.17677669
      %v1771 = vmul.f32 %v1737, 0.17677669
      %v1772 = vmul.f32 %v1742, 0.17677669
      %v1773 = vmul.f32 %v1747, 0.17677669
      %v1774 = vmul.f32 %v1752, 0.17677669
      %v1775 = vmul.f32 %v1757, 0.17677669
      %v1776 = vmul.f32 %v1762, 0.17677669
      %v1777 = vsel %vm1556, %v1765, -1e+30
      %v1778 = vsel %vm1557, %v1766, -1e+30
      %v1779 = vsel %vm1558, %v1767, -1e+30
      %v1780 = vsel %vm1559, %v1768, -1e+30
      %v1781 = vsel %vm1560, %v1769, -1e+30
      %v1782 = vsel %vm1561, %v1770, -1e+30
      %v1783 = vsel %vm1562, %v1771, -1e+30
      %v1784 = vsel %vm1563, %v1772, -1e+30
      %v1785 = vsel %vm1564, %v1773, -1e+30
      %v1786 = vsel %vm1565, %v1774, -1e+30
      %v1787 = vsel %vm1566, %v1775, -1e+30
      %v1788 = vsel %vm1567, %v1776, -1e+30
      %vm1789 = vcmask 785408
      %v1790 = vsel %vm1789, %v1777, -inf
      %1791 = vmax.xlane.f32.xlu0 %v1790
      %v1792 = vpop.xlane.xlu0 %1791
      %v1793 = vsel %vm1789, %v1778, -inf
      %1794 = vmax.xlane.f32.xlu0 %v1793
      %v1795 = vpop.xlane.xlu0 %1794
      %v1796 = vsel %vm1789, %v1779, -inf
      %1797 = vmax.xlane.f32.xlu0 %v1796
      %v1798 = vpop.xlane.xlu0 %1797
      %v1799 = vsel %vm1789, %v1780, -inf
      %1800 = vmax.xlane.f32.xlu0 %v1799
      %v1801 = vpop.xlane.xlu0 %1800
      %v1802 = vsel %vm1789, %v1781, -inf
      %1803 = vmax.xlane.f32.xlu0 %v1802
      %v1804 = vpop.xlane.xlu0 %1803
      %v1805 = vsel %vm1789, %v1782, -inf
      %1806 = vmax.xlane.f32.xlu0 %v1805
      %v1807 = vpop.xlane.xlu0 %1806
      %v1808 = vsel %vm1789, %v1783, -inf
      %1809 = vmax.xlane.f32.xlu0 %v1808
      %v1810 = vpop.xlane.xlu0 %1809
      %v1811 = vsel %vm1789, %v1784, -inf
      %1812 = vmax.xlane.f32.xlu0 %v1811
      %v1813 = vpop.xlane.xlu0 %1812
      %v1814 = vsel %vm1789, %v1785, -inf
      %1815 = vmax.xlane.f32.xlu0 %v1814
      %v1816 = vpop.xlane.xlu0 %1815
      %v1817 = vsel %vm1789, %v1786, -inf
      %1818 = vmax.xlane.f32.xlu0 %v1817
      %v1819 = vpop.xlane.xlu0 %1818
      %v1820 = vsel %vm1789, %v1787, -inf
      %1821 = vmax.xlane.f32.xlu0 %v1820
      %v1822 = vpop.xlane.xlu0 %1821
      %v1823 = vsel %vm1789, %v1788, -inf
      %1824 = vmax.xlane.f32.xlu0 %v1823
      %v1825 = vpop.xlane.xlu0 %1824
      %v1826 = vsub.f32 %v1777, %v1792
      %v1827 = vsub.f32 %v1778, %v1795
      %v1828 = vsub.f32 %v1779, %v1798
      %v1829 = vsub.f32 %v1780, %v1801
      %v1830 = vsub.f32 %v1781, %v1804
      %v1831 = vsub.f32 %v1782, %v1807
      %v1832 = vsub.f32 %v1783, %v1810
      %v1833 = vsub.f32 %v1784, %v1813
      %v1834 = vsub.f32 %v1785, %v1816
      %v1835 = vsub.f32 %v1786, %v1819
      %v1836 = vsub.f32 %v1787, %v1822
      %v1837 = vsub.f32 %v1788, %v1825
      %v1838 = vmul.f32 %v1826, 1.442695
      %v1839 = vpow.pop %v1838
      %v1840 = vmul.f32 %v1827, 1.442695
      %v1841 = vpow.pop %v1840
      %v1842 = vmul.f32 %v1828, 1.442695
      %v1843 = vpow.pop %v1842
      %v1844 = vmul.f32 %v1829, 1.442695
      %v1845 = vpow.pop %v1844
      %v1846 = vmul.f32 %v1830, 1.442695
      %v1847 = vpow.pop %v1846
      %v1848 = vmul.f32 %v1831, 1.442695
      %v1849 = vpow.pop %v1848
      %v1850 = vmul.f32 %v1832, 1.442695
      %v1851 = vpow.pop %v1850
      %v1852 = vmul.f32 %v1833, 1.442695
      %v1853 = vpow.pop %v1852
      %v1854 = vmul.f32 %v1834, 1.442695
      %v1855 = vpow.pop %v1854
      %v1856 = vmul.f32 %v1835, 1.442695
      %v1857 = vpow.pop %v1856
      %v1858 = vmul.f32 %v1836, 1.442695
      %v1859 = vpow.pop %v1858
      %v1860 = vmul.f32 %v1837, 1.442695
      %v1861 = vpow.pop %v1860
      %v1862 = vsel %vm1789, %v1839, 0.0
      %1863 = vadd.xlane.f32.xlu0 %v1862
      %v1864 = vpop.xlane.xlu0 %1863
      %v1865 = vsel %vm1789, %v1841, 0.0
      %1866 = vadd.xlane.f32.xlu0 %v1865
      %v1867 = vpop.xlane.xlu0 %1866
      %v1868 = vsel %vm1789, %v1843, 0.0
      %1869 = vadd.xlane.f32.xlu0 %v1868
      %v1870 = vpop.xlane.xlu0 %1869
      %v1871 = vsel %vm1789, %v1845, 0.0
      %1872 = vadd.xlane.f32.xlu0 %v1871
      %v1873 = vpop.xlane.xlu0 %1872
      %v1874 = vsel %vm1789, %v1847, 0.0
      %1875 = vadd.xlane.f32.xlu0 %v1874
      %v1876 = vpop.xlane.xlu0 %1875
      %v1877 = vsel %vm1789, %v1849, 0.0
      %1878 = vadd.xlane.f32.xlu0 %v1877
      %v1879 = vpop.xlane.xlu0 %1878
      %v1880 = vsel %vm1789, %v1851, 0.0
      %1881 = vadd.xlane.f32.xlu0 %v1880
      %v1882 = vpop.xlane.xlu0 %1881
      %v1883 = vsel %vm1789, %v1853, 0.0
      %1884 = vadd.xlane.f32.xlu0 %v1883
      %v1885 = vpop.xlane.xlu0 %1884
      %v1886 = vsel %vm1789, %v1855, 0.0
      %1887 = vadd.xlane.f32.xlu0 %v1886
      %v1888 = vpop.xlane.xlu0 %1887
      %v1889 = vsel %vm1789, %v1857, 0.0
      %1890 = vadd.xlane.f32.xlu0 %v1889
      %v1891 = vpop.xlane.xlu0 %1890
      %v1892 = vsel %vm1789, %v1859, 0.0
      %1893 = vadd.xlane.f32.xlu0 %v1892
      %v1894 = vpop.xlane.xlu0 %1893
      %v1895 = vsel %vm1789, %v1861, 0.0
      %1896 = vadd.xlane.f32.xlu0 %v1895
      %v1897 = vpop.xlane.xlu0 %1896
      %v1898 = vrcp.pop %v1864
      %v1899 = vmul.f32 %v1839, %v1898
      %v1900 = vrcp.pop %v1867
      %v1901 = vmul.f32 %v1841, %v1900
      %v1902 = vrcp.pop %v1870
      %v1903 = vmul.f32 %v1843, %v1902
      %v1904 = vrcp.pop %v1873
      %v1905 = vmul.f32 %v1845, %v1904
      %v1906 = vrcp.pop %v1876
      %v1907 = vmul.f32 %v1847, %v1906
      %v1908 = vrcp.pop %v1879
      %v1909 = vmul.f32 %v1849, %v1908
      %v1910 = vrcp.pop %v1882
      %v1911 = vmul.f32 %v1851, %v1910
      %v1912 = vrcp.pop %v1885
      %v1913 = vmul.f32 %v1853, %v1912
      %v1914 = vrcp.pop %v1888
      %v1915 = vmul.f32 %v1855, %v1914
      %v1916 = vrcp.pop %v1891
      %v1917 = vmul.f32 %v1857, %v1916
      %v1918 = vrcp.pop %v1894
      %v1919 = vmul.f32 %v1859, %v1918
      %v1920 = vrcp.pop %v1897
      %v1921 = vmul.f32 %v1861, %v1920
      %v1923 = vsel %vm1789, %v1899, 0
      %v1926 = vsel %vm1789, %v1901, 0
      %v1929 = vsel %vm1789, %v1903, 0
      %v1932 = vsel %vm1789, %v1905, 0
      %v1935 = vsel %vm1789, %v1907, 0
      %v1938 = vsel %vm1789, %v1909, 0
      %v1941 = vsel %vm1789, %v1911, 0
      %v1944 = vsel %vm1789, %v1913, 0
      %v1947 = vsel %vm1789, %v1915, 0
      %v1950 = vsel %vm1789, %v1917, 0
      %v1953 = vsel %vm1789, %v1919, 0
      %v1956 = vsel %vm1789, %v1921, 0
      %1958 = vmatprep.subr.mxu0 0.0
      %1959 = vmatpush1.msra.mxu0 %v1303
      %1960 = vmatprep.subr.mxu0 0.0
      %1961 = vmatpush1.msra.mxu0 %v1308
      %1962 = vmatprep.subr.mxu0 0.0
      %1963 = vmatpush1.msra.mxu0 %v1313
      %1964 = vmatprep.subr.mxu0 0.0
      %1965 = vmatpush1.msra.mxu0 %v1318
      %1966 = vmatprep.subr.mxu0 0.0
      %1967 = vmatpush1.msra.mxu0 %v1323
      %1968 = vmatprep.subr.mxu0 0.0
      %1969 = vmatpush1.msra.mxu0 %v1328
      %1970 = vmatprep.subr.mxu0 0.0
      %1971 = vmatpush1.msra.mxu0 %v1333
      %1972 = vmatprep.subr.mxu0 0.0
      %1973 = vmatpush1.msra.mxu0 %v1338
      %1974 = vmatprep.subr.mxu0 0.0
      %1975 = vmatpush1.msra.mxu0 %v1343
      %1976 = vmatprep.subr.mxu0 0.0
      %1977 = vmatpush1.msra.mxu0 %v1348
      %1978 = vmatprep.subr.mxu0 0.0
      %1979 = vmatpush1.msra.mxu0 %v1353
      %1980 = vmatprep.subr.mxu0 0.0
      %1981 = vmatpush1.msra.mxu0 %v1358
      %1982 = vmatprep.subr.mxu0 0.0
      %1983 = vmatpush1.msra.mxu0 0.0
      %1984 = vmatprep.subr.mxu0 0.0
      %1985 = vmatpush1.msra.mxu0 0.0
      %1986 = vmatprep.subr.mxu0 0.0
      %1987 = vmatpush1.msra.mxu0 0.0
      %1988 = vmatprep.subr.mxu0 0.0
      %1989 = vmatpush1.msra.mxu0 0.0
      %1990 = vmatprep.subr.mxu0 0.0
      %1991 = vmatpush1.msra.mxu0 0.0
      %1992 = vmatprep.subr.mxu0 0.0
      %1993 = vmatpush1.msra.mxu0 0.0
      %1994 = vmatprep.subr.mxu0 0.0
      %1995 = vmatpush1.msra.mxu0 0.0
      %1996 = vmatprep.subr.mxu0 0.0
      %1997 = vmatpush1.msra.mxu0 0.0
      %1998 = vmatprep.subr.mxu0 0.0
      %1999 = vmatpush1.msra.mxu0 0.0
      %2000 = vmatprep.subr.mxu0 0.0
      %2001 = vmatpush1.msra.mxu0 0.0
      %2002 = vmatprep.subr.mxu0 0.0
      %2003 = vmatpush1.msra.mxu0 0.0
      %2004 = vmatprep.subr.mxu0 0.0
      %2005 = vmatpush1.msra.mxu0 0.0
      %2006 = vmatprep.subr.mxu0 0.0
      %2007 = vmatpush1.msra.mxu0 0.0
      %2008 = vmatprep.subr.mxu0 0.0
      %2009 = vmatpush1.msra.mxu0 0.0
      %2010 = vmatprep.subr.mxu0 0.0
      %2011 = vmatpush1.msra.mxu0 0.0
      %2012 = vmatprep.subr.mxu0 0.0
      %2013 = vmatpush1.msra.mxu0 0.0
      %2014 = vmatprep.subr.mxu0 0.0
      %2015 = vmatpush1.msra.mxu0 0.0
      %2016 = vmatprep.subr.mxu0 0.0
      %2017 = vmatpush1.msra.mxu0 0.0
      %2018 = vmatprep.subr.mxu0 0.0
      %2019 = vmatpush1.msra.mxu0 0.0
      %2020 = vmatprep.subr.mxu0 0.0
      %2021 = vmatpush1.msra.mxu0 0.0
      %2022 = vmatprep.mubr.f32.mxu0 0.0
      %2023 = vmatmul.mubr.f32.gmra.mrb[0].mxu0 %v1923
      %v2024 = vpop.f32.mrb[0].mxu0
      %v2025 = vadd.f32 0.0, %v2024
      %v2026 = vpop.f32.mrb[0].mxu0
      %2027 = vmatprep.mubr.f32.mxu0 0.0
      %2028 = vmatmul.mubr.f32.gmra.mrb[0].mxu0 %v1926
      %v2029 = vpop.f32.mrb[0].mxu0
      %v2030 = vadd.f32 0.0, %v2029
      %v2031 = vpop.f32.mrb[0].mxu0
      %2032 = vmatprep.mubr.f32.mxu0 0.0
      %2033 = vmatmul.mubr.f32.gmra.mrb[0].mxu0 %v1929
      %v2034 = vpop.f32.mrb[0].mxu0
      %v2035 = vadd.f32 0.0, %v2034
      %v2036 = vpop.f32.mrb[0].mxu0
      %2037 = vmatprep.mubr.f32.mxu0 0.0
      %2038 = vmatmul.mubr.f32.gmra.mrb[0].mxu0 %v1932
      %v2039 = vpop.f32.mrb[0].mxu0
      %v2040 = vadd.f32 0.0, %v2039
      %v2041 = vpop.f32.mrb[0].mxu0
      %2042 = vmatprep.mubr.f32.mxu0 0.0
      %2043 = vmatmul.mubr.f32.gmra.mrb[0].mxu0 %v1935
      %v2044 = vpop.f32.mrb[0].mxu0
      %v2045 = vadd.f32 0.0, %v2044
      %v2046 = vpop.f32.mrb[0].mxu0
      %2047 = vmatprep.mubr.f32.mxu0 0.0
      %2048 = vmatmul.mubr.f32.gmra.mrb[0].mxu0 %v1938
      %v2049 = vpop.f32.mrb[0].mxu0
      %v2050 = vadd.f32 0.0, %v2049
      %v2051 = vpop.f32.mrb[0].mxu0
      %2052 = vmatprep.mubr.f32.mxu0 0.0
      %2053 = vmatmul.mubr.f32.gmra.mrb[0].mxu0 %v1941
      %v2054 = vpop.f32.mrb[0].mxu0
      %v2055 = vadd.f32 0.0, %v2054
      %v2056 = vpop.f32.mrb[0].mxu0
      %2057 = vmatprep.mubr.f32.mxu0 0.0
      %2058 = vmatmul.mubr.f32.gmra.mrb[0].mxu0 %v1944
      %v2059 = vpop.f32.mrb[0].mxu0
      %v2060 = vadd.f32 0.0, %v2059
      %v2061 = vpop.f32.mrb[0].mxu0
      %2062 = vmatprep.mubr.f32.mxu0 0.0
      %2063 = vmatmul.mubr.f32.gmra.mrb[0].mxu0 %v1947
      %v2064 = vpop.f32.mrb[0].mxu0
      %v2065 = vadd.f32 0.0, %v2064
      %v2066 = vpop.f32.mrb[0].mxu0
      %2067 = vmatprep.mubr.f32.mxu0 0.0
      %2068 = vmatmul.mubr.f32.gmra.mrb[0].mxu0 %v1950
      %v2069 = vpop.f32.mrb[0].mxu0
      %v2070 = vadd.f32 0.0, %v2069
      %v2071 = vpop.f32.mrb[0].mxu0
      %2072 = vmatprep.mubr.f32.mxu0 0.0
      %2073 = vmatmul.mubr.f32.gmra.mrb[0].mxu0 %v1953
      %v2074 = vpop.f32.mrb[0].mxu0
      %v2075 = vadd.f32 0.0, %v2074
      %v2076 = vpop.f32.mrb[0].mxu0
      %2077 = vmatprep.mubr.f32.mxu0 0.0
      %2078 = vmatmul.mubr.f32.gmra.mrb[0].mxu0 %v1956
      %v2079 = vpop.f32.mrb[0].mxu0
      %v2080 = vadd.f32 0.0, %v2079
      %v2081 = vpop.f32.mrb[0].mxu0
      %2082 = vdwg.mxu0
      %2083 = vrot.lane.b32.xlu0 %v1166, 96
      %v2084 = vpop.permute.xlu0 %2083
      %2085 = vrot.lane.b32.xlu0 %v1172, 96
      %v2086 = vpop.permute.xlu0 %2085
      %2087 = vrot.lane.b32.xlu0 %v1178, 96
      %v2088 = vpop.permute.xlu0 %2087
      %2089 = vrot.lane.b32.xlu0 %v1184, 96
      %v2090 = vpop.permute.xlu0 %2089
      %2091 = vrot.lane.b32.xlu0 %v1190, 96
      %v2092 = vpop.permute.xlu0 %2091
      %2093 = vrot.lane.b32.xlu0 %v1196, 96
      %v2094 = vpop.permute.xlu0 %2093
      %2095 = vrot.lane.b32.xlu0 %v1202, 96
      %v2096 = vpop.permute.xlu0 %2095
      %2097 = vrot.lane.b32.xlu0 %v1208, 96
      %v2098 = vpop.permute.xlu0 %2097
      %2099 = vrot.lane.b32.xlu0 %v1214, 96
      %v2100 = vpop.permute.xlu0 %2099
      %2101 = vrot.lane.b32.xlu0 %v1220, 96
      %v2102 = vpop.permute.xlu0 %2101
      %2103 = vrot.lane.b32.xlu0 %v1226, 96
      %v2104 = vpop.permute.xlu0 %2103
      %2105 = vrot.lane.b32.xlu0 %v1232, 96
      %v2106 = vpop.permute.xlu0 %2105
      %2107 = vrot.lane.b32.xlu0 %v1168, 96
      %v2108 = vpop.permute.xlu0 %2107
      %2109 = vrot.lane.b32.xlu0 %v1174, 96
      %v2110 = vpop.permute.xlu0 %2109
      %2111 = vrot.lane.b32.xlu0 %v1180, 96
      %v2112 = vpop.permute.xlu0 %2111
      %2113 = vrot.lane.b32.xlu0 %v1186, 96
      %v2114 = vpop.permute.xlu0 %2113
      %2115 = vrot.lane.b32.xlu0 %v1192, 96
      %v2116 = vpop.permute.xlu0 %2115
      %2117 = vrot.lane.b32.xlu0 %v1198, 96
      %v2118 = vpop.permute.xlu0 %2117
      %2119 = vrot.lane.b32.xlu0 %v1204, 96
      %v2120 = vpop.permute.xlu0 %2119
      %2121 = vrot.lane.b32.xlu0 %v1210, 96
      %v2122 = vpop.permute.xlu0 %2121
      %2123 = vrot.lane.b32.xlu0 %v1216, 96
      %v2124 = vpop.permute.xlu0 %2123
      %2125 = vrot.lane.b32.xlu0 %v1222, 96
      %v2126 = vpop.permute.xlu0 %2125
      %2127 = vrot.lane.b32.xlu0 %v1228, 96
      %v2128 = vpop.permute.xlu0 %2127
      %2129 = vrot.lane.b32.xlu0 %v1234, 96
      %v2130 = vpop.permute.xlu0 %2129
      %v2131 = vsel %vm1062, %v2084, 0
      %v2133 = vsel %vm1062, %v2086, 0
      %v2135 = vsel %vm1062, %v2088, 0
      %v2137 = vsel %vm1062, %v2090, 0
      %v2139 = vsel %vm1062, %v2092, 0
      %v2141 = vsel %vm1062, %v2094, 0
      %v2143 = vsel %vm1062, %v2096, 0
      %v2145 = vsel %vm1062, %v2098, 0
      %v2147 = vsel %vm1062, %v2100, 0
      %v2149 = vsel %vm1062, %v2102, 0
      %v2151 = vsel %vm1062, %v2104, 0
      %v2153 = vsel %vm1062, %v2106, 0
      %v2155 = vsel %vm1062, %v2108, 0
      %v2157 = vsel %vm1062, %v2110, 0
      %v2159 = vsel %vm1062, %v2112, 0
      %v2161 = vsel %vm1062, %v2114, 0
      %v2163 = vsel %vm1062, %v2116, 0
      %v2165 = vsel %vm1062, %v2118, 0
      %v2167 = vsel %vm1062, %v2120, 0
      %v2169 = vsel %vm1062, %v2122, 0
      %v2171 = vsel %vm1062, %v2124, 0
      %v2173 = vsel %vm1062, %v2126, 0
      %v2175 = vsel %vm1062, %v2128, 0
      %v2177 = vsel %vm1062, %v2130, 0
      %2179 = vmatprep.subr.mxu0 0.0
      %2180 = vmatpush1.xpose.msra.mxu0 %v2155
      %2181 = vmatprep.subr.mxu0 0.0
      %2182 = vmatpush1.xpose.msra.mxu0 %v2157
      %2183 = vmatprep.subr.mxu0 0.0
      %2184 = vmatpush1.xpose.msra.mxu0 %v2159
      %2185 = vmatprep.subr.mxu0 0.0
      %2186 = vmatpush1.xpose.msra.mxu0 %v2161
      %2187 = vmatprep.subr.mxu0 0.0
      %2188 = vmatpush1.xpose.msra.mxu0 %v2163
      %2189 = vmatprep.subr.mxu0 0.0
      %2190 = vmatpush1.xpose.msra.mxu0 %v2165
      %2191 = vmatprep.subr.mxu0 0.0
      %2192 = vmatpush1.xpose.msra.mxu0 %v2167
      %2193 = vmatprep.subr.mxu0 0.0
      %2194 = vmatpush1.xpose.msra.mxu0 %v2169
      %2195 = vmatprep.subr.mxu0 0.0
      %2196 = vmatpush1.xpose.msra.mxu0 %v2171
      %2197 = vmatprep.subr.mxu0 0.0
      %2198 = vmatpush1.xpose.msra.mxu0 %v2173
      %2199 = vmatprep.subr.mxu0 0.0
      %2200 = vmatpush1.xpose.msra.mxu0 %v2175
      %2201 = vmatprep.subr.mxu0 0.0
      %2202 = vmatpush1.xpose.msra.mxu0 %v2177
      %2203 = vmatprep.subr.mxu0 0.0
      %2204 = vmatpush1.xpose.msra.mxu0 0.0
      %2205 = vmatprep.subr.mxu0 0.0
      %2206 = vmatpush1.xpose.msra.mxu0 0.0
      %2207 = vmatprep.subr.mxu0 0.0
      %2208 = vmatpush1.xpose.msra.mxu0 0.0
      %2209 = vmatprep.subr.mxu0 0.0
      %2210 = vmatpush1.xpose.msra.mxu0 0.0
      %2211 = vmatprep.subr.mxu0 0.0
      %2212 = vmatpush1.xpose.msra.mxu0 0.0
      %2213 = vmatprep.subr.mxu0 0.0
      %2214 = vmatpush1.xpose.msra.mxu0 0.0
      %2215 = vmatprep.subr.mxu0 0.0
      %2216 = vmatpush1.xpose.msra.mxu0 0.0
      %2217 = vmatprep.subr.mxu0 0.0
      %2218 = vmatpush1.xpose.msra.mxu0 0.0
      %2219 = vmatprep.subr.mxu0 0.0
      %2220 = vmatpush1.xpose.msra.mxu0 0.0
      %2221 = vmatprep.subr.mxu0 0.0
      %2222 = vmatpush1.xpose.msra.mxu0 0.0
      %2223 = vmatprep.subr.mxu0 0.0
      %2224 = vmatpush1.xpose.msra.mxu0 0.0
      %2225 = vmatprep.subr.mxu0 0.0
      %2226 = vmatpush1.xpose.msra.mxu0 0.0
      %2227 = vmatprep.subr.mxu0 0.0
      %2228 = vmatpush1.xpose.msra.mxu0 0.0
      %2229 = vmatprep.subr.mxu0 0.0
      %2230 = vmatpush1.xpose.msra.mxu0 0.0
      %2231 = vmatprep.subr.mxu0 0.0
      %2232 = vmatpush1.xpose.msra.mxu0 0.0
      %2233 = vmatprep.subr.mxu0 0.0
      %2234 = vmatpush1.xpose.msra.mxu0 0.0
      %2235 = vmatprep.subr.mxu0 0.0
      %2236 = vmatpush1.xpose.msra.mxu0 0.0
      %2237 = vmatprep.subr.mxu0 0.0
      %2238 = vmatpush1.xpose.msra.mxu0 0.0
      %2239 = vmatprep.subr.mxu0 0.0
      %2240 = vmatpush1.xpose.msra.mxu0 0.0
      %2241 = vmatprep.subr.mxu0 0.0
      %2242 = vmatpush1.xpose.msra.mxu0 0.0
      %2243 = vmatprep.mubr.f32.mxu0 0.0
      %2244 = vmatmul.mubr.f32.gmra.mrb[0].mxu0 %v2131
      %v2245 = vpop.f32.mrb[0].mxu0
      %v2246 = vadd.f32 0.0, %v2245
      %v2247 = vpop.f32.mrb[0].mxu0
      %2248 = vmatprep.mubr.f32.mxu0 0.0
      %2249 = vmatmul.mubr.f32.gmra.mrb[0].mxu0 %v2133
      %v2250 = vpop.f32.mrb[0].mxu0
      %v2251 = vadd.f32 0.0, %v2250
      %v2252 = vpop.f32.mrb[0].mxu0
      %2253 = vmatprep.mubr.f32.mxu0 0.0
      %2254 = vmatmul.mubr.f32.gmra.mrb[0].mxu0 %v2135
      %v2255 = vpop.f32.mrb[0].mxu0
      %v2256 = vadd.f32 0.0, %v2255
      %v2257 = vpop.f32.mrb[0].mxu0
      %2258 = vmatprep.mubr.f32.mxu0 0.0
      %2259 = vmatmul.mubr.f32.gmra.mrb[0].mxu0 %v2137
      %v2260 = vpop.f32.mrb[0].mxu0
      %v2261 = vadd.f32 0.0, %v2260
      %v2262 = vpop.f32.mrb[0].mxu0
      %2263 = vmatprep.mubr.f32.mxu0 0.0
      %2264 = vmatmul.mubr.f32.gmra.mrb[0].mxu0 %v2139
      %v2265 = vpop.f32.mrb[0].mxu0
      %v2266 = vadd.f32 0.0, %v2265
      %v2267 = vpop.f32.mrb[0].mxu0
      %2268 = vmatprep.mubr.f32.mxu0 0.0
      %2269 = vmatmul.mubr.f32.gmra.mrb[0].mxu0 %v2141
      %v2270 = vpop.f32.mrb[0].mxu0
      %v2271 = vadd.f32 0.0, %v2270
      %v2272 = vpop.f32.mrb[0].mxu0
      %2273 = vmatprep.mubr.f32.mxu0 0.0
      %2274 = vmatmul.mubr.f32.gmra.mrb[0].mxu0 %v2143
      %v2275 = vpop.f32.mrb[0].mxu0
      %v2276 = vadd.f32 0.0, %v2275
      %v2277 = vpop.f32.mrb[0].mxu0
      %2278 = vmatprep.mubr.f32.mxu0 0.0
      %2279 = vmatmul.mubr.f32.gmra.mrb[0].mxu0 %v2145
      %v2280 = vpop.f32.mrb[0].mxu0
      %v2281 = vadd.f32 0.0, %v2280
      %v2282 = vpop.f32.mrb[0].mxu0
      %2283 = vmatprep.mubr.f32.mxu0 0.0
      %2284 = vmatmul.mubr.f32.gmra.mrb[0].mxu0 %v2147
      %v2285 = vpop.f32.mrb[0].mxu0
      %v2286 = vadd.f32 0.0, %v2285
      %v2287 = vpop.f32.mrb[0].mxu0
      %2288 = vmatprep.mubr.f32.mxu0 0.0
      %2289 = vmatmul.mubr.f32.gmra.mrb[0].mxu0 %v2149
      %v2290 = vpop.f32.mrb[0].mxu0
      %v2291 = vadd.f32 0.0, %v2290
      %v2292 = vpop.f32.mrb[0].mxu0
      %2293 = vmatprep.mubr.f32.mxu0 0.0
      %2294 = vmatmul.mubr.f32.gmra.mrb[0].mxu0 %v2151
      %v2295 = vpop.f32.mrb[0].mxu0
      %v2296 = vadd.f32 0.0, %v2295
      %v2297 = vpop.f32.mrb[0].mxu0
      %2298 = vmatprep.mubr.f32.mxu0 0.0
      %2299 = vmatmul.mubr.f32.gmra.mrb[0].mxu0 %v2153
      %v2300 = vpop.f32.mrb[0].mxu0
      %v2301 = vadd.f32 0.0, %v2300
      %v2302 = vpop.f32.mrb[0].mxu0
      %2303 = vdwg.mxu0
      %v2304 = vmul.f32 %v2246, 0.17677669
      %v2305 = vmul.f32 %v2251, 0.17677669
      %v2306 = vmul.f32 %v2256, 0.17677669
      %v2307 = vmul.f32 %v2261, 0.17677669
      %v2308 = vmul.f32 %v2266, 0.17677669
      %v2309 = vmul.f32 %v2271, 0.17677669
      %v2310 = vmul.f32 %v2276, 0.17677669
      %v2311 = vmul.f32 %v2281, 0.17677669
      %v2312 = vmul.f32 %v2286, 0.17677669
      %v2313 = vmul.f32 %v2291, 0.17677669
      %v2314 = vmul.f32 %v2296, 0.17677669
      %v2315 = vmul.f32 %v2301, 0.17677669
      %v2316 = vsel %vm1556, %v2304, -1e+30
      %v2317 = vsel %vm1557, %v2305, -1e+30
      %v2318 = vsel %vm1558, %v2306, -1e+30
      %v2319 = vsel %vm1559, %v2307, -1e+30
      %v2320 = vsel %vm1560, %v2308, -1e+30
      %v2321 = vsel %vm1561, %v2309, -1e+30
      %v2322 = vsel %vm1562, %v2310, -1e+30
      %v2323 = vsel %vm1563, %v2311, -1e+30
      %v2324 = vsel %vm1564, %v2312, -1e+30
      %v2325 = vsel %vm1565, %v2313, -1e+30
      %v2326 = vsel %vm1566, %v2314, -1e+30
      %v2327 = vsel %vm1567, %v2315, -1e+30
      %v2328 = vsel %vm1789, %v2316, -inf
      %2329 = vmax.xlane.f32.xlu0 %v2328
      %v2330 = vpop.xlane.xlu0 %2329
      %v2331 = vsel %vm1789, %v2317, -inf
      %2332 = vmax.xlane.f32.xlu0 %v2331
      %v2333 = vpop.xlane.xlu0 %2332
      %v2334 = vsel %vm1789, %v2318, -inf
      %2335 = vmax.xlane.f32.xlu0 %v2334
      %v2336 = vpop.xlane.xlu0 %2335
      %v2337 = vsel %vm1789, %v2319, -inf
      %2338 = vmax.xlane.f32.xlu0 %v2337
      %v2339 = vpop.xlane.xlu0 %2338
      %v2340 = vsel %vm1789, %v2320, -inf
      %2341 = vmax.xlane.f32.xlu0 %v2340
      %v2342 = vpop.xlane.xlu0 %2341
      %v2343 = vsel %vm1789, %v2321, -inf
      %2344 = vmax.xlane.f32.xlu0 %v2343
      %v2345 = vpop.xlane.xlu0 %2344
      %v2346 = vsel %vm1789, %v2322, -inf
      %2347 = vmax.xlane.f32.xlu0 %v2346
      %v2348 = vpop.xlane.xlu0 %2347
      %v2349 = vsel %vm1789, %v2323, -inf
      %2350 = vmax.xlane.f32.xlu0 %v2349
      %v2351 = vpop.xlane.xlu0 %2350
      %v2352 = vsel %vm1789, %v2324, -inf
      %2353 = vmax.xlane.f32.xlu0 %v2352
      %v2354 = vpop.xlane.xlu0 %2353
      %v2355 = vsel %vm1789, %v2325, -inf
      %2356 = vmax.xlane.f32.xlu0 %v2355
      %v2357 = vpop.xlane.xlu0 %2356
      %v2358 = vsel %vm1789, %v2326, -inf
      %2359 = vmax.xlane.f32.xlu0 %v2358
      %v2360 = vpop.xlane.xlu0 %2359
      %v2361 = vsel %vm1789, %v2327, -inf
      %2362 = vmax.xlane.f32.xlu0 %v2361
      %v2363 = vpop.xlane.xlu0 %2362
      %v2364 = vsub.f32 %v2316, %v2330
      %v2365 = vsub.f32 %v2317, %v2333
      %v2366 = vsub.f32 %v2318, %v2336
      %v2367 = vsub.f32 %v2319, %v2339
      %v2368 = vsub.f32 %v2320, %v2342
      %v2369 = vsub.f32 %v2321, %v2345
      %v2370 = vsub.f32 %v2322, %v2348
      %v2371 = vsub.f32 %v2323, %v2351
      %v2372 = vsub.f32 %v2324, %v2354
      %v2373 = vsub.f32 %v2325, %v2357
      %v2374 = vsub.f32 %v2326, %v2360
      %v2375 = vsub.f32 %v2327, %v2363
      %v2376 = vmul.f32 %v2364, 1.442695
      %v2377 = vpow.pop %v2376
      %v2378 = vmul.f32 %v2365, 1.442695
      %v2379 = vpow.pop %v2378
      %v2380 = vmul.f32 %v2366, 1.442695
      %v2381 = vpow.pop %v2380
      %v2382 = vmul.f32 %v2367, 1.442695
      %v2383 = vpow.pop %v2382
      %v2384 = vmul.f32 %v2368, 1.442695
      %v2385 = vpow.pop %v2384
      %v2386 = vmul.f32 %v2369, 1.442695
      %v2387 = vpow.pop %v2386
      %v2388 = vmul.f32 %v2370, 1.442695
      %v2389 = vpow.pop %v2388
      %v2390 = vmul.f32 %v2371, 1.442695
      %v2391 = vpow.pop %v2390
      %v2392 = vmul.f32 %v2372, 1.442695
      %v2393 = vpow.pop %v2392
      %v2394 = vmul.f32 %v2373, 1.442695
      %v2395 = vpow.pop %v2394
      %v2396 = vmul.f32 %v2374, 1.442695
      %v2397 = vpow.pop %v2396
      %v2398 = vmul.f32 %v2375, 1.442695
      %v2399 = vpow.pop %v2398
      %v2400 = vsel %vm1789, %v2377, 0.0
      %2401 = vadd.xlane.f32.xlu0 %v2400
      %v2402 = vpop.xlane.xlu0 %2401
      %v2403 = vsel %vm1789, %v2379, 0.0
      %2404 = vadd.xlane.f32.xlu0 %v2403
      %v2405 = vpop.xlane.xlu0 %2404
      %v2406 = vsel %vm1789, %v2381, 0.0
      %2407 = vadd.xlane.f32.xlu0 %v2406
      %v2408 = vpop.xlane.xlu0 %2407
      %v2409 = vsel %vm1789, %v2383, 0.0
      %2410 = vadd.xlane.f32.xlu0 %v2409
      %v2411 = vpop.xlane.xlu0 %2410
      %v2412 = vsel %vm1789, %v2385, 0.0
      %2413 = vadd.xlane.f32.xlu0 %v2412
      %v2414 = vpop.xlane.xlu0 %2413
      %v2415 = vsel %vm1789, %v2387, 0.0
      %2416 = vadd.xlane.f32.xlu0 %v2415
      %v2417 = vpop.xlane.xlu0 %2416
      %v2418 = vsel %vm1789, %v2389, 0.0
      %2419 = vadd.xlane.f32.xlu0 %v2418
      %v2420 = vpop.xlane.xlu0 %2419
      %v2421 = vsel %vm1789, %v2391, 0.0
      %2422 = vadd.xlane.f32.xlu0 %v2421
      %v2423 = vpop.xlane.xlu0 %2422
      %v2424 = vsel %vm1789, %v2393, 0.0
      %2425 = vadd.xlane.f32.xlu0 %v2424
      %v2426 = vpop.xlane.xlu0 %2425
      %v2427 = vsel %vm1789, %v2395, 0.0
      %2428 = vadd.xlane.f32.xlu0 %v2427
      %v2429 = vpop.xlane.xlu0 %2428
      %v2430 = vsel %vm1789, %v2397, 0.0
      %2431 = vadd.xlane.f32.xlu0 %v2430
      %v2432 = vpop.xlane.xlu0 %2431
      %v2433 = vsel %vm1789, %v2399, 0.0
      %2434 = vadd.xlane.f32.xlu0 %v2433
      %v2435 = vpop.xlane.xlu0 %2434
      %v2436 = vrcp.pop %v2402
      %v2437 = vmul.f32 %v2377, %v2436
      %v2438 = vrcp.pop %v2405
      %v2439 = vmul.f32 %v2379, %v2438
      %v2440 = vrcp.pop %v2408
      %v2441 = vmul.f32 %v2381, %v2440
      %v2442 = vrcp.pop %v2411
      %v2443 = vmul.f32 %v2383, %v2442
      %v2444 = vrcp.pop %v2414
      %v2445 = vmul.f32 %v2385, %v2444
      %v2446 = vrcp.pop %v2417
      %v2447 = vmul.f32 %v2387, %v2446
      %v2448 = vrcp.pop %v2420
      %v2449 = vmul.f32 %v2389, %v2448
      %v2450 = vrcp.pop %v2423
      %v2451 = vmul.f32 %v2391, %v2450
      %v2452 = vrcp.pop %v2426
      %v2453 = vmul.f32 %v2393, %v2452
      %v2454 = vrcp.pop %v2429
      %v2455 = vmul.f32 %v2395, %v2454
      %v2456 = vrcp.pop %v2432
      %v2457 = vmul.f32 %v2397, %v2456
      %v2458 = vrcp.pop %v2435
      %v2459 = vmul.f32 %v2399, %v2458
      %2472 = vrot.lane.b32.xlu0 %v1303, 96
      %v2473 = vpop.permute.xlu0 %2472
      %2474 = vrot.lane.b32.xlu0 %v1308, 96
      %v2475 = vpop.permute.xlu0 %2474
      %2476 = vrot.lane.b32.xlu0 %v1313, 96
      %v2477 = vpop.permute.xlu0 %2476
      %2478 = vrot.lane.b32.xlu0 %v1318, 96
      %v2479 = vpop.permute.xlu0 %2478
      %2480 = vrot.lane.b32.xlu0 %v1323, 96
      %v2481 = vpop.permute.xlu0 %2480
      %2482 = vrot.lane.b32.xlu0 %v1328, 96
      %v2483 = vpop.permute.xlu0 %2482
      %2484 = vrot.lane.b32.xlu0 %v1333, 96
      %v2485 = vpop.permute.xlu0 %2484
      %2486 = vrot.lane.b32.xlu0 %v1338, 96
      %v2487 = vpop.permute.xlu0 %2486
      %2488 = vrot.lane.b32.xlu0 %v1343, 96
      %v2489 = vpop.permute.xlu0 %2488
      %2490 = vrot.lane.b32.xlu0 %v1348, 96
      %v2491 = vpop.permute.xlu0 %2490
      %2492 = vrot.lane.b32.xlu0 %v1353, 96
      %v2493 = vpop.permute.xlu0 %2492
      %2494 = vrot.lane.b32.xlu0 %v1358, 96
      %v2495 = vpop.permute.xlu0 %2494
      %v2509 = vsel %vm1789, %v2437, 0
      %v2512 = vsel %vm1789, %v2439, 0
      %v2515 = vsel %vm1789, %v2441, 0
      %v2518 = vsel %vm1789, %v2443, 0
      %v2521 = vsel %vm1789, %v2445, 0
      %v2524 = vsel %vm1789, %v2447, 0
      %v2527 = vsel %vm1789, %v2449, 0
      %v2530 = vsel %vm1789, %v2451, 0
      %v2533 = vsel %vm1789, %v2453, 0
      %v2536 = vsel %vm1789, %v2455, 0
      %v2539 = vsel %vm1789, %v2457, 0
      %v2542 = vsel %vm1789, %v2459, 0
      %2544 = vmatprep.subr.mxu0 0.0
      %2545 = vmatpush1.msra.mxu0 %v2473
      %2546 = vmatprep.subr.mxu0 0.0
      %2547 = vmatpush1.msra.mxu0 %v2475
      %2548 = vmatprep.subr.mxu0 0.0
      %2549 = vmatpush1.msra.mxu0 %v2477
      %2550 = vmatprep.subr.mxu0 0.0
      %2551 = vmatpush1.msra.mxu0 %v2479
      %2552 = vmatprep.subr.mxu0 0.0
      %2553 = vmatpush1.msra.mxu0 %v2481
      %2554 = vmatprep.subr.mxu0 0.0
      %2555 = vmatpush1.msra.mxu0 %v2483
      %2556 = vmatprep.subr.mxu0 0.0
      %2557 = vmatpush1.msra.mxu0 %v2485
      %2558 = vmatprep.subr.mxu0 0.0
      %2559 = vmatpush1.msra.mxu0 %v2487
      %2560 = vmatprep.subr.mxu0 0.0
      %2561 = vmatpush1.msra.mxu0 %v2489
      %2562 = vmatprep.subr.mxu0 0.0
      %2563 = vmatpush1.msra.mxu0 %v2491
      %2564 = vmatprep.subr.mxu0 0.0
      %2565 = vmatpush1.msra.mxu0 %v2493
      %2566 = vmatprep.subr.mxu0 0.0
      %2567 = vmatpush1.msra.mxu0 %v2495
      %2568 = vmatprep.subr.mxu0 0.0
      %2569 = vmatpush1.msra.mxu0 0.0
      %2570 = vmatprep.subr.mxu0 0.0
      %2571 = vmatpush1.msra.mxu0 0.0
      %2572 = vmatprep.subr.mxu0 0.0
      %2573 = vmatpush1.msra.mxu0 0.0
      %2574 = vmatprep.subr.mxu0 0.0
      %2575 = vmatpush1.msra.mxu0 0.0
      %2576 = vmatprep.subr.mxu0 0.0
      %2577 = vmatpush1.msra.mxu0 0.0
      %2578 = vmatprep.subr.mxu0 0.0
      %2579 = vmatpush1.msra.mxu0 0.0
      %2580 = vmatprep.subr.mxu0 0.0
      %2581 = vmatpush1.msra.mxu0 0.0
      %2582 = vmatprep.subr.mxu0 0.0
      %2583 = vmatpush1.msra.mxu0 0.0
      %2584 = vmatprep.subr.mxu0 0.0
      %2585 = vmatpush1.msra.mxu0 0.0
      %2586 = vmatprep.subr.mxu0 0.0
      %2587 = vmatpush1.msra.mxu0 0.0
      %2588 = vmatprep.subr.mxu0 0.0
      %2589 = vmatpush1.msra.mxu0 0.0
      %2590 = vmatprep.subr.mxu0 0.0
      %2591 = vmatpush1.msra.mxu0 0.0
      %2592 = vmatprep.subr.mxu0 0.0
      %2593 = vmatpush1.msra.mxu0 0.0
      %2594 = vmatprep.subr.mxu0 0.0
      %2595 = vmatpush1.msra.mxu0 0.0
      %2596 = vmatprep.subr.mxu0 0.0
      %2597 = vmatpush1.msra.mxu0 0.0
      %2598 = vmatprep.subr.mxu0 0.0
      %2599 = vmatpush1.msra.mxu0 0.0
      %2600 = vmatprep.subr.mxu0 0.0
      %2601 = vmatpush1.msra.mxu0 0.0
      %2602 = vmatprep.subr.mxu0 0.0
      %2603 = vmatpush1.msra.mxu0 0.0
      %2604 = vmatprep.subr.mxu0 0.0
      %2605 = vmatpush1.msra.mxu0 0.0
      %2606 = vmatprep.subr.mxu0 0.0
      %2607 = vmatpush1.msra.mxu0 0.0
      %2608 = vmatprep.mubr.f32.mxu0 0.0
      %2609 = vmatmul.mubr.f32.gmra.mrb[0].mxu0 %v2509
      %v2610 = vpop.f32.mrb[0].mxu0
      %v2611 = vadd.f32 0.0, %v2610
      %v2612 = vpop.f32.mrb[0].mxu0
      %2613 = vmatprep.mubr.f32.mxu0 0.0
      %2614 = vmatmul.mubr.f32.gmra.mrb[0].mxu0 %v2512
      %v2615 = vpop.f32.mrb[0].mxu0
      %v2616 = vadd.f32 0.0, %v2615
      %v2617 = vpop.f32.mrb[0].mxu0
      %2618 = vmatprep.mubr.f32.mxu0 0.0
      %2619 = vmatmul.mubr.f32.gmra.mrb[0].mxu0 %v2515
      %v2620 = vpop.f32.mrb[0].mxu0
      %v2621 = vadd.f32 0.0, %v2620
      %v2622 = vpop.f32.mrb[0].mxu0
      %2623 = vmatprep.mubr.f32.mxu0 0.0
      %2624 = vmatmul.mubr.f32.gmra.mrb[0].mxu0 %v2518
      %v2625 = vpop.f32.mrb[0].mxu0
      %v2626 = vadd.f32 0.0, %v2625
      %v2627 = vpop.f32.mrb[0].mxu0
      %2628 = vmatprep.mubr.f32.mxu0 0.0
      %2629 = vmatmul.mubr.f32.gmra.mrb[0].mxu0 %v2521
      %v2630 = vpop.f32.mrb[0].mxu0
      %v2631 = vadd.f32 0.0, %v2630
      %v2632 = vpop.f32.mrb[0].mxu0
      %2633 = vmatprep.mubr.f32.mxu0 0.0
      %2634 = vmatmul.mubr.f32.gmra.mrb[0].mxu0 %v2524
      %v2635 = vpop.f32.mrb[0].mxu0
      %v2636 = vadd.f32 0.0, %v2635
      %v2637 = vpop.f32.mrb[0].mxu0
      %2638 = vmatprep.mubr.f32.mxu0 0.0
      %2639 = vmatmul.mubr.f32.gmra.mrb[0].mxu0 %v2527
      %v2640 = vpop.f32.mrb[0].mxu0
      %v2641 = vadd.f32 0.0, %v2640
      %v2642 = vpop.f32.mrb[0].mxu0
      %2643 = vmatprep.mubr.f32.mxu0 0.0
      %2644 = vmatmul.mubr.f32.gmra.mrb[0].mxu0 %v2530
      %v2645 = vpop.f32.mrb[0].mxu0
      %v2646 = vadd.f32 0.0, %v2645
      %v2647 = vpop.f32.mrb[0].mxu0
      %2648 = vmatprep.mubr.f32.mxu0 0.0
      %2649 = vmatmul.mubr.f32.gmra.mrb[0].mxu0 %v2533
      %v2650 = vpop.f32.mrb[0].mxu0
      %v2651 = vadd.f32 0.0, %v2650
      %v2652 = vpop.f32.mrb[0].mxu0
      %2653 = vmatprep.mubr.f32.mxu0 0.0
      %2654 = vmatmul.mubr.f32.gmra.mrb[0].mxu0 %v2536
      %v2655 = vpop.f32.mrb[0].mxu0
      %v2656 = vadd.f32 0.0, %v2655
      %v2657 = vpop.f32.mrb[0].mxu0
      %2658 = vmatprep.mubr.f32.mxu0 0.0
      %2659 = vmatmul.mubr.f32.gmra.mrb[0].mxu0 %v2539
      %v2660 = vpop.f32.mrb[0].mxu0
      %v2661 = vadd.f32 0.0, %v2660
      %v2662 = vpop.f32.mrb[0].mxu0
      %2663 = vmatprep.mubr.f32.mxu0 0.0
      %2664 = vmatmul.mubr.f32.gmra.mrb[0].mxu0 %v2542
      %v2665 = vpop.f32.mrb[0].mxu0
      %v2666 = vadd.f32 0.0, %v2665
      %v2667 = vpop.f32.mrb[0].mxu0
      %2668 = vdwg.mxu0
      %2669 = vrot.lane.b32.xlu0 %v1166, 64
      %v2670 = vpop.permute.xlu0 %2669
      %2671 = vrot.lane.b32.xlu0 %v1172, 64
      %v2672 = vpop.permute.xlu0 %2671
      %2673 = vrot.lane.b32.xlu0 %v1178, 64
      %v2674 = vpop.permute.xlu0 %2673
      %2675 = vrot.lane.b32.xlu0 %v1184, 64
      %v2676 = vpop.permute.xlu0 %2675
      %2677 = vrot.lane.b32.xlu0 %v1190, 64
      %v2678 = vpop.permute.xlu0 %2677
      %2679 = vrot.lane.b32.xlu0 %v1196, 64
      %v2680 = vpop.permute.xlu0 %2679
      %2681 = vrot.lane.b32.xlu0 %v1202, 64
      %v2682 = vpop.permute.xlu0 %2681
      %2683 = vrot.lane.b32.xlu0 %v1208, 64
      %v2684 = vpop.permute.xlu0 %2683
      %2685 = vrot.lane.b32.xlu0 %v1214, 64
      %v2686 = vpop.permute.xlu0 %2685
      %2687 = vrot.lane.b32.xlu0 %v1220, 64
      %v2688 = vpop.permute.xlu0 %2687
      %2689 = vrot.lane.b32.xlu0 %v1226, 64
      %v2690 = vpop.permute.xlu0 %2689
      %2691 = vrot.lane.b32.xlu0 %v1232, 64
      %v2692 = vpop.permute.xlu0 %2691
      %2693 = vrot.lane.b32.xlu0 %v1168, 64
      %v2694 = vpop.permute.xlu0 %2693
      %2695 = vrot.lane.b32.xlu0 %v1174, 64
      %v2696 = vpop.permute.xlu0 %2695
      %2697 = vrot.lane.b32.xlu0 %v1180, 64
      %v2698 = vpop.permute.xlu0 %2697
      %2699 = vrot.lane.b32.xlu0 %v1186, 64
      %v2700 = vpop.permute.xlu0 %2699
      %2701 = vrot.lane.b32.xlu0 %v1192, 64
      %v2702 = vpop.permute.xlu0 %2701
      %2703 = vrot.lane.b32.xlu0 %v1198, 64
      %v2704 = vpop.permute.xlu0 %2703
      %2705 = vrot.lane.b32.xlu0 %v1204, 64
      %v2706 = vpop.permute.xlu0 %2705
      %2707 = vrot.lane.b32.xlu0 %v1210, 64
      %v2708 = vpop.permute.xlu0 %2707
      %2709 = vrot.lane.b32.xlu0 %v1216, 64
      %v2710 = vpop.permute.xlu0 %2709
      %2711 = vrot.lane.b32.xlu0 %v1222, 64
      %v2712 = vpop.permute.xlu0 %2711
      %2713 = vrot.lane.b32.xlu0 %v1228, 64
      %v2714 = vpop.permute.xlu0 %2713
      %2715 = vrot.lane.b32.xlu0 %v1234, 64
      %v2716 = vpop.permute.xlu0 %2715
      %v2717 = vsel %vm1062, %v2670, 0
      %v2719 = vsel %vm1062, %v2672, 0
      %v2721 = vsel %vm1062, %v2674, 0
      %v2723 = vsel %vm1062, %v2676, 0
      %v2725 = vsel %vm1062, %v2678, 0
      %v2727 = vsel %vm1062, %v2680, 0
      %v2729 = vsel %vm1062, %v2682, 0
      %v2731 = vsel %vm1062, %v2684, 0
      %v2733 = vsel %vm1062, %v2686, 0
      %v2735 = vsel %vm1062, %v2688, 0
      %v2737 = vsel %vm1062, %v2690, 0
      %v2739 = vsel %vm1062, %v2692, 0
      %v2741 = vsel %vm1062, %v2694, 0
      %v2743 = vsel %vm1062, %v2696, 0
      %v2745 = vsel %vm1062, %v2698, 0
      %v2747 = vsel %vm1062, %v2700, 0
      %v2749 = vsel %vm1062, %v2702, 0
      %v2751 = vsel %vm1062, %v2704, 0
      %v2753 = vsel %vm1062, %v2706, 0
      %v2755 = vsel %vm1062, %v2708, 0
      %v2757 = vsel %vm1062, %v2710, 0
      %v2759 = vsel %vm1062, %v2712, 0
      %v2761 = vsel %vm1062, %v2714, 0
      %v2763 = vsel %vm1062, %v2716, 0
      %2765 = vmatprep.subr.mxu0 0.0
      %2766 = vmatpush1.xpose.msra.mxu0 %v2741
      %2767 = vmatprep.subr.mxu0 0.0
      %2768 = vmatpush1.xpose.msra.mxu0 %v2743
      %2769 = vmatprep.subr.mxu0 0.0
      %2770 = vmatpush1.xpose.msra.mxu0 %v2745
      %2771 = vmatprep.subr.mxu0 0.0
      %2772 = vmatpush1.xpose.msra.mxu0 %v2747
      %2773 = vmatprep.subr.mxu0 0.0
      %2774 = vmatpush1.xpose.msra.mxu0 %v2749
      %2775 = vmatprep.subr.mxu0 0.0
      %2776 = vmatpush1.xpose.msra.mxu0 %v2751
      %2777 = vmatprep.subr.mxu0 0.0
      %2778 = vmatpush1.xpose.msra.mxu0 %v2753
      %2779 = vmatprep.subr.mxu0 0.0
      %2780 = vmatpush1.xpose.msra.mxu0 %v2755
      %2781 = vmatprep.subr.mxu0 0.0
      %2782 = vmatpush1.xpose.msra.mxu0 %v2757
      %2783 = vmatprep.subr.mxu0 0.0
      %2784 = vmatpush1.xpose.msra.mxu0 %v2759
      %2785 = vmatprep.subr.mxu0 0.0
      %2786 = vmatpush1.xpose.msra.mxu0 %v2761
      %2787 = vmatprep.subr.mxu0 0.0
      %2788 = vmatpush1.xpose.msra.mxu0 %v2763
      %2789 = vmatprep.subr.mxu0 0.0
      %2790 = vmatpush1.xpose.msra.mxu0 0.0
      %2791 = vmatprep.subr.mxu0 0.0
      %2792 = vmatpush1.xpose.msra.mxu0 0.0
      %2793 = vmatprep.subr.mxu0 0.0
      %2794 = vmatpush1.xpose.msra.mxu0 0.0
      %2795 = vmatprep.subr.mxu0 0.0
      %2796 = vmatpush1.xpose.msra.mxu0 0.0
      %2797 = vmatprep.subr.mxu0 0.0
      %2798 = vmatpush1.xpose.msra.mxu0 0.0
      %2799 = vmatprep.subr.mxu0 0.0
      %2800 = vmatpush1.xpose.msra.mxu0 0.0
      %2801 = vmatprep.subr.mxu0 0.0
      %2802 = vmatpush1.xpose.msra.mxu0 0.0
      %2803 = vmatprep.subr.mxu0 0.0
      %2804 = vmatpush1.xpose.msra.mxu0 0.0
      %2805 = vmatprep.subr.mxu0 0.0
      %2806 = vmatpush1.xpose.msra.mxu0 0.0
      %2807 = vmatprep.subr.mxu0 0.0
      %2808 = vmatpush1.xpose.msra.mxu0 0.0
      %2809 = vmatprep.subr.mxu0 0.0
      %2810 = vmatpush1.xpose.msra.mxu0 0.0
      %2811 = vmatprep.subr.mxu0 0.0
      %2812 = vmatpush1.xpose.msra.mxu0 0.0
      %2813 = vmatprep.subr.mxu0 0.0
      %2814 = vmatpush1.xpose.msra.mxu0 0.0
      %2815 = vmatprep.subr.mxu0 0.0
      %2816 = vmatpush1.xpose.msra.mxu0 0.0
      %2817 = vmatprep.subr.mxu0 0.0
      %2818 = vmatpush1.xpose.msra.mxu0 0.0
      %2819 = vmatprep.subr.mxu0 0.0
      %2820 = vmatpush1.xpose.msra.mxu0 0.0
      %2821 = vmatprep.subr.mxu0 0.0
      %2822 = vmatpush1.xpose.msra.mxu0 0.0
      %2823 = vmatprep.subr.mxu0 0.0
      %2824 = vmatpush1.xpose.msra.mxu0 0.0
      %2825 = vmatprep.subr.mxu0 0.0
      %2826 = vmatpush1.xpose.msra.mxu0 0.0
      %2827 = vmatprep.subr.mxu0 0.0
      %2828 = vmatpush1.xpose.msra.mxu0 0.0
      %2829 = vmatprep.mubr.f32.mxu0 0.0
      %2830 = vmatmul.mubr.f32.gmra.mrb[0].mxu0 %v2717
      %v2831 = vpop.f32.mrb[0].mxu0
      %v2832 = vadd.f32 0.0, %v2831
      %v2833 = vpop.f32.mrb[0].mxu0
      %2834 = vmatprep.mubr.f32.mxu0 0.0
      %2835 = vmatmul.mubr.f32.gmra.mrb[0].mxu0 %v2719
      %v2836 = vpop.f32.mrb[0].mxu0
      %v2837 = vadd.f32 0.0, %v2836
      %v2838 = vpop.f32.mrb[0].mxu0
      %2839 = vmatprep.mubr.f32.mxu0 0.0
      %2840 = vmatmul.mubr.f32.gmra.mrb[0].mxu0 %v2721
      %v2841 = vpop.f32.mrb[0].mxu0
      %v2842 = vadd.f32 0.0, %v2841
      %v2843 = vpop.f32.mrb[0].mxu0
      %2844 = vmatprep.mubr.f32.mxu0 0.0
      %2845 = vmatmul.mubr.f32.gmra.mrb[0].mxu0 %v2723
      %v2846 = vpop.f32.mrb[0].mxu0
      %v2847 = vadd.f32 0.0, %v2846
      %v2848 = vpop.f32.mrb[0].mxu0
      %2849 = vmatprep.mubr.f32.mxu0 0.0
      %2850 = vmatmul.mubr.f32.gmra.mrb[0].mxu0 %v2725
      %v2851 = vpop.f32.mrb[0].mxu0
      %v2852 = vadd.f32 0.0, %v2851
      %v2853 = vpop.f32.mrb[0].mxu0
      %2854 = vmatprep.mubr.f32.mxu0 0.0
      %2855 = vmatmul.mubr.f32.gmra.mrb[0].mxu0 %v2727
      %v2856 = vpop.f32.mrb[0].mxu0
      %v2857 = vadd.f32 0.0, %v2856
      %v2858 = vpop.f32.mrb[0].mxu0
      %2859 = vmatprep.mubr.f32.mxu0 0.0
      %2860 = vmatmul.mubr.f32.gmra.mrb[0].mxu0 %v2729
      %v2861 = vpop.f32.mrb[0].mxu0
      %v2862 = vadd.f32 0.0, %v2861
      %v2863 = vpop.f32.mrb[0].mxu0
      %2864 = vmatprep.mubr.f32.mxu0 0.0
      %2865 = vmatmul.mubr.f32.gmra.mrb[0].mxu0 %v2731
      %v2866 = vpop.f32.mrb[0].mxu0
      %v2867 = vadd.f32 0.0, %v2866
      %v2868 = vpop.f32.mrb[0].mxu0
      %2869 = vmatprep.mubr.f32.mxu0 0.0
      %2870 = vmatmul.mubr.f32.gmra.mrb[0].mxu0 %v2733
      %v2871 = vpop.f32.mrb[0].mxu0
      %v2872 = vadd.f32 0.0, %v2871
      %v2873 = vpop.f32.mrb[0].mxu0
      %2874 = vmatprep.mubr.f32.mxu0 0.0
      %2875 = vmatmul.mubr.f32.gmra.mrb[0].mxu0 %v2735
      %v2876 = vpop.f32.mrb[0].mxu0
      %v2877 = vadd.f32 0.0, %v2876
      %v2878 = vpop.f32.mrb[0].mxu0
      %2879 = vmatprep.mubr.f32.mxu0 0.0
      %2880 = vmatmul.mubr.f32.gmra.mrb[0].mxu0 %v2737
      %v2881 = vpop.f32.mrb[0].mxu0
      %v2882 = vadd.f32 0.0, %v2881
      %v2883 = vpop.f32.mrb[0].mxu0
      %2884 = vmatprep.mubr.f32.mxu0 0.0
      %2885 = vmatmul.mubr.f32.gmra.mrb[0].mxu0 %v2739
      %v2886 = vpop.f32.mrb[0].mxu0
      %v2887 = vadd.f32 0.0, %v2886
      %v2888 = vpop.f32.mrb[0].mxu0
      %2889 = vdwg.mxu0
      %v2890 = vmul.f32 %v2832, 0.17677669
      %v2891 = vmul.f32 %v2837, 0.17677669
      %v2892 = vmul.f32 %v2842, 0.17677669
      %v2893 = vmul.f32 %v2847, 0.17677669
      %v2894 = vmul.f32 %v2852, 0.17677669
      %v2895 = vmul.f32 %v2857, 0.17677669
      %v2896 = vmul.f32 %v2862, 0.17677669
      %v2897 = vmul.f32 %v2867, 0.17677669
      %v2898 = vmul.f32 %v2872, 0.17677669
      %v2899 = vmul.f32 %v2877, 0.17677669
      %v2900 = vmul.f32 %v2882, 0.17677669
      %v2901 = vmul.f32 %v2887, 0.17677669
      %v2902 = vsel %vm1556, %v2890, -1e+30
      %v2903 = vsel %vm1557, %v2891, -1e+30
      %v2904 = vsel %vm1558, %v2892, -1e+30
      %v2905 = vsel %vm1559, %v2893, -1e+30
      %v2906 = vsel %vm1560, %v2894, -1e+30
      %v2907 = vsel %vm1561, %v2895, -1e+30
      %v2908 = vsel %vm1562, %v2896, -1e+30
      %v2909 = vsel %vm1563, %v2897, -1e+30
      %v2910 = vsel %vm1564, %v2898, -1e+30
      %v2911 = vsel %vm1565, %v2899, -1e+30
      %v2912 = vsel %vm1566, %v2900, -1e+30
      %v2913 = vsel %vm1567, %v2901, -1e+30
      %v2914 = vsel %vm1789, %v2902, -inf
      %2915 = vmax.xlane.f32.xlu0 %v2914
      %v2916 = vpop.xlane.xlu0 %2915
      %v2917 = vsel %vm1789, %v2903, -inf
      %2918 = vmax.xlane.f32.xlu0 %v2917
      %v2919 = vpop.xlane.xlu0 %2918
      %v2920 = vsel %vm1789, %v2904, -inf
      %2921 = vmax.xlane.f32.xlu0 %v2920
      %v2922 = vpop.xlane.xlu0 %2921
      %v2923 = vsel %vm1789, %v2905, -inf
      %2924 = vmax.xlane.f32.xlu0 %v2923
      %v2925 = vpop.xlane.xlu0 %2924
      %v2926 = vsel %vm1789, %v2906, -inf
      %2927 = vmax.xlane.f32.xlu0 %v2926
      %v2928 = vpop.xlane.xlu0 %2927
      %v2929 = vsel %vm1789, %v2907, -inf
      %2930 = vmax.xlane.f32.xlu0 %v2929
      %v2931 = vpop.xlane.xlu0 %2930
      %v2932 = vsel %vm1789, %v2908, -inf
      %2933 = vmax.xlane.f32.xlu0 %v2932
      %v2934 = vpop.xlane.xlu0 %2933
      %v2935 = vsel %vm1789, %v2909, -inf
      %2936 = vmax.xlane.f32.xlu0 %v2935
      %v2937 = vpop.xlane.xlu0 %2936
      %v2938 = vsel %vm1789, %v2910, -inf
      %2939 = vmax.xlane.f32.xlu0 %v2938
      %v2940 = vpop.xlane.xlu0 %2939
      %v2941 = vsel %vm1789, %v2911, -inf
      %2942 = vmax.xlane.f32.xlu0 %v2941
      %v2943 = vpop.xlane.xlu0 %2942
      %v2944 = vsel %vm1789, %v2912, -inf
      %2945 = vmax.xlane.f32.xlu0 %v2944
      %v2946 = vpop.xlane.xlu0 %2945
      %v2947 = vsel %vm1789, %v2913, -inf
      %2948 = vmax.xlane.f32.xlu0 %v2947
      %v2949 = vpop.xlane.xlu0 %2948
      %v2950 = vsub.f32 %v2902, %v2916
      %v2951 = vsub.f32 %v2903, %v2919
      %v2952 = vsub.f32 %v2904, %v2922
      %v2953 = vsub.f32 %v2905, %v2925
      %v2954 = vsub.f32 %v2906, %v2928
      %v2955 = vsub.f32 %v2907, %v2931
      %v2956 = vsub.f32 %v2908, %v2934
      %v2957 = vsub.f32 %v2909, %v2937
      %v2958 = vsub.f32 %v2910, %v2940
      %v2959 = vsub.f32 %v2911, %v2943
      %v2960 = vsub.f32 %v2912, %v2946
      %v2961 = vsub.f32 %v2913, %v2949
      %v2962 = vmul.f32 %v2950, 1.442695
      %v2963 = vpow.pop %v2962
      %v2964 = vmul.f32 %v2951, 1.442695
      %v2965 = vpow.pop %v2964
      %v2966 = vmul.f32 %v2952, 1.442695
      %v2967 = vpow.pop %v2966
      %v2968 = vmul.f32 %v2953, 1.442695
      %v2969 = vpow.pop %v2968
      %v2970 = vmul.f32 %v2954, 1.442695
      %v2971 = vpow.pop %v2970
      %v2972 = vmul.f32 %v2955, 1.442695
      %v2973 = vpow.pop %v2972
      %v2974 = vmul.f32 %v2956, 1.442695
      %v2975 = vpow.pop %v2974
      %v2976 = vmul.f32 %v2957, 1.442695
      %v2977 = vpow.pop %v2976
      %v2978 = vmul.f32 %v2958, 1.442695
      %v2979 = vpow.pop %v2978
      %v2980 = vmul.f32 %v2959, 1.442695
      %v2981 = vpow.pop %v2980
      %v2982 = vmul.f32 %v2960, 1.442695
      %v2983 = vpow.pop %v2982
      %v2984 = vmul.f32 %v2961, 1.442695
      %v2985 = vpow.pop %v2984
      %v2986 = vsel %vm1789, %v2963, 0.0
      %2987 = vadd.xlane.f32.xlu0 %v2986
      %v2988 = vpop.xlane.xlu0 %2987
      %v2989 = vsel %vm1789, %v2965, 0.0
      %2990 = vadd.xlane.f32.xlu0 %v2989
      %v2991 = vpop.xlane.xlu0 %2990
      %v2992 = vsel %vm1789, %v2967, 0.0
      %2993 = vadd.xlane.f32.xlu0 %v2992
      %v2994 = vpop.xlane.xlu0 %2993
      %v2995 = vsel %vm1789, %v2969, 0.0
      %2996 = vadd.xlane.f32.xlu0 %v2995
      %v2997 = vpop.xlane.xlu0 %2996
      %v2998 = vsel %vm1789, %v2971, 0.0
      %2999 = vadd.xlane.f32.xlu0 %v2998
      %v3000 = vpop.xlane.xlu0 %2999
      %v3001 = vsel %vm1789, %v2973, 0.0
      %3002 = vadd.xlane.f32.xlu0 %v3001
      %v3003 = vpop.xlane.xlu0 %3002
      %v3004 = vsel %vm1789, %v2975, 0.0
      %3005 = vadd.xlane.f32.xlu0 %v3004
      %v3006 = vpop.xlane.xlu0 %3005
      %v3007 = vsel %vm1789, %v2977, 0.0
      %3008 = vadd.xlane.f32.xlu0 %v3007
      %v3009 = vpop.xlane.xlu0 %3008
      %v3010 = vsel %vm1789, %v2979, 0.0
      %3011 = vadd.xlane.f32.xlu0 %v3010
      %v3012 = vpop.xlane.xlu0 %3011
      %v3013 = vsel %vm1789, %v2981, 0.0
      %3014 = vadd.xlane.f32.xlu0 %v3013
      %v3015 = vpop.xlane.xlu0 %3014
      %v3016 = vsel %vm1789, %v2983, 0.0
      %3017 = vadd.xlane.f32.xlu0 %v3016
      %v3018 = vpop.xlane.xlu0 %3017
      %v3019 = vsel %vm1789, %v2985, 0.0
      %3020 = vadd.xlane.f32.xlu0 %v3019
      %v3021 = vpop.xlane.xlu0 %3020
      %v3022 = vrcp.pop %v2988
      %v3023 = vmul.f32 %v2963, %v3022
      %v3024 = vrcp.pop %v2991
      %v3025 = vmul.f32 %v2965, %v3024
      %v3026 = vrcp.pop %v2994
      %v3027 = vmul.f32 %v2967, %v3026
      %v3028 = vrcp.pop %v2997
      %v3029 = vmul.f32 %v2969, %v3028
      %v3030 = vrcp.pop %v3000
      %v3031 = vmul.f32 %v2971, %v3030
      %v3032 = vrcp.pop %v3003
      %v3033 = vmul.f32 %v2973, %v3032
      %v3034 = vrcp.pop %v3006
      %v3035 = vmul.f32 %v2975, %v3034
      %v3036 = vrcp.pop %v3009
      %v3037 = vmul.f32 %v2977, %v3036
      %v3038 = vrcp.pop %v3012
      %v3039 = vmul.f32 %v2979, %v3038
      %v3040 = vrcp.pop %v3015
      %v3041 = vmul.f32 %v2981, %v3040
      %v3042 = vrcp.pop %v3018
      %v3043 = vmul.f32 %v2983, %v3042
      %v3044 = vrcp.pop %v3021
      %v3045 = vmul.f32 %v2985, %v3044
      %3046 = vrot.lane.b32.xlu0 %v1303, 64
      %v3047 = vpop.permute.xlu0 %3046
      %3048 = vrot.lane.b32.xlu0 %v1308, 64
      %v3049 = vpop.permute.xlu0 %3048
      %3050 = vrot.lane.b32.xlu0 %v1313, 64
      %v3051 = vpop.permute.xlu0 %3050
      %3052 = vrot.lane.b32.xlu0 %v1318, 64
      %v3053 = vpop.permute.xlu0 %3052
      %3054 = vrot.lane.b32.xlu0 %v1323, 64
      %v3055 = vpop.permute.xlu0 %3054
      %3056 = vrot.lane.b32.xlu0 %v1328, 64
      %v3057 = vpop.permute.xlu0 %3056
      %3058 = vrot.lane.b32.xlu0 %v1333, 64
      %v3059 = vpop.permute.xlu0 %3058
      %3060 = vrot.lane.b32.xlu0 %v1338, 64
      %v3061 = vpop.permute.xlu0 %3060
      %3062 = vrot.lane.b32.xlu0 %v1343, 64
      %v3063 = vpop.permute.xlu0 %3062
      %3064 = vrot.lane.b32.xlu0 %v1348, 64
      %v3065 = vpop.permute.xlu0 %3064
      %3066 = vrot.lane.b32.xlu0 %v1353, 64
      %v3067 = vpop.permute.xlu0 %3066
      %3068 = vrot.lane.b32.xlu0 %v1358, 64
      %v3069 = vpop.permute.xlu0 %3068
      %v3083 = vsel %vm1789, %v3023, 0
      %v3086 = vsel %vm1789, %v3025, 0
      %v3089 = vsel %vm1789, %v3027, 0
      %v3092 = vsel %vm1789, %v3029, 0
      %v3095 = vsel %vm1789, %v3031, 0
      %v3098 = vsel %vm1789, %v3033, 0
      %v3101 = vsel %vm1789, %v3035, 0
      %v3104 = vsel %vm1789, %v3037, 0
      %v3107 = vsel %vm1789, %v3039, 0
      %v3110 = vsel %vm1789, %v3041, 0
      %v3113 = vsel %vm1789, %v3043, 0
      %v3116 = vsel %vm1789, %v3045, 0
      %3118 = vmatprep.subr.mxu0 0.0
      %3119 = vmatpush1.msra.mxu0 %v3047
      %3120 = vmatprep.subr.mxu0 0.0
      %3121 = vmatpush1.msra.mxu0 %v3049
      %3122 = vmatprep.subr.mxu0 0.0
      %3123 = vmatpush1.msra.mxu0 %v3051
      %3124 = vmatprep.subr.mxu0 0.0
      %3125 = vmatpush1.msra.mxu0 %v3053
      %3126 = vmatprep.subr.mxu0 0.0
      %3127 = vmatpush1.msra.mxu0 %v3055
      %3128 = vmatprep.subr.mxu0 0.0
      %3129 = vmatpush1.msra.mxu0 %v3057
      %3130 = vmatprep.subr.mxu0 0.0
      %3131 = vmatpush1.msra.mxu0 %v3059
      %3132 = vmatprep.subr.mxu0 0.0
      %3133 = vmatpush1.msra.mxu0 %v3061
      %3134 = vmatprep.subr.mxu0 0.0
      %3135 = vmatpush1.msra.mxu0 %v3063
      %3136 = vmatprep.subr.mxu0 0.0
      %3137 = vmatpush1.msra.mxu0 %v3065
      %3138 = vmatprep.subr.mxu0 0.0
      %3139 = vmatpush1.msra.mxu0 %v3067
      %3140 = vmatprep.subr.mxu0 0.0
      %3141 = vmatpush1.msra.mxu0 %v3069
      %3142 = vmatprep.subr.mxu0 0.0
      %3143 = vmatpush1.msra.mxu0 0.0
      %3144 = vmatprep.subr.mxu0 0.0
      %3145 = vmatpush1.msra.mxu0 0.0
      %3146 = vmatprep.subr.mxu0 0.0
      %3147 = vmatpush1.msra.mxu0 0.0
      %3148 = vmatprep.subr.mxu0 0.0
      %3149 = vmatpush1.msra.mxu0 0.0
      %3150 = vmatprep.subr.mxu0 0.0
      %3151 = vmatpush1.msra.mxu0 0.0
      %3152 = vmatprep.subr.mxu0 0.0
      %3153 = vmatpush1.msra.mxu0 0.0
      %3154 = vmatprep.subr.mxu0 0.0
      %3155 = vmatpush1.msra.mxu0 0.0
      %3156 = vmatprep.subr.mxu0 0.0
      %3157 = vmatpush1.msra.mxu0 0.0
      %3158 = vmatprep.subr.mxu0 0.0
      %3159 = vmatpush1.msra.mxu0 0.0
      %3160 = vmatprep.subr.mxu0 0.0
      %3161 = vmatpush1.msra.mxu0 0.0
      %3162 = vmatprep.subr.mxu0 0.0
      %3163 = vmatpush1.msra.mxu0 0.0
      %3164 = vmatprep.subr.mxu0 0.0
      %3165 = vmatpush1.msra.mxu0 0.0
      %3166 = vmatprep.subr.mxu0 0.0
      %3167 = vmatpush1.msra.mxu0 0.0
      %3168 = vmatprep.subr.mxu0 0.0
      %3169 = vmatpush1.msra.mxu0 0.0
      %3170 = vmatprep.subr.mxu0 0.0
      %3171 = vmatpush1.msra.mxu0 0.0
      %3172 = vmatprep.subr.mxu0 0.0
      %3173 = vmatpush1.msra.mxu0 0.0
      %3174 = vmatprep.subr.mxu0 0.0
      %3175 = vmatpush1.msra.mxu0 0.0
      %3176 = vmatprep.subr.mxu0 0.0
      %3177 = vmatpush1.msra.mxu0 0.0
      %3178 = vmatprep.subr.mxu0 0.0
      %3179 = vmatpush1.msra.mxu0 0.0
      %3180 = vmatprep.subr.mxu0 0.0
      %3181 = vmatpush1.msra.mxu0 0.0
      %3182 = vmatprep.mubr.f32.mxu0 0.0
      %3183 = vmatmul.mubr.f32.gmra.mrb[0].mxu0 %v3083
      %v3184 = vpop.f32.mrb[0].mxu0
      %v3185 = vadd.f32 0.0, %v3184
      %v3186 = vpop.f32.mrb[0].mxu0
      %3187 = vmatprep.mubr.f32.mxu0 0.0
      %3188 = vmatmul.mubr.f32.gmra.mrb[0].mxu0 %v3086
      %v3189 = vpop.f32.mrb[0].mxu0
      %v3190 = vadd.f32 0.0, %v3189
      %v3191 = vpop.f32.mrb[0].mxu0
      %3192 = vmatprep.mubr.f32.mxu0 0.0
      %3193 = vmatmul.mubr.f32.gmra.mrb[0].mxu0 %v3089
      %v3194 = vpop.f32.mrb[0].mxu0
      %v3195 = vadd.f32 0.0, %v3194
      %v3196 = vpop.f32.mrb[0].mxu0
      %3197 = vmatprep.mubr.f32.mxu0 0.0
      %3198 = vmatmul.mubr.f32.gmra.mrb[0].mxu0 %v3092
      %v3199 = vpop.f32.mrb[0].mxu0
      %v3200 = vadd.f32 0.0, %v3199
      %v3201 = vpop.f32.mrb[0].mxu0
      %3202 = vmatprep.mubr.f32.mxu0 0.0
      %3203 = vmatmul.mubr.f32.gmra.mrb[0].mxu0 %v3095
      %v3204 = vpop.f32.mrb[0].mxu0
      %v3205 = vadd.f32 0.0, %v3204
      %v3206 = vpop.f32.mrb[0].mxu0
      %3207 = vmatprep.mubr.f32.mxu0 0.0
      %3208 = vmatmul.mubr.f32.gmra.mrb[0].mxu0 %v3098
      %v3209 = vpop.f32.mrb[0].mxu0
      %v3210 = vadd.f32 0.0, %v3209
      %v3211 = vpop.f32.mrb[0].mxu0
      %3212 = vmatprep.mubr.f32.mxu0 0.0
      %3213 = vmatmul.mubr.f32.gmra.mrb[0].mxu0 %v3101
      %v3214 = vpop.f32.mrb[0].mxu0
      %v3215 = vadd.f32 0.0, %v3214
      %v3216 = vpop.f32.mrb[0].mxu0
      %3217 = vmatprep.mubr.f32.mxu0 0.0
      %3218 = vmatmul.mubr.f32.gmra.mrb[0].mxu0 %v3104
      %v3219 = vpop.f32.mrb[0].mxu0
      %v3220 = vadd.f32 0.0, %v3219
      %v3221 = vpop.f32.mrb[0].mxu0
      %3222 = vmatprep.mubr.f32.mxu0 0.0
      %3223 = vmatmul.mubr.f32.gmra.mrb[0].mxu0 %v3107
      %v3224 = vpop.f32.mrb[0].mxu0
      %v3225 = vadd.f32 0.0, %v3224
      %v3226 = vpop.f32.mrb[0].mxu0
      %3227 = vmatprep.mubr.f32.mxu0 0.0
      %3228 = vmatmul.mubr.f32.gmra.mrb[0].mxu0 %v3110
      %v3229 = vpop.f32.mrb[0].mxu0
      %v3230 = vadd.f32 0.0, %v3229
      %v3231 = vpop.f32.mrb[0].mxu0
      %3232 = vmatprep.mubr.f32.mxu0 0.0
      %3233 = vmatmul.mubr.f32.gmra.mrb[0].mxu0 %v3113
      %v3234 = vpop.f32.mrb[0].mxu0
      %v3235 = vadd.f32 0.0, %v3234
      %v3236 = vpop.f32.mrb[0].mxu0
      %3237 = vmatprep.mubr.f32.mxu0 0.0
      %3238 = vmatmul.mubr.f32.gmra.mrb[0].mxu0 %v3116
      %v3239 = vpop.f32.mrb[0].mxu0
      %v3240 = vadd.f32 0.0, %v3239
      %v3241 = vpop.f32.mrb[0].mxu0
      %3242 = vdwg.mxu0
      %3243 = vrot.lane.b32.xlu0 %v1166, 32
      %v3244 = vpop.permute.xlu0 %3243
      %3245 = vrot.lane.b32.xlu0 %v1172, 32
      %v3246 = vpop.permute.xlu0 %3245
      %3247 = vrot.lane.b32.xlu0 %v1178, 32
      %v3248 = vpop.permute.xlu0 %3247
      %3249 = vrot.lane.b32.xlu0 %v1184, 32
      %v3250 = vpop.permute.xlu0 %3249
      %3251 = vrot.lane.b32.xlu0 %v1190, 32
      %v3252 = vpop.permute.xlu0 %3251
      %3253 = vrot.lane.b32.xlu0 %v1196, 32
      %v3254 = vpop.permute.xlu0 %3253
      %3255 = vrot.lane.b32.xlu0 %v1202, 32
      %v3256 = vpop.permute.xlu0 %3255
      %3257 = vrot.lane.b32.xlu0 %v1208, 32
      %v3258 = vpop.permute.xlu0 %3257
      %3259 = vrot.lane.b32.xlu0 %v1214, 32
      %v3260 = vpop.permute.xlu0 %3259
      %3261 = vrot.lane.b32.xlu0 %v1220, 32
      %v3262 = vpop.permute.xlu0 %3261
      %3263 = vrot.lane.b32.xlu0 %v1226, 32
      %v3264 = vpop.permute.xlu0 %3263
      %3265 = vrot.lane.b32.xlu0 %v1232, 32
      %v3266 = vpop.permute.xlu0 %3265
      %3267 = vrot.lane.b32.xlu0 %v1168, 32
      %v3268 = vpop.permute.xlu0 %3267
      %3269 = vrot.lane.b32.xlu0 %v1174, 32
      %v3270 = vpop.permute.xlu0 %3269
      %3271 = vrot.lane.b32.xlu0 %v1180, 32
      %v3272 = vpop.permute.xlu0 %3271
      %3273 = vrot.lane.b32.xlu0 %v1186, 32
      %v3274 = vpop.permute.xlu0 %3273
      %3275 = vrot.lane.b32.xlu0 %v1192, 32
      %v3276 = vpop.permute.xlu0 %3275
      %3277 = vrot.lane.b32.xlu0 %v1198, 32
      %v3278 = vpop.permute.xlu0 %3277
      %3279 = vrot.lane.b32.xlu0 %v1204, 32
      %v3280 = vpop.permute.xlu0 %3279
      %3281 = vrot.lane.b32.xlu0 %v1210, 32
      %v3282 = vpop.permute.xlu0 %3281
      %3283 = vrot.lane.b32.xlu0 %v1216, 32
      %v3284 = vpop.permute.xlu0 %3283
      %3285 = vrot.lane.b32.xlu0 %v1222, 32
      %v3286 = vpop.permute.xlu0 %3285
      %3287 = vrot.lane.b32.xlu0 %v1228, 32
      %v3288 = vpop.permute.xlu0 %3287
      %3289 = vrot.lane.b32.xlu0 %v1234, 32
      %v3290 = vpop.permute.xlu0 %3289
      %v3291 = vsel %vm1062, %v3244, 0
      %v3293 = vsel %vm1062, %v3246, 0
      %v3295 = vsel %vm1062, %v3248, 0
      %v3297 = vsel %vm1062, %v3250, 0
      %v3299 = vsel %vm1062, %v3252, 0
      %v3301 = vsel %vm1062, %v3254, 0
      %v3303 = vsel %vm1062, %v3256, 0
      %v3305 = vsel %vm1062, %v3258, 0
      %v3307 = vsel %vm1062, %v3260, 0
      %v3309 = vsel %vm1062, %v3262, 0
      %v3311 = vsel %vm1062, %v3264, 0
      %v3313 = vsel %vm1062, %v3266, 0
      %v3315 = vsel %vm1062, %v3268, 0
      %v3317 = vsel %vm1062, %v3270, 0
      %v3319 = vsel %vm1062, %v3272, 0
      %v3321 = vsel %vm1062, %v3274, 0
      %v3323 = vsel %vm1062, %v3276, 0
      %v3325 = vsel %vm1062, %v3278, 0
      %v3327 = vsel %vm1062, %v3280, 0
      %v3329 = vsel %vm1062, %v3282, 0
      %v3331 = vsel %vm1062, %v3284, 0
      %v3333 = vsel %vm1062, %v3286, 0
      %v3335 = vsel %vm1062, %v3288, 0
      %v3337 = vsel %vm1062, %v3290, 0
      %3339 = vmatprep.subr.mxu0 0.0
      %3340 = vmatpush1.xpose.msra.mxu0 %v3315
      %3341 = vmatprep.subr.mxu0 0.0
      %3342 = vmatpush1.xpose.msra.mxu0 %v3317
      %3343 = vmatprep.subr.mxu0 0.0
      %3344 = vmatpush1.xpose.msra.mxu0 %v3319
      %3345 = vmatprep.subr.mxu0 0.0
      %3346 = vmatpush1.xpose.msra.mxu0 %v3321
      %3347 = vmatprep.subr.mxu0 0.0
      %3348 = vmatpush1.xpose.msra.mxu0 %v3323
      %3349 = vmatprep.subr.mxu0 0.0
      %3350 = vmatpush1.xpose.msra.mxu0 %v3325
      %3351 = vmatprep.subr.mxu0 0.0
      %3352 = vmatpush1.xpose.msra.mxu0 %v3327
      %3353 = vmatprep.subr.mxu0 0.0
      %3354 = vmatpush1.xpose.msra.mxu0 %v3329
      %3355 = vmatprep.subr.mxu0 0.0
      %3356 = vmatpush1.xpose.msra.mxu0 %v3331
      %3357 = vmatprep.subr.mxu0 0.0
      %3358 = vmatpush1.xpose.msra.mxu0 %v3333
      %3359 = vmatprep.subr.mxu0 0.0
      %3360 = vmatpush1.xpose.msra.mxu0 %v3335
      %3361 = vmatprep.subr.mxu0 0.0
      %3362 = vmatpush1.xpose.msra.mxu0 %v3337
      %3363 = vmatprep.subr.mxu0 0.0
      %3364 = vmatpush1.xpose.msra.mxu0 0.0
      %3365 = vmatprep.subr.mxu0 0.0
      %3366 = vmatpush1.xpose.msra.mxu0 0.0
      %3367 = vmatprep.subr.mxu0 0.0
      %3368 = vmatpush1.xpose.msra.mxu0 0.0
      %3369 = vmatprep.subr.mxu0 0.0
      %3370 = vmatpush1.xpose.msra.mxu0 0.0
      %3371 = vmatprep.subr.mxu0 0.0
      %3372 = vmatpush1.xpose.msra.mxu0 0.0
      %3373 = vmatprep.subr.mxu0 0.0
      %3374 = vmatpush1.xpose.msra.mxu0 0.0
      %3375 = vmatprep.subr.mxu0 0.0
      %3376 = vmatpush1.xpose.msra.mxu0 0.0
      %3377 = vmatprep.subr.mxu0 0.0
      %3378 = vmatpush1.xpose.msra.mxu0 0.0
      %3379 = vmatprep.subr.mxu0 0.0
      %3380 = vmatpush1.xpose.msra.mxu0 0.0
      %3381 = vmatprep.subr.mxu0 0.0
      %3382 = vmatpush1.xpose.msra.mxu0 0.0
      %3383 = vmatprep.subr.mxu0 0.0
      %3384 = vmatpush1.xpose.msra.mxu0 0.0
      %3385 = vmatprep.subr.mxu0 0.0
      %3386 = vmatpush1.xpose.msra.mxu0 0.0
      %3387 = vmatprep.subr.mxu0 0.0
      %3388 = vmatpush1.xpose.msra.mxu0 0.0
      %3389 = vmatprep.subr.mxu0 0.0
      %3390 = vmatpush1.xpose.msra.mxu0 0.0
      %3391 = vmatprep.subr.mxu0 0.0
      %3392 = vmatpush1.xpose.msra.mxu0 0.0
      %3393 = vmatprep.subr.mxu0 0.0
      %3394 = vmatpush1.xpose.msra.mxu0 0.0
      %3395 = vmatprep.subr.mxu0 0.0
      %3396 = vmatpush1.xpose.msra.mxu0 0.0
      %3397 = vmatprep.subr.mxu0 0.0
      %3398 = vmatpush1.xpose.msra.mxu0 0.0
      %3399 = vmatprep.subr.mxu0 0.0
      %3400 = vmatpush1.xpose.msra.mxu0 0.0
      %3401 = vmatprep.subr.mxu0 0.0
      %3402 = vmatpush1.xpose.msra.mxu0 0.0
      %3403 = vmatprep.mubr.f32.mxu0 0.0
      %3404 = vmatmul.mubr.f32.gmra.mrb[0].mxu0 %v3291
      %v3405 = vpop.f32.mrb[0].mxu0
      %v3406 = vadd.f32 0.0, %v3405
      %v3407 = vpop.f32.mrb[0].mxu0
      %3408 = vmatprep.mubr.f32.mxu0 0.0
      %3409 = vmatmul.mubr.f32.gmra.mrb[0].mxu0 %v3293
      %v3410 = vpop.f32.mrb[0].mxu0
      %v3411 = vadd.f32 0.0, %v3410
      %v3412 = vpop.f32.mrb[0].mxu0
      %3413 = vmatprep.mubr.f32.mxu0 0.0
      %3414 = vmatmul.mubr.f32.gmra.mrb[0].mxu0 %v3295
      %v3415 = vpop.f32.mrb[0].mxu0
      %v3416 = vadd.f32 0.0, %v3415
      %v3417 = vpop.f32.mrb[0].mxu0
      %3418 = vmatprep.mubr.f32.mxu0 0.0
      %3419 = vmatmul.mubr.f32.gmra.mrb[0].mxu0 %v3297
      %v3420 = vpop.f32.mrb[0].mxu0
      %v3421 = vadd.f32 0.0, %v3420
      %v3422 = vpop.f32.mrb[0].mxu0
      %3423 = vmatprep.mubr.f32.mxu0 0.0
      %3424 = vmatmul.mubr.f32.gmra.mrb[0].mxu0 %v3299
      %v3425 = vpop.f32.mrb[0].mxu0
      %v3426 = vadd.f32 0.0, %v3425
      %v3427 = vpop.f32.mrb[0].mxu0
      %3428 = vmatprep.mubr.f32.mxu0 0.0
      %3429 = vmatmul.mubr.f32.gmra.mrb[0].mxu0 %v3301
      %v3430 = vpop.f32.mrb[0].mxu0
      %v3431 = vadd.f32 0.0, %v3430
      %v3432 = vpop.f32.mrb[0].mxu0
      %3433 = vmatprep.mubr.f32.mxu0 0.0
      %3434 = vmatmul.mubr.f32.gmra.mrb[0].mxu0 %v3303
      %v3435 = vpop.f32.mrb[0].mxu0
      %v3436 = vadd.f32 0.0, %v3435
      %v3437 = vpop.f32.mrb[0].mxu0
      %3438 = vmatprep.mubr.f32.mxu0 0.0
      %3439 = vmatmul.mubr.f32.gmra.mrb[0].mxu0 %v3305
      %v3440 = vpop.f32.mrb[0].mxu0
      %v3441 = vadd.f32 0.0, %v3440
      %v3442 = vpop.f32.mrb[0].mxu0
      %3443 = vmatprep.mubr.f32.mxu0 0.0
      %3444 = vmatmul.mubr.f32.gmra.mrb[0].mxu0 %v3307
      %v3445 = vpop.f32.mrb[0].mxu0
      %v3446 = vadd.f32 0.0, %v3445
      %v3447 = vpop.f32.mrb[0].mxu0
      %3448 = vmatprep.mubr.f32.mxu0 0.0
      %3449 = vmatmul.mubr.f32.gmra.mrb[0].mxu0 %v3309
      %v3450 = vpop.f32.mrb[0].mxu0
      %v3451 = vadd.f32 0.0, %v3450
      %v3452 = vpop.f32.mrb[0].mxu0
      %3453 = vmatprep.mubr.f32.mxu0 0.0
      %3454 = vmatmul.mubr.f32.gmra.mrb[0].mxu0 %v3311
      %v3455 = vpop.f32.mrb[0].mxu0
      %v3456 = vadd.f32 0.0, %v3455
      %v3457 = vpop.f32.mrb[0].mxu0
      %3458 = vmatprep.mubr.f32.mxu0 0.0
      %3459 = vmatmul.mubr.f32.gmra.mrb[0].mxu0 %v3313
      %v3460 = vpop.f32.mrb[0].mxu0
      %v3461 = vadd.f32 0.0, %v3460
      %v3462 = vpop.f32.mrb[0].mxu0
      %3463 = vdwg.mxu0
      %v3464 = vmul.f32 %v3406, 0.17677669
      %v3465 = vmul.f32 %v3411, 0.17677669
      %v3466 = vmul.f32 %v3416, 0.17677669
      %v3467 = vmul.f32 %v3421, 0.17677669
      %v3468 = vmul.f32 %v3426, 0.17677669
      %v3469 = vmul.f32 %v3431, 0.17677669
      %v3470 = vmul.f32 %v3436, 0.17677669
      %v3471 = vmul.f32 %v3441, 0.17677669
      %v3472 = vmul.f32 %v3446, 0.17677669
      %v3473 = vmul.f32 %v3451, 0.17677669
      %v3474 = vmul.f32 %v3456, 0.17677669
      %v3475 = vmul.f32 %v3461, 0.17677669
      %v3476 = vsel %vm1556, %v3464, -1e+30
      %v3477 = vsel %vm1557, %v3465, -1e+30
      %v3478 = vsel %vm1558, %v3466, -1e+30
      %v3479 = vsel %vm1559, %v3467, -1e+30
      %v3480 = vsel %vm1560, %v3468, -1e+30
      %v3481 = vsel %vm1561, %v3469, -1e+30
      %v3482 = vsel %vm1562, %v3470, -1e+30
      %v3483 = vsel %vm1563, %v3471, -1e+30
      %v3484 = vsel %vm1564, %v3472, -1e+30
      %v3485 = vsel %vm1565, %v3473, -1e+30
      %v3486 = vsel %vm1566, %v3474, -1e+30
      %v3487 = vsel %vm1567, %v3475, -1e+30
      %v3488 = vsel %vm1789, %v3476, -inf
      %3489 = vmax.xlane.f32.xlu0 %v3488
      %v3490 = vpop.xlane.xlu0 %3489
      %v3491 = vsel %vm1789, %v3477, -inf
      %3492 = vmax.xlane.f32.xlu0 %v3491
      %v3493 = vpop.xlane.xlu0 %3492
      %v3494 = vsel %vm1789, %v3478, -inf
      %3495 = vmax.xlane.f32.xlu0 %v3494
      %v3496 = vpop.xlane.xlu0 %3495
      %v3497 = vsel %vm1789, %v3479, -inf
      %3498 = vmax.xlane.f32.xlu0 %v3497
      %v3499 = vpop.xlane.xlu0 %3498
      %v3500 = vsel %vm1789, %v3480, -inf
      %3501 = vmax.xlane.f32.xlu0 %v3500
      %v3502 = vpop.xlane.xlu0 %3501
      %v3503 = vsel %vm1789, %v3481, -inf
      %3504 = vmax.xlane.f32.xlu0 %v3503
      %v3505 = vpop.xlane.xlu0 %3504
      %v3506 = vsel %vm1789, %v3482, -inf
      %3507 = vmax.xlane.f32.xlu0 %v3506
      %v3508 = vpop.xlane.xlu0 %3507
      %v3509 = vsel %vm1789, %v3483, -inf
      %3510 = vmax.xlane.f32.xlu0 %v3509
      %v3511 = vpop.xlane.xlu0 %3510
      %v3512 = vsel %vm1789, %v3484, -inf
      %3513 = vmax.xlane.f32.xlu0 %v3512
      %v3514 = vpop.xlane.xlu0 %3513
      %v3515 = vsel %vm1789, %v3485, -inf
      %3516 = vmax.xlane.f32.xlu0 %v3515
      %v3517 = vpop.xlane.xlu0 %3516
      %v3518 = vsel %vm1789, %v3486, -inf
      %3519 = vmax.xlane.f32.xlu0 %v3518
      %v3520 = vpop.xlane.xlu0 %3519
      %v3521 = vsel %vm1789, %v3487, -inf
      %3522 = vmax.xlane.f32.xlu0 %v3521
      %v3523 = vpop.xlane.xlu0 %3522
      %v3524 = vsub.f32 %v3476, %v3490
      %v3525 = vsub.f32 %v3477, %v3493
      %v3526 = vsub.f32 %v3478, %v3496
      %v3527 = vsub.f32 %v3479, %v3499
      %v3528 = vsub.f32 %v3480, %v3502
      %v3529 = vsub.f32 %v3481, %v3505
      %v3530 = vsub.f32 %v3482, %v3508
      %v3531 = vsub.f32 %v3483, %v3511
      %v3532 = vsub.f32 %v3484, %v3514
      %v3533 = vsub.f32 %v3485, %v3517
      %v3534 = vsub.f32 %v3486, %v3520
      %v3535 = vsub.f32 %v3487, %v3523
      %v3536 = vmul.f32 %v3524, 1.442695
      %v3537 = vpow.pop %v3536
      %v3538 = vmul.f32 %v3525, 1.442695
      %v3539 = vpow.pop %v3538
      %v3540 = vmul.f32 %v3526, 1.442695
      %v3541 = vpow.pop %v3540
      %v3542 = vmul.f32 %v3527, 1.442695
      %v3543 = vpow.pop %v3542
      %v3544 = vmul.f32 %v3528, 1.442695
      %v3545 = vpow.pop %v3544
      %v3546 = vmul.f32 %v3529, 1.442695
      %v3547 = vpow.pop %v3546
      %v3548 = vmul.f32 %v3530, 1.442695
      %v3549 = vpow.pop %v3548
      %v3550 = vmul.f32 %v3531, 1.442695
      %v3551 = vpow.pop %v3550
      %v3552 = vmul.f32 %v3532, 1.442695
      %v3553 = vpow.pop %v3552
      %v3554 = vmul.f32 %v3533, 1.442695
      %v3555 = vpow.pop %v3554
      %v3556 = vmul.f32 %v3534, 1.442695
      %v3557 = vpow.pop %v3556
      %v3558 = vmul.f32 %v3535, 1.442695
      %v3559 = vpow.pop %v3558
      %v3560 = vsel %vm1789, %v3537, 0.0
      %3561 = vadd.xlane.f32.xlu0 %v3560
      %v3562 = vpop.xlane.xlu0 %3561
      %v3563 = vsel %vm1789, %v3539, 0.0
      %3564 = vadd.xlane.f32.xlu0 %v3563
      %v3565 = vpop.xlane.xlu0 %3564
      %v3566 = vsel %vm1789, %v3541, 0.0
      %3567 = vadd.xlane.f32.xlu0 %v3566
      %v3568 = vpop.xlane.xlu0 %3567
      %v3569 = vsel %vm1789, %v3543, 0.0
      %3570 = vadd.xlane.f32.xlu0 %v3569
      %v3571 = vpop.xlane.xlu0 %3570
      %v3572 = vsel %vm1789, %v3545, 0.0
      %3573 = vadd.xlane.f32.xlu0 %v3572
      %v3574 = vpop.xlane.xlu0 %3573
      %v3575 = vsel %vm1789, %v3547, 0.0
      %3576 = vadd.xlane.f32.xlu0 %v3575
      %v3577 = vpop.xlane.xlu0 %3576
      %v3578 = vsel %vm1789, %v3549, 0.0
      %3579 = vadd.xlane.f32.xlu0 %v3578
      %v3580 = vpop.xlane.xlu0 %3579
      %v3581 = vsel %vm1789, %v3551, 0.0
      %3582 = vadd.xlane.f32.xlu0 %v3581
      %v3583 = vpop.xlane.xlu0 %3582
      %v3584 = vsel %vm1789, %v3553, 0.0
      %3585 = vadd.xlane.f32.xlu0 %v3584
      %v3586 = vpop.xlane.xlu0 %3585
      %v3587 = vsel %vm1789, %v3555, 0.0
      %3588 = vadd.xlane.f32.xlu0 %v3587
      %v3589 = vpop.xlane.xlu0 %3588
      %v3590 = vsel %vm1789, %v3557, 0.0
      %3591 = vadd.xlane.f32.xlu0 %v3590
      %v3592 = vpop.xlane.xlu0 %3591
      %v3593 = vsel %vm1789, %v3559, 0.0
      %3594 = vadd.xlane.f32.xlu0 %v3593
      %v3595 = vpop.xlane.xlu0 %3594
      %v3596 = vrcp.pop %v3562
      %v3597 = vmul.f32 %v3537, %v3596
      %v3598 = vrcp.pop %v3565
      %v3599 = vmul.f32 %v3539, %v3598
      %v3600 = vrcp.pop %v3568
      %v3601 = vmul.f32 %v3541, %v3600
      %v3602 = vrcp.pop %v3571
      %v3603 = vmul.f32 %v3543, %v3602
      %v3604 = vrcp.pop %v3574
      %v3605 = vmul.f32 %v3545, %v3604
      %v3606 = vrcp.pop %v3577
      %v3607 = vmul.f32 %v3547, %v3606
      %v3608 = vrcp.pop %v3580
      %v3609 = vmul.f32 %v3549, %v3608
      %v3610 = vrcp.pop %v3583
      %v3611 = vmul.f32 %v3551, %v3610
      %v3612 = vrcp.pop %v3586
      %v3613 = vmul.f32 %v3553, %v3612
      %v3614 = vrcp.pop %v3589
      %v3615 = vmul.f32 %v3555, %v3614
      %v3616 = vrcp.pop %v3592
      %v3617 = vmul.f32 %v3557, %v3616
      %v3618 = vrcp.pop %v3595
      %v3619 = vmul.f32 %v3559, %v3618
      %3620 = vrot.lane.b32.xlu0 %v1303, 32
      %v3621 = vpop.permute.xlu0 %3620
      %3622 = vrot.lane.b32.xlu0 %v1308, 32
      %v3623 = vpop.permute.xlu0 %3622
      %3624 = vrot.lane.b32.xlu0 %v1313, 32
      %v3625 = vpop.permute.xlu0 %3624
      %3626 = vrot.lane.b32.xlu0 %v1318, 32
      %v3627 = vpop.permute.xlu0 %3626
      %3628 = vrot.lane.b32.xlu0 %v1323, 32
      %v3629 = vpop.permute.xlu0 %3628
      %3630 = vrot.lane.b32.xlu0 %v1328, 32
      %v3631 = vpop.permute.xlu0 %3630
      %3632 = vrot.lane.b32.xlu0 %v1333, 32
      %v3633 = vpop.permute.xlu0 %3632
      %3634 = vrot.lane.b32.xlu0 %v1338, 32
      %v3635 = vpop.permute.xlu0 %3634
      %3636 = vrot.lane.b32.xlu0 %v1343, 32
      %v3637 = vpop.permute.xlu0 %3636
      %3638 = vrot.lane.b32.xlu0 %v1348, 32
      %v3639 = vpop.permute.xlu0 %3638
      %3640 = vrot.lane.b32.xlu0 %v1353, 32
      %v3641 = vpop.permute.xlu0 %3640
      %3642 = vrot.lane.b32.xlu0 %v1358, 32
      %v3643 = vpop.permute.xlu0 %3642
      %v3657 = vsel %vm1789, %v3597, 0
      %v3660 = vsel %vm1789, %v3599, 0
      %v3663 = vsel %vm1789, %v3601, 0
      %v3666 = vsel %vm1789, %v3603, 0
      %v3669 = vsel %vm1789, %v3605, 0
      %v3672 = vsel %vm1789, %v3607, 0
      %v3675 = vsel %vm1789, %v3609, 0
      %v3678 = vsel %vm1789, %v3611, 0
      %v3681 = vsel %vm1789, %v3613, 0
      %v3684 = vsel %vm1789, %v3615, 0
      %v3687 = vsel %vm1789, %v3617, 0
      %v3690 = vsel %vm1789, %v3619, 0
      %3692 = vmatprep.subr.mxu0 0.0
      %3693 = vmatpush1.msra.mxu0 %v3621
      %3694 = vmatprep.subr.mxu0 0.0
      %3695 = vmatpush1.msra.mxu0 %v3623
      %3696 = vmatprep.subr.mxu0 0.0
      %3697 = vmatpush1.msra.mxu0 %v3625
      %3698 = vmatprep.subr.mxu0 0.0
      %3699 = vmatpush1.msra.mxu0 %v3627
      %3700 = vmatprep.subr.mxu0 0.0
      %3701 = vmatpush1.msra.mxu0 %v3629
      %3702 = vmatprep.subr.mxu0 0.0
      %3703 = vmatpush1.msra.mxu0 %v3631
      %3704 = vmatprep.subr.mxu0 0.0
      %3705 = vmatpush1.msra.mxu0 %v3633
      %3706 = vmatprep.subr.mxu0 0.0
      %3707 = vmatpush1.msra.mxu0 %v3635
      %3708 = vmatprep.subr.mxu0 0.0
      %3709 = vmatpush1.msra.mxu0 %v3637
      %3710 = vmatprep.subr.mxu0 0.0
      %3711 = vmatpush1.msra.mxu0 %v3639
      %3712 = vmatprep.subr.mxu0 0.0
      %3713 = vmatpush1.msra.mxu0 %v3641
      %3714 = vmatprep.subr.mxu0 0.0
      %3715 = vmatpush1.msra.mxu0 %v3643
      %3716 = vmatprep.subr.mxu0 0.0
      %3717 = vmatpush1.msra.mxu0 0.0
      %3718 = vmatprep.subr.mxu0 0.0
      %3719 = vmatpush1.msra.mxu0 0.0
      %3720 = vmatprep.subr.mxu0 0.0
      %3721 = vmatpush1.msra.mxu0 0.0
      %3722 = vmatprep.subr.mxu0 0.0
      %3723 = vmatpush1.msra.mxu0 0.0
      %3724 = vmatprep.subr.mxu0 0.0
      %3725 = vmatpush1.msra.mxu0 0.0
      %3726 = vmatprep.subr.mxu0 0.0
      %3727 = vmatpush1.msra.mxu0 0.0
      %3728 = vmatprep.subr.mxu0 0.0
      %3729 = vmatpush1.msra.mxu0 0.0
      %3730 = vmatprep.subr.mxu0 0.0
      %3731 = vmatpush1.msra.mxu0 0.0
      %3732 = vmatprep.subr.mxu0 0.0
      %3733 = vmatpush1.msra.mxu0 0.0
      %3734 = vmatprep.subr.mxu0 0.0
      %3735 = vmatpush1.msra.mxu0 0.0
      %3736 = vmatprep.subr.mxu0 0.0
      %3737 = vmatpush1.msra.mxu0 0.0
      %3738 = vmatprep.subr.mxu0 0.0
      %3739 = vmatpush1.msra.mxu0 0.0
      %3740 = vmatprep.subr.mxu0 0.0
      %3741 = vmatpush1.msra.mxu0 0.0
      %3742 = vmatprep.subr.mxu0 0.0
      %3743 = vmatpush1.msra.mxu0 0.0
      %3744 = vmatprep.subr.mxu0 0.0
      %3745 = vmatpush1.msra.mxu0 0.0
      %3746 = vmatprep.subr.mxu0 0.0
      %3747 = vmatpush1.msra.mxu0 0.0
      %3748 = vmatprep.subr.mxu0 0.0
      %3749 = vmatpush1.msra.mxu0 0.0
      %3750 = vmatprep.subr.mxu0 0.0
      %3751 = vmatpush1.msra.mxu0 0.0
      %3752 = vmatprep.subr.mxu0 0.0
      %3753 = vmatpush1.msra.mxu0 0.0
      %3754 = vmatprep.subr.mxu0 0.0
      %3755 = vmatpush1.msra.mxu0 0.0
      %3756 = vmatprep.mubr.f32.mxu0 0.0
      %3757 = vmatmul.mubr.f32.gmra.mrb[0].mxu0 %v3657
      %v3758 = vpop.f32.mrb[0].mxu0
      %v3759 = vadd.f32 0.0, %v3758
      %v3760 = vpop.f32.mrb[0].mxu0
      %3761 = vmatprep.mubr.f32.mxu0 0.0
      %3762 = vmatmul.mubr.f32.gmra.mrb[0].mxu0 %v3660
      %v3763 = vpop.f32.mrb[0].mxu0
      %v3764 = vadd.f32 0.0, %v3763
      %v3765 = vpop.f32.mrb[0].mxu0
      %3766 = vmatprep.mubr.f32.mxu0 0.0
      %3767 = vmatmul.mubr.f32.gmra.mrb[0].mxu0 %v3663
      %v3768 = vpop.f32.mrb[0].mxu0
      %v3769 = vadd.f32 0.0, %v3768
      %v3770 = vpop.f32.mrb[0].mxu0
      %3771 = vmatprep.mubr.f32.mxu0 0.0
      %3772 = vmatmul.mubr.f32.gmra.mrb[0].mxu0 %v3666
      %v3773 = vpop.f32.mrb[0].mxu0
      %v3774 = vadd.f32 0.0, %v3773
      %v3775 = vpop.f32.mrb[0].mxu0
      %3776 = vmatprep.mubr.f32.mxu0 0.0
      %3777 = vmatmul.mubr.f32.gmra.mrb[0].mxu0 %v3669
      %v3778 = vpop.f32.mrb[0].mxu0
      %v3779 = vadd.f32 0.0, %v3778
      %v3780 = vpop.f32.mrb[0].mxu0
      %3781 = vmatprep.mubr.f32.mxu0 0.0
      %3782 = vmatmul.mubr.f32.gmra.mrb[0].mxu0 %v3672
      %v3783 = vpop.f32.mrb[0].mxu0
      %v3784 = vadd.f32 0.0, %v3783
      %v3785 = vpop.f32.mrb[0].mxu0
      %3786 = vmatprep.mubr.f32.mxu0 0.0
      %3787 = vmatmul.mubr.f32.gmra.mrb[0].mxu0 %v3675
      %v3788 = vpop.f32.mrb[0].mxu0
      %v3789 = vadd.f32 0.0, %v3788
      %v3790 = vpop.f32.mrb[0].mxu0
      %3791 = vmatprep.mubr.f32.mxu0 0.0
      %3792 = vmatmul.mubr.f32.gmra.mrb[0].mxu0 %v3678
      %v3793 = vpop.f32.mrb[0].mxu0
      %v3794 = vadd.f32 0.0, %v3793
      %v3795 = vpop.f32.mrb[0].mxu0
      %3796 = vmatprep.mubr.f32.mxu0 0.0
      %3797 = vmatmul.mubr.f32.gmra.mrb[0].mxu0 %v3681
      %v3798 = vpop.f32.mrb[0].mxu0
      %v3799 = vadd.f32 0.0, %v3798
      %v3800 = vpop.f32.mrb[0].mxu0
      %3801 = vmatprep.mubr.f32.mxu0 0.0
      %3802 = vmatmul.mubr.f32.gmra.mrb[0].mxu0 %v3684
      %v3803 = vpop.f32.mrb[0].mxu0
      %v3804 = vadd.f32 0.0, %v3803
      %v3805 = vpop.f32.mrb[0].mxu0
      %3806 = vmatprep.mubr.f32.mxu0 0.0
      %3807 = vmatmul.mubr.f32.gmra.mrb[0].mxu0 %v3687
      %v3808 = vpop.f32.mrb[0].mxu0
      %v3809 = vadd.f32 0.0, %v3808
      %v3810 = vpop.f32.mrb[0].mxu0
      %3811 = vmatprep.mubr.f32.mxu0 0.0
      %3812 = vmatmul.mubr.f32.gmra.mrb[0].mxu0 %v3690
      %v3813 = vpop.f32.mrb[0].mxu0
      %v3814 = vadd.f32 0.0, %v3813
      %v3815 = vpop.f32.mrb[0].mxu0
      %3816 = vdwg.mxu0
      %3829 = vrot.lane.b32.xlu0 %v2611, 32
      %v3830 = vpop.permute.xlu0 %3829
      %3831 = vrot.lane.b32.xlu0 %v2616, 32
      %v3832 = vpop.permute.xlu0 %3831
      %3833 = vrot.lane.b32.xlu0 %v2621, 32
      %v3834 = vpop.permute.xlu0 %3833
      %3835 = vrot.lane.b32.xlu0 %v2626, 32
      %v3836 = vpop.permute.xlu0 %3835
      %3837 = vrot.lane.b32.xlu0 %v2631, 32
      %v3838 = vpop.permute.xlu0 %3837
      %3839 = vrot.lane.b32.xlu0 %v2636, 32
      %v3840 = vpop.permute.xlu0 %3839
      %3841 = vrot.lane.b32.xlu0 %v2641, 32
      %v3842 = vpop.permute.xlu0 %3841
      %3843 = vrot.lane.b32.xlu0 %v2646, 32
      %v3844 = vpop.permute.xlu0 %3843
      %3845 = vrot.lane.b32.xlu0 %v2651, 32
      %v3846 = vpop.permute.xlu0 %3845
      %3847 = vrot.lane.b32.xlu0 %v2656, 32
      %v3848 = vpop.permute.xlu0 %3847
      %3849 = vrot.lane.b32.xlu0 %v2661, 32
      %v3850 = vpop.permute.xlu0 %3849
      %3851 = vrot.lane.b32.xlu0 %v2666, 32
      %v3852 = vpop.permute.xlu0 %3851
      %3877 = vrot.lane.b32.xlu0 %v3185, 64
      %v3878 = vpop.permute.xlu0 %3877
      %3879 = vrot.lane.b32.xlu0 %v3190, 64
      %v3880 = vpop.permute.xlu0 %3879
      %3881 = vrot.lane.b32.xlu0 %v3195, 64
      %v3882 = vpop.permute.xlu0 %3881
      %3883 = vrot.lane.b32.xlu0 %v3200, 64
      %v3884 = vpop.permute.xlu0 %3883
      %3885 = vrot.lane.b32.xlu0 %v3205, 64
      %v3886 = vpop.permute.xlu0 %3885
      %3887 = vrot.lane.b32.xlu0 %v3210, 64
      %v3888 = vpop.permute.xlu0 %3887
      %3889 = vrot.lane.b32.xlu0 %v3215, 64
      %v3890 = vpop.permute.xlu0 %3889
      %3891 = vrot.lane.b32.xlu0 %v3220, 64
      %v3892 = vpop.permute.xlu0 %3891
      %3893 = vrot.lane.b32.xlu0 %v3225, 64
      %v3894 = vpop.permute.xlu0 %3893
      %3895 = vrot.lane.b32.xlu0 %v3230, 64
      %v3896 = vpop.permute.xlu0 %3895
      %3897 = vrot.lane.b32.xlu0 %v3235, 64
      %v3898 = vpop.permute.xlu0 %3897
      %3899 = vrot.lane.b32.xlu0 %v3240, 64
      %v3900 = vpop.permute.xlu0 %3899
      %3925 = vrot.lane.b32.xlu0 %v3759, 96
      %v3926 = vpop.permute.xlu0 %3925
      %3927 = vrot.lane.b32.xlu0 %v3764, 96
      %v3928 = vpop.permute.xlu0 %3927
      %3929 = vrot.lane.b32.xlu0 %v3769, 96
      %v3930 = vpop.permute.xlu0 %3929
      %3931 = vrot.lane.b32.xlu0 %v3774, 96
      %v3932 = vpop.permute.xlu0 %3931
      %3933 = vrot.lane.b32.xlu0 %v3779, 96
      %v3934 = vpop.permute.xlu0 %3933
      %3935 = vrot.lane.b32.xlu0 %v3784, 96
      %v3936 = vpop.permute.xlu0 %3935
      %3937 = vrot.lane.b32.xlu0 %v3789, 96
      %v3938 = vpop.permute.xlu0 %3937
      %3939 = vrot.lane.b32.xlu0 %v3794, 96
      %v3940 = vpop.permute.xlu0 %3939
      %3941 = vrot.lane.b32.xlu0 %v3799, 96
      %v3942 = vpop.permute.xlu0 %3941
      %3943 = vrot.lane.b32.xlu0 %v3804, 96
      %v3944 = vpop.permute.xlu0 %3943
      %3945 = vrot.lane.b32.xlu0 %v3809, 96
      %v3946 = vpop.permute.xlu0 %3945
      %3947 = vrot.lane.b32.xlu0 %v3814, 96
      %v3948 = vpop.permute.xlu0 %3947
      %v3961 = vsel %vm1062, %v2025, %v3830
      %v3962 = vsel %vm1062, %v2030, %v3832
      %v3963 = vsel %vm1062, %v2035, %v3834
      %v3964 = vsel %vm1062, %v2040, %v3836
      %v3965 = vsel %vm1062, %v2045, %v3838
      %v3966 = vsel %vm1062, %v2050, %v3840
      %v3967 = vsel %vm1062, %v2055, %v3842
      %v3968 = vsel %vm1062, %v2060, %v3844
      %v3969 = vsel %vm1062, %v2065, %v3846
      %v3970 = vsel %vm1062, %v2070, %v3848
      %v3971 = vsel %vm1062, %v2075, %v3850
      %v3972 = vsel %vm1062, %v2080, %v3852
      %vm3973 = vcmask 523264
      %v3974 = vsel %vm3973, %v3961, %v3878
      %v3975 = vsel %vm3973, %v3962, %v3880
      %v3976 = vsel %vm3973, %v3963, %v3882
      %v3977 = vsel %vm3973, %v3964, %v3884
      %v3978 = vsel %vm3973, %v3965, %v3886
      %v3979 = vsel %vm3973, %v3966, %v3888
      %v3980 = vsel %vm3973, %v3967, %v3890
      %v3981 = vsel %vm3973, %v3968, %v3892
      %v3982 = vsel %vm3973, %v3969, %v3894
      %v3983 = vsel %vm3973, %v3970, %v3896
      %v3984 = vsel %vm3973, %v3971, %v3898
      %v3985 = vsel %vm3973, %v3972, %v3900
      %v3986 = vsel %vm1789, %v3974, %v3926
      %v3987 = vsel %vm1789, %v3975, %v3928
      %v3988 = vsel %vm1789, %v3976, %v3930
      %v3989 = vsel %vm1789, %v3977, %v3932
      %v3990 = vsel %vm1789, %v3978, %v3934
      %v3991 = vsel %vm1789, %v3979, %v3936
      %v3992 = vsel %vm1789, %v3980, %v3938
      %v3993 = vsel %vm1789, %v3981, %v3940
      %v3994 = vsel %vm1789, %v3982, %v3942
      %v3995 = vsel %vm1789, %v3983, %v3944
      %v3996 = vsel %vm1789, %v3984, %v3946
      %v3997 = vsel %vm1789, %v3985, %v3948
      %v3998 = vld [vmem:[%s5] sm:$0xff]
      %v3999 = vld [vmem:[%s5 + $0x8] sm:$0xff]
      %v4000 = vld [vmem:[%s5 + $0x10] sm:$0xff]
      %v4001 = vld [vmem:[%s5 + $0x18] sm:$0xff]
      %v4002 = vld [vmem:[%s5 + $0x20] sm:$0xff]
      %v4003 = vld [vmem:[%s5 + $0x28] sm:$0xff]
      %v4004 = vld [vmem:[%s5 + $0x30] sm:$0xff]
      %v4005 = vld [vmem:[%s5 + $0x38] sm:$0xff]
      %v4006 = vld [vmem:[%s5 + $0x40] sm:$0xff]
      %v4007 = vld [vmem:[%s5 + $0x48] sm:$0xff]
      %v4008 = vld [vmem:[%s5 + $0x50] sm:$0xff]
      %v4009 = vld [vmem:[%s5 + $0x58] sm:$0xff]
      %v4010 = vld [vmem:[%s5 + $0x60] sm:$0xff]
      %v4011 = vld [vmem:[%s5 + $0x68] sm:$0xff]
      %v4012 = vld [vmem:[%s5 + $0x70] sm:$0xff]
      %v4013 = vld [vmem:[%s5 + $0x78] sm:$0xff]
      %v4014 = vld [vmem:[%s6] sm:$0x1]
      %v4016 = vlaneseq
      %v4017 = vshrl.u32 %v4016, 7
      %v4018 = vsub.s32 0, %v4017
      %v4019 = vrot.slane %v4014, %v4018
      %4021 = vmatprep.subr.mxu0 0.0
      %4022 = vmatpush1.msra.mxu0 %v3998
      %4023 = vmatprep.subr.mxu0 0.0
      %4024 = vmatpush1.msra.mxu0 %v3999
      %4025 = vmatprep.subr.mxu0 0.0
      %4026 = vmatpush1.msra.mxu0 %v4000
      %4027 = vmatprep.subr.mxu0 0.0
      %4028 = vmatpush1.msra.mxu0 %v4001
      %4029 = vmatprep.subr.mxu0 0.0
      %4030 = vmatpush1.msra.mxu0 %v4002
      %4031 = vmatprep.subr.mxu0 0.0
      %4032 = vmatpush1.msra.mxu0 %v4003
      %4033 = vmatprep.subr.mxu0 0.0
      %4034 = vmatpush1.msra.mxu0 %v4004
      %4035 = vmatprep.subr.mxu0 0.0
      %4036 = vmatpush1.msra.mxu0 %v4005
      %4037 = vmatprep.subr.mxu0 0.0
      %4038 = vmatpush1.msra.mxu0 %v4006
      %4039 = vmatprep.subr.mxu0 0.0
      %4040 = vmatpush1.msra.mxu0 %v4007
      %4041 = vmatprep.subr.mxu0 0.0
      %4042 = vmatpush1.msra.mxu0 %v4008
      %4043 = vmatprep.subr.mxu0 0.0
      %4044 = vmatpush1.msra.mxu0 %v4009
      %4045 = vmatprep.subr.mxu0 0.0
      %4046 = vmatpush1.msra.mxu0 %v4010
      %4047 = vmatprep.subr.mxu0 0.0
      %4048 = vmatpush1.msra.mxu0 %v4011
      %4049 = vmatprep.subr.mxu0 0.0
      %4050 = vmatpush1.msra.mxu0 %v4012
      %4051 = vmatprep.subr.mxu0 0.0
      %4052 = vmatpush1.msra.mxu0 %v4013
      %4053 = vmatprep.subr.mxu0 0.0
      %4054 = vmatpush1.msra.mxu0 0.0
      %4055 = vmatprep.subr.mxu0 0.0
      %4056 = vmatpush1.msra.mxu0 0.0
      %4057 = vmatprep.subr.mxu0 0.0
      %4058 = vmatpush1.msra.mxu0 0.0
      %4059 = vmatprep.subr.mxu0 0.0
      %4060 = vmatpush1.msra.mxu0 0.0
      %4061 = vmatprep.subr.mxu0 0.0
      %4062 = vmatpush1.msra.mxu0 0.0
      %4063 = vmatprep.subr.mxu0 0.0
      %4064 = vmatpush1.msra.mxu0 0.0
      %4065 = vmatprep.subr.mxu0 0.0
      %4066 = vmatpush1.msra.mxu0 0.0
      %4067 = vmatprep.subr.mxu0 0.0
      %4068 = vmatpush1.msra.mxu0 0.0
      %4069 = vmatprep.subr.mxu0 0.0
      %4070 = vmatpush1.msra.mxu0 0.0
      %4071 = vmatprep.subr.mxu0 0.0
      %4072 = vmatpush1.msra.mxu0 0.0
      %4073 = vmatprep.subr.mxu0 0.0
      %4074 = vmatpush1.msra.mxu0 0.0
      %4075 = vmatprep.subr.mxu0 0.0
      %4076 = vmatpush1.msra.mxu0 0.0
      %4077 = vmatprep.subr.mxu0 0.0
      %4078 = vmatpush1.msra.mxu0 0.0
      %4079 = vmatprep.subr.mxu0 0.0
      %4080 = vmatpush1.msra.mxu0 0.0
      %4081 = vmatprep.subr.mxu0 0.0
      %4082 = vmatpush1.msra.mxu0 0.0
      %4083 = vmatprep.subr.mxu0 0.0
      %4084 = vmatpush1.msra.mxu0 0.0
      %4085 = vmatprep.mubr.f32.mxu0 0.0
      %4086 = vmatmul.mubr.f32.gmra.mrb[0].mxu0 %v3986
      %v4087 = vpop.f32.mrb[0].mxu0
      %v4088 = vadd.f32 %v4019, %v4087
      %v4089 = vpop.f32.mrb[0].mxu0
      %4090 = vmatprep.mubr.f32.mxu0 0.0
      %4091 = vmatmul.mubr.f32.gmra.mrb[0].mxu0 %v3987
      %v4092 = vpop.f32.mrb[0].mxu0
      %v4093 = vadd.f32 %v4019, %v4092
      %v4094 = vpop.f32.mrb[0].mxu0
      %4095 = vmatprep.mubr.f32.mxu0 0.0
      %4096 = vmatmul.mubr.f32.gmra.mrb[0].mxu0 %v3988
      %v4097 = vpop.f32.mrb[0].mxu0
      %v4098 = vadd.f32 %v4019, %v4097
      %v4099 = vpop.f32.mrb[0].mxu0
      %4100 = vmatprep.mubr.f32.mxu0 0.0
      %4101 = vmatmul.mubr.f32.gmra.mrb[0].mxu0 %v3989
      %v4102 = vpop.f32.mrb[0].mxu0
      %v4103 = vadd.f32 %v4019, %v4102
      %v4104 = vpop.f32.mrb[0].mxu0
      %4105 = vmatprep.mubr.f32.mxu0 0.0
      %4106 = vmatmul.mubr.f32.gmra.mrb[0].mxu0 %v3990
      %v4107 = vpop.f32.mrb[0].mxu0
      %v4108 = vadd.f32 %v4019, %v4107
      %v4109 = vpop.f32.mrb[0].mxu0
      %4110 = vmatprep.mubr.f32.mxu0 0.0
      %4111 = vmatmul.mubr.f32.gmra.mrb[0].mxu0 %v3991
      %v4112 = vpop.f32.mrb[0].mxu0
      %v4113 = vadd.f32 %v4019, %v4112
      %v4114 = vpop.f32.mrb[0].mxu0
      %4115 = vmatprep.mubr.f32.mxu0 0.0
      %4116 = vmatmul.mubr.f32.gmra.mrb[0].mxu0 %v3992
      %v4117 = vpop.f32.mrb[0].mxu0
      %v4118 = vadd.f32 %v4019, %v4117
      %v4119 = vpop.f32.mrb[0].mxu0
      %4120 = vmatprep.mubr.f32.mxu0 0.0
      %4121 = vmatmul.mubr.f32.gmra.mrb[0].mxu0 %v3993
      %v4122 = vpop.f32.mrb[0].mxu0
      %v4123 = vadd.f32 %v4019, %v4122
      %v4124 = vpop.f32.mrb[0].mxu0
      %4125 = vmatprep.mubr.f32.mxu0 0.0
      %4126 = vmatmul.mubr.f32.gmra.mrb[0].mxu0 %v3994
      %v4127 = vpop.f32.mrb[0].mxu0
      %v4128 = vadd.f32 %v4019, %v4127
      %v4129 = vpop.f32.mrb[0].mxu0
      %4130 = vmatprep.mubr.f32.mxu0 0.0
      %4131 = vmatmul.mubr.f32.gmra.mrb[0].mxu0 %v3995
      %v4132 = vpop.f32.mrb[0].mxu0
      %v4133 = vadd.f32 %v4019, %v4132
      %v4134 = vpop.f32.mrb[0].mxu0
      %4135 = vmatprep.mubr.f32.mxu0 0.0
      %4136 = vmatmul.mubr.f32.gmra.mrb[0].mxu0 %v3996
      %v4137 = vpop.f32.mrb[0].mxu0
      %v4138 = vadd.f32 %v4019, %v4137
      %v4139 = vpop.f32.mrb[0].mxu0
      %4140 = vmatprep.mubr.f32.mxu0 0.0
      %4141 = vmatmul.mubr.f32.gmra.mrb[0].mxu0 %v3997
      %v4142 = vpop.f32.mrb[0].mxu0
      %v4143 = vadd.f32 %v4019, %v4142
      %v4144 = vpop.f32.mrb[0].mxu0
      %4145 = vdwg.mxu0
      %v4146 = vadd.f32 %v975, %v4088
      %v4147 = vadd.f32 %v980, %v4093
      %v4148 = vadd.f32 %v985, %v4098
      %v4149 = vadd.f32 %v990, %v4103
      %v4150 = vadd.f32 %v995, %v4108
      %v4151 = vadd.f32 %v1000, %v4113
      %v4152 = vadd.f32 %v1005, %v4118
      %v4153 = vadd.f32 %v1010, %v4123
      %v4154 = vadd.f32 %v1015, %v4128
      %v4155 = vadd.f32 %v1020, %v4133
      %v4156 = vadd.f32 %v1025, %v4138
      %v4157 = vadd.f32 %v1030, %v4143
      %v4158 = vsel %vm1062, %v4146, 0.0
      %4159 = vadd.xlane.f32.xlu0 %v4158
      %v4160 = vpop.xlane.xlu0 %4159
      %v4161 = vsel %vm1062, %v4147, 0.0
      %4162 = vadd.xlane.f32.xlu0 %v4161
      %v4163 = vpop.xlane.xlu0 %4162
      %v4164 = vsel %vm1062, %v4148, 0.0
      %4165 = vadd.xlane.f32.xlu0 %v4164
      %v4166 = vpop.xlane.xlu0 %4165
      %v4167 = vsel %vm1062, %v4149, 0.0
      %4168 = vadd.xlane.f32.xlu0 %v4167
      %v4169 = vpop.xlane.xlu0 %4168
      %v4170 = vsel %vm1062, %v4150, 0.0
      %4171 = vadd.xlane.f32.xlu0 %v4170
      %v4172 = vpop.xlane.xlu0 %4171
      %v4173 = vsel %vm1062, %v4151, 0.0
      %4174 = vadd.xlane.f32.xlu0 %v4173
      %v4175 = vpop.xlane.xlu0 %4174
      %v4176 = vsel %vm1062, %v4152, 0.0
      %4177 = vadd.xlane.f32.xlu0 %v4176
      %v4178 = vpop.xlane.xlu0 %4177
      %v4179 = vsel %vm1062, %v4153, 0.0
      %4180 = vadd.xlane.f32.xlu0 %v4179
      %v4181 = vpop.xlane.xlu0 %4180
      %v4182 = vsel %vm1062, %v4154, 0.0
      %4183 = vadd.xlane.f32.xlu0 %v4182
      %v4184 = vpop.xlane.xlu0 %4183
      %v4185 = vsel %vm1062, %v4155, 0.0
      %4186 = vadd.xlane.f32.xlu0 %v4185
      %v4187 = vpop.xlane.xlu0 %4186
      %v4188 = vsel %vm1062, %v4156, 0.0
      %4189 = vadd.xlane.f32.xlu0 %v4188
      %v4190 = vpop.xlane.xlu0 %4189
      %v4191 = vsel %vm1062, %v4157, 0.0
      %4192 = vadd.xlane.f32.xlu0 %v4191
      %v4193 = vpop.xlane.xlu0 %4192
      %v4194 = vrcp.pop 32.0
      %v4195 = vmul.f32 %v4160, %v4194
      %v4196 = vmul.f32 %v4163, %v4194
      %v4197 = vmul.f32 %v4166, %v4194
      %v4198 = vmul.f32 %v4169, %v4194
      %v4199 = vmul.f32 %v4172, %v4194
      %v4200 = vmul.f32 %v4175, %v4194
      %v4201 = vmul.f32 %v4178, %v4194
      %v4202 = vmul.f32 %v4181, %v4194
      %v4203 = vmul.f32 %v4184, %v4194
      %v4204 = vmul.f32 %v4187, %v4194
      %v4205 = vmul.f32 %v4190, %v4194
      %v4206 = vmul.f32 %v4193, %v4194
      %v4207 = vsub.f32 %v4146, %v4195
      %v4208 = vsub.f32 %v4147, %v4196
      %v4209 = vsub.f32 %v4148, %v4197
      %v4210 = vsub.f32 %v4149, %v4198
      %v4211 = vsub.f32 %v4150, %v4199
      %v4212 = vsub.f32 %v4151, %v4200
      %v4213 = vsub.f32 %v4152, %v4201
      %v4214 = vsub.f32 %v4153, %v4202
      %v4215 = vsub.f32 %v4154, %v4203
      %v4216 = vsub.f32 %v4155, %v4204
      %v4217 = vsub.f32 %v4156, %v4205
      %v4218 = vsub.f32 %v4157, %v4206
      %v4219 = vmul.f32 %v4207, %v4207
      %v4220 = vmul.f32 %v4208, %v4208
      %v4221 = vmul.f32 %v4209, %v4209
      %v4222 = vmul.f32 %v4210, %v4210
      %v4223 = vmul.f32 %v4211, %v4211
      %v4224 = vmul.f32 %v4212, %v4212
      %v4225 = vmul.f32 %v4213, %v4213
      %v4226 = vmul.f32 %v4214, %v4214
      %v4227 = vmul.f32 %v4215, %v4215
      %v4228 = vmul.f32 %v4216, %v4216
      %v4229 = vmul.f32 %v4217, %v4217
      %v4230 = vmul.f32 %v4218, %v4218
      %v4231 = vsel %vm1062, %v4219, 0.0
      %4232 = vadd.xlane.f32.xlu0 %v4231
      %v4233 = vpop.xlane.xlu0 %4232
      %v4234 = vsel %vm1062, %v4220, 0.0
      %4235 = vadd.xlane.f32.xlu0 %v4234
      %v4236 = vpop.xlane.xlu0 %4235
      %v4237 = vsel %vm1062, %v4221, 0.0
      %4238 = vadd.xlane.f32.xlu0 %v4237
      %v4239 = vpop.xlane.xlu0 %4238
      %v4240 = vsel %vm1062, %v4222, 0.0
      %4241 = vadd.xlane.f32.xlu0 %v4240
      %v4242 = vpop.xlane.xlu0 %4241
      %v4243 = vsel %vm1062, %v4223, 0.0
      %4244 = vadd.xlane.f32.xlu0 %v4243
      %v4245 = vpop.xlane.xlu0 %4244
      %v4246 = vsel %vm1062, %v4224, 0.0
      %4247 = vadd.xlane.f32.xlu0 %v4246
      %v4248 = vpop.xlane.xlu0 %4247
      %v4249 = vsel %vm1062, %v4225, 0.0
      %4250 = vadd.xlane.f32.xlu0 %v4249
      %v4251 = vpop.xlane.xlu0 %4250
      %v4252 = vsel %vm1062, %v4226, 0.0
      %4253 = vadd.xlane.f32.xlu0 %v4252
      %v4254 = vpop.xlane.xlu0 %4253
      %v4255 = vsel %vm1062, %v4227, 0.0
      %4256 = vadd.xlane.f32.xlu0 %v4255
      %v4257 = vpop.xlane.xlu0 %4256
      %v4258 = vsel %vm1062, %v4228, 0.0
      %4259 = vadd.xlane.f32.xlu0 %v4258
      %v4260 = vpop.xlane.xlu0 %4259
      %v4261 = vsel %vm1062, %v4229, 0.0
      %4262 = vadd.xlane.f32.xlu0 %v4261
      %v4263 = vpop.xlane.xlu0 %4262
      %v4264 = vsel %vm1062, %v4230, 0.0
      %4265 = vadd.xlane.f32.xlu0 %v4264
      %v4266 = vpop.xlane.xlu0 %4265
      %v4267 = vmul.f32 %v4233, %v4194
      %v4268 = vmul.f32 %v4236, %v4194
      %v4269 = vmul.f32 %v4239, %v4194
      %v4270 = vmul.f32 %v4242, %v4194
      %v4271 = vmul.f32 %v4245, %v4194
      %v4272 = vmul.f32 %v4248, %v4194
      %v4273 = vmul.f32 %v4251, %v4194
      %v4274 = vmul.f32 %v4254, %v4194
      %v4275 = vmul.f32 %v4257, %v4194
      %v4276 = vmul.f32 %v4260, %v4194
      %v4277 = vmul.f32 %v4263, %v4194
      %v4278 = vmul.f32 %v4266, %v4194
      %v4279 = vadd.f32 %v4267, 1e-05
      %v4280 = vadd.f32 %v4268, 1e-05
      %v4281 = vadd.f32 %v4269, 1e-05
      %v4282 = vadd.f32 %v4270, 1e-05
      %v4283 = vadd.f32 %v4271, 1e-05
      %v4284 = vadd.f32 %v4272, 1e-05
      %v4285 = vadd.f32 %v4273, 1e-05
      %v4286 = vadd.f32 %v4274, 1e-05
      %v4287 = vadd.f32 %v4275, 1e-05
      %v4288 = vadd.f32 %v4276, 1e-05
      %v4289 = vadd.f32 %v4277, 1e-05
      %v4290 = vadd.f32 %v4278, 1e-05
      %v4291 = vrsqrt.pop %v4279
      %v4292 = vrsqrt.pop %v4280
      %v4293 = vrsqrt.pop %v4281
      %v4294 = vrsqrt.pop %v4282
      %v4295 = vrsqrt.pop %v4283
      %v4296 = vrsqrt.pop %v4284
      %v4297 = vrsqrt.pop %v4285
      %v4298 = vrsqrt.pop %v4286
      %v4299 = vrsqrt.pop %v4287
      %v4300 = vrsqrt.pop %v4288
      %v4301 = vrsqrt.pop %v4289
      %v4302 = vrsqrt.pop %v4290
      %v4303 = vmul.f32 %v4207, %v4291
      %v4304 = vmul.f32 %v4208, %v4292
      %v4305 = vmul.f32 %v4209, %v4293
      %v4306 = vmul.f32 %v4210, %v4294
      %v4307 = vmul.f32 %v4211, %v4295
      %v4308 = vmul.f32 %v4212, %v4296
      %v4309 = vmul.f32 %v4213, %v4297
      %v4310 = vmul.f32 %v4214, %v4298
      %v4311 = vmul.f32 %v4215, %v4299
      %v4312 = vmul.f32 %v4216, %v4300
      %v4313 = vmul.f32 %v4217, %v4301
      %v4314 = vmul.f32 %v4218, %v4302
      %v4315 = vld [vmem:[%s7] sm:$0xff]
      %v4316 = vld [vmem:[%s7 + $0x8] sm:$0xff]
      %v4317 = vld [vmem:[%s7 + $0x10] sm:$0xff]
      %v4318 = vld [vmem:[%s7 + $0x18] sm:$0xff]
      %v4319 = vld [vmem:[%s8] sm:$0x1]
      %v4321 = vlaneseq
      %v4322 = vshrl.u32 %v4321, 7
      %v4323 = vsub.s32 0, %v4322
      %v4324 = vrot.slane %v4319, %v4323
      %v4327 = vsel %vm1062, %v4303, 0
      %v4330 = vsel %vm1062, %v4304, 0
      %v4333 = vsel %vm1062, %v4305, 0
      %v4336 = vsel %vm1062, %v4306, 0
      %v4339 = vsel %vm1062, %v4307, 0
      %v4342 = vsel %vm1062, %v4308, 0
      %v4345 = vsel %vm1062, %v4309, 0
      %v4348 = vsel %vm1062, %v4310, 0
      %v4351 = vsel %vm1062, %v4311, 0
      %v4354 = vsel %vm1062, %v4312, 0
      %v4357 = vsel %vm1062, %v4313, 0
      %v4360 = vsel %vm1062, %v4314, 0
      %4362 = vmatprep.subr.mxu0 0.0
      %4363 = vmatpush1.msra.mxu0 %v4315
      %4364 = vmatprep.subr.mxu0 0.0
      %4365 = vmatpush1.msra.mxu0 %v4316
      %4366 = vmatprep.subr.mxu0 0.0
      %4367 = vmatpush1.msra.mxu0 %v4317
      %4368 = vmatprep.subr.mxu0 0.0
      %4369 = vmatpush1.msra.mxu0 %v4318
      %4370 = vmatprep.subr.mxu0 0.0
      %4371 = vmatpush1.msra.mxu0 0.0
      %4372 = vmatprep.subr.mxu0 0.0
      %4373 = vmatpush1.msra.mxu0 0.0
      %4374 = vmatprep.subr.mxu0 0.0
      %4375 = vmatpush1.msra.mxu0 0.0
      %4376 = vmatprep.subr.mxu0 0.0
      %4377 = vmatpush1.msra.mxu0 0.0
      %4378 = vmatprep.subr.mxu0 0.0
      %4379 = vmatpush1.msra.mxu0 0.0
      %4380 = vmatprep.subr.mxu0 0.0
      %4381 = vmatpush1.msra.mxu0 0.0
      %4382 = vmatprep.subr.mxu0 0.0
      %4383 = vmatpush1.msra.mxu0 0.0
      %4384 = vmatprep.subr.mxu0 0.0
      %4385 = vmatpush1.msra.mxu0 0.0
      %4386 = vmatprep.subr.mxu0 0.0
      %4387 = vmatpush1.msra.mxu0 0.0
      %4388 = vmatprep.subr.mxu0 0.0
      %4389 = vmatpush1.msra.mxu0 0.0
      %4390 = vmatprep.subr.mxu0 0.0
      %4391 = vmatpush1.msra.mxu0 0.0
      %4392 = vmatprep.subr.mxu0 0.0
      %4393 = vmatpush1.msra.mxu0 0.0
      %4394 = vmatprep.subr.mxu0 0.0
      %4395 = vmatpush1.msra.mxu0 0.0
      %4396 = vmatprep.subr.mxu0 0.0
      %4397 = vmatpush1.msra.mxu0 0.0
      %4398 = vmatprep.subr.mxu0 0.0
      %4399 = vmatpush1.msra.mxu0 0.0
      %4400 = vmatprep.subr.mxu0 0.0
      %4401 = vmatpush1.msra.mxu0 0.0
      %4402 = vmatprep.subr.mxu0 0.0
      %4403 = vmatpush1.msra.mxu0 0.0
      %4404 = vmatprep.subr.mxu0 0.0
      %4405 = vmatpush1.msra.mxu0 0.0
      %4406 = vmatprep.subr.mxu0 0.0
      %4407 = vmatpush1.msra.mxu0 0.0
      %4408 = vmatprep.subr.mxu0 0.0
      %4409 = vmatpush1.msra.mxu0 0.0
      %4410 = vmatprep.subr.mxu0 0.0
      %4411 = vmatpush1.msra.mxu0 0.0
      %4412 = vmatprep.subr.mxu0 0.0
      %4413 = vmatpush1.msra.mxu0 0.0
      %4414 = vmatprep.subr.mxu0 0.0
      %4415 = vmatpush1.msra.mxu0 0.0
      %4416 = vmatprep.subr.mxu0 0.0
      %4417 = vmatpush1.msra.mxu0 0.0
      %4418 = vmatprep.subr.mxu0 0.0
      %4419 = vmatpush1.msra.mxu0 0.0
      %4420 = vmatprep.subr.mxu0 0.0
      %4421 = vmatpush1.msra.mxu0 0.0
      %4422 = vmatprep.subr.mxu0 0.0
      %4423 = vmatpush1.msra.mxu0 0.0
      %4424 = vmatprep.subr.mxu0 0.0
      %4425 = vmatpush1.msra.mxu0 0.0
      %4426 = vmatprep.mubr.f32.mxu0 0.0
      %4427 = vmatmul.mubr.f32.gmra.mrb[0].mxu0 %v4327
      %v4428 = vpop.f32.mrb[0].mxu0
      %v4429 = vadd.f32 %v4324, %v4428
      %v4430 = vpop.f32.mrb[0].mxu0
      %4431 = vmatprep.mubr.f32.mxu0 0.0
      %4432 = vmatmul.mubr.f32.gmra.mrb[0].mxu0 %v4330
      %v4433 = vpop.f32.mrb[0].mxu0
      %v4434 = vadd.f32 %v4324, %v4433
      %v4435 = vpop.f32.mrb[0].mxu0
      %4436 = vmatprep.mubr.f32.mxu0 0.0
      %4437 = vmatmul.mubr.f32.gmra.mrb[0].mxu0 %v4333
      %v4438 = vpop.f32.mrb[0].mxu0
      %v4439 = vadd.f32 %v4324, %v4438
      %v4440 = vpop.f32.mrb[0].mxu0
      %4441 = vmatprep.mubr.f32.mxu0 0.0
      %4442 = vmatmul.mubr.f32.gmra.mrb[0].mxu0 %v4336
      %v4443 = vpop.f32.mrb[0].mxu0
      %v4444 = vadd.f32 %v4324, %v4443
      %v4445 = vpop.f32.mrb[0].mxu0
      %4446 = vmatprep.mubr.f32.mxu0 0.0
      %4447 = vmatmul.mubr.f32.gmra.mrb[0].mxu0 %v4339
      %v4448 = vpop.f32.mrb[0].mxu0
      %v4449 = vadd.f32 %v4324, %v4448
      %v4450 = vpop.f32.mrb[0].mxu0
      %4451 = vmatprep.mubr.f32.mxu0 0.0
      %4452 = vmatmul.mubr.f32.gmra.mrb[0].mxu0 %v4342
      %v4453 = vpop.f32.mrb[0].mxu0
      %v4454 = vadd.f32 %v4324, %v4453
      %v4455 = vpop.f32.mrb[0].mxu0
      %4456 = vmatprep.mubr.f32.mxu0 0.0
      %4457 = vmatmul.mubr.f32.gmra.mrb[0].mxu0 %v4345
      %v4458 = vpop.f32.mrb[0].mxu0
      %v4459 = vadd.f32 %v4324, %v4458
      %v4460 = vpop.f32.mrb[0].mxu0
      %4461 = vmatprep.mubr.f32.mxu0 0.0
      %4462 = vmatmul.mubr.f32.gmra.mrb[0].mxu0 %v4348
      %v4463 = vpop.f32.mrb[0].mxu0
      %v4464 = vadd.f32 %v4324, %v4463
      %v4465 = vpop.f32.mrb[0].mxu0
      %4466 = vmatprep.mubr.f32.mxu0 0.0
      %4467 = vmatmul.mubr.f32.gmra.mrb[0].mxu0 %v4351
      %v4468 = vpop.f32.mrb[0].mxu0
      %v4469 = vadd.f32 %v4324, %v4468
      %v4470 = vpop.f32.mrb[0].mxu0
      %4471 = vmatprep.mubr.f32.mxu0 0.0
      %4472 = vmatmul.mubr.f32.gmra.mrb[0].mxu0 %v4354
      %v4473 = vpop.f32.mrb[0].mxu0
      %v4474 = vadd.f32 %v4324, %v4473
      %v4475 = vpop.f32.mrb[0].mxu0
      %4476 = vmatprep.mubr.f32.mxu0 0.0
      %4477 = vmatmul.mubr.f32.gmra.mrb[0].mxu0 %v4357
      %v4478 = vpop.f32.mrb[0].mxu0
      %v4479 = vadd.f32 %v4324, %v4478
      %v4480 = vpop.f32.mrb[0].mxu0
      %4481 = vmatprep.mubr.f32.mxu0 0.0
      %4482 = vmatmul.mubr.f32.gmra.mrb[0].mxu0 %v4360
      %v4483 = vpop.f32.mrb[0].mxu0
      %v4484 = vadd.f32 %v4324, %v4483
      %v4485 = vpop.f32.mrb[0].mxu0
      %4486 = vdwg.mxu0
      %v4487 = vmul.f32 %v4429, 0.5
      %v4488 = vmul.f32 %v4434, 0.5
      %v4489 = vmul.f32 %v4439, 0.5
      %v4490 = vmul.f32 %v4444, 0.5
      %v4491 = vmul.f32 %v4449, 0.5
      %v4492 = vmul.f32 %v4454, 0.5
      %v4493 = vmul.f32 %v4459, 0.5
      %v4494 = vmul.f32 %v4464, 0.5
      %v4495 = vmul.f32 %v4469, 0.5
      %v4496 = vmul.f32 %v4474, 0.5
      %v4497 = vmul.f32 %v4479, 0.5
      %v4498 = vmul.f32 %v4484, 0.5
      %v4499 = vmul.f32 %v4429, 0.044715
      %v4500 = vmul.f32 %v4434, 0.044715
      %v4501 = vmul.f32 %v4439, 0.044715
      %v4502 = vmul.f32 %v4444, 0.044715
      %v4503 = vmul.f32 %v4449, 0.044715
      %v4504 = vmul.f32 %v4454, 0.044715
      %v4505 = vmul.f32 %v4459, 0.044715
      %v4506 = vmul.f32 %v4464, 0.044715
      %v4507 = vmul.f32 %v4469, 0.044715
      %v4508 = vmul.f32 %v4474, 0.044715
      %v4509 = vmul.f32 %v4479, 0.044715
      %v4510 = vmul.f32 %v4484, 0.044715
      %v4511 = vmul.f32 %v4499, %v4429
      %v4512 = vmul.f32 %v4500, %v4434
      %v4513 = vmul.f32 %v4501, %v4439
      %v4514 = vmul.f32 %v4502, %v4444
      %v4515 = vmul.f32 %v4503, %v4449
      %v4516 = vmul.f32 %v4504, %v4454
      %v4517 = vmul.f32 %v4505, %v4459
      %v4518 = vmul.f32 %v4506, %v4464
      %v4519 = vmul.f32 %v4507, %v4469
      %v4520 = vmul.f32 %v4508, %v4474
      %v4521 = vmul.f32 %v4509, %v4479
      %v4522 = vmul.f32 %v4510, %v4484
      %v4523 = vmul.f32 %v4511, %v4429
      %v4524 = vmul.f32 %v4512, %v4434
      %v4525 = vmul.f32 %v4513, %v4439
      %v4526 = vmul.f32 %v4514, %v4444
      %v4527 = vmul.f32 %v4515, %v4449
      %v4528 = vmul.f32 %v4516, %v4454
      %v4529 = vmul.f32 %v4517, %v4459
      %v4530 = vmul.f32 %v4518, %v4464
      %v4531 = vmul.f32 %v4519, %v4469
      %v4532 = vmul.f32 %v4520, %v4474
      %v4533 = vmul.f32 %v4521, %v4479
      %v4534 = vmul.f32 %v4522, %v4484
      %v4535 = vadd.f32 %v4429, %v4523
      %v4536 = vadd.f32 %v4434, %v4524
      %v4537 = vadd.f32 %v4439, %v4525
      %v4538 = vadd.f32 %v4444, %v4526
      %v4539 = vadd.f32 %v4449, %v4527
      %v4540 = vadd.f32 %v4454, %v4528
      %v4541 = vadd.f32 %v4459, %v4529
      %v4542 = vadd.f32 %v4464, %v4530
      %v4543 = vadd.f32 %v4469, %v4531
      %v4544 = vadd.f32 %v4474, %v4532
      %v4545 = vadd.f32 %v4479, %v4533
      %v4546 = vadd.f32 %v4484, %v4534
      %v4547 = vmul.f32 %v4535, 0.7978846
      %v4548 = vmul.f32 %v4536, 0.7978846
      %v4549 = vmul.f32 %v4537, 0.7978846
      %v4550 = vmul.f32 %v4538, 0.7978846
      %v4551 = vmul.f32 %v4539, 0.7978846
      %v4552 = vmul.f32 %v4540, 0.7978846
      %v4553 = vmul.f32 %v4541, 0.7978846
      %v4554 = vmul.f32 %v4542, 0.7978846
      %v4555 = vmul.f32 %v4543, 0.7978846
      %v4556 = vmul.f32 %v4544, 0.7978846
      %v4557 = vmul.f32 %v4545, 0.7978846
      %v4558 = vmul.f32 %v4546, 0.7978846
      %v4559 = vtanh.pop %v4547
      %v4560 = vtanh.pop %v4548
      %v4561 = vtanh.pop %v4549
      %v4562 = vtanh.pop %v4550
      %v4563 = vtanh.pop %v4551
      %v4564 = vtanh.pop %v4552
      %v4565 = vtanh.pop %v4553
      %v4566 = vtanh.pop %v4554
      %v4567 = vtanh.pop %v4555
      %v4568 = vtanh.pop %v4556
      %v4569 = vtanh.pop %v4557
      %v4570 = vtanh.pop %v4558
      %v4571 = vadd.f32 %v4559, 1.0
      %v4572 = vadd.f32 %v4560, 1.0
      %v4573 = vadd.f32 %v4561, 1.0
      %v4574 = vadd.f32 %v4562, 1.0
      %v4575 = vadd.f32 %v4563, 1.0
      %v4576 = vadd.f32 %v4564, 1.0
      %v4577 = vadd.f32 %v4565, 1.0
      %v4578 = vadd.f32 %v4566, 1.0
      %v4579 = vadd.f32 %v4567, 1.0
      %v4580 = vadd.f32 %v4568, 1.0
      %v4581 = vadd.f32 %v4569, 1.0
      %v4582 = vadd.f32 %v4570, 1.0
      %v4583 = vmul.f32 %v4487, %v4571
      %v4584 = vmul.f32 %v4488, %v4572
      %v4585 = vmul.f32 %v4489, %v4573
      %v4586 = vmul.f32 %v4490, %v4574
      %v4587 = vmul.f32 %v4491, %v4575
      %v4588 = vmul.f32 %v4492, %v4576
      %v4589 = vmul.f32 %v4493, %v4577
      %v4590 = vmul.f32 %v4494, %v4578
      %v4591 = vmul.f32 %v4495, %v4579
      %v4592 = vmul.f32 %v4496, %v4580
      %v4593 = vmul.f32 %v4497, %v4581
      %v4594 = vmul.f32 %v4498, %v4582
      %v4595 = vld [vmem:[%s9] sm:$0xff]
      %v4596 = vld [vmem:[%s9 + $0x8] sm:$0xff]
      %v4597 = vld [vmem:[%s9 + $0x10] sm:$0xff]
      %v4598 = vld [vmem:[%s9 + $0x18] sm:$0xff]
      %v4599 = vld [vmem:[%s9 + $0x20] sm:$0xff]
      %v4600 = vld [vmem:[%s9 + $0x28] sm:$0xff]
      %v4601 = vld [vmem:[%s9 + $0x30] sm:$0xff]
      %v4602 = vld [vmem:[%s9 + $0x38] sm:$0xff]
      %v4603 = vld [vmem:[%s9 + $0x40] sm:$0xff]
      %v4604 = vld [vmem:[%s9 + $0x48] sm:$0xff]
      %v4605 = vld [vmem:[%s9 + $0x50] sm:$0xff]
      %v4606 = vld [vmem:[%s9 + $0x58] sm:$0xff]
      %v4607 = vld [vmem:[%s9 + $0x60] sm:$0xff]
      %v4608 = vld [vmem:[%s9 + $0x68] sm:$0xff]
      %v4609 = vld [vmem:[%s9 + $0x70] sm:$0xff]
      %v4610 = vld [vmem:[%s9 + $0x78] sm:$0xff]
      %v4611 = vld [vmem:[%s10] sm:$0x1]
      %v4613 = vlaneseq
      %v4614 = vshrl.u32 %v4613, 7
      %v4615 = vsub.s32 0, %v4614
      %v4616 = vrot.slane %v4611, %v4615
      %4618 = vmatprep.subr.mxu0 0.0
      %4619 = vmatpush1.msra.mxu0 %v4595
      %4620 = vmatprep.subr.mxu0 0.0
      %4621 = vmatpush1.msra.mxu0 %v4596
      %4622 = vmatprep.subr.mxu0 0.0
      %4623 = vmatpush1.msra.mxu0 %v4597
      %4624 = vmatprep.subr.mxu0 0.0
      %4625 = vmatpush1.msra.mxu0 %v4598
      %4626 = vmatprep.subr.mxu0 0.0
      %4627 = vmatpush1.msra.mxu0 %v4599
      %4628 = vmatprep.subr.mxu0 0.0
      %4629 = vmatpush1.msra.mxu0 %v4600
      %4630 = vmatprep.subr.mxu0 0.0
      %4631 = vmatpush1.msra.mxu0 %v4601
      %4632 = vmatprep.subr.mxu0 0.0
      %4633 = vmatpush1.msra.mxu0 %v4602
      %4634 = vmatprep.subr.mxu0 0.0
      %4635 = vmatpush1.msra.mxu0 %v4603
      %4636 = vmatprep.subr.mxu0 0.0
      %4637 = vmatpush1.msra.mxu0 %v4604
      %4638 = vmatprep.subr.mxu0 0.0
      %4639 = vmatpush1.msra.mxu0 %v4605
      %4640 = vmatprep.subr.mxu0 0.0
      %4641 = vmatpush1.msra.mxu0 %v4606
      %4642 = vmatprep.subr.mxu0 0.0
      %4643 = vmatpush1.msra.mxu0 %v4607
      %4644 = vmatprep.subr.mxu0 0.0
      %4645 = vmatpush1.msra.mxu0 %v4608
      %4646 = vmatprep.subr.mxu0 0.0
      %4647 = vmatpush1.msra.mxu0 %v4609
      %4648 = vmatprep.subr.mxu0 0.0
      %4649 = vmatpush1.msra.mxu0 %v4610
      %4650 = vmatprep.subr.mxu0 0.0
      %4651 = vmatpush1.msra.mxu0 0.0
      %4652 = vmatprep.subr.mxu0 0.0
      %4653 = vmatpush1.msra.mxu0 0.0
      %4654 = vmatprep.subr.mxu0 0.0
      %4655 = vmatpush1.msra.mxu0 0.0
      %4656 = vmatprep.subr.mxu0 0.0
      %4657 = vmatpush1.msra.mxu0 0.0
      %4658 = vmatprep.subr.mxu0 0.0
      %4659 = vmatpush1.msra.mxu0 0.0
      %4660 = vmatprep.subr.mxu0 0.0
      %4661 = vmatpush1.msra.mxu0 0.0
      %4662 = vmatprep.subr.mxu0 0.0
      %4663 = vmatpush1.msra.mxu0 0.0
      %4664 = vmatprep.subr.mxu0 0.0
      %4665 = vmatpush1.msra.mxu0 0.0
      %4666 = vmatprep.subr.mxu0 0.0
      %4667 = vmatpush1.msra.mxu0 0.0
      %4668 = vmatprep.subr.mxu0 0.0
      %4669 = vmatpush1.msra.mxu0 0.0
      %4670 = vmatprep.subr.mxu0 0.0
      %4671 = vmatpush1.msra.mxu0 0.0
      %4672 = vmatprep.subr.mxu0 0.0
      %4673 = vmatpush1.msra.mxu0 0.0
      %4674 = vmatprep.subr.mxu0 0.0
      %4675 = vmatpush1.msra.mxu0 0.0
      %4676 = vmatprep.subr.mxu0 0.0
      %4677 = vmatpush1.msra.mxu0 0.0
      %4678 = vmatprep.subr.mxu0 0.0
      %4679 = vmatpush1.msra.mxu0 0.0
      %4680 = vmatprep.subr.mxu0 0.0
      %4681 = vmatpush1.msra.mxu0 0.0
      %4682 = vmatprep.mubr.f32.mxu0 0.0
      %4683 = vmatmul.mubr.f32.gmra.mrb[0].mxu0 %v4583
      %v4684 = vpop.f32.mrb[0].mxu0
      %v4685 = vadd.f32 %v4616, %v4684
      %v4686 = vpop.f32.mrb[0].mxu0
      %4687 = vmatprep.mubr.f32.mxu0 0.0
      %4688 = vmatmul.mubr.f32.gmra.mrb[0].mxu0 %v4584
      %v4689 = vpop.f32.mrb[0].mxu0
      %v4690 = vadd.f32 %v4616, %v4689
      %v4691 = vpop.f32.mrb[0].mxu0
      %4692 = vmatprep.mubr.f32.mxu0 0.0
      %4693 = vmatmul.mubr.f32.gmra.mrb[0].mxu0 %v4585
      %v4694 = vpop.f32.mrb[0].mxu0
      %v4695 = vadd.f32 %v4616, %v4694
      %v4696 = vpop.f32.mrb[0].mxu0
      %4697 = vmatprep.mubr.f32.mxu0 0.0
      %4698 = vmatmul.mubr.f32.gmra.mrb[0].mxu0 %v4586
      %v4699 = vpop.f32.mrb[0].mxu0
      %v4700 = vadd.f32 %v4616, %v4699
      %v4701 = vpop.f32.mrb[0].mxu0
      %4702 = vmatprep.mubr.f32.mxu0 0.0
      %4703 = vmatmul.mubr.f32.gmra.mrb[0].mxu0 %v4587
      %v4704 = vpop.f32.mrb[0].mxu0
      %v4705 = vadd.f32 %v4616, %v4704
      %v4706 = vpop.f32.mrb[0].mxu0
      %4707 = vmatprep.mubr.f32.mxu0 0.0
      %4708 = vmatmul.mubr.f32.gmra.mrb[0].mxu0 %v4588
      %v4709 = vpop.f32.mrb[0].mxu0
      %v4710 = vadd.f32 %v4616, %v4709
      %v4711 = vpop.f32.mrb[0].mxu0
      %4712 = vmatprep.mubr.f32.mxu0 0.0
      %4713 = vmatmul.mubr.f32.gmra.mrb[0].mxu0 %v4589
      %v4714 = vpop.f32.mrb[0].mxu0
      %v4715 = vadd.f32 %v4616, %v4714
      %v4716 = vpop.f32.mrb[0].mxu0
      %4717 = vmatprep.mubr.f32.mxu0 0.0
      %4718 = vmatmul.mubr.f32.gmra.mrb[0].mxu0 %v4590
      %v4719 = vpop.f32.mrb[0].mxu0
      %v4720 = vadd.f32 %v4616, %v4719
      %v4721 = vpop.f32.mrb[0].mxu0
      %4722 = vmatprep.mubr.f32.mxu0 0.0
      %4723 = vmatmul.mubr.f32.gmra.mrb[0].mxu0 %v4591
      %v4724 = vpop.f32.mrb[0].mxu0
      %v4725 = vadd.f32 %v4616, %v4724
      %v4726 = vpop.f32.mrb[0].mxu0
      %4727 = vmatprep.mubr.f32.mxu0 0.0
      %4728 = vmatmul.mubr.f32.gmra.mrb[0].mxu0 %v4592
      %v4729 = vpop.f32.mrb[0].mxu0
      %v4730 = vadd.f32 %v4616, %v4729
      %v4731 = vpop.f32.mrb[0].mxu0
      %4732 = vmatprep.mubr.f32.mxu0 0.0
      %4733 = vmatmul.mubr.f32.gmra.mrb[0].mxu0 %v4593
      %v4734 = vpop.f32.mrb[0].mxu0
      %v4735 = vadd.f32 %v4616, %v4734
      %v4736 = vpop.f32.mrb[0].mxu0
      %4737 = vmatprep.mubr.f32.mxu0 0.0
      %4738 = vmatmul.mubr.f32.gmra.mrb[0].mxu0 %v4594
      %v4739 = vpop.f32.mrb[0].mxu0
      %v4740 = vadd.f32 %v4616, %v4739
      %v4741 = vpop.f32.mrb[0].mxu0
      %4742 = vdwg.mxu0
      %v4743 = vadd.f32 %v4303, %v4685
      %v4744 = vadd.f32 %v4304, %v4690
      %v4745 = vadd.f32 %v4305, %v4695
      %v4746 = vadd.f32 %v4306, %v4700
      %v4747 = vadd.f32 %v4307, %v4705
      %v4748 = vadd.f32 %v4308, %v4710
      %v4749 = vadd.f32 %v4309, %v4715
      %v4750 = vadd.f32 %v4310, %v4720
      %v4751 = vadd.f32 %v4311, %v4725
      %v4752 = vadd.f32 %v4312, %v4730
      %v4753 = vadd.f32 %v4313, %v4735
      %v4754 = vadd.f32 %v4314, %v4740
      %v4755 = vsel %vm1062, %v4743, 0.0
      %4756 = vadd.xlane.f32.xlu0 %v4755
      %v4757 = vpop.xlane.xlu0 %4756
      %v4758 = vsel %vm1062, %v4744, 0.0
      %4759 = vadd.xlane.f32.xlu0 %v4758
      %v4760 = vpop.xlane.xlu0 %4759
      %v4761 = vsel %vm1062, %v4745, 0.0
      %4762 = vadd.xlane.f32.xlu0 %v4761
      %v4763 = vpop.xlane.xlu0 %4762
      %v4764 = vsel %vm1062, %v4746, 0.0
      %4765 = vadd.xlane.f32.xlu0 %v4764
      %v4766 = vpop.xlane.xlu0 %4765
      %v4767 = vsel %vm1062, %v4747, 0.0
      %4768 = vadd.xlane.f32.xlu0 %v4767
      %v4769 = vpop.xlane.xlu0 %4768
      %v4770 = vsel %vm1062, %v4748, 0.0
      %4771 = vadd.xlane.f32.xlu0 %v4770
      %v4772 = vpop.xlane.xlu0 %4771
      %v4773 = vsel %vm1062, %v4749, 0.0
      %4774 = vadd.xlane.f32.xlu0 %v4773
      %v4775 = vpop.xlane.xlu0 %4774
      %v4776 = vsel %vm1062, %v4750, 0.0
      %4777 = vadd.xlane.f32.xlu0 %v4776
      %v4778 = vpop.xlane.xlu0 %4777
      %v4779 = vsel %vm1062, %v4751, 0.0
      %4780 = vadd.xlane.f32.xlu0 %v4779
      %v4781 = vpop.xlane.xlu0 %4780
      %v4782 = vsel %vm1062, %v4752, 0.0
      %4783 = vadd.xlane.f32.xlu0 %v4782
      %v4784 = vpop.xlane.xlu0 %4783
      %v4785 = vsel %vm1062, %v4753, 0.0
      %4786 = vadd.xlane.f32.xlu0 %v4785
      %v4787 = vpop.xlane.xlu0 %4786
      %v4788 = vsel %vm1062, %v4754, 0.0
      %4789 = vadd.xlane.f32.xlu0 %v4788
      %v4790 = vpop.xlane.xlu0 %4789
      %v4791 = vmul.f32 %v4757, %v4194
      %v4792 = vmul.f32 %v4760, %v4194
      %v4793 = vmul.f32 %v4763, %v4194
      %v4794 = vmul.f32 %v4766, %v4194
      %v4795 = vmul.f32 %v4769, %v4194
      %v4796 = vmul.f32 %v4772, %v4194
      %v4797 = vmul.f32 %v4775, %v4194
      %v4798 = vmul.f32 %v4778, %v4194
      %v4799 = vmul.f32 %v4781, %v4194
      %v4800 = vmul.f32 %v4784, %v4194
      %v4801 = vmul.f32 %v4787, %v4194
      %v4802 = vmul.f32 %v4790, %v4194
      %v4803 = vsub.f32 %v4743, %v4791
      %v4804 = vsub.f32 %v4744, %v4792
      %v4805 = vsub.f32 %v4745, %v4793
      %v4806 = vsub.f32 %v4746, %v4794
      %v4807 = vsub.f32 %v4747, %v4795
      %v4808 = vsub.f32 %v4748, %v4796
      %v4809 = vsub.f32 %v4749, %v4797
      %v4810 = vsub.f32 %v4750, %v4798
      %v4811 = vsub.f32 %v4751, %v4799
      %v4812 = vsub.f32 %v4752, %v4800
      %v4813 = vsub.f32 %v4753, %v4801
      %v4814 = vsub.f32 %v4754, %v4802
      %v4815 = vmul.f32 %v4803, %v4803
      %v4816 = vmul.f32 %v4804, %v4804
      %v4817 = vmul.f32 %v4805, %v4805
      %v4818 = vmul.f32 %v4806, %v4806
      %v4819 = vmul.f32 %v4807, %v4807
      %v4820 = vmul.f32 %v4808, %v4808
      %v4821 = vmul.f32 %v4809, %v4809
      %v4822 = vmul.f32 %v4810, %v4810
      %v4823 = vmul.f32 %v4811, %v4811
      %v4824 = vmul.f32 %v4812, %v4812
      %v4825 = vmul.f32 %v4813, %v4813
      %v4826 = vmul.f32 %v4814, %v4814
      %v4827 = vsel %vm1062, %v4815, 0.0
      %4828 = vadd.xlane.f32.xlu0 %v4827
      %v4829 = vpop.xlane.xlu0 %4828
      %v4830 = vsel %vm1062, %v4816, 0.0
      %4831 = vadd.xlane.f32.xlu0 %v4830
      %v4832 = vpop.xlane.xlu0 %4831
      %v4833 = vsel %vm1062, %v4817, 0.0
      %4834 = vadd.xlane.f32.xlu0 %v4833
      %v4835 = vpop.xlane.xlu0 %4834
      %v4836 = vsel %vm1062, %v4818, 0.0
      %4837 = vadd.xlane.f32.xlu0 %v4836
      %v4838 = vpop.xlane.xlu0 %4837
      %v4839 = vsel %vm1062, %v4819, 0.0
      %4840 = vadd.xlane.f32.xlu0 %v4839
      %v4841 = vpop.xlane.xlu0 %4840
      %v4842 = vsel %vm1062, %v4820, 0.0
      %4843 = vadd.xlane.f32.xlu0 %v4842
      %v4844 = vpop.xlane.xlu0 %4843
      %v4845 = vsel %vm1062, %v4821, 0.0
      %4846 = vadd.xlane.f32.xlu0 %v4845
      %v4847 = vpop.xlane.xlu0 %4846
      %v4848 = vsel %vm1062, %v4822, 0.0
      %4849 = vadd.xlane.f32.xlu0 %v4848
      %v4850 = vpop.xlane.xlu0 %4849
      %v4851 = vsel %vm1062, %v4823, 0.0
      %4852 = vadd.xlane.f32.xlu0 %v4851
      %v4853 = vpop.xlane.xlu0 %4852
      %v4854 = vsel %vm1062, %v4824, 0.0
      %4855 = vadd.xlane.f32.xlu0 %v4854
      %v4856 = vpop.xlane.xlu0 %4855
      %v4857 = vsel %vm1062, %v4825, 0.0
      %4858 = vadd.xlane.f32.xlu0 %v4857
      %v4859 = vpop.xlane.xlu0 %4858
      %v4860 = vsel %vm1062, %v4826, 0.0
      %4861 = vadd.xlane.f32.xlu0 %v4860
      %v4862 = vpop.xlane.xlu0 %4861
      %v4863 = vmul.f32 %v4829, %v4194
      %v4864 = vmul.f32 %v4832, %v4194
      %v4865 = vmul.f32 %v4835, %v4194
      %v4866 = vmul.f32 %v4838, %v4194
      %v4867 = vmul.f32 %v4841, %v4194
      %v4868 = vmul.f32 %v4844, %v4194
      %v4869 = vmul.f32 %v4847, %v4194
      %v4870 = vmul.f32 %v4850, %v4194
      %v4871 = vmul.f32 %v4853, %v4194
      %v4872 = vmul.f32 %v4856, %v4194
      %v4873 = vmul.f32 %v4859, %v4194
      %v4874 = vmul.f32 %v4862, %v4194
      %v4875 = vadd.f32 %v4863, 1e-05
      %v4876 = vadd.f32 %v4864, 1e-05
      %v4877 = vadd.f32 %v4865, 1e-05
      %v4878 = vadd.f32 %v4866, 1e-05
      %v4879 = vadd.f32 %v4867, 1e-05
      %v4880 = vadd.f32 %v4868, 1e-05
      %v4881 = vadd.f32 %v4869, 1e-05
      %v4882 = vadd.f32 %v4870, 1e-05
      %v4883 = vadd.f32 %v4871, 1e-05
      %v4884 = vadd.f32 %v4872, 1e-05
      %v4885 = vadd.f32 %v4873, 1e-05
      %v4886 = vadd.f32 %v4874, 1e-05
      %v4887 = vrsqrt.pop %v4875
      %v4888 = vrsqrt.pop %v4876
      %v4889 = vrsqrt.pop %v4877
      %v4890 = vrsqrt.pop %v4878
      %v4891 = vrsqrt.pop %v4879
      %v4892 = vrsqrt.pop %v4880
      %v4893 = vrsqrt.pop %v4881
      %v4894 = vrsqrt.pop %v4882
      %v4895 = vrsqrt.pop %v4883
      %v4896 = vrsqrt.pop %v4884
      %v4897 = vrsqrt.pop %v4885
      %v4898 = vrsqrt.pop %v4886
      %v4899 = vmul.f32 %v4803, %v4887
      %v4900 = vmul.f32 %v4804, %v4888
      %v4901 = vmul.f32 %v4805, %v4889
      %v4902 = vmul.f32 %v4806, %v4890
      %v4903 = vmul.f32 %v4807, %v4891
      %v4904 = vmul.f32 %v4808, %v4892
      %v4905 = vmul.f32 %v4809, %v4893
      %v4906 = vmul.f32 %v4810, %v4894
      %v4907 = vmul.f32 %v4811, %v4895
      %v4908 = vmul.f32 %v4812, %v4896
      %v4909 = vmul.f32 %v4813, %v4897
      %v4910 = vmul.f32 %v4814, %v4898
      %v4911 = vsel %vm1062, %v4899, 0.0
      %4912 = vadd.xlane.f32.xlu0 %v4911
      %v4913 = vpop.xlane.xlu0 %4912
      %v4914 = vsel %vm1062, %v4900, 0.0
      %4915 = vadd.xlane.f32.xlu0 %v4914
      %v4916 = vpop.xlane.xlu0 %4915
      %v4917 = vsel %vm1062, %v4901, 0.0
      %4918 = vadd.xlane.f32.xlu0 %v4917
      %v4919 = vpop.xlane.xlu0 %4918
      %v4920 = vsel %vm1062, %v4902, 0.0
      %4921 = vadd.xlane.f32.xlu0 %v4920
      %v4922 = vpop.xlane.xlu0 %4921
      %v4923 = vsel %vm1062, %v4903, 0.0
      %4924 = vadd.xlane.f32.xlu0 %v4923
      %v4925 = vpop.xlane.xlu0 %4924
      %v4926 = vsel %vm1062, %v4904, 0.0
      %4927 = vadd.xlane.f32.xlu0 %v4926
      %v4928 = vpop.xlane.xlu0 %4927
      %v4929 = vsel %vm1062, %v4905, 0.0
      %4930 = vadd.xlane.f32.xlu0 %v4929
      %v4931 = vpop.xlane.xlu0 %4930
      %v4932 = vsel %vm1062, %v4906, 0.0
      %4933 = vadd.xlane.f32.xlu0 %v4932
      %v4934 = vpop.xlane.xlu0 %4933
      %v4935 = vsel %vm1062, %v4907, 0.0
      %4936 = vadd.xlane.f32.xlu0 %v4935
      %v4937 = vpop.xlane.xlu0 %4936
      %v4938 = vsel %vm1062, %v4908, 0.0
      %4939 = vadd.xlane.f32.xlu0 %v4938
      %v4940 = vpop.xlane.xlu0 %4939
      %v4941 = vsel %vm1062, %v4909, 0.0
      %4942 = vadd.xlane.f32.xlu0 %v4941
      %v4943 = vpop.xlane.xlu0 %4942
      %v4944 = vsel %vm1062, %v4910, 0.0
      %4945 = vadd.xlane.f32.xlu0 %v4944
      %v4946 = vpop.xlane.xlu0 %4945
      %v4947 = vmul.f32 %v4913, %v4194
      %v4948 = vmul.f32 %v4916, %v4194
      %v4949 = vmul.f32 %v4919, %v4194
      %v4950 = vmul.f32 %v4922, %v4194
      %v4951 = vmul.f32 %v4925, %v4194
      %v4952 = vmul.f32 %v4928, %v4194
      %v4953 = vmul.f32 %v4931, %v4194
      %v4954 = vmul.f32 %v4934, %v4194
      %v4955 = vmul.f32 %v4937, %v4194
      %v4956 = vmul.f32 %v4940, %v4194
      %v4957 = vmul.f32 %v4943, %v4194
      %v4958 = vmul.f32 %v4946, %v4194
      %v4959 = vsub.f32 %v4899, %v4947
      %v4960 = vsub.f32 %v4900, %v4948
      %v4961 = vsub.f32 %v4901, %v4949
      %v4962 = vsub.f32 %v4902, %v4950
      %v4963 = vsub.f32 %v4903, %v4951
      %v4964 = vsub.f32 %v4904, %v4952
      %v4965 = vsub.f32 %v4905, %v4953
      %v4966 = vsub.f32 %v4906, %v4954
      %v4967 = vsub.f32 %v4907, %v4955
      %v4968 = vsub.f32 %v4908, %v4956
      %v4969 = vsub.f32 %v4909, %v4957
      %v4970 = vsub.f32 %v4910, %v4958
      %v4971 = vmul.f32 %v4959, %v4959
      %v4972 = vmul.f32 %v4960, %v4960
      %v4973 = vmul.f32 %v4961, %v4961
      %v4974 = vmul.f32 %v4962, %v4962
      %v4975 = vmul.f32 %v4963, %v4963
      %v4976 = vmul.f32 %v4964, %v4964
      %v4977 = vmul.f32 %v4965, %v4965
      %v4978 = vmul.f32 %v4966, %v4966
      %v4979 = vmul.f32 %v4967, %v4967
      %v4980 = vmul.f32 %v4968, %v4968
      %v4981 = vmul.f32 %v4969, %v4969
      %v4982 = vmul.f32 %v4970, %v4970
      %v4983 = vsel %vm1062, %v4971, 0.0
      %4984 = vadd.xlane.f32.xlu0 %v4983
      %v4985 = vpop.xlane.xlu0 %4984
      %v4986 = vsel %vm1062, %v4972, 0.0
      %4987 = vadd.xlane.f32.xlu0 %v4986
      %v4988 = vpop.xlane.xlu0 %4987
      %v4989 = vsel %vm1062, %v4973, 0.0
      %4990 = vadd.xlane.f32.xlu0 %v4989
      %v4991 = vpop.xlane.xlu0 %4990
      %v4992 = vsel %vm1062, %v4974, 0.0
      %4993 = vadd.xlane.f32.xlu0 %v4992
      %v4994 = vpop.xlane.xlu0 %4993
      %v4995 = vsel %vm1062, %v4975, 0.0
      %4996 = vadd.xlane.f32.xlu0 %v4995
      %v4997 = vpop.xlane.xlu0 %4996
      %v4998 = vsel %vm1062, %v4976, 0.0
      %4999 = vadd.xlane.f32.xlu0 %v4998
      %v5000 = vpop.xlane.xlu0 %4999
      %v5001 = vsel %vm1062, %v4977, 0.0
      %5002 = vadd.xlane.f32.xlu0 %v5001
      %v5003 = vpop.xlane.xlu0 %5002
      %v5004 = vsel %vm1062, %v4978, 0.0
      %5005 = vadd.xlane.f32.xlu0 %v5004
      %v5006 = vpop.xlane.xlu0 %5005
      %v5007 = vsel %vm1062, %v4979, 0.0
      %5008 = vadd.xlane.f32.xlu0 %v5007
      %v5009 = vpop.xlane.xlu0 %5008
      %v5010 = vsel %vm1062, %v4980, 0.0
      %5011 = vadd.xlane.f32.xlu0 %v5010
      %v5012 = vpop.xlane.xlu0 %5011
      %v5013 = vsel %vm1062, %v4981, 0.0
      %5014 = vadd.xlane.f32.xlu0 %v5013
      %v5015 = vpop.xlane.xlu0 %5014
      %v5016 = vsel %vm1062, %v4982, 0.0
      %5017 = vadd.xlane.f32.xlu0 %v5016
      %v5018 = vpop.xlane.xlu0 %5017
      %v5019 = vmul.f32 %v4985, %v4194
      %v5020 = vmul.f32 %v4988, %v4194
      %v5021 = vmul.f32 %v4991, %v4194
      %v5022 = vmul.f32 %v4994, %v4194
      %v5023 = vmul.f32 %v4997, %v4194
      %v5024 = vmul.f32 %v5000, %v4194
      %v5025 = vmul.f32 %v5003, %v4194
      %v5026 = vmul.f32 %v5006, %v4194
      %v5027 = vmul.f32 %v5009, %v4194
      %v5028 = vmul.f32 %v5012, %v4194
      %v5029 = vmul.f32 %v5015, %v4194
      %v5030 = vmul.f32 %v5018, %v4194
      %v5031 = vadd.f32 %v5019, 1e-05
      %v5032 = vadd.f32 %v5020, 1e-05
      %v5033 = vadd.f32 %v5021, 1e-05
      %v5034 = vadd.f32 %v5022, 1e-05
      %v5035 = vadd.f32 %v5023, 1e-05
      %v5036 = vadd.f32 %v5024, 1e-05
      %v5037 = vadd.f32 %v5025, 1e-05
      %v5038 = vadd.f32 %v5026, 1e-05
      %v5039 = vadd.f32 %v5027, 1e-05
      %v5040 = vadd.f32 %v5028, 1e-05
      %v5041 = vadd.f32 %v5029, 1e-05
      %v5042 = vadd.f32 %v5030, 1e-05
      %v5043 = vrsqrt.pop %v5031
      %v5044 = vrsqrt.pop %v5032
      %v5045 = vrsqrt.pop %v5033
      %v5046 = vrsqrt.pop %v5034
      %v5047 = vrsqrt.pop %v5035
      %v5048 = vrsqrt.pop %v5036
      %v5049 = vrsqrt.pop %v5037
      %v5050 = vrsqrt.pop %v5038
      %v5051 = vrsqrt.pop %v5039
      %v5052 = vrsqrt.pop %v5040
      %v5053 = vrsqrt.pop %v5041
      %v5054 = vrsqrt.pop %v5042
      %v5055 = vmul.f32 %v4959, %v5043
      %v5056 = vmul.f32 %v4960, %v5044
      %v5057 = vmul.f32 %v4961, %v5045
      %v5058 = vmul.f32 %v4962, %v5046
      %v5059 = vmul.f32 %v4963, %v5047
      %v5060 = vmul.f32 %v4964, %v5048
      %v5061 = vmul.f32 %v4965, %v5049
      %v5062 = vmul.f32 %v4966, %v5050
      %v5063 = vmul.f32 %v4967, %v5051
      %v5064 = vmul.f32 %v4968, %v5052
      %v5065 = vmul.f32 %v4969, %v5053
      %v5066 = vmul.f32 %v4970, %v5054
      %v5067 = vld [vmem:[%s11] sm:$0xff]
      %v5068 = vld [vmem:[%s11 + $0x8] sm:$0xff]
      %v5069 = vld [vmem:[%s11 + $0x10] sm:$0xff]
      %v5070 = vld [vmem:[%s11 + $0x18] sm:$0xff]
      %v5071 = vld [vmem:[%s11 + $0x20] sm:$0xff]
      %v5072 = vld [vmem:[%s11 + $0x28] sm:$0xff]
      %v5073 = vld [vmem:[%s11 + $0x30] sm:$0xff]
      %v5074 = vld [vmem:[%s11 + $0x38] sm:$0xff]
      %v5075 = vld [vmem:[%s12] sm:$0x3]
      %v5077 = vlaneseq
      %v5078 = vshrl.u32 %v5077, 7
      %v5079 = vsub.s32 0, %v5078
      %v5080 = vrot.slane %v5075, %v5079
      %v5081 = vlaneseq
      %v5082 = vshrl.u32 %v5081, 7
      %v5083 = vsub.s32 1, %v5082
      %v5084 = vrot.slane %v5075, %v5083
      %v5088 = vsel %vm1062, %v5055, 0
      %v5091 = vsel %vm1062, %v5056, 0
      %v5094 = vsel %vm1062, %v5057, 0
      %v5097 = vsel %vm1062, %v5058, 0
      %v5100 = vsel %vm1062, %v5059, 0
      %v5103 = vsel %vm1062, %v5060, 0
      %v5106 = vsel %vm1062, %v5061, 0
      %v5109 = vsel %vm1062, %v5062, 0
      %v5112 = vsel %vm1062, %v5063, 0
      %v5115 = vsel %vm1062, %v5064, 0
      %v5118 = vsel %vm1062, %v5065, 0
      %v5121 = vsel %vm1062, %v5066, 0
      %5123 = vmatprep.subr.mxu0 %v5068
      %5124 = vmatpush1.msra.mxu0 %v5067
      %5125 = vmatprep.subr.mxu0 %v5070
      %5126 = vmatpush1.msra.mxu0 %v5069
      %5127 = vmatprep.subr.mxu0 %v5072
      %5128 = vmatpush1.msra.mxu0 %v5071
      %5129 = vmatprep.subr.mxu0 %v5074
      %5130 = vmatpush1.msra.mxu0 %v5073
      %5131 = vmatprep.subr.mxu0 0.0
      %5132 = vmatpush1.msra.mxu0 0.0
      %5133 = vmatprep.subr.mxu0 0.0
      %5134 = vmatpush1.msra.mxu0 0.0
      %5135 = vmatprep.subr.mxu0 0.0
      %5136 = vmatpush1.msra.mxu0 0.0
      %5137 = vmatprep.subr.mxu0 0.0
      %5138 = vmatpush1.msra.mxu0 0.0
      %5139 = vmatprep.subr.mxu0 0.0
      %5140 = vmatpush1.msra.mxu0 0.0
      %5141 = vmatprep.subr.mxu0 0.0
      %5142 = vmatpush1.msra.mxu0 0.0
      %5143 = vmatprep.subr.mxu0 0.0
      %5144 = vmatpush1.msra.mxu0 0.0
      %5145 = vmatprep.subr.mxu0 0.0
      %5146 = vmatpush1.msra.mxu0 0.0
      %5147 = vmatprep.subr.mxu0 0.0
      %5148 = vmatpush1.msra.mxu0 0.0
      %5149 = vmatprep.subr.mxu0 0.0
      %5150 = vmatpush1.msra.mxu0 0.0
      %5151 = vmatprep.subr.mxu0 0.0
      %5152 = vmatpush1.msra.mxu0 0.0
      %5153 = vmatprep.subr.mxu0 0.0
      %5154 = vmatpush1.msra.mxu0 0.0
      %5155 = vmatprep.subr.mxu0 0.0
      %5156 = vmatpush1.msra.mxu0 0.0
      %5157 = vmatprep.subr.mxu0 0.0
      %5158 = vmatpush1.msra.mxu0 0.0
      %5159 = vmatprep.subr.mxu0 0.0
      %5160 = vmatpush1.msra.mxu0 0.0
      %5161 = vmatprep.subr.mxu0 0.0
      %5162 = vmatpush1.msra.mxu0 0.0
      %5163 = vmatprep.subr.mxu0 0.0
      %5164 = vmatpush1.msra.mxu0 0.0
      %5165 = vmatprep.subr.mxu0 0.0
      %5166 = vmatpush1.msra.mxu0 0.0
      %5167 = vmatprep.subr.mxu0 0.0
      %5168 = vmatpush1.msra.mxu0 0.0
      %5169 = vmatprep.subr.mxu0 0.0
      %5170 = vmatpush1.msra.mxu0 0.0
      %5171 = vmatprep.subr.mxu0 0.0
      %5172 = vmatpush1.msra.mxu0 0.0
      %5173 = vmatprep.subr.mxu0 0.0
      %5174 = vmatpush1.msra.mxu0 0.0
      %5175 = vmatprep.subr.mxu0 0.0
      %5176 = vmatpush1.msra.mxu0 0.0
      %5177 = vmatprep.subr.mxu0 0.0
      %5178 = vmatpush1.msra.mxu0 0.0
      %5179 = vmatprep.subr.mxu0 0.0
      %5180 = vmatpush1.msra.mxu0 0.0
      %5181 = vmatprep.subr.mxu0 0.0
      %5182 = vmatpush1.msra.mxu0 0.0
      %5183 = vmatprep.subr.mxu0 0.0
      %5184 = vmatpush1.msra.mxu0 0.0
      %5185 = vmatprep.subr.mxu0 0.0
      %5186 = vmatpush1.msra.mxu0 0.0
      %5187 = vmatprep.mubr.f32.mxu0 0.0
      %5188 = vmatmul.mubr.f32.gmra.mrb[0].mxu0 %v5088
      %v5189 = vpop.f32.mrb[0].mxu0
      %v5190 = vadd.f32 %v5080, %v5189
      %v5191 = vpop.f32.mrb[0].mxu0
      %v5192 = vadd.f32 %v5084, %v5191
      %5193 = vmatprep.mubr.f32.mxu0 0.0
      %5194 = vmatmul.mubr.f32.gmra.mrb[0].mxu0 %v5091
      %v5195 = vpop.f32.mrb[0].mxu0
      %v5196 = vadd.f32 %v5080, %v5195
      %v5197 = vpop.f32.mrb[0].mxu0
      %v5198 = vadd.f32 %v5084, %v5197
      %5199 = vmatprep.mubr.f32.mxu0 0.0
      %5200 = vmatmul.mubr.f32.gmra.mrb[0].mxu0 %v5094
      %v5201 = vpop.f32.mrb[0].mxu0
      %v5202 = vadd.f32 %v5080, %v5201
      %v5203 = vpop.f32.mrb[0].mxu0
      %v5204 = vadd.f32 %v5084, %v5203
      %5205 = vmatprep.mubr.f32.mxu0 0.0
      %5206 = vmatmul.mubr.f32.gmra.mrb[0].mxu0 %v5097
      %v5207 = vpop.f32.mrb[0].mxu0
      %v5208 = vadd.f32 %v5080, %v5207
      %v5209 = vpop.f32.mrb[0].mxu0
      %v5210 = vadd.f32 %v5084, %v5209
      %5211 = vmatprep.mubr.f32.mxu0 0.0
      %5212 = vmatmul.mubr.f32.gmra.mrb[0].mxu0 %v5100
      %v5213 = vpop.f32.mrb[0].mxu0
      %v5214 = vadd.f32 %v5080, %v5213
      %v5215 = vpop.f32.mrb[0].mxu0
      %v5216 = vadd.f32 %v5084, %v5215
      %5217 = vmatprep.mubr.f32.mxu0 0.0
      %5218 = vmatmul.mubr.f32.gmra.mrb[0].mxu0 %v5103
      %v5219 = vpop.f32.mrb[0].mxu0
      %v5220 = vadd.f32 %v5080, %v5219
      %v5221 = vpop.f32.mrb[0].mxu0
      %v5222 = vadd.f32 %v5084, %v5221
      %5223 = vmatprep.mubr.f32.mxu0 0.0
      %5224 = vmatmul.mubr.f32.gmra.mrb[0].mxu0 %v5106
      %v5225 = vpop.f32.mrb[0].mxu0
      %v5226 = vadd.f32 %v5080, %v5225
      %v5227 = vpop.f32.mrb[0].mxu0
      %v5228 = vadd.f32 %v5084, %v5227
      %5229 = vmatprep.mubr.f32.mxu0 0.0
      %5230 = vmatmul.mubr.f32.gmra.mrb[0].mxu0 %v5109
      %v5231 = vpop.f32.mrb[0].mxu0
      %v5232 = vadd.f32 %v5080, %v5231
      %v5233 = vpop.f32.mrb[0].mxu0
      %v5234 = vadd.f32 %v5084, %v5233
      %5235 = vmatprep.mubr.f32.mxu0 0.0
      %5236 = vmatmul.mubr.f32.gmra.mrb[0].mxu0 %v5112
      %v5237 = vpop.f32.mrb[0].mxu0
      %v5238 = vadd.f32 %v5080, %v5237
      %v5239 = vpop.f32.mrb[0].mxu0
      %v5240 = vadd.f32 %v5084, %v5239
      %5241 = vmatprep.mubr.f32.mxu0 0.0
      %5242 = vmatmul.mubr.f32.gmra.mrb[0].mxu0 %v5115
      %v5243 = vpop.f32.mrb[0].mxu0
      %v5244 = vadd.f32 %v5080, %v5243
      %v5245 = vpop.f32.mrb[0].mxu0
      %v5246 = vadd.f32 %v5084, %v5245
      %5247 = vmatprep.mubr.f32.mxu0 0.0
      %5248 = vmatmul.mubr.f32.gmra.mrb[0].mxu0 %v5118
      %v5249 = vpop.f32.mrb[0].mxu0
      %v5250 = vadd.f32 %v5080, %v5249
      %v5251 = vpop.f32.mrb[0].mxu0
      %v5252 = vadd.f32 %v5084, %v5251
      %5253 = vmatprep.mubr.f32.mxu0 0.0
      %5254 = vmatmul.mubr.f32.gmra.mrb[0].mxu0 %v5121
      %v5255 = vpop.f32.mrb[0].mxu0
      %v5256 = vadd.f32 %v5080, %v5255
      %v5257 = vpop.f32.mrb[0].mxu0
      %v5258 = vadd.f32 %v5084, %v5257
      %5259 = vdwg.mxu0
      %v5260 = vld [vmem:[%s13] sm:$0xff]
      %v5261 = vld [vmem:[%s13 + $0x8] sm:$0xff]
      %v5262 = vld [vmem:[%s13 + $0x10] sm:$0xff]
      %v5263 = vld [vmem:[%s13 + $0x18] sm:$0xff]
      %v5264 = vld [vmem:[%s13 + $0x20] sm:$0xff]
      %v5265 = vld [vmem:[%s13 + $0x28] sm:$0xff]
      %v5266 = vld [vmem:[%s13 + $0x30] sm:$0xff]
      %v5267 = vld [vmem:[%s13 + $0x38] sm:$0xff]
      %v5268 = vld [vmem:[%s14] sm:$0xff]
      %v5269 = vld [vmem:[%s14 + $0x8] sm:$0xff]
      %v5270 = vld [vmem:[%s14 + $0x10] sm:$0xff]
      %v5271 = vld [vmem:[%s14 + $0x18] sm:$0xff]
      %v5272 = vld [vmem:[%s14 + $0x20] sm:$0xff]
      %v5273 = vld [vmem:[%s14 + $0x28] sm:$0xff]
      %v5274 = vld [vmem:[%s14 + $0x30] sm:$0xff]
      %v5275 = vld [vmem:[%s14 + $0x38] sm:$0xff]
      %v5277 = vsel %vm3973, 0.0, 0
      %5279 = vmatprep.subr.mxu0 0.0
      %5280 = vmatpush1.msra.mxu0 %v5260
      %5281 = vmatprep.subr.mxu0 0.0
      %5282 = vmatpush1.msra.mxu0 %v5261
      %5283 = vmatprep.subr.mxu0 0.0
      %5284 = vmatpush1.msra.mxu0 %v5262
      %5285 = vmatprep.subr.mxu0 0.0
      %5286 = vmatpush1.msra.mxu0 %v5263
      %5287 = vmatprep.subr.mxu0 0.0
      %5288 = vmatpush1.msra.mxu0 %v5264
      %5289 = vmatprep.subr.mxu0 0.0
      %5290 = vmatpush1.msra.mxu0 %v5265
      %5291 = vmatprep.subr.mxu0 0.0
      %5292 = vmatpush1.msra.mxu0 %v5266
      %5293 = vmatprep.subr.mxu0 0.0
      %5294 = vmatpush1.msra.mxu0 %v5267
      %5295 = vmatprep.subr.mxu0 0.0
      %5296 = vmatpush1.msra.mxu0 0.0
      %5297 = vmatprep.subr.mxu0 0.0
      %5298 = vmatpush1.msra.mxu0 0.0
      %5299 = vmatprep.subr.mxu0 0.0
      %5300 = vmatpush1.msra.mxu0 0.0
      %5301 = vmatprep.subr.mxu0 0.0
      %5302 = vmatpush1.msra.mxu0 0.0
      %5303 = vmatprep.subr.mxu0 0.0
      %5304 = vmatpush1.msra.mxu0 0.0
      %5305 = vmatprep.subr.mxu0 0.0
      %5306 = vmatpush1.msra.mxu0 0.0
      %5307 = vmatprep.subr.mxu0 0.0
      %5308 = vmatpush1.msra.mxu0 0.0
      %5309 = vmatprep.subr.mxu0 0.0
      %5310 = vmatpush1.msra.mxu0 0.0
      %5311 = vmatprep.subr.mxu0 0.0
      %5312 = vmatpush1.msra.mxu0 0.0
      %5313 = vmatprep.subr.mxu0 0.0
      %5314 = vmatpush1.msra.mxu0 0.0
      %5315 = vmatprep.subr.mxu0 0.0
      %5316 = vmatpush1.msra.mxu0 0.0
      %5317 = vmatprep.subr.mxu0 0.0
      %5318 = vmatpush1.msra.mxu0 0.0
      %5319 = vmatprep.subr.mxu0 0.0
      %5320 = vmatpush1.msra.mxu0 0.0
      %5321 = vmatprep.subr.mxu0 0.0
      %5322 = vmatpush1.msra.mxu0 0.0
      %5323 = vmatprep.subr.mxu0 0.0
      %5324 = vmatpush1.msra.mxu0 0.0
      %5325 = vmatprep.subr.mxu0 0.0
      %5326 = vmatpush1.msra.mxu0 0.0
      %5327 = vmatprep.subr.mxu0 0.0
      %5328 = vmatpush1.msra.mxu0 0.0
      %5329 = vmatprep.subr.mxu0 0.0
      %5330 = vmatpush1.msra.mxu0 0.0
      %5331 = vmatprep.subr.mxu0 0.0
      %5332 = vmatpush1.msra.mxu0 0.0
      %5333 = vmatprep.subr.mxu0 0.0
      %5334 = vmatpush1.msra.mxu0 0.0
      %5335 = vmatprep.subr.mxu0 0.0
      %5336 = vmatpush1.msra.mxu0 0.0
      %5337 = vmatprep.subr.mxu0 0.0
      %5338 = vmatpush1.msra.mxu0 0.0
      %5339 = vmatprep.subr.mxu0 0.0
      %5340 = vmatpush1.msra.mxu0 0.0
      %5341 = vmatprep.subr.mxu0 0.0
      %5342 = vmatpush1.msra.mxu0 0.0
      %5343 = vmatprep.mubr.f32.mxu0 0.0
      %5344 = vmatmul.mubr.f32.gmra.mrb[0].mxu0 %v5277
      %v5345 = vpop.f32.mrb[0].mxu0
      %v5346 = vadd.f32 0.0, %v5345
      %v5347 = vpop.f32.mrb[0].mxu0
      %5348 = vdwg.mxu0
      %v5349 = vadd.f32 %v5190, %v5346
      %v5350 = vxor.u32 %v5349, 2147483648
      %v5351 = vmul.f32 %v5350, 1.442695
      %v5352 = vpow.pop %v5351
      %v5353 = vadd.f32 %v5352, 1.0
      %v5354 = vrcp.pop %v5353
      %v5355 = vmul.f32 1.0, %v5354
      %v5356 = vmul.f32 %v5355, 0.0
      %5358 = vrot.lane.b32.xlu0 %v5356, 64
      %v5359 = vpop.permute.xlu0 %5358
      %v5360 = vsel %vm3973, %v5359, 0
      %5362 = vmatprep.subr.mxu0 0.0
      %5363 = vmatpush1.msra.mxu0 %v5268
      %5364 = vmatprep.subr.mxu0 0.0
      %5365 = vmatpush1.msra.mxu0 %v5269
      %5366 = vmatprep.subr.mxu0 0.0
      %5367 = vmatpush1.msra.mxu0 %v5270
      %5368 = vmatprep.subr.mxu0 0.0
      %5369 = vmatpush1.msra.mxu0 %v5271
      %5370 = vmatprep.subr.mxu0 0.0
      %5371 = vmatpush1.msra.mxu0 %v5272
      %5372 = vmatprep.subr.mxu0 0.0
      %5373 = vmatpush1.msra.mxu0 %v5273
      %5374 = vmatprep.subr.mxu0 0.0
      %5375 = vmatpush1.msra.mxu0 %v5274
      %5376 = vmatprep.subr.mxu0 0.0
      %5377 = vmatpush1.msra.mxu0 %v5275
      %5378 = vmatprep.subr.mxu0 0.0
      %5379 = vmatpush1.msra.mxu0 0.0
      %5380 = vmatprep.subr.mxu0 0.0
      %5381 = vmatpush1.msra.mxu0 0.0
      %5382 = vmatprep.subr.mxu0 0.0
      %5383 = vmatpush1.msra.mxu0 0.0
      %5384 = vmatprep.subr.mxu0 0.0
      %5385 = vmatpush1.msra.mxu0 0.0
      %5386 = vmatprep.subr.mxu0 0.0
      %5387 = vmatpush1.msra.mxu0 0.0
      %5388 = vmatprep.subr.mxu0 0.0
      %5389 = vmatpush1.msra.mxu0 0.0
      %5390 = vmatprep.subr.mxu0 0.0
      %5391 = vmatpush1.msra.mxu0 0.0
      %5392 = vmatprep.subr.mxu0 0.0
      %5393 = vmatpush1.msra.mxu0 0.0
      %5394 = vmatprep.subr.mxu0 0.0
      %5395 = vmatpush1.msra.mxu0 0.0
      %5396 = vmatprep.subr.mxu0 0.0
      %5397 = vmatpush1.msra.mxu0 0.0
      %5398 = vmatprep.subr.mxu0 0.0
      %5399 = vmatpush1.msra.mxu0 0.0
      %5400 = vmatprep.subr.mxu0 0.0
      %5401 = vmatpush1.msra.mxu0 0.0
      %5402 = vmatprep.subr.mxu0 0.0
      %5403 = vmatpush1.msra.mxu0 0.0
      %5404 = vmatprep.subr.mxu0 0.0
      %5405 = vmatpush1.msra.mxu0 0.0
      %5406 = vmatprep.subr.mxu0 0.0
      %5407 = vmatpush1.msra.mxu0 0.0
      %5408 = vmatprep.subr.mxu0 0.0
      %5409 = vmatpush1.msra.mxu0 0.0
      %5410 = vmatprep.subr.mxu0 0.0
      %5411 = vmatpush1.msra.mxu0 0.0
      %5412 = vmatprep.subr.mxu0 0.0
      %5413 = vmatpush1.msra.mxu0 0.0
      %5414 = vmatprep.subr.mxu0 0.0
      %5415 = vmatpush1.msra.mxu0 0.0
      %5416 = vmatprep.subr.mxu0 0.0
      %5417 = vmatpush1.msra.mxu0 0.0
      %5418 = vmatprep.subr.mxu0 0.0
      %5419 = vmatpush1.msra.mxu0 0.0
      %5420 = vmatprep.subr.mxu0 0.0
      %5421 = vmatpush1.msra.mxu0 0.0
      %5422 = vmatprep.subr.mxu0 0.0
      %5423 = vmatpush1.msra.mxu0 0.0
      %5424 = vmatprep.subr.mxu0 0.0
      %5425 = vmatpush1.msra.mxu0 0.0
      %5426 = vmatprep.mubr.f32.mxu0 0.0
      %5427 = vmatmul.mubr.f32.gmra.mrb[0].mxu0 %v5360
      %v5428 = vpop.f32.mrb[0].mxu0
      %v5429 = vadd.f32 0.0, %v5428
      %v5430 = vpop.f32.mrb[0].mxu0
      %5431 = vdwg.mxu0
      %v5432 = vadd.f32 %v5192, %v5429
      %v5433 = vtanh.pop %v5432
      %v5434 = vsub.f32 1.0, %v5355
      %v5435 = vmul.f32 %v5434, %v5433
      %v5436 = vadd.f32 %v5435, %v5356
      %v5438 = vsel %vm3973, %v5436, 0
      %5440 = vmatprep.subr.mxu0 0.0
      %5441 = vmatpush1.msra.mxu0 %v5260
      %5442 = vmatprep.subr.mxu0 0.0
      %5443 = vmatpush1.msra.mxu0 %v5261
      %5444 = vmatprep.subr.mxu0 0.0
      %5445 = vmatpush1.msra.mxu0 %v5262
      %5446 = vmatprep.subr.mxu0 0.0
      %5447 = vmatpush1.msra.mxu0 %v5263
      %5448 = vmatprep.subr.mxu0 0.0
      %5449 = vmatpush1.msra.mxu0 %v5264
      %5450 = vmatprep.subr.mxu0 0.0
      %5451 = vmatpush1.msra.mxu0 %v5265
      %5452 = vmatprep.subr.mxu0 0.0
      %5453 = vmatpush1.msra.mxu0 %v5266
      %5454 = vmatprep.subr.mxu0 0.0
      %5455 = vmatpush1.msra.mxu0 %v5267
      %5456 = vmatprep.subr.mxu0 0.0
      %5457 = vmatpush1.msra.mxu0 0.0
      %5458 = vmatprep.subr.mxu0 0.0
      %5459 = vmatpush1.msra.mxu0 0.0
      %5460 = vmatprep.subr.mxu0 0.0
      %5461 = vmatpush1.msra.mxu0 0.0
      %5462 = vmatprep.subr.mxu0 0.0
      %5463 = vmatpush1.msra.mxu0 0.0
      %5464 = vmatprep.subr.mxu0 0.0
      %5465 = vmatpush1.msra.mxu0 0.0
      %5466 = vmatprep.subr.mxu0 0.0
      %5467 = vmatpush1.msra.mxu0 0.0
      %5468 = vmatprep.subr.mxu0 0.0
      %5469 = vmatpush1.msra.mxu0 0.0
      %5470 = vmatprep.subr.mxu0 0.0
      %5471 = vmatpush1.msra.mxu0 0.0
      %5472 = vmatprep.subr.mxu0 0.0
      %5473 = vmatpush1.msra.mxu0 0.0
      %5474 = vmatprep.subr.mxu0 0.0
      %5475 = vmatpush1.msra.mxu0 0.0
      %5476 = vmatprep.subr.mxu0 0.0
      %5477 = vmatpush1.msra.mxu0 0.0
      %5478 = vmatprep.subr.mxu0 0.0
      %5479 = vmatpush1.msra.mxu0 0.0
      %5480 = vmatprep.subr.mxu0 0.0
      %5481 = vmatpush1.msra.mxu0 0.0
      %5482 = vmatprep.subr.mxu0 0.0
      %5483 = vmatpush1.msra.mxu0 0.0
      %5484 = vmatprep.subr.mxu0 0.0
      %5485 = vmatpush1.msra.mxu0 0.0
      %5486 = vmatprep.subr.mxu0 0.0
      %5487 = vmatpush1.msra.mxu0 0.0
      %5488 = vmatprep.subr.mxu0 0.0
      %5489 = vmatpush1.msra.mxu0 0.0
      %5490 = vmatprep.subr.mxu0 0.0
      %5491 = vmatpush1.msra.mxu0 0.0
      %5492 = vmatprep.subr.mxu0 0.0
      %5493 = vmatpush1.msra.mxu0 0.0
      %5494 = vmatprep.subr.mxu0 0.0
      %5495 = vmatpush1.msra.mxu0 0.0
      %5496 = vmatprep.subr.mxu0 0.0
      %5497 = vmatpush1.msra.mxu0 0.0
      %5498 = vmatprep.subr.mxu0 0.0
      %5499 = vmatpush1.msra.mxu0 0.0
      %5500 = vmatprep.subr.mxu0 0.0
      %5501 = vmatpush1.msra.mxu0 0.0
      %5502 = vmatprep.subr.mxu0 0.0
      %5503 = vmatpush1.msra.mxu0 0.0
      %5504 = vmatprep.mubr.f32.mxu0 0.0
      %5505 = vmatmul.mubr.f32.gmra.mrb[0].mxu0 %v5438
      %v5506 = vpop.f32.mrb[0].mxu0
      %v5507 = vadd.f32 0.0, %v5506
      %v5508 = vpop.f32.mrb[0].mxu0
      %5509 = vdwg.mxu0
      %v5510 = vadd.f32 %v5196, %v5507
      %v5511 = vxor.u32 %v5510, 2147483648
      %v5512 = vmul.f32 %v5511, 1.442695
      %v5513 = vpow.pop %v5512
      %v5514 = vadd.f32 %v5513, 1.0
      %v5515 = vrcp.pop %v5514
      %v5516 = vmul.f32 1.0, %v5515
      %5517 = vrot.lane.b32.xlu0 %v5436, 64
      %v5518 = vpop.permute.xlu0 %5517
      %v5520 = vmul.f32 %v5516, %v5518
      %5522 = vrot.lane.b32.xlu0 %v5520, 64
      %v5523 = vpop.permute.xlu0 %5522
      %v5524 = vsel %vm3973, %v5523, 0
      %5526 = vmatprep.subr.mxu0 0.0
      %5527 = vmatpush1.msra.mxu0 %v5268
      %5528 = vmatprep.subr.mxu0 0.0
      %5529 = vmatpush1.msra.mxu0 %v5269
      %5530 = vmatprep.subr.mxu0 0.0
      %5531 = vmatpush1.msra.mxu0 %v5270
      %5532 = vmatprep.subr.mxu0 0.0
      %5533 = vmatpush1.msra.mxu0 %v5271
      %5534 = vmatprep.subr.mxu0 0.0
      %5535 = vmatpush1.msra.mxu0 %v5272
      %5536 = vmatprep.subr.mxu0 0.0
      %5537 = vmatpush1.msra.mxu0 %v5273
      %5538 = vmatprep.subr.mxu0 0.0
      %5539 = vmatpush1.msra.mxu0 %v5274
      %5540 = vmatprep.subr.mxu0 0.0
      %5541 = vmatpush1.msra.mxu0 %v5275
      %5542 = vmatprep.subr.mxu0 0.0
      %5543 = vmatpush1.msra.mxu0 0.0
      %5544 = vmatprep.subr.mxu0 0.0
      %5545 = vmatpush1.msra.mxu0 0.0
      %5546 = vmatprep.subr.mxu0 0.0
      %5547 = vmatpush1.msra.mxu0 0.0
      %5548 = vmatprep.subr.mxu0 0.0
      %5549 = vmatpush1.msra.mxu0 0.0
      %5550 = vmatprep.subr.mxu0 0.0
      %5551 = vmatpush1.msra.mxu0 0.0
      %5552 = vmatprep.subr.mxu0 0.0
      %5553 = vmatpush1.msra.mxu0 0.0
      %5554 = vmatprep.subr.mxu0 0.0
      %5555 = vmatpush1.msra.mxu0 0.0
      %5556 = vmatprep.subr.mxu0 0.0
      %5557 = vmatpush1.msra.mxu0 0.0
      %5558 = vmatprep.subr.mxu0 0.0
      %5559 = vmatpush1.msra.mxu0 0.0
      %5560 = vmatprep.subr.mxu0 0.0
      %5561 = vmatpush1.msra.mxu0 0.0
      %5562 = vmatprep.subr.mxu0 0.0
      %5563 = vmatpush1.msra.mxu0 0.0
      %5564 = vmatprep.subr.mxu0 0.0
      %5565 = vmatpush1.msra.mxu0 0.0
      %5566 = vmatprep.subr.mxu0 0.0
      %5567 = vmatpush1.msra.mxu0 0.0
      %5568 = vmatprep.subr.mxu0 0.0
      %5569 = vmatpush1.msra.mxu0 0.0
      %5570 = vmatprep.subr.mxu0 0.0
      %5571 = vmatpush1.msra.mxu0 0.0
      %5572 = vmatprep.subr.mxu0 0.0
      %5573 = vmatpush1.msra.mxu0 0.0
      %5574 = vmatprep.subr.mxu0 0.0
      %5575 = vmatpush1.msra.mxu0 0.0
      %5576 = vmatprep.subr.mxu0 0.0
      %5577 = vmatpush1.msra.mxu0 0.0
      %5578 = vmatprep.subr.mxu0 0.0
      %5579 = vmatpush1.msra.mxu0 0.0
      %5580 = vmatprep.subr.mxu0 0.0
      %5581 = vmatpush1.msra.mxu0 0.0
      %5582 = vmatprep.subr.mxu0 0.0
      %5583 = vmatpush1.msra.mxu0 0.0
      %5584 = vmatprep.subr.mxu0 0.0
      %5585 = vmatpush1.msra.mxu0 0.0
      %5586 = vmatprep.subr.mxu0 0.0
      %5587 = vmatpush1.msra.mxu0 0.0
      %5588 = vmatprep.subr.mxu0 0.0
      %5589 = vmatpush1.msra.mxu0 0.0
      %5590 = vmatprep.mubr.f32.mxu0 0.0
      %5591 = vmatmul.mubr.f32.gmra.mrb[0].mxu0 %v5524
      %v5592 = vpop.f32.mrb[0].mxu0
      %v5593 = vadd.f32 0.0, %v5592
      %v5594 = vpop.f32.mrb[0].mxu0
      %5595 = vdwg.mxu0
      %v5596 = vadd.f32 %v5198, %v5593
      %v5597 = vtanh.pop %v5596
      %v5598 = vsub.f32 1.0, %v5516
      %v5599 = vmul.f32 %v5598, %v5597
      %v5600 = vmul.f32 %v5516, %v5436
      %v5601 = vadd.f32 %v5599, %v5600
      %v5603 = vsel %vm3973, %v5601, 0
      %5605 = vmatprep.subr.mxu0 0.0
      %5606 = vmatpush1.msra.mxu0 %v5260
      %5607 = vmatprep.subr.mxu0 0.0
      %5608 = vmatpush1.msra.mxu0 %v5261
      %5609 = vmatprep.subr.mxu0 0.0
      %5610 = vmatpush1.msra.mxu0 %v5262
      %5611 = vmatprep.subr.mxu0 0.0
      %5612 = vmatpush1.msra.mxu0 %v5263
      %5613 = vmatprep.subr.mxu0 0.0
      %5614 = vmatpush1.msra.mxu0 %v5264
      %5615 = vmatprep.subr.mxu0 0.0
      %5616 = vmatpush1.msra.mxu0 %v5265
      %5617 = vmatprep.subr.mxu0 0.0
      %5618 = vmatpush1.msra.mxu0 %v5266
      %5619 = vmatprep.subr.mxu0 0.0
      %5620 = vmatpush1.msra.mxu0 %v5267
      %5621 = vmatprep.subr.mxu0 0.0
      %5622 = vmatpush1.msra.mxu0 0.0
      %5623 = vmatprep.subr.mxu0 0.0
      %5624 = vmatpush1.msra.mxu0 0.0
      %5625 = vmatprep.subr.mxu0 0.0
      %5626 = vmatpush1.msra.mxu0 0.0
      %5627 = vmatprep.subr.mxu0 0.0
      %5628 = vmatpush1.msra.mxu0 0.0
      %5629 = vmatprep.subr.mxu0 0.0
      %5630 = vmatpush1.msra.mxu0 0.0
      %5631 = vmatprep.subr.mxu0 0.0
      %5632 = vmatpush1.msra.mxu0 0.0
      %5633 = vmatprep.subr.mxu0 0.0
      %5634 = vmatpush1.msra.mxu0 0.0
      %5635 = vmatprep.subr.mxu0 0.0
      %5636 = vmatpush1.msra.mxu0 0.0
      %5637 = vmatprep.subr.mxu0 0.0
      %5638 = vmatpush1.msra.mxu0 0.0
      %5639 = vmatprep.subr.mxu0 0.0
      %5640 = vmatpush1.msra.mxu0 0.0
      %5641 = vmatprep.subr.mxu0 0.0
      %5642 = vmatpush1.msra.mxu0 0.0
      %5643 = vmatprep.subr.mxu0 0.0
      %5644 = vmatpush1.msra.mxu0 0.0
      %5645 = vmatprep.subr.mxu0 0.0
      %5646 = vmatpush1.msra.mxu0 0.0
      %5647 = vmatprep.subr.mxu0 0.0
      %5648 = vmatpush1.msra.mxu0 0.0
      %5649 = vmatprep.subr.mxu0 0.0
      %5650 = vmatpush1.msra.mxu0 0.0
      %5651 = vmatprep.subr.mxu0 0.0
      %5652 = vmatpush1.msra.mxu0 0.0
      %5653 = vmatprep.subr.mxu0 0.0
      %5654 = vmatpush1.msra.mxu0 0.0
      %5655 = vmatprep.subr.mxu0 0.0
      %5656 = vmatpush1.msra.mxu0 0.0
      %5657 = vmatprep.subr.mxu0 0.0
      %5658 = vmatpush1.msra.mxu0 0.0
      %5659 = vmatprep.subr.mxu0 0.0
      %5660 = vmatpush1.msra.mxu0 0.0
      %5661 = vmatprep.subr.mxu0 0.0
      %5662 = vmatpush1.msra.mxu0 0.0
      %5663 = vmatprep.subr.mxu0 0.0
      %5664 = vmatpush1.msra.mxu0 0.0
      %5665 = vmatprep.subr.mxu0 0.0
      %5666 = vmatpush1.msra.mxu0 0.0
      %5667 = vmatprep.subr.mxu0 0.0
      %5668 = vmatpush1.msra.mxu0 0.0
      %5669 = vmatprep.mubr.f32.mxu0 0.0
      %5670 = vmatmul.mubr.f32.gmra.mrb[0].mxu0 %v5603
      %v5671 = vpop.f32.mrb[0].mxu0
      %v5672 = vadd.f32 0.0, %v5671
      %v5673 = vpop.f32.mrb[0].mxu0
      %5674 = vdwg.mxu0
      %v5675 = vadd.f32 %v5202, %v5672
      %v5676 = vxor.u32 %v5675, 2147483648
      %v5677 = vmul.f32 %v5676, 1.442695
      %v5678 = vpow.pop %v5677
      %v5679 = vadd.f32 %v5678, 1.0
      %v5680 = vrcp.pop %v5679
      %v5681 = vmul.f32 1.0, %v5680
      %5682 = vrot.lane.b32.xlu0 %v5601, 64
      %v5683 = vpop.permute.xlu0 %5682
      %v5685 = vmul.f32 %v5681, %v5683
      %5687 = vrot.lane.b32.xlu0 %v5685, 64
      %v5688 = vpop.permute.xlu0 %5687
      %v5689 = vsel %vm3973, %v5688, 0
      %5691 = vmatprep.subr.mxu0 0.0
      %5692 = vmatpush1.msra.mxu0 %v5268
      %5693 = vmatprep.subr.mxu0 0.0
      %5694 = vmatpush1.msra.mxu0 %v5269
      %5695 = vmatprep.subr.mxu0 0.0
      %5696 = vmatpush1.msra.mxu0 %v5270
      %5697 = vmatprep.subr.mxu0 0.0
      %5698 = vmatpush1.msra.mxu0 %v5271
      %5699 = vmatprep.subr.mxu0 0.0
      %5700 = vmatpush1.msra.mxu0 %v5272
      %5701 = vmatprep.subr.mxu0 0.0
      %5702 = vmatpush1.msra.mxu0 %v5273
      %5703 = vmatprep.subr.mxu0 0.0
      %5704 = vmatpush1.msra.mxu0 %v5274
      %5705 = vmatprep.subr.mxu0 0.0
      %5706 = vmatpush1.msra.mxu0 %v5275
      %5707 = vmatprep.subr.mxu0 0.0
      %5708 = vmatpush1.msra.mxu0 0.0
      %5709 = vmatprep.subr.mxu0 0.0
      %5710 = vmatpush1.msra.mxu0 0.0
      %5711 = vmatprep.subr.mxu0 0.0
      %5712 = vmatpush1.msra.mxu0 0.0
      %5713 = vmatprep.subr.mxu0 0.0
      %5714 = vmatpush1.msra.mxu0 0.0
      %5715 = vmatprep.subr.mxu0 0.0
      %5716 = vmatpush1.msra.mxu0 0.0
      %5717 = vmatprep.subr.mxu0 0.0
      %5718 = vmatpush1.msra.mxu0 0.0
      %5719 = vmatprep.subr.mxu0 0.0
      %5720 = vmatpush1.msra.mxu0 0.0
      %5721 = vmatprep.subr.mxu0 0.0
      %5722 = vmatpush1.msra.mxu0 0.0
      %5723 = vmatprep.subr.mxu0 0.0
      %5724 = vmatpush1.msra.mxu0 0.0
      %5725 = vmatprep.subr.mxu0 0.0
      %5726 = vmatpush1.msra.mxu0 0.0
      %5727 = vmatprep.subr.mxu0 0.0
      %5728 = vmatpush1.msra.mxu0 0.0
      %5729 = vmatprep.subr.mxu0 0.0
      %5730 = vmatpush1.msra.mxu0 0.0
      %5731 = vmatprep.subr.mxu0 0.0
      %5732 = vmatpush1.msra.mxu0 0.0
      %5733 = vmatprep.subr.mxu0 0.0
      %5734 = vmatpush1.msra.mxu0 0.0
      %5735 = vmatprep.subr.mxu0 0.0
      %5736 = vmatpush1.msra.mxu0 0.0
      %5737 = vmatprep.subr.mxu0 0.0
      %5738 = vmatpush1.msra.mxu0 0.0
      %5739 = vmatprep.subr.mxu0 0.0
      %5740 = vmatpush1.msra.mxu0 0.0
      %5741 = vmatprep.subr.mxu0 0.0
      %5742 = vmatpush1.msra.mxu0 0.0
      %5743 = vmatprep.subr.mxu0 0.0
      %5744 = vmatpush1.msra.mxu0 0.0
      %5745 = vmatprep.subr.mxu0 0.0
      %5746 = vmatpush1.msra.mxu0 0.0
      %5747 = vmatprep.subr.mxu0 0.0
      %5748 = vmatpush1.msra.mxu0 0.0
      %5749 = vmatprep.subr.mxu0 0.0
      %5750 = vmatpush1.msra.mxu0 0.0
      %5751 = vmatprep.subr.mxu0 0.0
      %5752 = vmatpush1.msra.mxu0 0.0
      %5753 = vmatprep.subr.mxu0 0.0
      %5754 = vmatpush1.msra.mxu0 0.0
      %5755 = vmatprep.mubr.f32.mxu0 0.0
      %5756 = vmatmul.mubr.f32.gmra.mrb[0].mxu0 %v5689
      %v5757 = vpop.f32.mrb[0].mxu0
      %v5758 = vadd.f32 0.0, %v5757
      %v5759 = vpop.f32.mrb[0].mxu0
      %5760 = vdwg.mxu0
      %v5761 = vadd.f32 %v5204, %v5758
      %v5762 = vtanh.pop %v5761
      %v5763 = vsub.f32 1.0, %v5681
      %v5764 = vmul.f32 %v5763, %v5762
      %v5765 = vmul.f32 %v5681, %v5601
      %v5766 = vadd.f32 %v5764, %v5765
      %v5768 = vsel %vm3973, %v5766, 0
      %5770 = vmatprep.subr.mxu0 0.0
      %5771 = vmatpush1.msra.mxu0 %v5260
      %5772 = vmatprep.subr.mxu0 0.0
      %5773 = vmatpush1.msra.mxu0 %v5261
      %5774 = vmatprep.subr.mxu0 0.0
      %5775 = vmatpush1.msra.mxu0 %v5262
      %5776 = vmatprep.subr.mxu0 0.0
      %5777 = vmatpush1.msra.mxu0 %v5263
      %5778 = vmatprep.subr.mxu0 0.0
      %5779 = vmatpush1.msra.mxu0 %v5264
      %5780 = vmatprep.subr.mxu0 0.0
      %5781 = vmatpush1.msra.mxu0 %v5265
      %5782 = vmatprep.subr.mxu0 0.0
      %5783 = vmatpush1.msra.mxu0 %v5266
      %5784 = vmatprep.subr.mxu0 0.0
      %5785 = vmatpush1.msra.mxu0 %v5267
      %5786 = vmatprep.subr.mxu0 0.0
      %5787 = vmatpush1.msra.mxu0 0.0
      %5788 = vmatprep.subr.mxu0 0.0
      %5789 = vmatpush1.msra.mxu0 0.0
      %5790 = vmatprep.subr.mxu0 0.0
      %5791 = vmatpush1.msra.mxu0 0.0
      %5792 = vmatprep.subr.mxu0 0.0
      %5793 = vmatpush1.msra.mxu0 0.0
      %5794 = vmatprep.subr.mxu0 0.0
      %5795 = vmatpush1.msra.mxu0 0.0
      %5796 = vmatprep.subr.mxu0 0.0
      %5797 = vmatpush1.msra.mxu0 0.0
      %5798 = vmatprep.subr.mxu0 0.0
      %5799 = vmatpush1.msra.mxu0 0.0
      %5800 = vmatprep.subr.mxu0 0.0
      %5801 = vmatpush1.msra.mxu0 0.0
      %5802 = vmatprep.subr.mxu0 0.0
      %5803 = vmatpush1.msra.mxu0 0.0
      %5804 = vmatprep.subr.mxu0 0.0
      %5805 = vmatpush1.msra.mxu0 0.0
      %5806 = vmatprep.subr.mxu0 0.0
      %5807 = vmatpush1.msra.mxu0 0.0
      %5808 = vmatprep.subr.mxu0 0.0
      %5809 = vmatpush1.msra.mxu0 0.0
      %5810 = vmatprep.subr.mxu0 0.0
      %5811 = vmatpush1.msra.mxu0 0.0
      %5812 = vmatprep.subr.mxu0 0.0
      %5813 = vmatpush1.msra.mxu0 0.0
      %5814 = vmatprep.subr.mxu0 0.0
      %5815 = vmatpush1.msra.mxu0 0.0
      %5816 = vmatprep.subr.mxu0 0.0
      %5817 = vmatpush1.msra.mxu0 0.0
      %5818 = vmatprep.subr.mxu0 0.0
      %5819 = vmatpush1.msra.mxu0 0.0
      %5820 = vmatprep.subr.mxu0 0.0
      %5821 = vmatpush1.msra.mxu0 0.0
      %5822 = vmatprep.subr.mxu0 0.0
      %5823 = vmatpush1.msra.mxu0 0.0
      %5824 = vmatprep.subr.mxu0 0.0
      %5825 = vmatpush1.msra.mxu0 0.0
      %5826 = vmatprep.subr.mxu0 0.0
      %5827 = vmatpush1.msra.mxu0 0.0
      %5828 = vmatprep.subr.mxu0 0.0
      %5829 = vmatpush1.msra.mxu0 0.0
      %5830 = vmatprep.subr.mxu0 0.0
      %5831 = vmatpush1.msra.mxu0 0.0
      %5832 = vmatprep.subr.mxu0 0.0
      %5833 = vmatpush1.msra.mxu0 0.0
      %5834 = vmatprep.mubr.f32.mxu0 0.0
      %5835 = vmatmul.mubr.f32.gmra.mrb[0].mxu0 %v5768
      %v5836 = vpop.f32.mrb[0].mxu0
      %v5837 = vadd.f32 0.0, %v5836
      %v5838 = vpop.f32.mrb[0].mxu0
      %5839 = vdwg.mxu0
      %v5840 = vadd.f32 %v5208, %v5837
      %v5841 = vxor.u32 %v5840, 2147483648
      %v5842 = vmul.f32 %v5841, 1.442695
      %v5843 = vpow.pop %v5842
      %v5844 = vadd.f32 %v5843, 1.0
      %v5845 = vrcp.pop %v5844
      %v5846 = vmul.f32 1.0, %v5845
      %5847 = vrot.lane.b32.xlu0 %v5766, 64
      %v5848 = vpop.permute.xlu0 %5847
      %v5850 = vmul.f32 %v5846, %v5848
      %5852 = vrot.lane.b32.xlu0 %v5850, 64
      %v5853 = vpop.permute.xlu0 %5852
      %v5854 = vsel %vm3973, %v5853, 0
      %5856 = vmatprep.subr.mxu0 0.0
      %5857 = vmatpush1.msra.mxu0 %v5268
      %5858 = vmatprep.subr.mxu0 0.0
      %5859 = vmatpush1.msra.mxu0 %v5269
      %5860 = vmatprep.subr.mxu0 0.0
      %5861 = vmatpush1.msra.mxu0 %v5270
      %5862 = vmatprep.subr.mxu0 0.0
      %5863 = vmatpush1.msra.mxu0 %v5271
      %5864 = vmatprep.subr.mxu0 0.0
      %5865 = vmatpush1.msra.mxu0 %v5272
      %5866 = vmatprep.subr.mxu0 0.0
      %5867 = vmatpush1.msra.mxu0 %v5273
      %5868 = vmatprep.subr.mxu0 0.0
      %5869 = vmatpush1.msra.mxu0 %v5274
      %5870 = vmatprep.subr.mxu0 0.0
      %5871 = vmatpush1.msra.mxu0 %v5275
      %5872 = vmatprep.subr.mxu0 0.0
      %5873 = vmatpush1.msra.mxu0 0.0
      %5874 = vmatprep.subr.mxu0 0.0
      %5875 = vmatpush1.msra.mxu0 0.0
      %5876 = vmatprep.subr.mxu0 0.0
      %5877 = vmatpush1.msra.mxu0 0.0
      %5878 = vmatprep.subr.mxu0 0.0
      %5879 = vmatpush1.msra.mxu0 0.0
      %5880 = vmatprep.subr.mxu0 0.0
      %5881 = vmatpush1.msra.mxu0 0.0
      %5882 = vmatprep.subr.mxu0 0.0
      %5883 = vmatpush1.msra.mxu0 0.0
      %5884 = vmatprep.subr.mxu0 0.0
      %5885 = vmatpush1.msra.mxu0 0.0
      %5886 = vmatprep.subr.mxu0 0.0
      %5887 = vmatpush1.msra.mxu0 0.0
      %5888 = vmatprep.subr.mxu0 0.0
      %5889 = vmatpush1.msra.mxu0 0.0
      %5890 = vmatprep.subr.mxu0 0.0
      %5891 = vmatpush1.msra.mxu0 0.0
      %5892 = vmatprep.subr.mxu0 0.0
      %5893 = vmatpush1.msra.mxu0 0.0
      %5894 = vmatprep.subr.mxu0 0.0
      %5895 = vmatpush1.msra.mxu0 0.0
      %5896 = vmatprep.subr.mxu0 0.0
      %5897 = vmatpush1.msra.mxu0 0.0
      %5898 = vmatprep.subr.mxu0 0.0
      %5899 = vmatpush1.msra.mxu0 0.0
      %5900 = vmatprep.subr.mxu0 0.0
      %5901 = vmatpush1.msra.mxu0 0.0
      %5902 = vmatprep.subr.mxu0 0.0
      %5903 = vmatpush1.msra.mxu0 0.0
      %5904 = vmatprep.subr.mxu0 0.0
      %5905 = vmatpush1.msra.mxu0 0.0
      %5906 = vmatprep.subr.mxu0 0.0
      %5907 = vmatpush1.msra.mxu0 0.0
      %5908 = vmatprep.subr.mxu0 0.0
      %5909 = vmatpush1.msra.mxu0 0.0
      %5910 = vmatprep.subr.mxu0 0.0
      %5911 = vmatpush1.msra.mxu0 0.0
      %5912 = vmatprep.subr.mxu0 0.0
      %5913 = vmatpush1.msra.mxu0 0.0
      %5914 = vmatprep.subr.mxu0 0.0
      %5915 = vmatpush1.msra.mxu0 0.0
      %5916 = vmatprep.subr.mxu0 0.0
      %5917 = vmatpush1.msra.mxu0 0.0
      %5918 = vmatprep.subr.mxu0 0.0
      %5919 = vmatpush1.msra.mxu0 0.0
      %5920 = vmatprep.mubr.f32.mxu0 0.0
      %5921 = vmatmul.mubr.f32.gmra.mrb[0].mxu0 %v5854
      %v5922 = vpop.f32.mrb[0].mxu0
      %v5923 = vadd.f32 0.0, %v5922
      %v5924 = vpop.f32.mrb[0].mxu0
      %5925 = vdwg.mxu0
      %v5926 = vadd.f32 %v5210, %v5923
      %v5927 = vtanh.pop %v5926
      %v5928 = vsub.f32 1.0, %v5846
      %v5929 = vmul.f32 %v5928, %v5927
      %v5930 = vmul.f32 %v5846, %v5766
      %v5931 = vadd.f32 %v5929, %v5930
      %v5933 = vsel %vm3973, %v5931, 0
      %5935 = vmatprep.subr.mxu0 0.0
      %5936 = vmatpush1.msra.mxu0 %v5260
      %5937 = vmatprep.subr.mxu0 0.0
      %5938 = vmatpush1.msra.mxu0 %v5261
      %5939 = vmatprep.subr.mxu0 0.0
      %5940 = vmatpush1.msra.mxu0 %v5262
      %5941 = vmatprep.subr.mxu0 0.0
      %5942 = vmatpush1.msra.mxu0 %v5263
      %5943 = vmatprep.subr.mxu0 0.0
      %5944 = vmatpush1.msra.mxu0 %v5264
      %5945 = vmatprep.subr.mxu0 0.0
      %5946 = vmatpush1.msra.mxu0 %v5265
      %5947 = vmatprep.subr.mxu0 0.0
      %5948 = vmatpush1.msra.mxu0 %v5266
      %5949 = vmatprep.subr.mxu0 0.0
      %5950 = vmatpush1.msra.mxu0 %v5267
      %5951 = vmatprep.subr.mxu0 0.0
      %5952 = vmatpush1.msra.mxu0 0.0
      %5953 = vmatprep.subr.mxu0 0.0
      %5954 = vmatpush1.msra.mxu0 0.0
      %5955 = vmatprep.subr.mxu0 0.0
      %5956 = vmatpush1.msra.mxu0 0.0
      %5957 = vmatprep.subr.mxu0 0.0
      %5958 = vmatpush1.msra.mxu0 0.0
      %5959 = vmatprep.subr.mxu0 0.0
      %5960 = vmatpush1.msra.mxu0 0.0
      %5961 = vmatprep.subr.mxu0 0.0
      %5962 = vmatpush1.msra.mxu0 0.0
      %5963 = vmatprep.subr.mxu0 0.0
      %5964 = vmatpush1.msra.mxu0 0.0
      %5965 = vmatprep.subr.mxu0 0.0
      %5966 = vmatpush1.msra.mxu0 0.0
      %5967 = vmatprep.subr.mxu0 0.0
      %5968 = vmatpush1.msra.mxu0 0.0
      %5969 = vmatprep.subr.mxu0 0.0
      %5970 = vmatpush1.msra.mxu0 0.0
      %5971 = vmatprep.subr.mxu0 0.0
      %5972 = vmatpush1.msra.mxu0 0.0
      %5973 = vmatprep.subr.mxu0 0.0
      %5974 = vmatpush1.msra.mxu0 0.0
      %5975 = vmatprep.subr.mxu0 0.0
      %5976 = vmatpush1.msra.mxu0 0.0
      %5977 = vmatprep.subr.mxu0 0.0
      %5978 = vmatpush1.msra.mxu0 0.0
      %5979 = vmatprep.subr.mxu0 0.0
      %5980 = vmatpush1.msra.mxu0 0.0
      %5981 = vmatprep.subr.mxu0 0.0
      %5982 = vmatpush1.msra.mxu0 0.0
      %5983 = vmatprep.subr.mxu0 0.0
      %5984 = vmatpush1.msra.mxu0 0.0
      %5985 = vmatprep.subr.mxu0 0.0
      %5986 = vmatpush1.msra.mxu0 0.0
      %5987 = vmatprep.subr.mxu0 0.0
      %5988 = vmatpush1.msra.mxu0 0.0
      %5989 = vmatprep.subr.mxu0 0.0
      %5990 = vmatpush1.msra.mxu0 0.0
      %5991 = vmatprep.subr.mxu0 0.0
      %5992 = vmatpush1.msra.mxu0 0.0
      %5993 = vmatprep.subr.mxu0 0.0
      %5994 = vmatpush1.msra.mxu0 0.0
      %5995 = vmatprep.subr.mxu0 0.0
      %5996 = vmatpush1.msra.mxu0 0.0
      %5997 = vmatprep.subr.mxu0 0.0
      %5998 = vmatpush1.msra.mxu0 0.0
      %5999 = vmatprep.mubr.f32.mxu0 0.0
      %6000 = vmatmul.mubr.f32.gmra.mrb[0].mxu0 %v5933
      %v6001 = vpop.f32.mrb[0].mxu0
      %v6002 = vadd.f32 0.0, %v6001
      %v6003 = vpop.f32.mrb[0].mxu0
      %6004 = vdwg.mxu0
      %v6005 = vadd.f32 %v5214, %v6002
      %v6006 = vxor.u32 %v6005, 2147483648
      %v6007 = vmul.f32 %v6006, 1.442695
      %v6008 = vpow.pop %v6007
      %v6009 = vadd.f32 %v6008, 1.0
      %v6010 = vrcp.pop %v6009
      %v6011 = vmul.f32 1.0, %v6010
      %6012 = vrot.lane.b32.xlu0 %v5931, 64
      %v6013 = vpop.permute.xlu0 %6012
      %v6015 = vmul.f32 %v6011, %v6013
      %6017 = vrot.lane.b32.xlu0 %v6015, 64
      %v6018 = vpop.permute.xlu0 %6017
      %v6019 = vsel %vm3973, %v6018, 0
      %6021 = vmatprep.subr.mxu0 0.0
      %6022 = vmatpush1.msra.mxu0 %v5268
      %6023 = vmatprep.subr.mxu0 0.0
      %6024 = vmatpush1.msra.mxu0 %v5269
      %6025 = vmatprep.subr.mxu0 0.0
      %6026 = vmatpush1.msra.mxu0 %v5270
      %6027 = vmatprep.subr.mxu0 0.0
      %6028 = vmatpush1.msra.mxu0 %v5271
      %6029 = vmatprep.subr.mxu0 0.0
      %6030 = vmatpush1.msra.mxu0 %v5272
      %6031 = vmatprep.subr.mxu0 0.0
      %6032 = vmatpush1.msra.mxu0 %v5273
      %6033 = vmatprep.subr.mxu0 0.0
      %6034 = vmatpush1.msra.mxu0 %v5274
      %6035 = vmatprep.subr.mxu0 0.0
      %6036 = vmatpush1.msra.mxu0 %v5275
      %6037 = vmatprep.subr.mxu0 0.0
      %6038 = vmatpush1.msra.mxu0 0.0
      %6039 = vmatprep.subr.mxu0 0.0
      %6040 = vmatpush1.msra.mxu0 0.0
      %6041 = vmatprep.subr.mxu0 0.0
      %6042 = vmatpush1.msra.mxu0 0.0
      %6043 = vmatprep.subr.mxu0 0.0
      %6044 = vmatpush1.msra.mxu0 0.0
      %6045 = vmatprep.subr.mxu0 0.0
      %6046 = vmatpush1.msra.mxu0 0.0
      %6047 = vmatprep.subr.mxu0 0.0
      %6048 = vmatpush1.msra.mxu0 0.0
      %6049 = vmatprep.subr.mxu0 0.0
      %6050 = vmatpush1.msra.mxu0 0.0
      %6051 = vmatprep.subr.mxu0 0.0
      %6052 = vmatpush1.msra.mxu0 0.0
      %6053 = vmatprep.subr.mxu0 0.0
      %6054 = vmatpush1.msra.mxu0 0.0
      %6055 = vmatprep.subr.mxu0 0.0
      %6056 = vmatpush1.msra.mxu0 0.0
      %6057 = vmatprep.subr.mxu0 0.0
      %6058 = vmatpush1.msra.mxu0 0.0
      %6059 = vmatprep.subr.mxu0 0.0
      %6060 = vmatpush1.msra.mxu0 0.0
      %6061 = vmatprep.subr.mxu0 0.0
      %6062 = vmatpush1.msra.mxu0 0.0
      %6063 = vmatprep.subr.mxu0 0.0
      %6064 = vmatpush1.msra.mxu0 0.0
      %6065 = vmatprep.subr.mxu0 0.0
      %6066 = vmatpush1.msra.mxu0 0.0
      %6067 = vmatprep.subr.mxu0 0.0
      %6068 = vmatpush1.msra.mxu0 0.0
      %6069 = vmatprep.subr.mxu0 0.0
      %6070 = vmatpush1.msra.mxu0 0.0
      %6071 = vmatprep.subr.mxu0 0.0
      %6072 = vmatpush1.msra.mxu0 0.0
      %6073 = vmatprep.subr.mxu0 0.0
      %6074 = vmatpush1.msra.mxu0 0.0
      %6075 = vmatprep.subr.mxu0 0.0
      %6076 = vmatpush1.msra.mxu0 0.0
      %6077 = vmatprep.subr.mxu0 0.0
      %6078 = vmatpush1.msra.mxu0 0.0
      %6079 = vmatprep.subr.mxu0 0.0
      %6080 = vmatpush1.msra.mxu0 0.0
      %6081 = vmatprep.subr.mxu0 0.0
      %6082 = vmatpush1.msra.mxu0 0.0
      %6083 = vmatprep.subr.mxu0 0.0
      %6084 = vmatpush1.msra.mxu0 0.0
      %6085 = vmatprep.mubr.f32.mxu0 0.0
      %6086 = vmatmul.mubr.f32.gmra.mrb[0].mxu0 %v6019
      %v6087 = vpop.f32.mrb[0].mxu0
      %v6088 = vadd.f32 0.0, %v6087
      %v6089 = vpop.f32.mrb[0].mxu0
      %6090 = vdwg.mxu0
      %v6091 = vadd.f32 %v5216, %v6088
      %v6092 = vtanh.pop %v6091
      %v6093 = vsub.f32 1.0, %v6011
      %v6094 = vmul.f32 %v6093, %v6092
      %v6095 = vmul.f32 %v6011, %v5931
      %v6096 = vadd.f32 %v6094, %v6095
      %v6098 = vsel %vm3973, %v6096, 0
      %6100 = vmatprep.subr.mxu0 0.0
      %6101 = vmatpush1.msra.mxu0 %v5260
      %6102 = vmatprep.subr.mxu0 0.0
      %6103 = vmatpush1.msra.mxu0 %v5261
      %6104 = vmatprep.subr.mxu0 0.0
      %6105 = vmatpush1.msra.mxu0 %v5262
      %6106 = vmatprep.subr.mxu0 0.0
      %6107 = vmatpush1.msra.mxu0 %v5263
      %6108 = vmatprep.subr.mxu0 0.0
      %6109 = vmatpush1.msra.mxu0 %v5264
      %6110 = vmatprep.subr.mxu0 0.0
      %6111 = vmatpush1.msra.mxu0 %v5265
      %6112 = vmatprep.subr.mxu0 0.0
      %6113 = vmatpush1.msra.mxu0 %v5266
      %6114 = vmatprep.subr.mxu0 0.0
      %6115 = vmatpush1.msra.mxu0 %v5267
      %6116 = vmatprep.subr.mxu0 0.0
      %6117 = vmatpush1.msra.mxu0 0.0
      %6118 = vmatprep.subr.mxu0 0.0
      %6119 = vmatpush1.msra.mxu0 0.0
      %6120 = vmatprep.subr.mxu0 0.0
      %6121 = vmatpush1.msra.mxu0 0.0
      %6122 = vmatprep.subr.mxu0 0.0
      %6123 = vmatpush1.msra.mxu0 0.0
      %6124 = vmatprep.subr.mxu0 0.0
      %6125 = vmatpush1.msra.mxu0 0.0
      %6126 = vmatprep.subr.mxu0 0.0
      %6127 = vmatpush1.msra.mxu0 0.0
      %6128 = vmatprep.subr.mxu0 0.0
      %6129 = vmatpush1.msra.mxu0 0.0
      %6130 = vmatprep.subr.mxu0 0.0
      %6131 = vmatpush1.msra.mxu0 0.0
      %6132 = vmatprep.subr.mxu0 0.0
      %6133 = vmatpush1.msra.mxu0 0.0
      %6134 = vmatprep.subr.mxu0 0.0
      %6135 = vmatpush1.msra.mxu0 0.0
      %6136 = vmatprep.subr.mxu0 0.0
      %6137 = vmatpush1.msra.mxu0 0.0
      %6138 = vmatprep.subr.mxu0 0.0
      %6139 = vmatpush1.msra.mxu0 0.0
      %6140 = vmatprep.subr.mxu0 0.0
      %6141 = vmatpush1.msra.mxu0 0.0
      %6142 = vmatprep.subr.mxu0 0.0
      %6143 = vmatpush1.msra.mxu0 0.0
      %6144 = vmatprep.subr.mxu0 0.0
      %6145 = vmatpush1.msra.mxu0 0.0
      %6146 = vmatprep.subr.mxu0 0.0
      %6147 = vmatpush1.msra.mxu0 0.0
      %6148 = vmatprep.subr.mxu0 0.0
      %6149 = vmatpush1.msra.mxu0 0.0
      %6150 = vmatprep.subr.mxu0 0.0
      %6151 = vmatpush1.msra.mxu0 0.0
      %6152 = vmatprep.subr.mxu0 0.0
      %6153 = vmatpush1.msra.mxu0 0.0
      %6154 = vmatprep.subr.mxu0 0.0
      %6155 = vmatpush1.msra.mxu0 0.0
      %6156 = vmatprep.subr.mxu0 0.0
      %6157 = vmatpush1.msra.mxu0 0.0
      %6158 = vmatprep.subr.mxu0 0.0
      %6159 = vmatpush1.msra.mxu0 0.0
      %6160 = vmatprep.subr.mxu0 0.0
      %6161 = vmatpush1.msra.mxu0 0.0
      %6162 = vmatprep.subr.mxu0 0.0
      %6163 = vmatpush1.msra.mxu0 0.0
      %6164 = vmatprep.mubr.f32.mxu0 0.0
      %6165 = vmatmul.mubr.f32.gmra.mrb[0].mxu0 %v6098
      %v6166 = vpop.f32.mrb[0].mxu0
      %v6167 = vadd.f32 0.0, %v6166
      %v6168 = vpop.f32.mrb[0].mxu0
      %6169 = vdwg.mxu0
      %v6170 = vadd.f32 %v5220, %v6167
      %v6171 = vxor.u32 %v6170, 2147483648
      %v6172 = vmul.f32 %v6171, 1.442695
      %v6173 = vpow.pop %v6172
      %v6174 = vadd.f32 %v6173, 1.0
      %v6175 = vrcp.pop %v6174
      %v6176 = vmul.f32 1.0, %v6175
      %6177 = vrot.lane.b32.xlu0 %v6096, 64
      %v6178 = vpop.permute.xlu0 %6177
      %v6180 = vmul.f32 %v6176, %v6178
      %6182 = vrot.lane.b32.xlu0 %v6180, 64
      %v6183 = vpop.permute.xlu0 %6182
      %v6184 = vsel %vm3973, %v6183, 0
      %6186 = vmatprep.subr.mxu0 0.0
      %6187 = vmatpush1.msra.mxu0 %v5268
      %6188 = vmatprep.subr.mxu0 0.0
      %6189 = vmatpush1.msra.mxu0 %v5269
      %6190 = vmatprep.subr.mxu0 0.0
      %6191 = vmatpush1.msra.mxu0 %v5270
      %6192 = vmatprep.subr.mxu0 0.0
      %6193 = vmatpush1.msra.mxu0 %v5271
      %6194 = vmatprep.subr.mxu0 0.0
      %6195 = vmatpush1.msra.mxu0 %v5272
      %6196 = vmatprep.subr.mxu0 0.0
      %6197 = vmatpush1.msra.mxu0 %v5273
      %6198 = vmatprep.subr.mxu0 0.0
      %6199 = vmatpush1.msra.mxu0 %v5274
      %6200 = vmatprep.subr.mxu0 0.0
      %6201 = vmatpush1.msra.mxu0 %v5275
      %6202 = vmatprep.subr.mxu0 0.0
      %6203 = vmatpush1.msra.mxu0 0.0
      %6204 = vmatprep.subr.mxu0 0.0
      %6205 = vmatpush1.msra.mxu0 0.0
      %6206 = vmatprep.subr.mxu0 0.0
      %6207 = vmatpush1.msra.mxu0 0.0
      %6208 = vmatprep.subr.mxu0 0.0
      %6209 = vmatpush1.msra.mxu0 0.0
      %6210 = vmatprep.subr.mxu0 0.0
      %6211 = vmatpush1.msra.mxu0 0.0
      %6212 = vmatprep.subr.mxu0 0.0
      %6213 = vmatpush1.msra.mxu0 0.0
      %6214 = vmatprep.subr.mxu0 0.0
      %6215 = vmatpush1.msra.mxu0 0.0
      %6216 = vmatprep.subr.mxu0 0.0
      %6217 = vmatpush1.msra.mxu0 0.0
      %6218 = vmatprep.subr.mxu0 0.0
      %6219 = vmatpush1.msra.mxu0 0.0
      %6220 = vmatprep.subr.mxu0 0.0
      %6221 = vmatpush1.msra.mxu0 0.0
      %6222 = vmatprep.subr.mxu0 0.0
      %6223 = vmatpush1.msra.mxu0 0.0
      %6224 = vmatprep.subr.mxu0 0.0
      %6225 = vmatpush1.msra.mxu0 0.0
      %6226 = vmatprep.subr.mxu0 0.0
      %6227 = vmatpush1.msra.mxu0 0.0
      %6228 = vmatprep.subr.mxu0 0.0
      %6229 = vmatpush1.msra.mxu0 0.0
      %6230 = vmatprep.subr.mxu0 0.0
      %6231 = vmatpush1.msra.mxu0 0.0
      %6232 = vmatprep.subr.mxu0 0.0
      %6233 = vmatpush1.msra.mxu0 0.0
      %6234 = vmatprep.subr.mxu0 0.0
      %6235 = vmatpush1.msra.mxu0 0.0
      %6236 = vmatprep.subr.mxu0 0.0
      %6237 = vmatpush1.msra.mxu0 0.0
      %6238 = vmatprep.subr.mxu0 0.0
      %6239 = vmatpush1.msra.mxu0 0.0
      %6240 = vmatprep.subr.mxu0 0.0
      %6241 = vmatpush1.msra.mxu0 0.0
      %6242 = vmatprep.subr.mxu0 0.0
      %6243 = vmatpush1.msra.mxu0 0.0
      %6244 = vmatprep.subr.mxu0 0.0
      %6245 = vmatpush1.msra.mxu0 0.0
      %6246 = vmatprep.subr.mxu0 0.0
      %6247 = vmatpush1.msra.mxu0 0.0
      %6248 = vmatprep.subr.mxu0 0.0
      %6249 = vmatpush1.msra.mxu0 0.0
      %6250 = vmatprep.mubr.f32.mxu0 0.0
      %6251 = vmatmul.mubr.f32.gmra.mrb[0].mxu0 %v6184
      %v6252 = vpop.f32.mrb[0].mxu0
      %v6253 = vadd.f32 0.0, %v6252
      %v6254 = vpop.f32.mrb[0].mxu0
      %6255 = vdwg.mxu0
      %v6256 = vadd.f32 %v5222, %v6253
      %v6257 = vtanh.pop %v6256
      %v6258 = vsub.f32 1.0, %v6176
      %v6259 = vmul.f32 %v6258, %v6257
      %v6260 = vmul.f32 %v6176, %v6096
      %v6261 = vadd.f32 %v6259, %v6260
      %v6263 = vsel %vm3973, %v6261, 0
      %6265 = vmatprep.subr.mxu0 0.0
      %6266 = vmatpush1.msra.mxu0 %v5260
      %6267 = vmatprep.subr.mxu0 0.0
      %6268 = vmatpush1.msra.mxu0 %v5261
      %6269 = vmatprep.subr.mxu0 0.0
      %6270 = vmatpush1.msra.mxu0 %v5262
      %6271 = vmatprep.subr.mxu0 0.0
      %6272 = vmatpush1.msra.mxu0 %v5263
      %6273 = vmatprep.subr.mxu0 0.0
      %6274 = vmatpush1.msra.mxu0 %v5264
      %6275 = vmatprep.subr.mxu0 0.0
      %6276 = vmatpush1.msra.mxu0 %v5265
      %6277 = vmatprep.subr.mxu0 0.0
      %6278 = vmatpush1.msra.mxu0 %v5266
      %6279 = vmatprep.subr.mxu0 0.0
      %6280 = vmatpush1.msra.mxu0 %v5267
      %6281 = vmatprep.subr.mxu0 0.0
      %6282 = vmatpush1.msra.mxu0 0.0
      %6283 = vmatprep.subr.mxu0 0.0
      %6284 = vmatpush1.msra.mxu0 0.0
      %6285 = vmatprep.subr.mxu0 0.0
      %6286 = vmatpush1.msra.mxu0 0.0
      %6287 = vmatprep.subr.mxu0 0.0
      %6288 = vmatpush1.msra.mxu0 0.0
      %6289 = vmatprep.subr.mxu0 0.0
      %6290 = vmatpush1.msra.mxu0 0.0
      %6291 = vmatprep.subr.mxu0 0.0
      %6292 = vmatpush1.msra.mxu0 0.0
      %6293 = vmatprep.subr.mxu0 0.0
      %6294 = vmatpush1.msra.mxu0 0.0
      %6295 = vmatprep.subr.mxu0 0.0
      %6296 = vmatpush1.msra.mxu0 0.0
      %6297 = vmatprep.subr.mxu0 0.0
      %6298 = vmatpush1.msra.mxu0 0.0
      %6299 = vmatprep.subr.mxu0 0.0
      %6300 = vmatpush1.msra.mxu0 0.0
      %6301 = vmatprep.subr.mxu0 0.0
      %6302 = vmatpush1.msra.mxu0 0.0
      %6303 = vmatprep.subr.mxu0 0.0
      %6304 = vmatpush1.msra.mxu0 0.0
      %6305 = vmatprep.subr.mxu0 0.0
      %6306 = vmatpush1.msra.mxu0 0.0
      %6307 = vmatprep.subr.mxu0 0.0
      %6308 = vmatpush1.msra.mxu0 0.0
      %6309 = vmatprep.subr.mxu0 0.0
      %6310 = vmatpush1.msra.mxu0 0.0
      %6311 = vmatprep.subr.mxu0 0.0
      %6312 = vmatpush1.msra.mxu0 0.0
      %6313 = vmatprep.subr.mxu0 0.0
      %6314 = vmatpush1.msra.mxu0 0.0
      %6315 = vmatprep.subr.mxu0 0.0
      %6316 = vmatpush1.msra.mxu0 0.0
      %6317 = vmatprep.subr.mxu0 0.0
      %6318 = vmatpush1.msra.mxu0 0.0
      %6319 = vmatprep.subr.mxu0 0.0
      %6320 = vmatpush1.msra.mxu0 0.0
      %6321 = vmatprep.subr.mxu0 0.0
      %6322 = vmatpush1.msra.mxu0 0.0
      %6323 = vmatprep.subr.mxu0 0.0
      %6324 = vmatpush1.msra.mxu0 0.0
      %6325 = vmatprep.subr.mxu0 0.0
      %6326 = vmatpush1.msra.mxu0 0.0
      %6327 = vmatprep.subr.mxu0 0.0
      %6328 = vmatpush1.msra.mxu0 0.0
      %6329 = vmatprep.mubr.f32.mxu0 0.0
      %6330 = vmatmul.mubr.f32.gmra.mrb[0].mxu0 %v6263
      %v6331 = vpop.f32.mrb[0].mxu0
      %v6332 = vadd.f32 0.0, %v6331
      %v6333 = vpop.f32.mrb[0].mxu0
      %6334 = vdwg.mxu0
      %v6335 = vadd.f32 %v5226, %v6332
      %v6336 = vxor.u32 %v6335, 2147483648
      %v6337 = vmul.f32 %v6336, 1.442695
      %v6338 = vpow.pop %v6337
      %v6339 = vadd.f32 %v6338, 1.0
      %v6340 = vrcp.pop %v6339
      %v6341 = vmul.f32 1.0, %v6340
      %6342 = vrot.lane.b32.xlu0 %v6261, 64
      %v6343 = vpop.permute.xlu0 %6342
      %v6345 = vmul.f32 %v6341, %v6343
      %6347 = vrot.lane.b32.xlu0 %v6345, 64
      %v6348 = vpop.permute.xlu0 %6347
      %v6349 = vsel %vm3973, %v6348, 0
      %6351 = vmatprep.subr.mxu0 0.0
      %6352 = vmatpush1.msra.mxu0 %v5268
      %6353 = vmatprep.subr.mxu0 0.0
      %6354 = vmatpush1.msra.mxu0 %v5269
      %6355 = vmatprep.subr.mxu0 0.0
      %6356 = vmatpush1.msra.mxu0 %v5270
      %6357 = vmatprep.subr.mxu0 0.0
      %6358 = vmatpush1.msra.mxu0 %v5271
      %6359 = vmatprep.subr.mxu0 0.0
      %6360 = vmatpush1.msra.mxu0 %v5272
      %6361 = vmatprep.subr.mxu0 0.0
      %6362 = vmatpush1.msra.mxu0 %v5273
      %6363 = vmatprep.subr.mxu0 0.0
      %6364 = vmatpush1.msra.mxu0 %v5274
      %6365 = vmatprep.subr.mxu0 0.0
      %6366 = vmatpush1.msra.mxu0 %v5275
      %6367 = vmatprep.subr.mxu0 0.0
      %6368 = vmatpush1.msra.mxu0 0.0
      %6369 = vmatprep.subr.mxu0 0.0
      %6370 = vmatpush1.msra.mxu0 0.0
      %6371 = vmatprep.subr.mxu0 0.0
      %6372 = vmatpush1.msra.mxu0 0.0
      %6373 = vmatprep.subr.mxu0 0.0
      %6374 = vmatpush1.msra.mxu0 0.0
      %6375 = vmatprep.subr.mxu0 0.0
      %6376 = vmatpush1.msra.mxu0 0.0
      %6377 = vmatprep.subr.mxu0 0.0
      %6378 = vmatpush1.msra.mxu0 0.0
      %6379 = vmatprep.subr.mxu0 0.0
      %6380 = vmatpush1.msra.mxu0 0.0
      %6381 = vmatprep.subr.mxu0 0.0
      %6382 = vmatpush1.msra.mxu0 0.0
      %6383 = vmatprep.subr.mxu0 0.0
      %6384 = vmatpush1.msra.mxu0 0.0
      %6385 = vmatprep.subr.mxu0 0.0
      %6386 = vmatpush1.msra.mxu0 0.0
      %6387 = vmatprep.subr.mxu0 0.0
      %6388 = vmatpush1.msra.mxu0 0.0
      %6389 = vmatprep.subr.mxu0 0.0
      %6390 = vmatpush1.msra.mxu0 0.0
      %6391 = vmatprep.subr.mxu0 0.0
      %6392 = vmatpush1.msra.mxu0 0.0
      %6393 = vmatprep.subr.mxu0 0.0
      %6394 = vmatpush1.msra.mxu0 0.0
      %6395 = vmatprep.subr.mxu0 0.0
      %6396 = vmatpush1.msra.mxu0 0.0
      %6397 = vmatprep.subr.mxu0 0.0
      %6398 = vmatpush1.msra.mxu0 0.0
      %6399 = vmatprep.subr.mxu0 0.0
      %6400 = vmatpush1.msra.mxu0 0.0
      %6401 = vmatprep.subr.mxu0 0.0
      %6402 = vmatpush1.msra.mxu0 0.0
      %6403 = vmatprep.subr.mxu0 0.0
      %6404 = vmatpush1.msra.mxu0 0.0
      %6405 = vmatprep.subr.mxu0 0.0
      %6406 = vmatpush1.msra.mxu0 0.0
      %6407 = vmatprep.subr.mxu0 0.0
      %6408 = vmatpush1.msra.mxu0 0.0
      %6409 = vmatprep.subr.mxu0 0.0
      %6410 = vmatpush1.msra.mxu0 0.0
      %6411 = vmatprep.subr.mxu0 0.0
      %6412 = vmatpush1.msra.mxu0 0.0
      %6413 = vmatprep.subr.mxu0 0.0
      %6414 = vmatpush1.msra.mxu0 0.0
      %6415 = vmatprep.mubr.f32.mxu0 0.0
      %6416 = vmatmul.mubr.f32.gmra.mrb[0].mxu0 %v6349
      %v6417 = vpop.f32.mrb[0].mxu0
      %v6418 = vadd.f32 0.0, %v6417
      %v6419 = vpop.f32.mrb[0].mxu0
      %6420 = vdwg.mxu0
      %v6421 = vadd.f32 %v5228, %v6418
      %v6422 = vtanh.pop %v6421
      %v6423 = vsub.f32 1.0, %v6341
      %v6424 = vmul.f32 %v6423, %v6422
      %v6425 = vmul.f32 %v6341, %v6261
      %v6426 = vadd.f32 %v6424, %v6425
      %v6428 = vsel %vm3973, %v6426, 0
      %6430 = vmatprep.subr.mxu0 0.0
      %6431 = vmatpush1.msra.mxu0 %v5260
      %6432 = vmatprep.subr.mxu0 0.0
      %6433 = vmatpush1.msra.mxu0 %v5261
      %6434 = vmatprep.subr.mxu0 0.0
      %6435 = vmatpush1.msra.mxu0 %v5262
      %6436 = vmatprep.subr.mxu0 0.0
      %6437 = vmatpush1.msra.mxu0 %v5263
      %6438 = vmatprep.subr.mxu0 0.0
      %6439 = vmatpush1.msra.mxu0 %v5264
      %6440 = vmatprep.subr.mxu0 0.0
      %6441 = vmatpush1.msra.mxu0 %v5265
      %6442 = vmatprep.subr.mxu0 0.0
      %6443 = vmatpush1.msra.mxu0 %v5266
      %6444 = vmatprep.subr.mxu0 0.0
      %6445 = vmatpush1.msra.mxu0 %v5267
      %6446 = vmatprep.subr.mxu0 0.0
      %6447 = vmatpush1.msra.mxu0 0.0
      %6448 = vmatprep.subr.mxu0 0.0
      %6449 = vmatpush1.msra.mxu0 0.0
      %6450 = vmatprep.subr.mxu0 0.0
      %6451 = vmatpush1.msra.mxu0 0.0
      %6452 = vmatprep.subr.mxu0 0.0
      %6453 = vmatpush1.msra.mxu0 0.0
      %6454 = vmatprep.subr.mxu0 0.0
      %6455 = vmatpush1.msra.mxu0 0.0
      %6456 = vmatprep.subr.mxu0 0.0
      %6457 = vmatpush1.msra.mxu0 0.0
      %6458 = vmatprep.subr.mxu0 0.0
      %6459 = vmatpush1.msra.mxu0 0.0
      %6460 = vmatprep.subr.mxu0 0.0
      %6461 = vmatpush1.msra.mxu0 0.0
      %6462 = vmatprep.subr.mxu0 0.0
      %6463 = vmatpush1.msra.mxu0 0.0
      %6464 = vmatprep.subr.mxu0 0.0
      %6465 = vmatpush1.msra.mxu0 0.0
      %6466 = vmatprep.subr.mxu0 0.0
      %6467 = vmatpush1.msra.mxu0 0.0
      %6468 = vmatprep.subr.mxu0 0.0
      %6469 = vmatpush1.msra.mxu0 0.0
      %6470 = vmatprep.subr.mxu0 0.0
      %6471 = vmatpush1.msra.mxu0 0.0
      %6472 = vmatprep.subr.mxu0 0.0
      %6473 = vmatpush1.msra.mxu0 0.0
      %6474 = vmatprep.subr.mxu0 0.0
      %6475 = vmatpush1.msra.mxu0 0.0
      %6476 = vmatprep.subr.mxu0 0.0
      %6477 = vmatpush1.msra.mxu0 0.0
      %6478 = vmatprep.subr.mxu0 0.0
      %6479 = vmatpush1.msra.mxu0 0.0
      %6480 = vmatprep.subr.mxu0 0.0
      %6481 = vmatpush1.msra.mxu0 0.0
      %6482 = vmatprep.subr.mxu0 0.0
      %6483 = vmatpush1.msra.mxu0 0.0
      %6484 = vmatprep.subr.mxu0 0.0
      %6485 = vmatpush1.msra.mxu0 0.0
      %6486 = vmatprep.subr.mxu0 0.0
      %6487 = vmatpush1.msra.mxu0 0.0
      %6488 = vmatprep.subr.mxu0 0.0
      %6489 = vmatpush1.msra.mxu0 0.0
      %6490 = vmatprep.subr.mxu0 0.0
      %6491 = vmatpush1.msra.mxu0 0.0
      %6492 = vmatprep.subr.mxu0 0.0
      %6493 = vmatpush1.msra.mxu0 0.0
      %6494 = vmatprep.mubr.f32.mxu0 0.0
      %6495 = vmatmul.mubr.f32.gmra.mrb[0].mxu0 %v6428
      %v6496 = vpop.f32.mrb[0].mxu0
      %v6497 = vadd.f32 0.0, %v6496
      %v6498 = vpop.f32.mrb[0].mxu0
      %6499 = vdwg.mxu0
      %v6500 = vadd.f32 %v5232, %v6497
      %v6501 = vxor.u32 %v6500, 2147483648
      %v6502 = vmul.f32 %v6501, 1.442695
      %v6503 = vpow.pop %v6502
      %v6504 = vadd.f32 %v6503, 1.0
      %v6505 = vrcp.pop %v6504
      %v6506 = vmul.f32 1.0, %v6505
      %6507 = vrot.lane.b32.xlu0 %v6426, 64
      %v6508 = vpop.permute.xlu0 %6507
      %v6510 = vmul.f32 %v6506, %v6508
      %6512 = vrot.lane.b32.xlu0 %v6510, 64
      %v6513 = vpop.permute.xlu0 %6512
      %v6514 = vsel %vm3973, %v6513, 0
      %6516 = vmatprep.subr.mxu0 0.0
      %6517 = vmatpush1.msra.mxu0 %v5268
      %6518 = vmatprep.subr.mxu0 0.0
      %6519 = vmatpush1.msra.mxu0 %v5269
      %6520 = vmatprep.subr.mxu0 0.0
      %6521 = vmatpush1.msra.mxu0 %v5270
      %6522 = vmatprep.subr.mxu0 0.0
      %6523 = vmatpush1.msra.mxu0 %v5271
      %6524 = vmatprep.subr.mxu0 0.0
      %6525 = vmatpush1.msra.mxu0 %v5272
      %6526 = vmatprep.subr.mxu0 0.0
      %6527 = vmatpush1.msra.mxu0 %v5273
      %6528 = vmatprep.subr.mxu0 0.0
      %6529 = vmatpush1.msra.mxu0 %v5274
      %6530 = vmatprep.subr.mxu0 0.0
      %6531 = vmatpush1.msra.mxu0 %v5275
      %6532 = vmatprep.subr.mxu0 0.0
      %6533 = vmatpush1.msra.mxu0 0.0
      %6534 = vmatprep.subr.mxu0 0.0
      %6535 = vmatpush1.msra.mxu0 0.0
      %6536 = vmatprep.subr.mxu0 0.0
      %6537 = vmatpush1.msra.mxu0 0.0
      %6538 = vmatprep.subr.mxu0 0.0
      %6539 = vmatpush1.msra.mxu0 0.0
      %6540 = vmatprep.subr.mxu0 0.0
      %6541 = vmatpush1.msra.mxu0 0.0
      %6542 = vmatprep.subr.mxu0 0.0
      %6543 = vmatpush1.msra.mxu0 0.0
      %6544 = vmatprep.subr.mxu0 0.0
      %6545 = vmatpush1.msra.mxu0 0.0
      %6546 = vmatprep.subr.mxu0 0.0
      %6547 = vmatpush1.msra.mxu0 0.0
      %6548 = vmatprep.subr.mxu0 0.0
      %6549 = vmatpush1.msra.mxu0 0.0
      %6550 = vmatprep.subr.mxu0 0.0
      %6551 = vmatpush1.msra.mxu0 0.0
      %6552 = vmatprep.subr.mxu0 0.0
      %6553 = vmatpush1.msra.mxu0 0.0
      %6554 = vmatprep.subr.mxu0 0.0
      %6555 = vmatpush1.msra.mxu0 0.0
      %6556 = vmatprep.subr.mxu0 0.0
      %6557 = vmatpush1.msra.mxu0 0.0
      %6558 = vmatprep.subr.mxu0 0.0
      %6559 = vmatpush1.msra.mxu0 0.0
      %6560 = vmatprep.subr.mxu0 0.0
      %6561 = vmatpush1.msra.mxu0 0.0
      %6562 = vmatprep.subr.mxu0 0.0
      %6563 = vmatpush1.msra.mxu0 0.0
      %6564 = vmatprep.subr.mxu0 0.0
      %6565 = vmatpush1.msra.mxu0 0.0
      %6566 = vmatprep.subr.mxu0 0.0
      %6567 = vmatpush1.msra.mxu0 0.0
      %6568 = vmatprep.subr.mxu0 0.0
      %6569 = vmatpush1.msra.mxu0 0.0
      %6570 = vmatprep.subr.mxu0 0.0
      %6571 = vmatpush1.msra.mxu0 0.0
      %6572 = vmatprep.subr.mxu0 0.0
      %6573 = vmatpush1.msra.mxu0 0.0
      %6574 = vmatprep.subr.mxu0 0.0
      %6575 = vmatpush1.msra.mxu0 0.0
      %6576 = vmatprep.subr.mxu0 0.0
      %6577 = vmatpush1.msra.mxu0 0.0
      %6578 = vmatprep.subr.mxu0 0.0
      %6579 = vmatpush1.msra.mxu0 0.0
      %6580 = vmatprep.mubr.f32.mxu0 0.0
      %6581 = vmatmul.mubr.f32.gmra.mrb[0].mxu0 %v6514
      %v6582 = vpop.f32.mrb[0].mxu0
      %v6583 = vadd.f32 0.0, %v6582
      %v6584 = vpop.f32.mrb[0].mxu0
      %6585 = vdwg.mxu0
      %v6586 = vadd.f32 %v5234, %v6583
      %v6587 = vtanh.pop %v6586
      %v6588 = vsub.f32 1.0, %v6506
      %v6589 = vmul.f32 %v6588, %v6587
      %v6590 = vmul.f32 %v6506, %v6426
      %v6591 = vadd.f32 %v6589, %v6590
      %v6593 = vsel %vm3973, %v6591, 0
      %6595 = vmatprep.subr.mxu0 0.0
      %6596 = vmatpush1.msra.mxu0 %v5260
      %6597 = vmatprep.subr.mxu0 0.0
      %6598 = vmatpush1.msra.mxu0 %v5261
      %6599 = vmatprep.subr.mxu0 0.0
      %6600 = vmatpush1.msra.mxu0 %v5262
      %6601 = vmatprep.subr.mxu0 0.0
      %6602 = vmatpush1.msra.mxu0 %v5263
      %6603 = vmatprep.subr.mxu0 0.0
      %6604 = vmatpush1.msra.mxu0 %v5264
      %6605 = vmatprep.subr.mxu0 0.0
      %6606 = vmatpush1.msra.mxu0 %v5265
      %6607 = vmatprep.subr.mxu0 0.0
      %6608 = vmatpush1.msra.mxu0 %v5266
      %6609 = vmatprep.subr.mxu0 0.0
      %6610 = vmatpush1.msra.mxu0 %v5267
      %6611 = vmatprep.subr.mxu0 0.0
      %6612 = vmatpush1.msra.mxu0 0.0
      %6613 = vmatprep.subr.mxu0 0.0
      %6614 = vmatpush1.msra.mxu0 0.0
      %6615 = vmatprep.subr.mxu0 0.0
      %6616 = vmatpush1.msra.mxu0 0.0
      %6617 = vmatprep.subr.mxu0 0.0
      %6618 = vmatpush1.msra.mxu0 0.0
      %6619 = vmatprep.subr.mxu0 0.0
      %6620 = vmatpush1.msra.mxu0 0.0
      %6621 = vmatprep.subr.mxu0 0.0
      %6622 = vmatpush1.msra.mxu0 0.0
      %6623 = vmatprep.subr.mxu0 0.0
      %6624 = vmatpush1.msra.mxu0 0.0
      %6625 = vmatprep.subr.mxu0 0.0
      %6626 = vmatpush1.msra.mxu0 0.0
      %6627 = vmatprep.subr.mxu0 0.0
      %6628 = vmatpush1.msra.mxu0 0.0
      %6629 = vmatprep.subr.mxu0 0.0
      %6630 = vmatpush1.msra.mxu0 0.0
      %6631 = vmatprep.subr.mxu0 0.0
      %6632 = vmatpush1.msra.mxu0 0.0
      %6633 = vmatprep.subr.mxu0 0.0
      %6634 = vmatpush1.msra.mxu0 0.0
      %6635 = vmatprep.subr.mxu0 0.0
      %6636 = vmatpush1.msra.mxu0 0.0
      %6637 = vmatprep.subr.mxu0 0.0
      %6638 = vmatpush1.msra.mxu0 0.0
      %6639 = vmatprep.subr.mxu0 0.0
      %6640 = vmatpush1.msra.mxu0 0.0
      %6641 = vmatprep.subr.mxu0 0.0
      %6642 = vmatpush1.msra.mxu0 0.0
      %6643 = vmatprep.subr.mxu0 0.0
      %6644 = vmatpush1.msra.mxu0 0.0
      %6645 = vmatprep.subr.mxu0 0.0
      %6646 = vmatpush1.msra.mxu0 0.0
      %6647 = vmatprep.subr.mxu0 0.0
      %6648 = vmatpush1.msra.mxu0 0.0
      %6649 = vmatprep.subr.mxu0 0.0
      %6650 = vmatpush1.msra.mxu0 0.0
      %6651 = vmatprep.subr.mxu0 0.0
      %6652 = vmatpush1.msra.mxu0 0.0
      %6653 = vmatprep.subr.mxu0 0.0
      %6654 = vmatpush1.msra.mxu0 0.0
      %6655 = vmatprep.subr.mxu0 0.0
      %6656 = vmatpush1.msra.mxu0 0.0
      %6657 = vmatprep.subr.mxu0 0.0
      %6658 = vmatpush1.msra.mxu0 0.0
      %6659 = vmatprep.mubr.f32.mxu0 0.0
      %6660 = vmatmul.mubr.f32.gmra.mrb[0].mxu0 %v6593
      %v6661 = vpop.f32.mrb[0].mxu0
      %v6662 = vadd.f32 0.0, %v6661
      %v6663 = vpop.f32.mrb[0].mxu0
      %6664 = vdwg.mxu0
      %v6665 = vadd.f32 %v5238, %v6662
      %v6666 = vxor.u32 %v6665, 2147483648
      %v6667 = vmul.f32 %v6666, 1.442695
      %v6668 = vpow.pop %v6667
      %v6669 = vadd.f32 %v6668, 1.0
      %v6670 = vrcp.pop %v6669
      %v6671 = vmul.f32 1.0, %v6670
      %6672 = vrot.lane.b32.xlu0 %v6591, 64
      %v6673 = vpop.permute.xlu0 %6672
      %v6675 = vmul.f32 %v6671, %v6673
      %6677 = vrot.lane.b32.xlu0 %v6675, 64
      %v6678 = vpop.permute.xlu0 %6677
      %v6679 = vsel %vm3973, %v6678, 0
      %6681 = vmatprep.subr.mxu0 0.0
      %6682 = vmatpush1.msra.mxu0 %v5268
      %6683 = vmatprep.subr.mxu0 0.0
      %6684 = vmatpush1.msra.mxu0 %v5269
      %6685 = vmatprep.subr.mxu0 0.0
      %6686 = vmatpush1.msra.mxu0 %v5270
      %6687 = vmatprep.subr.mxu0 0.0
      %6688 = vmatpush1.msra.mxu0 %v5271
      %6689 = vmatprep.subr.mxu0 0.0
      %6690 = vmatpush1.msra.mxu0 %v5272
      %6691 = vmatprep.subr.mxu0 0.0
      %6692 = vmatpush1.msra.mxu0 %v5273
      %6693 = vmatprep.subr.mxu0 0.0
      %6694 = vmatpush1.msra.mxu0 %v5274
      %6695 = vmatprep.subr.mxu0 0.0
      %6696 = vmatpush1.msra.mxu0 %v5275
      %6697 = vmatprep.subr.mxu0 0.0
      %6698 = vmatpush1.msra.mxu0 0.0
      %6699 = vmatprep.subr.mxu0 0.0
      %6700 = vmatpush1.msra.mxu0 0.0
      %6701 = vmatprep.subr.mxu0 0.0
      %6702 = vmatpush1.msra.mxu0 0.0
      %6703 = vmatprep.subr.mxu0 0.0
      %6704 = vmatpush1.msra.mxu0 0.0
      %6705 = vmatprep.subr.mxu0 0.0
      %6706 = vmatpush1.msra.mxu0 0.0
      %6707 = vmatprep.subr.mxu0 0.0
      %6708 = vmatpush1.msra.mxu0 0.0
      %6709 = vmatprep.subr.mxu0 0.0
      %6710 = vmatpush1.msra.mxu0 0.0
      %6711 = vmatprep.subr.mxu0 0.0
      %6712 = vmatpush1.msra.mxu0 0.0
      %6713 = vmatprep.subr.mxu0 0.0
      %6714 = vmatpush1.msra.mxu0 0.0
      %6715 = vmatprep.subr.mxu0 0.0
      %6716 = vmatpush1.msra.mxu0 0.0
      %6717 = vmatprep.subr.mxu0 0.0
      %6718 = vmatpush1.msra.mxu0 0.0
      %6719 = vmatprep.subr.mxu0 0.0
      %6720 = vmatpush1.msra.mxu0 0.0
      %6721 = vmatprep.subr.mxu0 0.0
      %6722 = vmatpush1.msra.mxu0 0.0
      %6723 = vmatprep.subr.mxu0 0.0
      %6724 = vmatpush1.msra.mxu0 0.0
      %6725 = vmatprep.subr.mxu0 0.0
      %6726 = vmatpush1.msra.mxu0 0.0
      %6727 = vmatprep.subr.mxu0 0.0
      %6728 = vmatpush1.msra.mxu0 0.0
      %6729 = vmatprep.subr.mxu0 0.0
      %6730 = vmatpush1.msra.mxu0 0.0
      %6731 = vmatprep.subr.mxu0 0.0
      %6732 = vmatpush1.msra.mxu0 0.0
      %6733 = vmatprep.subr.mxu0 0.0
      %6734 = vmatpush1.msra.mxu0 0.0
      %6735 = vmatprep.subr.mxu0 0.0
      %6736 = vmatpush1.msra.mxu0 0.0
      %6737 = vmatprep.subr.mxu0 0.0
      %6738 = vmatpush1.msra.mxu0 0.0
      %6739 = vmatprep.subr.mxu0 0.0
      %6740 = vmatpush1.msra.mxu0 0.0
      %6741 = vmatprep.subr.mxu0 0.0
      %6742 = vmatpush1.msra.mxu0 0.0
      %6743 = vmatprep.subr.mxu0 0.0
      %6744 = vmatpush1.msra.mxu0 0.0
      %6745 = vmatprep.mubr.f32.mxu0 0.0
      %6746 = vmatmul.mubr.f32.gmra.mrb[0].mxu0 %v6679
      %v6747 = vpop.f32.mrb[0].mxu0
      %v6748 = vadd.f32 0.0, %v6747
      %v6749 = vpop.f32.mrb[0].mxu0
      %6750 = vdwg.mxu0
      %v6751 = vadd.f32 %v5240, %v6748
      %v6752 = vtanh.pop %v6751
      %v6753 = vsub.f32 1.0, %v6671
      %v6754 = vmul.f32 %v6753, %v6752
      %v6755 = vmul.f32 %v6671, %v6591
      %v6756 = vadd.f32 %v6754, %v6755
      %v6758 = vsel %vm3973, %v6756, 0
      %6760 = vmatprep.subr.mxu0 0.0
      %6761 = vmatpush1.msra.mxu0 %v5260
      %6762 = vmatprep.subr.mxu0 0.0
      %6763 = vmatpush1.msra.mxu0 %v5261
      %6764 = vmatprep.subr.mxu0 0.0
      %6765 = vmatpush1.msra.mxu0 %v5262
      %6766 = vmatprep.subr.mxu0 0.0
      %6767 = vmatpush1.msra.mxu0 %v5263
      %6768 = vmatprep.subr.mxu0 0.0
      %6769 = vmatpush1.msra.mxu0 %v5264
      %6770 = vmatprep.subr.mxu0 0.0
      %6771 = vmatpush1.msra.mxu0 %v5265
      %6772 = vmatprep.subr.mxu0 0.0
      %6773 = vmatpush1.msra.mxu0 %v5266
      %6774 = vmatprep.subr.mxu0 0.0
      %6775 = vmatpush1.msra.mxu0 %v5267
      %6776 = vmatprep.subr.mxu0 0.0
      %6777 = vmatpush1.msra.mxu0 0.0
      %6778 = vmatprep.subr.mxu0 0.0
      %6779 = vmatpush1.msra.mxu0 0.0
      %6780 = vmatprep.subr.mxu0 0.0
      %6781 = vmatpush1.msra.mxu0 0.0
      %6782 = vmatprep.subr.mxu0 0.0
      %6783 = vmatpush1.msra.mxu0 0.0
      %6784 = vmatprep.subr.mxu0 0.0
      %6785 = vmatpush1.msra.mxu0 0.0
      %6786 = vmatprep.subr.mxu0 0.0
      %6787 = vmatpush1.msra.mxu0 0.0
      %6788 = vmatprep.subr.mxu0 0.0
      %6789 = vmatpush1.msra.mxu0 0.0
      %6790 = vmatprep.subr.mxu0 0.0
      %6791 = vmatpush1.msra.mxu0 0.0
      %6792 = vmatprep.subr.mxu0 0.0
      %6793 = vmatpush1.msra.mxu0 0.0
      %6794 = vmatprep.subr.mxu0 0.0
      %6795 = vmatpush1.msra.mxu0 0.0
      %6796 = vmatprep.subr.mxu0 0.0
      %6797 = vmatpush1.msra.mxu0 0.0
      %6798 = vmatprep.subr.mxu0 0.0
      %6799 = vmatpush1.msra.mxu0 0.0
      %6800 = vmatprep.subr.mxu0 0.0
      %6801 = vmatpush1.msra.mxu0 0.0
      %6802 = vmatprep.subr.mxu0 0.0
      %6803 = vmatpush1.msra.mxu0 0.0
      %6804 = vmatprep.subr.mxu0 0.0
      %6805 = vmatpush1.msra.mxu0 0.0
      %6806 = vmatprep.subr.mxu0 0.0
      %6807 = vmatpush1.msra.mxu0 0.0
      %6808 = vmatprep.subr.mxu0 0.0
      %6809 = vmatpush1.msra.mxu0 0.0
      %6810 = vmatprep.subr.mxu0 0.0
      %6811 = vmatpush1.msra.mxu0 0.0
      %6812 = vmatprep.subr.mxu0 0.0
      %6813 = vmatpush1.msra.mxu0 0.0
      %6814 = vmatprep.subr.mxu0 0.0
      %6815 = vmatpush1.msra.mxu0 0.0
      %6816 = vmatprep.subr.mxu0 0.0
      %6817 = vmatpush1.msra.mxu0 0.0
      %6818 = vmatprep.subr.mxu0 0.0
      %6819 = vmatpush1.msra.mxu0 0.0
      %6820 = vmatprep.subr.mxu0 0.0
      %6821 = vmatpush1.msra.mxu0 0.0
      %6822 = vmatprep.subr.mxu0 0.0
      %6823 = vmatpush1.msra.mxu0 0.0
      %6824 = vmatprep.mubr.f32.mxu0 0.0
      %6825 = vmatmul.mubr.f32.gmra.mrb[0].mxu0 %v6758
      %v6826 = vpop.f32.mrb[0].mxu0
      %v6827 = vadd.f32 0.0, %v6826
      %v6828 = vpop.f32.mrb[0].mxu0
      %6829 = vdwg.mxu0
      %v6830 = vadd.f32 %v5244, %v6827
      %v6831 = vxor.u32 %v6830, 2147483648
      %v6832 = vmul.f32 %v6831, 1.442695
      %v6833 = vpow.pop %v6832
      %v6834 = vadd.f32 %v6833, 1.0
      %v6835 = vrcp.pop %v6834
      %v6836 = vmul.f32 1.0, %v6835
      %6837 = vrot.lane.b32.xlu0 %v6756, 64
      %v6838 = vpop.permute.xlu0 %6837
      %v6840 = vmul.f32 %v6836, %v6838
      %6842 = vrot.lane.b32.xlu0 %v6840, 64
      %v6843 = vpop.permute.xlu0 %6842
      %v6844 = vsel %vm3973, %v6843, 0
      %6846 = vmatprep.subr.mxu0 0.0
      %6847 = vmatpush1.msra.mxu0 %v5268
      %6848 = vmatprep.subr.mxu0 0.0
      %6849 = vmatpush1.msra.mxu0 %v5269
      %6850 = vmatprep.subr.mxu0 0.0
      %6851 = vmatpush1.msra.mxu0 %v5270
      %6852 = vmatprep.subr.mxu0 0.0
      %6853 = vmatpush1.msra.mxu0 %v5271
      %6854 = vmatprep.subr.mxu0 0.0
      %6855 = vmatpush1.msra.mxu0 %v5272
      %6856 = vmatprep.subr.mxu0 0.0
      %6857 = vmatpush1.msra.mxu0 %v5273
      %6858 = vmatprep.subr.mxu0 0.0
      %6859 = vmatpush1.msra.mxu0 %v5274
      %6860 = vmatprep.subr.mxu0 0.0
      %6861 = vmatpush1.msra.mxu0 %v5275
      %6862 = vmatprep.subr.mxu0 0.0
      %6863 = vmatpush1.msra.mxu0 0.0
      %6864 = vmatprep.subr.mxu0 0.0
      %6865 = vmatpush1.msra.mxu0 0.0
      %6866 = vmatprep.subr.mxu0 0.0
      %6867 = vmatpush1.msra.mxu0 0.0
      %6868 = vmatprep.subr.mxu0 0.0
      %6869 = vmatpush1.msra.mxu0 0.0
      %6870 = vmatprep.subr.mxu0 0.0
      %6871 = vmatpush1.msra.mxu0 0.0
      %6872 = vmatprep.subr.mxu0 0.0
      %6873 = vmatpush1.msra.mxu0 0.0
      %6874 = vmatprep.subr.mxu0 0.0
      %6875 = vmatpush1.msra.mxu0 0.0
      %6876 = vmatprep.subr.mxu0 0.0
      %6877 = vmatpush1.msra.mxu0 0.0
      %6878 = vmatprep.subr.mxu0 0.0
      %6879 = vmatpush1.msra.mxu0 0.0
      %6880 = vmatprep.subr.mxu0 0.0
      %6881 = vmatpush1.msra.mxu0 0.0
      %6882 = vmatprep.subr.mxu0 0.0
      %6883 = vmatpush1.msra.mxu0 0.0
      %6884 = vmatprep.subr.mxu0 0.0
      %6885 = vmatpush1.msra.mxu0 0.0
      %6886 = vmatprep.subr.mxu0 0.0
      %6887 = vmatpush1.msra.mxu0 0.0
      %6888 = vmatprep.subr.mxu0 0.0
      %6889 = vmatpush1.msra.mxu0 0.0
      %6890 = vmatprep.subr.mxu0 0.0
      %6891 = vmatpush1.msra.mxu0 0.0
      %6892 = vmatprep.subr.mxu0 0.0
      %6893 = vmatpush1.msra.mxu0 0.0
      %6894 = vmatprep.subr.mxu0 0.0
      %6895 = vmatpush1.msra.mxu0 0.0
      %6896 = vmatprep.subr.mxu0 0.0
      %6897 = vmatpush1.msra.mxu0 0.0
      %6898 = vmatprep.subr.mxu0 0.0
      %6899 = vmatpush1.msra.mxu0 0.0
      %6900 = vmatprep.subr.mxu0 0.0
      %6901 = vmatpush1.msra.mxu0 0.0
      %6902 = vmatprep.subr.mxu0 0.0
      %6903 = vmatpush1.msra.mxu0 0.0
      %6904 = vmatprep.subr.mxu0 0.0
      %6905 = vmatpush1.msra.mxu0 0.0
      %6906 = vmatprep.subr.mxu0 0.0
      %6907 = vmatpush1.msra.mxu0 0.0
      %6908 = vmatprep.subr.mxu0 0.0
      %6909 = vmatpush1.msra.mxu0 0.0
      %6910 = vmatprep.mubr.f32.mxu0 0.0
      %6911 = vmatmul.mubr.f32.gmra.mrb[0].mxu0 %v6844
      %v6912 = vpop.f32.mrb[0].mxu0
      %v6913 = vadd.f32 0.0, %v6912
      %v6914 = vpop.f32.mrb[0].mxu0
      %6915 = vdwg.mxu0
      %v6916 = vadd.f32 %v5246, %v6913
      %v6917 = vtanh.pop %v6916
      %v6918 = vsub.f32 1.0, %v6836
      %v6919 = vmul.f32 %v6918, %v6917
      %v6920 = vmul.f32 %v6836, %v6756
      %v6921 = vadd.f32 %v6919, %v6920
      %v6923 = vsel %vm3973, %v6921, 0
      %6925 = vmatprep.subr.mxu0 0.0
      %6926 = vmatpush1.msra.mxu0 %v5260
      %6927 = vmatprep.subr.mxu0 0.0
      %6928 = vmatpush1.msra.mxu0 %v5261
      %6929 = vmatprep.subr.mxu0 0.0
      %6930 = vmatpush1.msra.mxu0 %v5262
      %6931 = vmatprep.subr.mxu0 0.0
      %6932 = vmatpush1.msra.mxu0 %v5263
      %6933 = vmatprep.subr.mxu0 0.0
      %6934 = vmatpush1.msra.mxu0 %v5264
      %6935 = vmatprep.subr.mxu0 0.0
      %6936 = vmatpush1.msra.mxu0 %v5265
      %6937 = vmatprep.subr.mxu0 0.0
      %6938 = vmatpush1.msra.mxu0 %v5266
      %6939 = vmatprep.subr.mxu0 0.0
      %6940 = vmatpush1.msra.mxu0 %v5267
      %6941 = vmatprep.subr.mxu0 0.0
      %6942 = vmatpush1.msra.mxu0 0.0
      %6943 = vmatprep.subr.mxu0 0.0
      %6944 = vmatpush1.msra.mxu0 0.0
      %6945 = vmatprep.subr.mxu0 0.0
      %6946 = vmatpush1.msra.mxu0 0.0
      %6947 = vmatprep.subr.mxu0 0.0
      %6948 = vmatpush1.msra.mxu0 0.0
      %6949 = vmatprep.subr.mxu0 0.0
      %6950 = vmatpush1.msra.mxu0 0.0
      %6951 = vmatprep.subr.mxu0 0.0
      %6952 = vmatpush1.msra.mxu0 0.0
      %6953 = vmatprep.subr.mxu0 0.0
      %6954 = vmatpush1.msra.mxu0 0.0
      %6955 = vmatprep.subr.mxu0 0.0
      %6956 = vmatpush1.msra.mxu0 0.0
      %6957 = vmatprep.subr.mxu0 0.0
      %6958 = vmatpush1.msra.mxu0 0.0
      %6959 = vmatprep.subr.mxu0 0.0
      %6960 = vmatpush1.msra.mxu0 0.0
      %6961 = vmatprep.subr.mxu0 0.0
      %6962 = vmatpush1.msra.mxu0 0.0
      %6963 = vmatprep.subr.mxu0 0.0
      %6964 = vmatpush1.msra.mxu0 0.0
      %6965 = vmatprep.subr.mxu0 0.0
      %6966 = vmatpush1.msra.mxu0 0.0
      %6967 = vmatprep.subr.mxu0 0.0
      %6968 = vmatpush1.msra.mxu0 0.0
      %6969 = vmatprep.subr.mxu0 0.0
      %6970 = vmatpush1.msra.mxu0 0.0
      %6971 = vmatprep.subr.mxu0 0.0
      %6972 = vmatpush1.msra.mxu0 0.0
      %6973 = vmatprep.subr.mxu0 0.0
      %6974 = vmatpush1.msra.mxu0 0.0
      %6975 = vmatprep.subr.mxu0 0.0
      %6976 = vmatpush1.msra.mxu0 0.0
      %6977 = vmatprep.subr.mxu0 0.0
      %6978 = vmatpush1.msra.mxu0 0.0
      %6979 = vmatprep.subr.mxu0 0.0
      %6980 = vmatpush1.msra.mxu0 0.0
      %6981 = vmatprep.subr.mxu0 0.0
      %6982 = vmatpush1.msra.mxu0 0.0
      %6983 = vmatprep.subr.mxu0 0.0
      %6984 = vmatpush1.msra.mxu0 0.0
      %6985 = vmatprep.subr.mxu0 0.0
      %6986 = vmatpush1.msra.mxu0 0.0
      %6987 = vmatprep.subr.mxu0 0.0
      %6988 = vmatpush1.msra.mxu0 0.0
      %6989 = vmatprep.mubr.f32.mxu0 0.0
      %6990 = vmatmul.mubr.f32.gmra.mrb[0].mxu0 %v6923
      %v6991 = vpop.f32.mrb[0].mxu0
      %v6992 = vadd.f32 0.0, %v6991
      %v6993 = vpop.f32.mrb[0].mxu0
      %6994 = vdwg.mxu0
      %v6995 = vadd.f32 %v5250, %v6992
      %v6996 = vxor.u32 %v6995, 2147483648
      %v6997 = vmul.f32 %v6996, 1.442695
      %v6998 = vpow.pop %v6997
      %v6999 = vadd.f32 %v6998, 1.0
      %v7000 = vrcp.pop %v6999
      %v7001 = vmul.f32 1.0, %v7000
      %7002 = vrot.lane.b32.xlu0 %v6921, 64
      %v7003 = vpop.permute.xlu0 %7002
      %v7005 = vmul.f32 %v7001, %v7003
      %7007 = vrot.lane.b32.xlu0 %v7005, 64
      %v7008 = vpop.permute.xlu0 %7007
      %v7009 = vsel %vm3973, %v7008, 0
      %7011 = vmatprep.subr.mxu0 0.0
      %7012 = vmatpush1.msra.mxu0 %v5268
      %7013 = vmatprep.subr.mxu0 0.0
      %7014 = vmatpush1.msra.mxu0 %v5269
      %7015 = vmatprep.subr.mxu0 0.0
      %7016 = vmatpush1.msra.mxu0 %v5270
      %7017 = vmatprep.subr.mxu0 0.0
      %7018 = vmatpush1.msra.mxu0 %v5271
      %7019 = vmatprep.subr.mxu0 0.0
      %7020 = vmatpush1.msra.mxu0 %v5272
      %7021 = vmatprep.subr.mxu0 0.0
      %7022 = vmatpush1.msra.mxu0 %v5273
      %7023 = vmatprep.subr.mxu0 0.0
      %7024 = vmatpush1.msra.mxu0 %v5274
      %7025 = vmatprep.subr.mxu0 0.0
      %7026 = vmatpush1.msra.mxu0 %v5275
      %7027 = vmatprep.subr.mxu0 0.0
      %7028 = vmatpush1.msra.mxu0 0.0
      %7029 = vmatprep.subr.mxu0 0.0
      %7030 = vmatpush1.msra.mxu0 0.0
      %7031 = vmatprep.subr.mxu0 0.0
      %7032 = vmatpush1.msra.mxu0 0.0
      %7033 = vmatprep.subr.mxu0 0.0
      %7034 = vmatpush1.msra.mxu0 0.0
      %7035 = vmatprep.subr.mxu0 0.0
      %7036 = vmatpush1.msra.mxu0 0.0
      %7037 = vmatprep.subr.mxu0 0.0
      %7038 = vmatpush1.msra.mxu0 0.0
      %7039 = vmatprep.subr.mxu0 0.0
      %7040 = vmatpush1.msra.mxu0 0.0
      %7041 = vmatprep.subr.mxu0 0.0
      %7042 = vmatpush1.msra.mxu0 0.0
      %7043 = vmatprep.subr.mxu0 0.0
      %7044 = vmatpush1.msra.mxu0 0.0
      %7045 = vmatprep.subr.mxu0 0.0
      %7046 = vmatpush1.msra.mxu0 0.0
      %7047 = vmatprep.subr.mxu0 0.0
      %7048 = vmatpush1.msra.mxu0 0.0
      %7049 = vmatprep.subr.mxu0 0.0
      %7050 = vmatpush1.msra.mxu0 0.0
      %7051 = vmatprep.subr.mxu0 0.0
      %7052 = vmatpush1.msra.mxu0 0.0
      %7053 = vmatprep.subr.mxu0 0.0
      %7054 = vmatpush1.msra.mxu0 0.0
      %7055 = vmatprep.subr.mxu0 0.0
      %7056 = vmatpush1.msra.mxu0 0.0
      %7057 = vmatprep.subr.mxu0 0.0
      %7058 = vmatpush1.msra.mxu0 0.0
      %7059 = vmatprep.subr.mxu0 0.0
      %7060 = vmatpush1.msra.mxu0 0.0
      %7061 = vmatprep.subr.mxu0 0.0
      %7062 = vmatpush1.msra.mxu0 0.0
      %7063 = vmatprep.subr.mxu0 0.0
      %7064 = vmatpush1.msra.mxu0 0.0
      %7065 = vmatprep.subr.mxu0 0.0
      %7066 = vmatpush1.msra.mxu0 0.0
      %7067 = vmatprep.subr.mxu0 0.0
      %7068 = vmatpush1.msra.mxu0 0.0
      %7069 = vmatprep.subr.mxu0 0.0
      %7070 = vmatpush1.msra.mxu0 0.0
      %7071 = vmatprep.subr.mxu0 0.0
      %7072 = vmatpush1.msra.mxu0 0.0
      %7073 = vmatprep.subr.mxu0 0.0
      %7074 = vmatpush1.msra.mxu0 0.0
      %7075 = vmatprep.mubr.f32.mxu0 0.0
      %7076 = vmatmul.mubr.f32.gmra.mrb[0].mxu0 %v7009
      %v7077 = vpop.f32.mrb[0].mxu0
      %v7078 = vadd.f32 0.0, %v7077
      %v7079 = vpop.f32.mrb[0].mxu0
      %7080 = vdwg.mxu0
      %v7081 = vadd.f32 %v5252, %v7078
      %v7082 = vtanh.pop %v7081
      %v7083 = vsub.f32 1.0, %v7001
      %v7084 = vmul.f32 %v7083, %v7082
      %v7085 = vmul.f32 %v7001, %v6921
      %v7086 = vadd.f32 %v7084, %v7085
      %v7088 = vsel %vm3973, %v7086, 0
      %7090 = vmatprep.subr.mxu0 0.0
      %7091 = vmatpush1.msra.mxu0 %v5260
      %7092 = vmatprep.subr.mxu0 0.0
      %7093 = vmatpush1.msra.mxu0 %v5261
      %7094 = vmatprep.subr.mxu0 0.0
      %7095 = vmatpush1.msra.mxu0 %v5262
      %7096 = vmatprep.subr.mxu0 0.0
      %7097 = vmatpush1.msra.mxu0 %v5263
      %7098 = vmatprep.subr.mxu0 0.0
      %7099 = vmatpush1.msra.mxu0 %v5264
      %7100 = vmatprep.subr.mxu0 0.0
      %7101 = vmatpush1.msra.mxu0 %v5265
      %7102 = vmatprep.subr.mxu0 0.0
      %7103 = vmatpush1.msra.mxu0 %v5266
      %7104 = vmatprep.subr.mxu0 0.0
      %7105 = vmatpush1.msra.mxu0 %v5267
      %7106 = vmatprep.subr.mxu0 0.0
      %7107 = vmatpush1.msra.mxu0 0.0
      %7108 = vmatprep.subr.mxu0 0.0
      %7109 = vmatpush1.msra.mxu0 0.0
      %7110 = vmatprep.subr.mxu0 0.0
      %7111 = vmatpush1.msra.mxu0 0.0
      %7112 = vmatprep.subr.mxu0 0.0
      %7113 = vmatpush1.msra.mxu0 0.0
      %7114 = vmatprep.subr.mxu0 0.0
      %7115 = vmatpush1.msra.mxu0 0.0
      %7116 = vmatprep.subr.mxu0 0.0
      %7117 = vmatpush1.msra.mxu0 0.0
      %7118 = vmatprep.subr.mxu0 0.0
      %7119 = vmatpush1.msra.mxu0 0.0
      %7120 = vmatprep.subr.mxu0 0.0
      %7121 = vmatpush1.msra.mxu0 0.0
      %7122 = vmatprep.subr.mxu0 0.0
      %7123 = vmatpush1.msra.mxu0 0.0
      %7124 = vmatprep.subr.mxu0 0.0
      %7125 = vmatpush1.msra.mxu0 0.0
      %7126 = vmatprep.subr.mxu0 0.0
      %7127 = vmatpush1.msra.mxu0 0.0
      %7128 = vmatprep.subr.mxu0 0.0
      %7129 = vmatpush1.msra.mxu0 0.0
      %7130 = vmatprep.subr.mxu0 0.0
      %7131 = vmatpush1.msra.mxu0 0.0
      %7132 = vmatprep.subr.mxu0 0.0
      %7133 = vmatpush1.msra.mxu0 0.0
      %7134 = vmatprep.subr.mxu0 0.0
      %7135 = vmatpush1.msra.mxu0 0.0
      %7136 = vmatprep.subr.mxu0 0.0
      %7137 = vmatpush1.msra.mxu0 0.0
      %7138 = vmatprep.subr.mxu0 0.0
      %7139 = vmatpush1.msra.mxu0 0.0
      %7140 = vmatprep.subr.mxu0 0.0
      %7141 = vmatpush1.msra.mxu0 0.0
      %7142 = vmatprep.subr.mxu0 0.0
      %7143 = vmatpush1.msra.mxu0 0.0
      %7144 = vmatprep.subr.mxu0 0.0
      %7145 = vmatpush1.msra.mxu0 0.0
      %7146 = vmatprep.subr.mxu0 0.0
      %7147 = vmatpush1.msra.mxu0 0.0
      %7148 = vmatprep.subr.mxu0 0.0
      %7149 = vmatpush1.msra.mxu0 0.0
      %7150 = vmatprep.subr.mxu0 0.0
      %7151 = vmatpush1.msra.mxu0 0.0
      %7152 = vmatprep.subr.mxu0 0.0
      %7153 = vmatpush1.msra.mxu0 0.0
      %7154 = vmatprep.mubr.f32.mxu0 0.0
      %7155 = vmatmul.mubr.f32.gmra.mrb[0].mxu0 %v7088
      %v7156 = vpop.f32.mrb[0].mxu0
      %v7157 = vadd.f32 0.0, %v7156
      %v7158 = vpop.f32.mrb[0].mxu0
      %7159 = vdwg.mxu0
      %v7160 = vadd.f32 %v5256, %v7157
      %v7161 = vxor.u32 %v7160, 2147483648
      %v7162 = vmul.f32 %v7161, 1.442695
      %v7163 = vpow.pop %v7162
      %v7164 = vadd.f32 %v7163, 1.0
      %v7165 = vrcp.pop %v7164
      %v7166 = vmul.f32 1.0, %v7165
      %7167 = vrot.lane.b32.xlu0 %v7086, 64
      %v7168 = vpop.permute.xlu0 %7167
      %v7170 = vmul.f32 %v7166, %v7168
      %7172 = vrot.lane.b32.xlu0 %v7170, 64
      %v7173 = vpop.permute.xlu0 %7172
      %v7174 = vsel %vm3973, %v7173, 0
      %7176 = vmatprep.subr.mxu0 0.0
      %7177 = vmatpush1.msra.mxu0 %v5268
      %7178 = vmatprep.subr.mxu0 0.0
      %7179 = vmatpush1.msra.mxu0 %v5269
      %7180 = vmatprep.subr.mxu0 0.0
      %7181 = vmatpush1.msra.mxu0 %v5270
      %7182 = vmatprep.subr.mxu0 0.0
      %7183 = vmatpush1.msra.mxu0 %v5271
      %7184 = vmatprep.subr.mxu0 0.0
      %7185 = vmatpush1.msra.mxu0 %v5272
      %7186 = vmatprep.subr.mxu0 0.0
      %7187 = vmatpush1.msra.mxu0 %v5273
      %7188 = vmatprep.subr.mxu0 0.0
      %7189 = vmatpush1.msra.mxu0 %v5274
      %7190 = vmatprep.subr.mxu0 0.0
      %7191 = vmatpush1.msra.mxu0 %v5275
      %7192 = vmatprep.subr.mxu0 0.0
      %7193 = vmatpush1.msra.mxu0 0.0
      %7194 = vmatprep.subr.mxu0 0.0
      %7195 = vmatpush1.msra.mxu0 0.0
      %7196 = vmatprep.subr.mxu0 0.0
      %7197 = vmatpush1.msra.mxu0 0.0
      %7198 = vmatprep.subr.mxu0 0.0
      %7199 = vmatpush1.msra.mxu0 0.0
      %7200 = vmatprep.subr.mxu0 0.0
      %7201 = vmatpush1.msra.mxu0 0.0
      %7202 = vmatprep.subr.mxu0 0.0
      %7203 = vmatpush1.msra.mxu0 0.0
      %7204 = vmatprep.subr.mxu0 0.0
      %7205 = vmatpush1.msra.mxu0 0.0
      %7206 = vmatprep.subr.mxu0 0.0
      %7207 = vmatpush1.msra.mxu0 0.0
      %7208 = vmatprep.subr.mxu0 0.0
      %7209 = vmatpush1.msra.mxu0 0.0
      %7210 = vmatprep.subr.mxu0 0.0
      %7211 = vmatpush1.msra.mxu0 0.0
      %7212 = vmatprep.subr.mxu0 0.0
      %7213 = vmatpush1.msra.mxu0 0.0
      %7214 = vmatprep.subr.mxu0 0.0
      %7215 = vmatpush1.msra.mxu0 0.0
      %7216 = vmatprep.subr.mxu0 0.0
      %7217 = vmatpush1.msra.mxu0 0.0
      %7218 = vmatprep.subr.mxu0 0.0
      %7219 = vmatpush1.msra.mxu0 0.0
      %7220 = vmatprep.subr.mxu0 0.0
      %7221 = vmatpush1.msra.mxu0 0.0
      %7222 = vmatprep.subr.mxu0 0.0
      %7223 = vmatpush1.msra.mxu0 0.0
      %7224 = vmatprep.subr.mxu0 0.0
      %7225 = vmatpush1.msra.mxu0 0.0
      %7226 = vmatprep.subr.mxu0 0.0
      %7227 = vmatpush1.msra.mxu0 0.0
      %7228 = vmatprep.subr.mxu0 0.0
      %7229 = vmatpush1.msra.mxu0 0.0
      %7230 = vmatprep.subr.mxu0 0.0
      %7231 = vmatpush1.msra.mxu0 0.0
      %7232 = vmatprep.subr.mxu0 0.0
      %7233 = vmatpush1.msra.mxu0 0.0
      %7234 = vmatprep.subr.mxu0 0.0
      %7235 = vmatpush1.msra.mxu0 0.0
      %7236 = vmatprep.subr.mxu0 0.0
      %7237 = vmatpush1.msra.mxu0 0.0
      %7238 = vmatprep.subr.mxu0 0.0
      %7239 = vmatpush1.msra.mxu0 0.0
      %7240 = vmatprep.mubr.f32.mxu0 0.0
      %7241 = vmatmul.mubr.f32.gmra.mrb[0].mxu0 %v7174
      %v7242 = vpop.f32.mrb[0].mxu0
      %v7243 = vadd.f32 0.0, %v7242
      %v7244 = vpop.f32.mrb[0].mxu0
      %7245 = vdwg.mxu0
      %v7246 = vadd.f32 %v5258, %v7243
      %v7247 = vtanh.pop %v7246
      %v7248 = vsub.f32 1.0, %v7166
      %v7249 = vmul.f32 %v7248, %v7247
      %v7250 = vmul.f32 %v7166, %v7086
      %v7251 = vadd.f32 %v7249, %v7250
      %v7252 = vld [vmem:[%s15] sm:$0xff]
      %v7253 = vld [vmem:[%s15 + $0x8] sm:$0xff]
      %v7254 = vld [vmem:[%s15 + $0x10] sm:$0xff]
      %v7255 = vld [vmem:[%s15 + $0x18] sm:$0xff]
      %v7256 = vld [vmem:[%s15 + $0x20] sm:$0xff]
      %v7257 = vld [vmem:[%s15 + $0x28] sm:$0xff]
      %v7258 = vld [vmem:[%s15 + $0x30] sm:$0xff]
      %v7259 = vld [vmem:[%s15 + $0x38] sm:$0xff]
      %v7260 = vld [vmem:[%s16] sm:$0x1]
      %v7262 = vlaneseq
      %v7263 = vshrl.u32 %v7262, 7
      %v7264 = vsub.s32 0, %v7263
      %v7265 = vrot.slane %v7260, %v7264
      %v7268 = vsel %vm3973, %v7251, 0
      %7270 = vmatprep.subr.mxu0 0.0
      %7271 = vmatpush1.msra.mxu0 %v7252
      %7272 = vmatprep.subr.mxu0 0.0
      %7273 = vmatpush1.msra.mxu0 %v7253
      %7274 = vmatprep.subr.mxu0 0.0
      %7275 = vmatpush1.msra.mxu0 %v7254
      %7276 = vmatprep.subr.mxu0 0.0
      %7277 = vmatpush1.msra.mxu0 %v7255
      %7278 = vmatprep.subr.mxu0 0.0
      %7279 = vmatpush1.msra.mxu0 %v7256
      %7280 = vmatprep.subr.mxu0 0.0
      %7281 = vmatpush1.msra.mxu0 %v7257
      %7282 = vmatprep.subr.mxu0 0.0
      %7283 = vmatpush1.msra.mxu0 %v7258
      %7284 = vmatprep.subr.mxu0 0.0
      %7285 = vmatpush1.msra.mxu0 %v7259
      %7286 = vmatprep.subr.mxu0 0.0
      %7287 = vmatpush1.msra.mxu0 0.0
      %7288 = vmatprep.subr.mxu0 0.0
      %7289 = vmatpush1.msra.mxu0 0.0
      %7290 = vmatprep.subr.mxu0 0.0
      %7291 = vmatpush1.msra.mxu0 0.0
      %7292 = vmatprep.subr.mxu0 0.0
      %7293 = vmatpush1.msra.mxu0 0.0
      %7294 = vmatprep.subr.mxu0 0.0
      %7295 = vmatpush1.msra.mxu0 0.0
      %7296 = vmatprep.subr.mxu0 0.0
      %7297 = vmatpush1.msra.mxu0 0.0
      %7298 = vmatprep.subr.mxu0 0.0
      %7299 = vmatpush1.msra.mxu0 0.0
      %7300 = vmatprep.subr.mxu0 0.0
      %7301 = vmatpush1.msra.mxu0 0.0
      %7302 = vmatprep.subr.mxu0 0.0
      %7303 = vmatpush1.msra.mxu0 0.0
      %7304 = vmatprep.subr.mxu0 0.0
      %7305 = vmatpush1.msra.mxu0 0.0
      %7306 = vmatprep.subr.mxu0 0.0
      %7307 = vmatpush1.msra.mxu0 0.0
      %7308 = vmatprep.subr.mxu0 0.0
      %7309 = vmatpush1.msra.mxu0 0.0
      %7310 = vmatprep.subr.mxu0 0.0
      %7311 = vmatpush1.msra.mxu0 0.0
      %7312 = vmatprep.subr.mxu0 0.0
      %7313 = vmatpush1.msra.mxu0 0.0
      %7314 = vmatprep.subr.mxu0 0.0
      %7315 = vmatpush1.msra.mxu0 0.0
      %7316 = vmatprep.subr.mxu0 0.0
      %7317 = vmatpush1.msra.mxu0 0.0
      %7318 = vmatprep.subr.mxu0 0.0
      %7319 = vmatpush1.msra.mxu0 0.0
      %7320 = vmatprep.subr.mxu0 0.0
      %7321 = vmatpush1.msra.mxu0 0.0
      %7322 = vmatprep.subr.mxu0 0.0
      %7323 = vmatpush1.msra.mxu0 0.0
      %7324 = vmatprep.subr.mxu0 0.0
      %7325 = vmatpush1.msra.mxu0 0.0
      %7326 = vmatprep.subr.mxu0 0.0
      %7327 = vmatpush1.msra.mxu0 0.0
      %7328 = vmatprep.subr.mxu0 0.0
      %7329 = vmatpush1.msra.mxu0 0.0
      %7330 = vmatprep.subr.mxu0 0.0
      %7331 = vmatpush1.msra.mxu0 0.0
      %7332 = vmatprep.subr.mxu0 0.0
      %7333 = vmatpush1.msra.mxu0 0.0
      %7334 = vmatprep.mubr.f32.mxu0 0.0
      %7335 = vmatmul.mubr.f32.gmra.mrb[0].mxu0 %v7268
      %v7336 = vpop.f32.mrb[0].mxu0
      %v7337 = vadd.f32 %v7265, %v7336
      %v7338 = vpop.f32.mrb[0].mxu0
      %7339 = vdwg.mxu0
      %v7340 = vmul.f32 %v7337, 0.5
      %v7341 = vmul.f32 %v7337, 0.044715
      %v7342 = vmul.f32 %v7341, %v7337
      %v7343 = vmul.f32 %v7342, %v7337
      %v7344 = vadd.f32 %v7337, %v7343
      %v7345 = vmul.f32 %v7344, 0.7978846
      %v7346 = vtanh.pop %v7345
      %v7347 = vadd.f32 %v7346, 1.0
      %v7348 = vmul.f32 %v7340, %v7347
      %v7349 = vld [vmem:[%s17] sm:$0xff]
      %v7350 = vld [vmem:[%s17 + $0x8] sm:$0xff]
      %v7351 = vld [vmem:[%s17 + $0x10] sm:$0xff]
      %v7352 = vld [vmem:[%s17 + $0x18] sm:$0xff]
      %v7353 = vld [vmem:[%s17 + $0x20] sm:$0xff]
      %v7354 = vld [vmem:[%s17 + $0x28] sm:$0xff]
      %v7355 = vld [vmem:[%s17 + $0x30] sm:$0xff]
      %v7356 = vld [vmem:[%s17 + $0x38] sm:$0xff]
      %v7357 = vld [vmem:[%s18] sm:$0x1]
      %v7359 = vlaneseq
      %v7360 = vshrl.u32 %v7359, 7
      %v7361 = vsub.s32 0, %v7360
      %v7362 = vrot.slane %v7357, %v7361
      %v7365 = vsel %vm3973, %v7348, 0
      %7367 = vmatprep.subr.mxu0 0.0
      %7368 = vmatpush1.msra.mxu0 %v7349
      %7369 = vmatprep.subr.mxu0 0.0
      %7370 = vmatpush1.msra.mxu0 %v7350
      %7371 = vmatprep.subr.mxu0 0.0
      %7372 = vmatpush1.msra.mxu0 %v7351
      %7373 = vmatprep.subr.mxu0 0.0
      %7374 = vmatpush1.msra.mxu0 %v7352
      %7375 = vmatprep.subr.mxu0 0.0
      %7376 = vmatpush1.msra.mxu0 %v7353
      %7377 = vmatprep.subr.mxu0 0.0
      %7378 = vmatpush1.msra.mxu0 %v7354
      %7379 = vmatprep.subr.mxu0 0.0
      %7380 = vmatpush1.msra.mxu0 %v7355
      %7381 = vmatprep.subr.mxu0 0.0
      %7382 = vmatpush1.msra.mxu0 %v7356
      %7383 = vmatprep.subr.mxu0 0.0
      %7384 = vmatpush1.msra.mxu0 0.0
      %7385 = vmatprep.subr.mxu0 0.0
      %7386 = vmatpush1.msra.mxu0 0.0
      %7387 = vmatprep.subr.mxu0 0.0
      %7388 = vmatpush1.msra.mxu0 0.0
      %7389 = vmatprep.subr.mxu0 0.0
      %7390 = vmatpush1.msra.mxu0 0.0
      %7391 = vmatprep.subr.mxu0 0.0
      %7392 = vmatpush1.msra.mxu0 0.0
      %7393 = vmatprep.subr.mxu0 0.0
      %7394 = vmatpush1.msra.mxu0 0.0
      %7395 = vmatprep.subr.mxu0 0.0
      %7396 = vmatpush1.msra.mxu0 0.0
      %7397 = vmatprep.subr.mxu0 0.0
      %7398 = vmatpush1.msra.mxu0 0.0
      %7399 = vmatprep.subr.mxu0 0.0
      %7400 = vmatpush1.msra.mxu0 0.0
      %7401 = vmatprep.subr.mxu0 0.0
      %7402 = vmatpush1.msra.mxu0 0.0
      %7403 = vmatprep.subr.mxu0 0.0
      %7404 = vmatpush1.msra.mxu0 0.0
      %7405 = vmatprep.subr.mxu0 0.0
      %7406 = vmatpush1.msra.mxu0 0.0
      %7407 = vmatprep.subr.mxu0 0.0
      %7408 = vmatpush1.msra.mxu0 0.0
      %7409 = vmatprep.subr.mxu0 0.0
      %7410 = vmatpush1.msra.mxu0 0.0
      %7411 = vmatprep.subr.mxu0 0.0
      %7412 = vmatpush1.msra.mxu0 0.0
      %7413 = vmatprep.subr.mxu0 0.0
      %7414 = vmatpush1.msra.mxu0 0.0
      %7415 = vmatprep.subr.mxu0 0.0
      %7416 = vmatpush1.msra.mxu0 0.0
      %7417 = vmatprep.subr.mxu0 0.0
      %7418 = vmatpush1.msra.mxu0 0.0
      %7419 = vmatprep.subr.mxu0 0.0
      %7420 = vmatpush1.msra.mxu0 0.0
      %7421 = vmatprep.subr.mxu0 0.0
      %7422 = vmatpush1.msra.mxu0 0.0
      %7423 = vmatprep.subr.mxu0 0.0
      %7424 = vmatpush1.msra.mxu0 0.0
      %7425 = vmatprep.subr.mxu0 0.0
      %7426 = vmatpush1.msra.mxu0 0.0
      %7427 = vmatprep.subr.mxu0 0.0
      %7428 = vmatpush1.msra.mxu0 0.0
      %7429 = vmatprep.subr.mxu0 0.0
      %7430 = vmatpush1.msra.mxu0 0.0
      %7431 = vmatprep.mubr.f32.mxu0 0.0
      %7432 = vmatmul.mubr.f32.gmra.mrb[0].mxu0 %v7365
      %v7433 = vpop.f32.mrb[0].mxu0
      %v7434 = vadd.f32 %v7362, %v7433
      %v7435 = vpop.f32.mrb[0].mxu0
      %7436 = vdwg.mxu0
      %7438 = vrot.lane.b32.xlu0 %v7434, 96
      %v7439 = vpop.permute.xlu0 %7438
      %v7441 = vadd.f32 %v7434, %v7439
      %v7442 = vmul.f32 %v7441, 0.999995
      %v7443 = vld [vmem:[%s20] sm:$0xff]
      %v7444 = vld [vmem:[%s20 + $0x8] sm:$0xff]
      %v7445 = vld [vmem:[%s20 + $0x10] sm:$0xff]
      %v7446 = vld [vmem:[%s20 + $0x18] sm:$0xff]
      %v7447 = vld [vmem:[%s19] sm:$0xff]
      %v7449 = vsel %vm871, %v7447, 0
      %7451 = vmatprep.subr.mxu0 0.0
      %7452 = vmatpush1.msra.mxu0 %v7442
      %7453 = vmatprep.subr.mxu0 0.0
      %7454 = vmatpush1.msra.mxu0 0.0
      %7455 = vmatprep.subr.mxu0 0.0
      %7456 = vmatpush1.msra.mxu0 0.0
      %7457 = vmatprep.subr.mxu0 0.0
      %7458 = vmatpush1.msra.mxu0 0.0
      %7459 = vmatprep.subr.mxu0 0.0
      %7460 = vmatpush1.msra.mxu0 0.0
      %7461 = vmatprep.subr.mxu0 0.0
      %7462 = vmatpush1.msra.mxu0 0.0
      %7463 = vmatprep.subr.mxu0 0.0
      %7464 = vmatpush1.msra.mxu0 0.0
      %7465 = vmatprep.subr.mxu0 0.0
      %7466 = vmatpush1.msra.mxu0 0.0
      %7467 = vmatprep.subr.mxu0 0.0
      %7468 = vmatpush1.msra.mxu0 0.0
      %7469 = vmatprep.subr.mxu0 0.0
      %7470 = vmatpush1.msra.mxu0 0.0
      %7471 = vmatprep.subr.mxu0 0.0
      %7472 = vmatpush1.msra.mxu0 0.0
      %7473 = vmatprep.subr.mxu0 0.0
      %7474 = vmatpush1.msra.mxu0 0.0
      %7475 = vmatprep.subr.mxu0 0.0
      %7476 = vmatpush1.msra.mxu0 0.0
      %7477 = vmatprep.subr.mxu0 0.0
      %7478 = vmatpush1.msra.mxu0 0.0
      %7479 = vmatprep.subr.mxu0 0.0
      %7480 = vmatpush1.msra.mxu0 0.0
      %7481 = vmatprep.subr.mxu0 0.0
      %7482 = vmatpush1.msra.mxu0 0.0
      %7483 = vmatprep.subr.mxu0 0.0
      %7484 = vmatpush1.msra.mxu0 0.0
      %7485 = vmatprep.subr.mxu0 0.0
      %7486 = vmatpush1.msra.mxu0 0.0
      %7487 = vmatprep.subr.mxu0 0.0
      %7488 = vmatpush1.msra.mxu0 0.0
      %7489 = vmatprep.subr.mxu0 0.0
      %7490 = vmatpush1.msra.mxu0 0.0
      %7491 = vmatprep.subr.mxu0 0.0
      %7492 = vmatpush1.msra.mxu0 0.0
      %7493 = vmatprep.subr.mxu0 0.0
      %7494 = vmatpush1.msra.mxu0 0.0
      %7495 = vmatprep.subr.mxu0 0.0
      %7496 = vmatpush1.msra.mxu0 0.0
      %7497 = vmatprep.subr.mxu0 0.0
      %7498 = vmatpush1.msra.mxu0 0.0
      %7499 = vmatprep.subr.mxu0 0.0
      %7500 = vmatpush1.msra.mxu0 0.0
      %7501 = vmatprep.subr.mxu0 0.0
      %7502 = vmatpush1.msra.mxu0 0.0
      %7503 = vmatprep.subr.mxu0 0.0
      %7504 = vmatpush1.msra.mxu0 0.0
      %7505 = vmatprep.subr.mxu0 0.0
      %7506 = vmatpush1.msra.mxu0 0.0
      %7507 = vmatprep.subr.mxu0 0.0
      %7508 = vmatpush1.msra.mxu0 0.0
      %7509 = vmatprep.subr.mxu0 0.0
      %7510 = vmatpush1.msra.mxu0 0.0
      %7511 = vmatprep.subr.mxu0 0.0
      %7512 = vmatpush1.msra.mxu0 0.0
      %7513 = vmatprep.subr.mxu0 0.0
      %7514 = vmatpush1.msra.mxu0 0.0
      %7515 = vmatprep.mubr.f32.mxu0 0.0
      %7516 = vmatmul.mubr.f32.gmra.mrb[0].mxu0 %v7449
      %v7517 = vpop.f32.mrb[0].mxu0
      %v7518 = vadd.f32 0.0, %v7517
      %v7519 = vpop.f32.mrb[0].mxu0
      %7520 = vdwg.mxu0
      %7521 = vmatprep.subr.mxu0 0.0
      %7522 = vmatpush1.msra.mxu0 %v7518
      %7523 = vmatprep.subr.mxu0 0.0
      %7524 = vmatpush1.msra.mxu0 0.0
      %7525 = vmatprep.subr.mxu0 0.0
      %7526 = vmatpush1.msra.mxu0 0.0
      %7527 = vmatprep.subr.mxu0 0.0
      %7528 = vmatpush1.msra.mxu0 0.0
      %7529 = vmatprep.subr.mxu0 0.0
      %7530 = vmatpush1.msra.mxu0 0.0
      %7531 = vmatprep.subr.mxu0 0.0
      %7532 = vmatpush1.msra.mxu0 0.0
      %7533 = vmatprep.subr.mxu0 0.0
      %7534 = vmatpush1.msra.mxu0 0.0
      %7535 = vmatprep.subr.mxu0 0.0
      %7536 = vmatpush1.msra.mxu0 0.0
      %7537 = vmatprep.subr.mxu0 0.0
      %7538 = vmatpush1.msra.mxu0 0.0
      %7539 = vmatprep.subr.mxu0 0.0
      %7540 = vmatpush1.msra.mxu0 0.0
      %7541 = vmatprep.subr.mxu0 0.0
      %7542 = vmatpush1.msra.mxu0 0.0
      %7543 = vmatprep.subr.mxu0 0.0
      %7544 = vmatpush1.msra.mxu0 0.0
      %7545 = vmatprep.subr.mxu0 0.0
      %7546 = vmatpush1.msra.mxu0 0.0
      %7547 = vmatprep.subr.mxu0 0.0
      %7548 = vmatpush1.msra.mxu0 0.0
      %7549 = vmatprep.subr.mxu0 0.0
      %7550 = vmatpush1.msra.mxu0 0.0
      %7551 = vmatprep.subr.mxu0 0.0
      %7552 = vmatpush1.msra.mxu0 0.0
      %7553 = vmatprep.subr.mxu0 0.0
      %7554 = vmatpush1.msra.mxu0 0.0
      %7555 = vmatprep.subr.mxu0 0.0
      %7556 = vmatpush1.msra.mxu0 0.0
      %7557 = vmatprep.subr.mxu0 0.0
      %7558 = vmatpush1.msra.mxu0 0.0
      %7559 = vmatprep.subr.mxu0 0.0
      %7560 = vmatpush1.msra.mxu0 0.0
      %7561 = vmatprep.subr.mxu0 0.0
      %7562 = vmatpush1.msra.mxu0 0.0
      %7563 = vmatprep.subr.mxu0 0.0
      %7564 = vmatpush1.msra.mxu0 0.0
      %7565 = vmatprep.subr.mxu0 0.0
      %7566 = vmatpush1.msra.mxu0 0.0
      %7567 = vmatprep.subr.mxu0 0.0
      %7568 = vmatpush1.msra.mxu0 0.0
      %7569 = vmatprep.subr.mxu0 0.0
      %7570 = vmatpush1.msra.mxu0 0.0
      %7571 = vmatprep.subr.mxu0 0.0
      %7572 = vmatpush1.msra.mxu0 0.0
      %7573 = vmatprep.subr.mxu0 0.0
      %7574 = vmatpush1.msra.mxu0 0.0
      %7575 = vmatprep.subr.mxu0 0.0
      %7576 = vmatpush1.msra.mxu0 0.0
      %7577 = vmatprep.subr.mxu0 0.0
      %7578 = vmatpush1.msra.mxu0 0.0
      %7579 = vmatprep.subr.mxu0 0.0
      %7580 = vmatpush1.msra.mxu0 0.0
      %7581 = vmatprep.subr.mxu0 0.0
      %7582 = vmatpush1.msra.mxu0 0.0
      %7583 = vmatprep.subr.mxu0 0.0
      %7584 = vmatpush1.msra.mxu0 0.0
      %7585 = vmatprep.mubr.f32.mxu0 0.0
      %7586 = vmatmul.mubr.f32.gmra.mrb[0].mxu0 %v7449
      %v7587 = vpop.f32.mrb[0].mxu0
      %v7588 = vadd.f32 0.0, %v7587
      %v7589 = vpop.f32.mrb[0].mxu0
      %7590 = vdwg.mxu0
      %s7591 = scalar_lea.vmem %s19, 8
      %v7592 = vld [vmem:[%s7591] sm:$0xff]
      %v7594 = vsel %vm871, %v7592, 0
      %7596 = vmatprep.subr.mxu0 0.0
      %7597 = vmatpush1.msra.mxu0 %v7442
      %7598 = vmatprep.subr.mxu0 0.0
      %7599 = vmatpush1.msra.mxu0 0.0
      %7600 = vmatprep.subr.mxu0 0.0
      %7601 = vmatpush1.msra.mxu0 0.0
      %7602 = vmatprep.subr.mxu0 0.0
      %7603 = vmatpush1.msra.mxu0 0.0
      %7604 = vmatprep.subr.mxu0 0.0
      %7605 = vmatpush1.msra.mxu0 0.0
      %7606 = vmatprep.subr.mxu0 0.0
      %7607 = vmatpush1.msra.mxu0 0.0
      %7608 = vmatprep.subr.mxu0 0.0
      %7609 = vmatpush1.msra.mxu0 0.0
      %7610 = vmatprep.subr.mxu0 0.0
      %7611 = vmatpush1.msra.mxu0 0.0
      %7612 = vmatprep.subr.mxu0 0.0
      %7613 = vmatpush1.msra.mxu0 0.0
      %7614 = vmatprep.subr.mxu0 0.0
      %7615 = vmatpush1.msra.mxu0 0.0
      %7616 = vmatprep.subr.mxu0 0.0
      %7617 = vmatpush1.msra.mxu0 0.0
      %7618 = vmatprep.subr.mxu0 0.0
      %7619 = vmatpush1.msra.mxu0 0.0
      %7620 = vmatprep.subr.mxu0 0.0
      %7621 = vmatpush1.msra.mxu0 0.0
      %7622 = vmatprep.subr.mxu0 0.0
      %7623 = vmatpush1.msra.mxu0 0.0
      %7624 = vmatprep.subr.mxu0 0.0
      %7625 = vmatpush1.msra.mxu0 0.0
      %7626 = vmatprep.subr.mxu0 0.0
      %7627 = vmatpush1.msra.mxu0 0.0
      %7628 = vmatprep.subr.mxu0 0.0
      %7629 = vmatpush1.msra.mxu0 0.0
      %7630 = vmatprep.subr.mxu0 0.0
      %7631 = vmatpush1.msra.mxu0 0.0
      %7632 = vmatprep.subr.mxu0 0.0
      %7633 = vmatpush1.msra.mxu0 0.0
      %7634 = vmatprep.subr.mxu0 0.0
      %7635 = vmatpush1.msra.mxu0 0.0
      %7636 = vmatprep.subr.mxu0 0.0
      %7637 = vmatpush1.msra.mxu0 0.0
      %7638 = vmatprep.subr.mxu0 0.0
      %7639 = vmatpush1.msra.mxu0 0.0
      %7640 = vmatprep.subr.mxu0 0.0
      %7641 = vmatpush1.msra.mxu0 0.0
      %7642 = vmatprep.subr.mxu0 0.0
      %7643 = vmatpush1.msra.mxu0 0.0
      %7644 = vmatprep.subr.mxu0 0.0
      %7645 = vmatpush1.msra.mxu0 0.0
      %7646 = vmatprep.subr.mxu0 0.0
      %7647 = vmatpush1.msra.mxu0 0.0
      %7648 = vmatprep.subr.mxu0 0.0
      %7649 = vmatpush1.msra.mxu0 0.0
      %7650 = vmatprep.subr.mxu0 0.0
      %7651 = vmatpush1.msra.mxu0 0.0
      %7652 = vmatprep.subr.mxu0 0.0
      %7653 = vmatpush1.msra.mxu0 0.0
      %7654 = vmatprep.subr.mxu0 0.0
      %7655 = vmatpush1.msra.mxu0 0.0
      %7656 = vmatprep.subr.mxu0 0.0
      %7657 = vmatpush1.msra.mxu0 0.0
      %7658 = vmatprep.subr.mxu0 0.0
      %7659 = vmatpush1.msra.mxu0 0.0
      %7660 = vmatprep.mubr.f32.mxu0 0.0
      %7661 = vmatmul.mubr.f32.gmra.mrb[0].mxu0 %v7594
      %v7662 = vpop.f32.mrb[0].mxu0
      %v7663 = vadd.f32 0.0, %v7662
      %v7664 = vpop.f32.mrb[0].mxu0
      %7665 = vdwg.mxu0
      %7666 = vmatprep.subr.mxu0 0.0
      %7667 = vmatpush1.msra.mxu0 %v7663
      %7668 = vmatprep.subr.mxu0 0.0
      %7669 = vmatpush1.msra.mxu0 0.0
      %7670 = vmatprep.subr.mxu0 0.0
      %7671 = vmatpush1.msra.mxu0 0.0
      %7672 = vmatprep.subr.mxu0 0.0
      %7673 = vmatpush1.msra.mxu0 0.0
      %7674 = vmatprep.subr.mxu0 0.0
      %7675 = vmatpush1.msra.mxu0 0.0
      %7676 = vmatprep.subr.mxu0 0.0
      %7677 = vmatpush1.msra.mxu0 0.0
      %7678 = vmatprep.subr.mxu0 0.0
      %7679 = vmatpush1.msra.mxu0 0.0
      %7680 = vmatprep.subr.mxu0 0.0
      %7681 = vmatpush1.msra.mxu0 0.0
      %7682 = vmatprep.subr.mxu0 0.0
      %7683 = vmatpush1.msra.mxu0 0.0
      %7684 = vmatprep.subr.mxu0 0.0
      %7685 = vmatpush1.msra.mxu0 0.0
      %7686 = vmatprep.subr.mxu0 0.0
      %7687 = vmatpush1.msra.mxu0 0.0
      %7688 = vmatprep.subr.mxu0 0.0
      %7689 = vmatpush1.msra.mxu0 0.0
      %7690 = vmatprep.subr.mxu0 0.0
      %7691 = vmatpush1.msra.mxu0 0.0
      %7692 = vmatprep.subr.mxu0 0.0
      %7693 = vmatpush1.msra.mxu0 0.0
      %7694 = vmatprep.subr.mxu0 0.0
      %7695 = vmatpush1.msra.mxu0 0.0
      %7696 = vmatprep.subr.mxu0 0.0
      %7697 = vmatpush1.msra.mxu0 0.0
      %7698 = vmatprep.subr.mxu0 0.0
      %7699 = vmatpush1.msra.mxu0 0.0
      %7700 = vmatprep.subr.mxu0 0.0
      %7701 = vmatpush1.msra.mxu0 0.0
      %7702 = vmatprep.subr.mxu0 0.0
      %7703 = vmatpush1.msra.mxu0 0.0
      %7704 = vmatprep.subr.mxu0 0.0
      %7705 = vmatpush1.msra.mxu0 0.0
      %7706 = vmatprep.subr.mxu0 0.0
      %7707 = vmatpush1.msra.mxu0 0.0
      %7708 = vmatprep.subr.mxu0 0.0
      %7709 = vmatpush1.msra.mxu0 0.0
      %7710 = vmatprep.subr.mxu0 0.0
      %7711 = vmatpush1.msra.mxu0 0.0
      %7712 = vmatprep.subr.mxu0 0.0
      %7713 = vmatpush1.msra.mxu0 0.0
      %7714 = vmatprep.subr.mxu0 0.0
      %7715 = vmatpush1.msra.mxu0 0.0
      %7716 = vmatprep.subr.mxu0 0.0
      %7717 = vmatpush1.msra.mxu0 0.0
      %7718 = vmatprep.subr.mxu0 0.0
      %7719 = vmatpush1.msra.mxu0 0.0
      %7720 = vmatprep.subr.mxu0 0.0
      %7721 = vmatpush1.msra.mxu0 0.0
      %7722 = vmatprep.subr.mxu0 0.0
      %7723 = vmatpush1.msra.mxu0 0.0
      %7724 = vmatprep.subr.mxu0 0.0
      %7725 = vmatpush1.msra.mxu0 0.0
      %7726 = vmatprep.subr.mxu0 0.0
      %7727 = vmatpush1.msra.mxu0 0.0
      %7728 = vmatprep.subr.mxu0 0.0
      %7729 = vmatpush1.msra.mxu0 0.0
      %7730 = vmatprep.mubr.f32.mxu0 0.0
      %7731 = vmatmul.mubr.f32.gmra.mrb[0].mxu0 %v7594
      %v7732 = vpop.f32.mrb[0].mxu0
      %v7733 = vadd.f32 0.0, %v7732
      %v7734 = vpop.f32.mrb[0].mxu0
      %7735 = vdwg.mxu0
      %s7736 = scalar_lea.vmem %s19, 16
      %v7737 = vld [vmem:[%s7736] sm:$0xff]
      %v7739 = vsel %vm871, %v7737, 0
      %7741 = vmatprep.subr.mxu0 0.0
      %7742 = vmatpush1.msra.mxu0 %v7442
      %7743 = vmatprep.subr.mxu0 0.0
      %7744 = vmatpush1.msra.mxu0 0.0
      %7745 = vmatprep.subr.mxu0 0.0
      %7746 = vmatpush1.msra.mxu0 0.0
      %7747 = vmatprep.subr.mxu0 0.0
      %7748 = vmatpush1.msra.mxu0 0.0
      %7749 = vmatprep.subr.mxu0 0.0
      %7750 = vmatpush1.msra.mxu0 0.0
      %7751 = vmatprep.subr.mxu0 0.0
      %7752 = vmatpush1.msra.mxu0 0.0
      %7753 = vmatprep.subr.mxu0 0.0
      %7754 = vmatpush1.msra.mxu0 0.0
      %7755 = vmatprep.subr.mxu0 0.0
      %7756 = vmatpush1.msra.mxu0 0.0
      %7757 = vmatprep.subr.mxu0 0.0
      %7758 = vmatpush1.msra.mxu0 0.0
      %7759 = vmatprep.subr.mxu0 0.0
      %7760 = vmatpush1.msra.mxu0 0.0
      %7761 = vmatprep.subr.mxu0 0.0
      %7762 = vmatpush1.msra.mxu0 0.0
      %7763 = vmatprep.subr.mxu0 0.0
      %7764 = vmatpush1.msra.mxu0 0.0
      %7765 = vmatprep.subr.mxu0 0.0
      %7766 = vmatpush1.msra.mxu0 0.0
      %7767 = vmatprep.subr.mxu0 0.0
      %7768 = vmatpush1.msra.mxu0 0.0
      %7769 = vmatprep.subr.mxu0 0.0
      %7770 = vmatpush1.msra.mxu0 0.0
      %7771 = vmatprep.subr.mxu0 0.0
      %7772 = vmatpush1.msra.mxu0 0.0
      %7773 = vmatprep.subr.mxu0 0.0
      %7774 = vmatpush1.msra.mxu0 0.0
      %7775 = vmatprep.subr.mxu0 0.0
      %7776 = vmatpush1.msra.mxu0 0.0
      %7777 = vmatprep.subr.mxu0 0.0
      %7778 = vmatpush1.msra.mxu0 0.0
      %7779 = vmatprep.subr.mxu0 0.0
      %7780 = vmatpush1.msra.mxu0 0.0
      %7781 = vmatprep.subr.mxu0 0.0
      %7782 = vmatpush1.msra.mxu0 0.0
      %7783 = vmatprep.subr.mxu0 0.0
      %7784 = vmatpush1.msra.mxu0 0.0
      %7785 = vmatprep.subr.mxu0 0.0
      %7786 = vmatpush1.msra.mxu0 0.0
      %7787 = vmatprep.subr.mxu0 0.0
      %7788 = vmatpush1.msra.mxu0 0.0
      %7789 = vmatprep.subr.mxu0 0.0
      %7790 = vmatpush1.msra.mxu0 0.0
      %7791 = vmatprep.subr.mxu0 0.0
      %7792 = vmatpush1.msra.mxu0 0.0
      %7793 = vmatprep.subr.mxu0 0.0
      %7794 = vmatpush1.msra.mxu0 0.0
      %7795 = vmatprep.subr.mxu0 0.0
      %7796 = vmatpush1.msra.mxu0 0.0
      %7797 = vmatprep.subr.mxu0 0.0
      %7798 = vmatpush1.msra.mxu0 0.0
      %7799 = vmatprep.subr.mxu0 0.0
      %7800 = vmatpush1.msra.mxu0 0.0
      %7801 = vmatprep.subr.mxu0 0.0
      %7802 = vmatpush1.msra.mxu0 0.0
      %7803 = vmatprep.subr.mxu0 0.0
      %7804 = vmatpush1.msra.mxu0 0.0
      %7805 = vmatprep.mubr.f32.mxu0 0.0
      %7806 = vmatmul.mubr.f32.gmra.mrb[0].mxu0 %v7739
      %v7807 = vpop.f32.mrb[0].mxu0
      %v7808 = vadd.f32 0.0, %v7807
      %v7809 = vpop.f32.mrb[0].mxu0
      %7810 = vdwg.mxu0
      %7811 = vmatprep.subr.mxu0 0.0
      %7812 = vmatpush1.msra.mxu0 %v7808
      %7813 = vmatprep.subr.mxu0 0.0
      %7814 = vmatpush1.msra.mxu0 0.0
      %7815 = vmatprep.subr.mxu0 0.0
      %7816 = vmatpush1.msra.mxu0 0.0
      %7817 = vmatprep.subr.mxu0 0.0
      %7818 = vmatpush1.msra.mxu0 0.0
      %7819 = vmatprep.subr.mxu0 0.0
      %7820 = vmatpush1.msra.mxu0 0.0
      %7821 = vmatprep.subr.mxu0 0.0
      %7822 = vmatpush1.msra.mxu0 0.0
      %7823 = vmatprep.subr.mxu0 0.0
      %7824 = vmatpush1.msra.mxu0 0.0
      %7825 = vmatprep.subr.mxu0 0.0
      %7826 = vmatpush1.msra.mxu0 0.0
      %7827 = vmatprep.subr.mxu0 0.0
      %7828 = vmatpush1.msra.mxu0 0.0
      %7829 = vmatprep.subr.mxu0 0.0
      %7830 = vmatpush1.msra.mxu0 0.0
      %7831 = vmatprep.subr.mxu0 0.0
      %7832 = vmatpush1.msra.mxu0 0.0
      %7833 = vmatprep.subr.mxu0 0.0
      %7834 = vmatpush1.msra.mxu0 0.0
      %7835 = vmatprep.subr.mxu0 0.0
      %7836 = vmatpush1.msra.mxu0 0.0
      %7837 = vmatprep.subr.mxu0 0.0
      %7838 = vmatpush1.msra.mxu0 0.0
      %7839 = vmatprep.subr.mxu0 0.0
      %7840 = vmatpush1.msra.mxu0 0.0
      %7841 = vmatprep.subr.mxu0 0.0
      %7842 = vmatpush1.msra.mxu0 0.0
      %7843 = vmatprep.subr.mxu0 0.0
      %7844 = vmatpush1.msra.mxu0 0.0
      %7845 = vmatprep.subr.mxu0 0.0
      %7846 = vmatpush1.msra.mxu0 0.0
      %7847 = vmatprep.subr.mxu0 0.0
      %7848 = vmatpush1.msra.mxu0 0.0
      %7849 = vmatprep.subr.mxu0 0.0
      %7850 = vmatpush1.msra.mxu0 0.0
      %7851 = vmatprep.subr.mxu0 0.0
      %7852 = vmatpush1.msra.mxu0 0.0
      %7853 = vmatprep.subr.mxu0 0.0
      %7854 = vmatpush1.msra.mxu0 0.0
      %7855 = vmatprep.subr.mxu0 0.0
      %7856 = vmatpush1.msra.mxu0 0.0
      %7857 = vmatprep.subr.mxu0 0.0
      %7858 = vmatpush1.msra.mxu0 0.0
      %7859 = vmatprep.subr.mxu0 0.0
      %7860 = vmatpush1.msra.mxu0 0.0
      %7861 = vmatprep.subr.mxu0 0.0
      %7862 = vmatpush1.msra.mxu0 0.0
      %7863 = vmatprep.subr.mxu0 0.0
      %7864 = vmatpush1.msra.mxu0 0.0
      %7865 = vmatprep.subr.mxu0 0.0
      %7866 = vmatpush1.msra.mxu0 0.0
      %7867 = vmatprep.subr.mxu0 0.0
      %7868 = vmatpush1.msra.mxu0 0.0
      %7869 = vmatprep.subr.mxu0 0.0
      %7870 = vmatpush1.msra.mxu0 0.0
      %7871 = vmatprep.subr.mxu0 0.0
      %7872 = vmatpush1.msra.mxu0 0.0
      %7873 = vmatprep.subr.mxu0 0.0
      %7874 = vmatpush1.msra.mxu0 0.0
      %7875 = vmatprep.mubr.f32.mxu0 0.0
      %7876 = vmatmul.mubr.f32.gmra.mrb[0].mxu0 %v7739
      %v7877 = vpop.f32.mrb[0].mxu0
      %v7878 = vadd.f32 0.0, %v7877
      %v7879 = vpop.f32.mrb[0].mxu0
      %7880 = vdwg.mxu0
      %7882 = vrot.lane.b32.xlu0 %v7518, 32
      %v7883 = vpop.permute.xlu0 %7882
      %7886 = vrot.lane.b32.xlu0 %v7588, 64
      %v7887 = vpop.permute.xlu0 %7886
      %7890 = vrot.lane.b32.xlu0 %v7663, 96
      %v7891 = vpop.permute.xlu0 %7890
      %7894 = vrot.lane.b32.xlu0 %v7808, 32
      %v7895 = vpop.permute.xlu0 %7894
      %7898 = vrot.lane.b32.xlu0 %v7878, 64
      %v7899 = vpop.permute.xlu0 %7898
      %v7901 = vsel %vm1062, %v7442, %v7883
      %v7902 = vsel %vm3973, %v7901, %v7887
      %v7903 = vsel %vm1789, %v7902, %v7891
      %v7904 = vsel %vm1062, %v7733, %v7895
      %v7905 = vsel %vm3973, %v7904, %v7899
      %v7906 = vld [vmem:[%s22] sm:$0xff]
      %v7907 = vld [vmem:[%s22 + $0x8] sm:$0xff]
      %v7908 = vld [vmem:[%s22 + $0x10] sm:$0xff]
      %v7909 = vld [vmem:[%s22 + $0x18] sm:$0xff]
      %v7910 = vld [vmem:[%s22 + $0x20] sm:$0xff]
      %v7911 = vld [vmem:[%s22 + $0x28] sm:$0xff]
      %v7912 = vld [vmem:[%s22 + $0x30] sm:$0xff]
      %v7913 = vld [vmem:[%s22 + $0x38] sm:$0xff]
      %v7914 = vld [vmem:[%s22 + $0x40] sm:$0xff]
      %v7915 = vld [vmem:[%s22 + $0x48] sm:$0xff]
      %v7916 = vld [vmem:[%s22 + $0x50] sm:$0xff]
      %v7917 = vld [vmem:[%s22 + $0x58] sm:$0xff]
      %v7918 = vld [vmem:[%s22 + $0x60] sm:$0xff]
      %v7919 = vld [vmem:[%s22 + $0x68] sm:$0xff]
      %v7920 = vld [vmem:[%s22 + $0x70] sm:$0xff]
      %v7921 = vld [vmem:[%s22 + $0x78] sm:$0xff]
      %v7922 = vld [vmem:[%s22 + $0x80] sm:$0xff]
      %v7923 = vld [vmem:[%s22 + $0x88] sm:$0xff]
      %v7924 = vld [vmem:[%s22 + $0x90] sm:$0xff]
      %v7925 = vld [vmem:[%s22 + $0x98] sm:$0xff]
      %v7926 = vld [vmem:[%s22 + $0xa0] sm:$0xff]
      %v7927 = vld [vmem:[%s22 + $0xa8] sm:$0xff]
      %v7928 = vld [vmem:[%s22 + $0xb0] sm:$0xff]
      %v7929 = vld [vmem:[%s22 + $0xb8] sm:$0xff]
      %v7930 = vld [vmem:[%s22 + $0xc0] sm:$0xff]
      %v7931 = vld [vmem:[%s22 + $0xc8] sm:$0xff]
      %v7932 = vld [vmem:[%s22 + $0xd0] sm:$0xff]
      %v7933 = vld [vmem:[%s22 + $0xd8] sm:$0xff]
      %v7934 = vld [vmem:[%s23] sm:$0x1]
      %v7936 = vlaneseq
      %v7937 = vshrl.u32 %v7936, 7
      %v7938 = vsub.s32 0, %v7937
      %v7939 = vrot.slane %v7934, %v7938
      %v7942 = vsel %vm1789, %v7905, 0
      %7944 = vmatprep.subr.mxu0 0.0
      %7945 = vmatpush1.msra.mxu0 %v7906
      %7946 = vmatprep.subr.mxu0 0.0
      %7947 = vmatpush1.msra.mxu0 %v7907
      %7948 = vmatprep.subr.mxu0 0.0
      %7949 = vmatpush1.msra.mxu0 %v7908
      %7950 = vmatprep.subr.mxu0 0.0
      %7951 = vmatpush1.msra.mxu0 %v7909
      %7952 = vmatprep.subr.mxu0 0.0
      %7953 = vmatpush1.msra.mxu0 %v7910
      %7954 = vmatprep.subr.mxu0 0.0
      %7955 = vmatpush1.msra.mxu0 %v7911
      %7956 = vmatprep.subr.mxu0 0.0
      %7957 = vmatpush1.msra.mxu0 %v7912
      %7958 = vmatprep.subr.mxu0 0.0
      %7959 = vmatpush1.msra.mxu0 %v7913
      %7960 = vmatprep.subr.mxu0 0.0
      %7961 = vmatpush1.msra.mxu0 %v7914
      %7962 = vmatprep.subr.mxu0 0.0
      %7963 = vmatpush1.msra.mxu0 %v7915
      %7964 = vmatprep.subr.mxu0 0.0
      %7965 = vmatpush1.msra.mxu0 %v7916
      %7966 = vmatprep.subr.mxu0 0.0
      %7967 = vmatpush1.msra.mxu0 %v7917
      %7968 = vmatprep.subr.mxu0 0.0
      %7969 = vmatpush1.msra.mxu0 %v7918
      %7970 = vmatprep.subr.mxu0 0.0
      %7971 = vmatpush1.msra.mxu0 %v7919
      %7972 = vmatprep.subr.mxu0 0.0
      %7973 = vmatpush1.msra.mxu0 %v7920
      %7974 = vmatprep.subr.mxu0 0.0
      %7975 = vmatpush1.msra.mxu0 %v7921
      %7976 = vmatprep.subr.mxu0 0.0
      %7977 = vmatpush1.msra.mxu0 %v7922
      %7978 = vmatprep.subr.mxu0 0.0
      %7979 = vmatpush1.msra.mxu0 %v7923
      %7980 = vmatprep.subr.mxu0 0.0
      %7981 = vmatpush1.msra.mxu0 %v7924
      %7982 = vmatprep.subr.mxu0 0.0
      %7983 = vmatpush1.msra.mxu0 %v7925
      %7984 = vmatprep.subr.mxu0 0.0
      %7985 = vmatpush1.msra.mxu0 %v7926
      %7986 = vmatprep.subr.mxu0 0.0
      %7987 = vmatpush1.msra.mxu0 %v7927
      %7988 = vmatprep.subr.mxu0 0.0
      %7989 = vmatpush1.msra.mxu0 %v7928
      %7990 = vmatprep.subr.mxu0 0.0
      %7991 = vmatpush1.msra.mxu0 %v7929
      %7992 = vmatprep.subr.mxu0 0.0
      %7993 = vmatpush1.msra.mxu0 %v7930
      %7994 = vmatprep.subr.mxu0 0.0
      %7995 = vmatpush1.msra.mxu0 %v7931
      %7996 = vmatprep.subr.mxu0 0.0
      %7997 = vmatpush1.msra.mxu0 %v7932
      %7998 = vmatprep.subr.mxu0 0.0
      %7999 = vmatpush1.msra.mxu0 %v7933
      %8000 = vmatprep.subr.mxu0 0.0
      %8001 = vmatpush1.msra.mxu0 0.0
      %8002 = vmatprep.subr.mxu0 0.0
      %8003 = vmatpush1.msra.mxu0 0.0
      %8004 = vmatprep.subr.mxu0 0.0
      %8005 = vmatpush1.msra.mxu0 0.0
      %8006 = vmatprep.subr.mxu0 0.0
      %8007 = vmatpush1.msra.mxu0 0.0
      %8008 = vmatprep.mubr.f32.mxu0 %v7942
      %8009 = vmatmul.mubr.f32.gmra.mrb[0].mxu0 %v7903
      %v8010 = vpop.f32.mrb[0].mxu0
      %v8011 = vadd.f32 %v7939, %v8010
      %v8012 = vpop.f32.mrb[0].mxu0
      %8013 = vdwg.mxu0
      %v8014 = vadd.f32 %v8011, %v7442
      %v8015 = vmul.f32 %v8014, 0.999995
      %s8016 = scalar_lea.vmem %s20, 32
      %v8017 = vld [vmem:[%s8016] sm:$0xff]
      %v8018 = vld [vmem:[%s8016 + $0x8] sm:$0xff]
      %v8019 = vld [vmem:[%s8016 + $0x10] sm:$0xff]
      %v8020 = vld [vmem:[%s8016 + $0x18] sm:$0xff]
      %v8022 = vsel %vm1062, %v8015, 0
      %8024 = vmatprep.subr.mxu0 0.0
      %8025 = vmatpush1.msra.mxu0 %v8017
      %8026 = vmatprep.subr.mxu0 0.0
      %8027 = vmatpush1.msra.mxu0 %v8018
      %8028 = vmatprep.subr.mxu0 0.0
      %8029 = vmatpush1.msra.mxu0 %v8019
      %8030 = vmatprep.subr.mxu0 0.0
      %8031 = vmatpush1.msra.mxu0 %v8020
      %8032 = vmatprep.subr.mxu0 0.0
      %8033 = vmatpush1.msra.mxu0 0.0
      %8034 = vmatprep.subr.mxu0 0.0
      %8035 = vmatpush1.msra.mxu0 0.0
      %8036 = vmatprep.subr.mxu0 0.0
      %8037 = vmatpush1.msra.mxu0 0.0
      %8038 = vmatprep.subr.mxu0 0.0
      %8039 = vmatpush1.msra.mxu0 0.0
      %8040 = vmatprep.subr.mxu0 0.0
      %8041 = vmatpush1.msra.mxu0 0.0
      %8042 = vmatprep.subr.mxu0 0.0
      %8043 = vmatpush1.msra.mxu0 0.0
      %8044 = vmatprep.subr.mxu0 0.0
      %8045 = vmatpush1.msra.mxu0 0.0
      %8046 = vmatprep.subr.mxu0 0.0
      %8047 = vmatpush1.msra.mxu0 0.0
      %8048 = vmatprep.subr.mxu0 0.0
      %8049 = vmatpush1.msra.mxu0 0.0
      %8050 = vmatprep.subr.mxu0 0.0
      %8051 = vmatpush1.msra.mxu0 0.0
      %8052 = vmatprep.subr.mxu0 0.0
      %8053 = vmatpush1.msra.mxu0 0.0
      %8054 = vmatprep.subr.mxu0 0.0
      %8055 = vmatpush1.msra.mxu0 0.0
      %8056 = vmatprep.subr.mxu0 0.0
      %8057 = vmatpush1.msra.mxu0 0.0
      %8058 = vmatprep.subr.mxu0 0.0
      %8059 = vmatpush1.msra.mxu0 0.0
      %8060 = vmatprep.subr.mxu0 0.0
      %8061 = vmatpush1.msra.mxu0 0.0
      %8062 = vmatprep.subr.mxu0 0.0
      %8063 = vmatpush1.msra.mxu0 0.0
      %8064 = vmatprep.subr.mxu0 0.0
      %8065 = vmatpush1.msra.mxu0 0.0
      %8066 = vmatprep.subr.mxu0 0.0
      %8067 = vmatpush1.msra.mxu0 0.0
      %8068 = vmatprep.subr.mxu0 0.0
      %8069 = vmatpush1.msra.mxu0 0.0
      %8070 = vmatprep.subr.mxu0 0.0
      %8071 = vmatpush1.msra.mxu0 0.0
      %8072 = vmatprep.subr.mxu0 0.0
      %8073 = vmatpush1.msra.mxu0 0.0
      %8074 = vmatprep.subr.mxu0 0.0
      %8075 = vmatpush1.msra.mxu0 0.0
      %8076 = vmatprep.subr.mxu0 0.0
      %8077 = vmatpush1.msra.mxu0 0.0
      %8078 = vmatprep.subr.mxu0 0.0
      %8079 = vmatpush1.msra.mxu0 0.0
      %8080 = vmatprep.subr.mxu0 0.0
      %8081 = vmatpush1.msra.mxu0 0.0
      %8082 = vmatprep.subr.mxu0 0.0
      %8083 = vmatpush1.msra.mxu0 0.0
      %8084 = vmatprep.subr.mxu0 0.0
      %8085 = vmatpush1.msra.mxu0 0.0
      %8086 = vmatprep.subr.mxu0 0.0
      %8087 = vmatpush1.msra.mxu0 0.0
      %8088 = vmatprep.mubr.f32.mxu0 0.0
      %8089 = vmatmul.mubr.f32.gmra.mrb[0].mxu0 %v8022
      %v8090 = vpop.f32.mrb[0].mxu0
      %v8091 = vadd.f32 0.0, %v8090
      %v8092 = vpop.f32.mrb[0].mxu0
      %8093 = vdwg.mxu0
      %v8095 = vsel %vm1062, %v7442, 0
      %8097 = vmatprep.subr.mxu0 0.0
      %8098 = vmatpush1.msra.mxu0 %v7443
      %8099 = vmatprep.subr.mxu0 0.0
      %8100 = vmatpush1.msra.mxu0 %v7444
      %8101 = vmatprep.subr.mxu0 0.0
      %8102 = vmatpush1.msra.mxu0 %v7445
      %8103 = vmatprep.subr.mxu0 0.0
      %8104 = vmatpush1.msra.mxu0 %v7446
      %8105 = vmatprep.subr.mxu0 0.0
      %8106 = vmatpush1.msra.mxu0 0.0
      %8107 = vmatprep.subr.mxu0 0.0
      %8108 = vmatpush1.msra.mxu0 0.0
      %8109 = vmatprep.subr.mxu0 0.0
      %8110 = vmatpush1.msra.mxu0 0.0
      %8111 = vmatprep.subr.mxu0 0.0
      %8112 = vmatpush1.msra.mxu0 0.0
      %8113 = vmatprep.subr.mxu0 0.0
      %8114 = vmatpush1.msra.mxu0 0.0
      %8115 = vmatprep.subr.mxu0 0.0
      %8116 = vmatpush1.msra.mxu0 0.0
      %8117 = vmatprep.subr.mxu0 0.0
      %8118 = vmatpush1.msra.mxu0 0.0
      %8119 = vmatprep.subr.mxu0 0.0
      %8120 = vmatpush1.msra.mxu0 0.0
      %8121 = vmatprep.subr.mxu0 0.0
      %8122 = vmatpush1.msra.mxu0 0.0
      %8123 = vmatprep.subr.mxu0 0.0
      %8124 = vmatpush1.msra.mxu0 0.0
      %8125 = vmatprep.subr.mxu0 0.0
      %8126 = vmatpush1.msra.mxu0 0.0
      %8127 = vmatprep.subr.mxu0 0.0
      %8128 = vmatpush1.msra.mxu0 0.0
      %8129 = vmatprep.subr.mxu0 0.0
      %8130 = vmatpush1.msra.mxu0 0.0
      %8131 = vmatprep.subr.mxu0 0.0
      %8132 = vmatpush1.msra.mxu0 0.0
      %8133 = vmatprep.subr.mxu0 0.0
      %8134 = vmatpush1.msra.mxu0 0.0
      %8135 = vmatprep.subr.mxu0 0.0
      %8136 = vmatpush1.msra.mxu0 0.0
      %8137 = vmatprep.subr.mxu0 0.0
      %8138 = vmatpush1.msra.mxu0 0.0
      %8139 = vmatprep.subr.mxu0 0.0
      %8140 = vmatpush1.msra.mxu0 0.0
      %8141 = vmatprep.subr.mxu0 0.0
      %8142 = vmatpush1.msra.mxu0 0.0
      %8143 = vmatprep.subr.mxu0 0.0
      %8144 = vmatpush1.msra.mxu0 0.0
      %8145 = vmatprep.subr.mxu0 0.0
      %8146 = vmatpush1.msra.mxu0 0.0
      %8147 = vmatprep.subr.mxu0 0.0
      %8148 = vmatpush1.msra.mxu0 0.0
      %8149 = vmatprep.subr.mxu0 0.0
      %8150 = vmatpush1.msra.mxu0 0.0
      %8151 = vmatprep.subr.mxu0 0.0
      %8152 = vmatpush1.msra.mxu0 0.0
      %8153 = vmatprep.subr.mxu0 0.0
      %8154 = vmatpush1.msra.mxu0 0.0
      %8155 = vmatprep.subr.mxu0 0.0
      %8156 = vmatpush1.msra.mxu0 0.0
      %8157 = vmatprep.subr.mxu0 0.0
      %8158 = vmatpush1.msra.mxu0 0.0
      %8159 = vmatprep.subr.mxu0 0.0
      %8160 = vmatpush1.msra.mxu0 0.0
      %8161 = vmatprep.mubr.f32.mxu0 0.0
      %8162 = vmatmul.mubr.f32.gmra.mrb[0].mxu0 %v8095
      %v8163 = vpop.f32.mrb[0].mxu0
      %v8164 = vadd.f32 %v8091, %v8163
      %v8165 = vpop.f32.mrb[0].mxu0
      %8166 = vdwg.mxu0
      %8167 = vmatprep.subr.mxu0 0.0
      %8168 = vmatpush1.msra.mxu0 %v8015
      %8169 = vmatprep.subr.mxu0 0.0
      %8170 = vmatpush1.msra.mxu0 0.0
      %8171 = vmatprep.subr.mxu0 0.0
      %8172 = vmatpush1.msra.mxu0 0.0
      %8173 = vmatprep.subr.mxu0 0.0
      %8174 = vmatpush1.msra.mxu0 0.0
      %8175 = vmatprep.subr.mxu0 0.0
      %8176 = vmatpush1.msra.mxu0 0.0
      %8177 = vmatprep.subr.mxu0 0.0
      %8178 = vmatpush1.msra.mxu0 0.0
      %8179 = vmatprep.subr.mxu0 0.0
      %8180 = vmatpush1.msra.mxu0 0.0
      %8181 = vmatprep.subr.mxu0 0.0
      %8182 = vmatpush1.msra.mxu0 0.0
      %8183 = vmatprep.subr.mxu0 0.0
      %8184 = vmatpush1.msra.mxu0 0.0
      %8185 = vmatprep.subr.mxu0 0.0
      %8186 = vmatpush1.msra.mxu0 0.0
      %8187 = vmatprep.subr.mxu0 0.0
      %8188 = vmatpush1.msra.mxu0 0.0
      %8189 = vmatprep.subr.mxu0 0.0
      %8190 = vmatpush1.msra.mxu0 0.0
      %8191 = vmatprep.subr.mxu0 0.0
      %8192 = vmatpush1.msra.mxu0 0.0
      %8193 = vmatprep.subr.mxu0 0.0
      %8194 = vmatpush1.msra.mxu0 0.0
      %8195 = vmatprep.subr.mxu0 0.0
      %8196 = vmatpush1.msra.mxu0 0.0
      %8197 = vmatprep.subr.mxu0 0.0
      %8198 = vmatpush1.msra.mxu0 0.0
      %8199 = vmatprep.subr.mxu0 0.0
      %8200 = vmatpush1.msra.mxu0 0.0
      %8201 = vmatprep.subr.mxu0 0.0
      %8202 = vmatpush1.msra.mxu0 0.0
      %8203 = vmatprep.subr.mxu0 0.0
      %8204 = vmatpush1.msra.mxu0 0.0
      %8205 = vmatprep.subr.mxu0 0.0
      %8206 = vmatpush1.msra.mxu0 0.0
      %8207 = vmatprep.subr.mxu0 0.0
      %8208 = vmatpush1.msra.mxu0 0.0
      %8209 = vmatprep.subr.mxu0 0.0
      %8210 = vmatpush1.msra.mxu0 0.0
      %8211 = vmatprep.subr.mxu0 0.0
      %8212 = vmatpush1.msra.mxu0 0.0
      %8213 = vmatprep.subr.mxu0 0.0
      %8214 = vmatpush1.msra.mxu0 0.0
      %8215 = vmatprep.subr.mxu0 0.0
      %8216 = vmatpush1.msra.mxu0 0.0
      %8217 = vmatprep.subr.mxu0 0.0
      %8218 = vmatpush1.msra.mxu0 0.0
      %8219 = vmatprep.subr.mxu0 0.0
      %8220 = vmatpush1.msra.mxu0 0.0
      %8221 = vmatprep.subr.mxu0 0.0
      %8222 = vmatpush1.msra.mxu0 0.0
      %8223 = vmatprep.subr.mxu0 0.0
      %8224 = vmatpush1.msra.mxu0 0.0
      %8225 = vmatprep.subr.mxu0 0.0
      %8226 = vmatpush1.msra.mxu0 0.0
      %8227 = vmatprep.subr.mxu0 0.0
      %8228 = vmatpush1.msra.mxu0 0.0
      %8229 = vmatprep.subr.mxu0 0.0
      %8230 = vmatpush1.msra.mxu0 0.0
      %8231 = vmatprep.mubr.f32.mxu0 0.0
      %8232 = vmatmul.mubr.f32.gmra.mrb[0].mxu0 %v7449
      %v8233 = vpop.f32.mrb[0].mxu0
      %v8234 = vadd.f32 0.0, %v8233
      %v8235 = vpop.f32.mrb[0].mxu0
      %8236 = vdwg.mxu0
      %8237 = vmatprep.subr.mxu0 0.0
      %8238 = vmatpush1.msra.mxu0 %v8234
      %8239 = vmatprep.subr.mxu0 0.0
      %8240 = vmatpush1.msra.mxu0 0.0
      %8241 = vmatprep.subr.mxu0 0.0
      %8242 = vmatpush1.msra.mxu0 0.0
      %8243 = vmatprep.subr.mxu0 0.0
      %8244 = vmatpush1.msra.mxu0 0.0
      %8245 = vmatprep.subr.mxu0 0.0
      %8246 = vmatpush1.msra.mxu0 0.0
      %8247 = vmatprep.subr.mxu0 0.0
      %8248 = vmatpush1.msra.mxu0 0.0
      %8249 = vmatprep.subr.mxu0 0.0
      %8250 = vmatpush1.msra.mxu0 0.0
      %8251 = vmatprep.subr.mxu0 0.0
      %8252 = vmatpush1.msra.mxu0 0.0
      %8253 = vmatprep.subr.mxu0 0.0
      %8254 = vmatpush1.msra.mxu0 0.0
      %8255 = vmatprep.subr.mxu0 0.0
      %8256 = vmatpush1.msra.mxu0 0.0
      %8257 = vmatprep.subr.mxu0 0.0
      %8258 = vmatpush1.msra.mxu0 0.0
      %8259 = vmatprep.subr.mxu0 0.0
      %8260 = vmatpush1.msra.mxu0 0.0
      %8261 = vmatprep.subr.mxu0 0.0
      %8262 = vmatpush1.msra.mxu0 0.0
      %8263 = vmatprep.subr.mxu0 0.0
      %8264 = vmatpush1.msra.mxu0 0.0
      %8265 = vmatprep.subr.mxu0 0.0
      %8266 = vmatpush1.msra.mxu0 0.0
      %8267 = vmatprep.subr.mxu0 0.0
      %8268 = vmatpush1.msra.mxu0 0.0
      %8269 = vmatprep.subr.mxu0 0.0
      %8270 = vmatpush1.msra.mxu0 0.0
      %8271 = vmatprep.subr.mxu0 0.0
      %8272 = vmatpush1.msra.mxu0 0.0
      %8273 = vmatprep.subr.mxu0 0.0
      %8274 = vmatpush1.msra.mxu0 0.0
      %8275 = vmatprep.subr.mxu0 0.0
      %8276 = vmatpush1.msra.mxu0 0.0
      %8277 = vmatprep.subr.mxu0 0.0
      %8278 = vmatpush1.msra.mxu0 0.0
      %8279 = vmatprep.subr.mxu0 0.0
      %8280 = vmatpush1.msra.mxu0 0.0
      %8281 = vmatprep.subr.mxu0 0.0
      %8282 = vmatpush1.msra.mxu0 0.0
      %8283 = vmatprep.subr.mxu0 0.0
      %8284 = vmatpush1.msra.mxu0 0.0
      %8285 = vmatprep.subr.mxu0 0.0
      %8286 = vmatpush1.msra.mxu0 0.0
      %8287 = vmatprep.subr.mxu0 0.0
      %8288 = vmatpush1.msra.mxu0 0.0
      %8289 = vmatprep.subr.mxu0 0.0
      %8290 = vmatpush1.msra.mxu0 0.0
      %8291 = vmatprep.subr.mxu0 0.0
      %8292 = vmatpush1.msra.mxu0 0.0
      %8293 = vmatprep.subr.mxu0 0.0
      %8294 = vmatpush1.msra.mxu0 0.0
      %8295 = vmatprep.subr.mxu0 0.0
      %8296 = vmatpush1.msra.mxu0 0.0
      %8297 = vmatprep.subr.mxu0 0.0
      %8298 = vmatpush1.msra.mxu0 0.0
      %8299 = vmatprep.subr.mxu0 0.0
      %8300 = vmatpush1.msra.mxu0 0.0
      %8301 = vmatprep.mubr.f32.mxu0 0.0
      %8302 = vmatmul.mubr.f32.gmra.mrb[0].mxu0 %v7449
      %v8303 = vpop.f32.mrb[0].mxu0
      %v8304 = vadd.f32 0.0, %v8303
      %v8305 = vpop.f32.mrb[0].mxu0
      %8306 = vdwg.mxu0
      %8307 = vmatprep.subr.mxu0 0.0
      %8308 = vmatpush1.msra.mxu0 %v8015
      %8309 = vmatprep.subr.mxu0 0.0
      %8310 = vmatpush1.msra.mxu0 0.0
      %8311 = vmatprep.subr.mxu0 0.0
      %8312 = vmatpush1.msra.mxu0 0.0
      %8313 = vmatprep.subr.mxu0 0.0
      %8314 = vmatpush1.msra.mxu0 0.0
      %8315 = vmatprep.subr.mxu0 0.0
      %8316 = vmatpush1.msra.mxu0 0.0
      %8317 = vmatprep.subr.mxu0 0.0
      %8318 = vmatpush1.msra.mxu0 0.0
      %8319 = vmatprep.subr.mxu0 0.0
      %8320 = vmatpush1.msra.mxu0 0.0
      %8321 = vmatprep.subr.mxu0 0.0
      %8322 = vmatpush1.msra.mxu0 0.0
      %8323 = vmatprep.subr.mxu0 0.0
      %8324 = vmatpush1.msra.mxu0 0.0
      %8325 = vmatprep.subr.mxu0 0.0
      %8326 = vmatpush1.msra.mxu0 0.0
      %8327 = vmatprep.subr.mxu0 0.0
      %8328 = vmatpush1.msra.mxu0 0.0
      %8329 = vmatprep.subr.mxu0 0.0
      %8330 = vmatpush1.msra.mxu0 0.0
      %8331 = vmatprep.subr.mxu0 0.0
      %8332 = vmatpush1.msra.mxu0 0.0
      %8333 = vmatprep.subr.mxu0 0.0
      %8334 = vmatpush1.msra.mxu0 0.0
      %8335 = vmatprep.subr.mxu0 0.0
      %8336 = vmatpush1.msra.mxu0 0.0
      %8337 = vmatprep.subr.mxu0 0.0
      %8338 = vmatpush1.msra.mxu0 0.0
      %8339 = vmatprep.subr.mxu0 0.0
      %8340 = vmatpush1.msra.mxu0 0.0
      %8341 = vmatprep.subr.mxu0 0.0
      %8342 = vmatpush1.msra.mxu0 0.0
      %8343 = vmatprep.subr.mxu0 0.0
      %8344 = vmatpush1.msra.mxu0 0.0
      %8345 = vmatprep.subr.mxu0 0.0
      %8346 = vmatpush1.msra.mxu0 0.0
      %8347 = vmatprep.subr.mxu0 0.0
      %8348 = vmatpush1.msra.mxu0 0.0
      %8349 = vmatprep.subr.mxu0 0.0
      %8350 = vmatpush1.msra.mxu0 0.0
      %8351 = vmatprep.subr.mxu0 0.0
      %8352 = vmatpush1.msra.mxu0 0.0
      %8353 = vmatprep.subr.mxu0 0.0
      %8354 = vmatpush1.msra.mxu0 0.0
      %8355 = vmatprep.subr.mxu0 0.0
      %8356 = vmatpush1.msra.mxu0 0.0
      %8357 = vmatprep.subr.mxu0 0.0
      %8358 = vmatpush1.msra.mxu0 0.0
      %8359 = vmatprep.subr.mxu0 0.0
      %8360 = vmatpush1.msra.mxu0 0.0
      %8361 = vmatprep.subr.mxu0 0.0
      %8362 = vmatpush1.msra.mxu0 0.0
      %8363 = vmatprep.subr.mxu0 0.0
      %8364 = vmatpush1.msra.mxu0 0.0
      %8365 = vmatprep.subr.mxu0 0.0
      %8366 = vmatpush1.msra.mxu0 0.0
      %8367 = vmatprep.subr.mxu0 0.0
      %8368 = vmatpush1.msra.mxu0 0.0
      %8369 = vmatprep.subr.mxu0 0.0
      %8370 = vmatpush1.msra.mxu0 0.0
      %8371 = vmatprep.mubr.f32.mxu0 0.0
      %8372 = vmatmul.mubr.f32.gmra.mrb[0].mxu0 %v7594
      %v8373 = vpop.f32.mrb[0].mxu0
      %v8374 = vadd.f32 0.0, %v8373
      %v8375 = vpop.f32.mrb[0].mxu0
      %8376 = vdwg.mxu0
      %8377 = vmatprep.subr.mxu0 0.0
      %8378 = vmatpush1.msra.mxu0 %v8374
      %8379 = vmatprep.subr.mxu0 0.0
      %8380 = vmatpush1.msra.mxu0 0.0
      %8381 = vmatprep.subr.mxu0 0.0
      %8382 = vmatpush1.msra.mxu0 0.0
      %8383 = vmatprep.subr.mxu0 0.0
      %8384 = vmatpush1.msra.mxu0 0.0
      %8385 = vmatprep.subr.mxu0 0.0
      %8386 = vmatpush1.msra.mxu0 0.0
      %8387 = vmatprep.subr.mxu0 0.0
      %8388 = vmatpush1.msra.mxu0 0.0
      %8389 = vmatprep.subr.mxu0 0.0
      %8390 = vmatpush1.msra.mxu0 0.0
      %8391 = vmatprep.subr.mxu0 0.0
      %8392 = vmatpush1.msra.mxu0 0.0
      %8393 = vmatprep.subr.mxu0 0.0
      %8394 = vmatpush1.msra.mxu0 0.0
      %8395 = vmatprep.subr.mxu0 0.0
      %8396 = vmatpush1.msra.mxu0 0.0
      %8397 = vmatprep.subr.mxu0 0.0
      %8398 = vmatpush1.msra.mxu0 0.0
      %8399 = vmatprep.subr.mxu0 0.0
      %8400 = vmatpush1.msra.mxu0 0.0
      %8401 = vmatprep.subr.mxu0 0.0
      %8402 = vmatpush1.msra.mxu0 0.0
      %8403 = vmatprep.subr.mxu0 0.0
      %8404 = vmatpush1.msra.mxu0 0.0
      %8405 = vmatprep.subr.mxu0 0.0
      %8406 = vmatpush1.msra.mxu0 0.0
      %8407 = vmatprep.subr.mxu0 0.0
      %8408 = vmatpush1.msra.mxu0 0.0
      %8409 = vmatprep.subr.mxu0 0.0
      %8410 = vmatpush1.msra.mxu0 0.0
      %8411 = vmatprep.subr.mxu0 0.0
      %8412 = vmatpush1.msra.mxu0 0.0
      %8413 = vmatprep.subr.mxu0 0.0
      %8414 = vmatpush1.msra.mxu0 0.0
      %8415 = vmatprep.subr.mxu0 0.0
      %8416 = vmatpush1.msra.mxu0 0.0
      %8417 = vmatprep.subr.mxu0 0.0
      %8418 = vmatpush1.msra.mxu0 0.0
      %8419 = vmatprep.subr.mxu0 0.0
      %8420 = vmatpush1.msra.mxu0 0.0
      %8421 = vmatprep.subr.mxu0 0.0
      %8422 = vmatpush1.msra.mxu0 0.0
      %8423 = vmatprep.subr.mxu0 0.0
      %8424 = vmatpush1.msra.mxu0 0.0
      %8425 = vmatprep.subr.mxu0 0.0
      %8426 = vmatpush1.msra.mxu0 0.0
      %8427 = vmatprep.subr.mxu0 0.0
      %8428 = vmatpush1.msra.mxu0 0.0
      %8429 = vmatprep.subr.mxu0 0.0
      %8430 = vmatpush1.msra.mxu0 0.0
      %8431 = vmatprep.subr.mxu0 0.0
      %8432 = vmatpush1.msra.mxu0 0.0
      %8433 = vmatprep.subr.mxu0 0.0
      %8434 = vmatpush1.msra.mxu0 0.0
      %8435 = vmatprep.subr.mxu0 0.0
      %8436 = vmatpush1.msra.mxu0 0.0
      %8437 = vmatprep.subr.mxu0 0.0
      %8438 = vmatpush1.msra.mxu0 0.0
      %8439 = vmatprep.subr.mxu0 0.0
      %8440 = vmatpush1.msra.mxu0 0.0
      %8441 = vmatprep.mubr.f32.mxu0 0.0
      %8442 = vmatmul.mubr.f32.gmra.mrb[0].mxu0 %v7594
      %v8443 = vpop.f32.mrb[0].mxu0
      %v8444 = vadd.f32 0.0, %v8443
      %v8445 = vpop.f32.mrb[0].mxu0
      %8446 = vdwg.mxu0
      %8447 = vmatprep.subr.mxu0 0.0
      %8448 = vmatpush1.msra.mxu0 %v8015
      %8449 = vmatprep.subr.mxu0 0.0
      %8450 = vmatpush1.msra.mxu0 0.0
      %8451 = vmatprep.subr.mxu0 0.0
      %8452 = vmatpush1.msra.mxu0 0.0
      %8453 = vmatprep.subr.mxu0 0.0
      %8454 = vmatpush1.msra.mxu0 0.0
      %8455 = vmatprep.subr.mxu0 0.0
      %8456 = vmatpush1.msra.mxu0 0.0
      %8457 = vmatprep.subr.mxu0 0.0
      %8458 = vmatpush1.msra.mxu0 0.0
      %8459 = vmatprep.subr.mxu0 0.0
      %8460 = vmatpush1.msra.mxu0 0.0
      %8461 = vmatprep.subr.mxu0 0.0
      %8462 = vmatpush1.msra.mxu0 0.0
      %8463 = vmatprep.subr.mxu0 0.0
      %8464 = vmatpush1.msra.mxu0 0.0
      %8465 = vmatprep.subr.mxu0 0.0
      %8466 = vmatpush1.msra.mxu0 0.0
      %8467 = vmatprep.subr.mxu0 0.0
      %8468 = vmatpush1.msra.mxu0 0.0
      %8469 = vmatprep.subr.mxu0 0.0
      %8470 = vmatpush1.msra.mxu0 0.0
      %8471 = vmatprep.subr.mxu0 0.0
      %8472 = vmatpush1.msra.mxu0 0.0
      %8473 = vmatprep.subr.mxu0 0.0
      %8474 = vmatpush1.msra.mxu0 0.0
      %8475 = vmatprep.subr.mxu0 0.0
      %8476 = vmatpush1.msra.mxu0 0.0
      %8477 = vmatprep.subr.mxu0 0.0
      %8478 = vmatpush1.msra.mxu0 0.0
      %8479 = vmatprep.subr.mxu0 0.0
      %8480 = vmatpush1.msra.mxu0 0.0
      %8481 = vmatprep.subr.mxu0 0.0
      %8482 = vmatpush1.msra.mxu0 0.0
      %8483 = vmatprep.subr.mxu0 0.0
      %8484 = vmatpush1.msra.mxu0 0.0
      %8485 = vmatprep.subr.mxu0 0.0
      %8486 = vmatpush1.msra.mxu0 0.0
      %8487 = vmatprep.subr.mxu0 0.0
      %8488 = vmatpush1.msra.mxu0 0.0
      %8489 = vmatprep.subr.mxu0 0.0
      %8490 = vmatpush1.msra.mxu0 0.0
      %8491 = vmatprep.subr.mxu0 0.0
      %8492 = vmatpush1.msra.mxu0 0.0
      %8493 = vmatprep.subr.mxu0 0.0
      %8494 = vmatpush1.msra.mxu0 0.0
      %8495 = vmatprep.subr.mxu0 0.0
      %8496 = vmatpush1.msra.mxu0 0.0
      %8497 = vmatprep.subr.mxu0 0.0
      %8498 = vmatpush1.msra.mxu0 0.0
      %8499 = vmatprep.subr.mxu0 0.0
      %8500 = vmatpush1.msra.mxu0 0.0
      %8501 = vmatprep.subr.mxu0 0.0
      %8502 = vmatpush1.msra.mxu0 0.0
      %8503 = vmatprep.subr.mxu0 0.0
      %8504 = vmatpush1.msra.mxu0 0.0
      %8505 = vmatprep.subr.mxu0 0.0
      %8506 = vmatpush1.msra.mxu0 0.0
      %8507 = vmatprep.subr.mxu0 0.0
      %8508 = vmatpush1.msra.mxu0 0.0
      %8509 = vmatprep.subr.mxu0 0.0
      %8510 = vmatpush1.msra.mxu0 0.0
      %8511 = vmatprep.mubr.f32.mxu0 0.0
      %8512 = vmatmul.mubr.f32.gmra.mrb[0].mxu0 %v7739
      %v8513 = vpop.f32.mrb[0].mxu0
      %v8514 = vadd.f32 0.0, %v8513
      %v8515 = vpop.f32.mrb[0].mxu0
      %8516 = vdwg.mxu0
      %8517 = vmatprep.subr.mxu0 0.0
      %8518 = vmatpush1.msra.mxu0 %v8514
      %8519 = vmatprep.subr.mxu0 0.0
      %8520 = vmatpush1.msra.mxu0 0.0
      %8521 = vmatprep.subr.mxu0 0.0
      %8522 = vmatpush1.msra.mxu0 0.0
      %8523 = vmatprep.subr.mxu0 0.0
      %8524 = vmatpush1.msra.mxu0 0.0
      %8525 = vmatprep.subr.mxu0 0.0
      %8526 = vmatpush1.msra.mxu0 0.0
      %8527 = vmatprep.subr.mxu0 0.0
      %8528 = vmatpush1.msra.mxu0 0.0
      %8529 = vmatprep.subr.mxu0 0.0
      %8530 = vmatpush1.msra.mxu0 0.0
      %8531 = vmatprep.subr.mxu0 0.0
      %8532 = vmatpush1.msra.mxu0 0.0
      %8533 = vmatprep.subr.mxu0 0.0
      %8534 = vmatpush1.msra.mxu0 0.0
      %8535 = vmatprep.subr.mxu0 0.0
      %8536 = vmatpush1.msra.mxu0 0.0
      %8537 = vmatprep.subr.mxu0 0.0
      %8538 = vmatpush1.msra.mxu0 0.0
      %8539 = vmatprep.subr.mxu0 0.0
      %8540 = vmatpush1.msra.mxu0 0.0
      %8541 = vmatprep.subr.mxu0 0.0
      %8542 = vmatpush1.msra.mxu0 0.0
      %8543 = vmatprep.subr.mxu0 0.0
      %8544 = vmatpush1.msra.mxu0 0.0
      %8545 = vmatprep.subr.mxu0 0.0
      %8546 = vmatpush1.msra.mxu0 0.0
      %8547 = vmatprep.subr.mxu0 0.0
      %8548 = vmatpush1.msra.mxu0 0.0
      %8549 = vmatprep.subr.mxu0 0.0
      %8550 = vmatpush1.msra.mxu0 0.0
      %8551 = vmatprep.subr.mxu0 0.0
      %8552 = vmatpush1.msra.mxu0 0.0
      %8553 = vmatprep.subr.mxu0 0.0
      %8554 = vmatpush1.msra.mxu0 0.0
      %8555 = vmatprep.subr.mxu0 0.0
      %8556 = vmatpush1.msra.mxu0 0.0
      %8557 = vmatprep.subr.mxu0 0.0
      %8558 = vmatpush1.msra.mxu0 0.0
      %8559 = vmatprep.subr.mxu0 0.0
      %8560 = vmatpush1.msra.mxu0 0.0
      %8561 = vmatprep.subr.mxu0 0.0
      %8562 = vmatpush1.msra.mxu0 0.0
      %8563 = vmatprep.subr.mxu0 0.0
      %8564 = vmatpush1.msra.mxu0 0.0
      %8565 = vmatprep.subr.mxu0 0.0
      %8566 = vmatpush1.msra.mxu0 0.0
      %8567 = vmatprep.subr.mxu0 0.0
      %8568 = vmatpush1.msra.mxu0 0.0
      %8569 = vmatprep.subr.mxu0 0.0
      %8570 = vmatpush1.msra.mxu0 0.0
      %8571 = vmatprep.subr.mxu0 0.0
      %8572 = vmatpush1.msra.mxu0 0.0
      %8573 = vmatprep.subr.mxu0 0.0
      %8574 = vmatpush1.msra.mxu0 0.0
      %8575 = vmatprep.subr.mxu0 0.0
      %8576 = vmatpush1.msra.mxu0 0.0
      %8577 = vmatprep.subr.mxu0 0.0
      %8578 = vmatpush1.msra.mxu0 0.0
      %8579 = vmatprep.subr.mxu0 0.0
      %8580 = vmatpush1.msra.mxu0 0.0
      %8581 = vmatprep.mubr.f32.mxu0 0.0
      %8582 = vmatmul.mubr.f32.gmra.mrb[0].mxu0 %v7739
      %v8583 = vpop.f32.mrb[0].mxu0
      %v8584 = vadd.f32 0.0, %v8583
      %v8585 = vpop.f32.mrb[0].mxu0
      %8586 = vdwg.mxu0
      %8588 = vrot.lane.b32.xlu0 %v8234, 32
      %v8589 = vpop.permute.xlu0 %8588
      %8592 = vrot.lane.b32.xlu0 %v8304, 64
      %v8593 = vpop.permute.xlu0 %8592
      %8596 = vrot.lane.b32.xlu0 %v8374, 96
      %v8597 = vpop.permute.xlu0 %8596
      %8600 = vrot.lane.b32.xlu0 %v8514, 32
      %v8601 = vpop.permute.xlu0 %8600
      %8604 = vrot.lane.b32.xlu0 %v8584, 64
      %v8605 = vpop.permute.xlu0 %8604
      %v8607 = vsel %vm1062, %v8015, %v8589
      %v8608 = vsel %vm3973, %v8607, %v8593
      %v8609 = vsel %vm1789, %v8608, %v8597
      %v8610 = vsel %vm1062, %v8444, %v8601
      %v8611 = vsel %vm3973, %v8610, %v8605
      %s8612 = scalar_lea.vmem %s22, 224
      %v8613 = vld [vmem:[%s8612] sm:$0xff]
      %v8614 = vld [vmem:[%s8612 + $0x8] sm:$0xff]
      %v8615 = vld [vmem:[%s8612 + $0x10] sm:$0xff]
      %v8616 = vld [vmem:[%s8612 + $0x18] sm:$0xff]
      %v8617 = vld [vmem:[%s8612 + $0x20] sm:$0xff]
      %v8618 = vld [vmem:[%s8612 + $0x28] sm:$0xff]
      %v8619 = vld [vmem:[%s8612 + $0x30] sm:$0xff]
      %v8620 = vld [vmem:[%s8612 + $0x38] sm:$0xff]
      %v8621 = vld [vmem:[%s8612 + $0x40] sm:$0xff]
      %v8622 = vld [vmem:[%s8612 + $0x48] sm:$0xff]
      %v8623 = vld [vmem:[%s8612 + $0x50] sm:$0xff]
      %v8624 = vld [vmem:[%s8612 + $0x58] sm:$0xff]
      %v8625 = vld [vmem:[%s8612 + $0x60] sm:$0xff]
      %v8626 = vld [vmem:[%s8612 + $0x68] sm:$0xff]
      %v8627 = vld [vmem:[%s8612 + $0x70] sm:$0xff]
      %v8628 = vld [vmem:[%s8612 + $0x78] sm:$0xff]
      %v8629 = vld [vmem:[%s8612 + $0x80] sm:$0xff]
      %v8630 = vld [vmem:[%s8612 + $0x88] sm:$0xff]
      %v8631 = vld [vmem:[%s8612 + $0x90] sm:$0xff]
      %v8632 = vld [vmem:[%s8612 + $0x98] sm:$0xff]
      %v8633 = vld [vmem:[%s8612 + $0xa0] sm:$0xff]
      %v8634 = vld [vmem:[%s8612 + $0xa8] sm:$0xff]
      %v8635 = vld [vmem:[%s8612 + $0xb0] sm:$0xff]
      %v8636 = vld [vmem:[%s8612 + $0xb8] sm:$0xff]
      %v8637 = vld [vmem:[%s8612 + $0xc0] sm:$0xff]
      %v8638 = vld [vmem:[%s8612 + $0xc8] sm:$0xff]
      %v8639 = vld [vmem:[%s8612 + $0xd0] sm:$0xff]
      %v8640 = vld [vmem:[%s8612 + $0xd8] sm:$0xff]
      %s8641 = scalar_lea.vmem %s23, 1
      %v8642 = vld [vmem:[%s8641] sm:$0x1]
      %v8644 = vlaneseq
      %v8645 = vshrl.u32 %v8644, 7
      %v8646 = vsub.s32 0, %v8645
      %v8647 = vrot.slane %v8642, %v8646
      %v8650 = vsel %vm1789, %v8611, 0
      %8652 = vmatprep.subr.mxu0 0.0
      %8653 = vmatpush1.msra.mxu0 %v8613
      %8654 = vmatprep.subr.mxu0 0.0
      %8655 = vmatpush1.msra.mxu0 %v8614
      %8656 = vmatprep.subr.mxu0 0.0
      %8657 = vmatpush1.msra.mxu0 %v8615
      %8658 = vmatprep.subr.mxu0 0.0
      %8659 = vmatpush1.msra.mxu0 %v8616
      %8660 = vmatprep.subr.mxu0 0.0
      %8661 = vmatpush1.msra.mxu0 %v8617
      %8662 = vmatprep.subr.mxu0 0.0
      %8663 = vmatpush1.msra.mxu0 %v8618
      %8664 = vmatprep.subr.mxu0 0.0
      %8665 = vmatpush1.msra.mxu0 %v8619
      %8666 = vmatprep.subr.mxu0 0.0
      %8667 = vmatpush1.msra.mxu0 %v8620
      %8668 = vmatprep.subr.mxu0 0.0
      %8669 = vmatpush1.msra.mxu0 %v8621
      %8670 = vmatprep.subr.mxu0 0.0
      %8671 = vmatpush1.msra.mxu0 %v8622
      %8672 = vmatprep.subr.mxu0 0.0
      %8673 = vmatpush1.msra.mxu0 %v8623
      %8674 = vmatprep.subr.mxu0 0.0
      %8675 = vmatpush1.msra.mxu0 %v8624
      %8676 = vmatprep.subr.mxu0 0.0
      %8677 = vmatpush1.msra.mxu0 %v8625
      %8678 = vmatprep.subr.mxu0 0.0
      %8679 = vmatpush1.msra.mxu0 %v8626
      %8680 = vmatprep.subr.mxu0 0.0
      %8681 = vmatpush1.msra.mxu0 %v8627
      %8682 = vmatprep.subr.mxu0 0.0
      %8683 = vmatpush1.msra.mxu0 %v8628
      %8684 = vmatprep.subr.mxu0 0.0
      %8685 = vmatpush1.msra.mxu0 %v8629
      %8686 = vmatprep.subr.mxu0 0.0
      %8687 = vmatpush1.msra.mxu0 %v8630
      %8688 = vmatprep.subr.mxu0 0.0
      %8689 = vmatpush1.msra.mxu0 %v8631
      %8690 = vmatprep.subr.mxu0 0.0
      %8691 = vmatpush1.msra.mxu0 %v8632
      %8692 = vmatprep.subr.mxu0 0.0
      %8693 = vmatpush1.msra.mxu0 %v8633
      %8694 = vmatprep.subr.mxu0 0.0
      %8695 = vmatpush1.msra.mxu0 %v8634
      %8696 = vmatprep.subr.mxu0 0.0
      %8697 = vmatpush1.msra.mxu0 %v8635
      %8698 = vmatprep.subr.mxu0 0.0
      %8699 = vmatpush1.msra.mxu0 %v8636
      %8700 = vmatprep.subr.mxu0 0.0
      %8701 = vmatpush1.msra.mxu0 %v8637
      %8702 = vmatprep.subr.mxu0 0.0
      %8703 = vmatpush1.msra.mxu0 %v8638
      %8704 = vmatprep.subr.mxu0 0.0
      %8705 = vmatpush1.msra.mxu0 %v8639
      %8706 = vmatprep.subr.mxu0 0.0
      %8707 = vmatpush1.msra.mxu0 %v8640
      %8708 = vmatprep.subr.mxu0 0.0
      %8709 = vmatpush1.msra.mxu0 0.0
      %8710 = vmatprep.subr.mxu0 0.0
      %8711 = vmatpush1.msra.mxu0 0.0
      %8712 = vmatprep.subr.mxu0 0.0
      %8713 = vmatpush1.msra.mxu0 0.0
      %8714 = vmatprep.subr.mxu0 0.0
      %8715 = vmatpush1.msra.mxu0 0.0
      %8716 = vmatprep.mubr.f32.mxu0 %v8650
      %8717 = vmatmul.mubr.f32.gmra.mrb[0].mxu0 %v8609
      %v8718 = vpop.f32.mrb[0].mxu0
      %v8719 = vadd.f32 %v8647, %v8718
      %v8720 = vpop.f32.mrb[0].mxu0
      %8721 = vdwg.mxu0
      %v8722 = vadd.f32 %v8719, %v8015
      %v8723 = vmul.f32 %v8722, 0.999995
      %s8724 = scalar_lea.vmem %s20, 64
      %v8725 = vld [vmem:[%s8724] sm:$0xff]
      %v8726 = vld [vmem:[%s8724 + $0x8] sm:$0xff]
      %v8727 = vld [vmem:[%s8724 + $0x10] sm:$0xff]
      %v8728 = vld [vmem:[%s8724 + $0x18] sm:$0xff]
      %v8730 = vsel %vm1062, %v8723, 0
      %8732 = vmatprep.subr.mxu0 0.0
      %8733 = vmatpush1.msra.mxu0 %v8725
      %8734 = vmatprep.subr.mxu0 0.0
      %8735 = vmatpush1.msra.mxu0 %v8726
      %8736 = vmatprep.subr.mxu0 0.0
      %8737 = vmatpush1.msra.mxu0 %v8727
      %8738 = vmatprep.subr.mxu0 0.0
      %8739 = vmatpush1.msra.mxu0 %v8728
      %8740 = vmatprep.subr.mxu0 0.0
      %8741 = vmatpush1.msra.mxu0 0.0
      %8742 = vmatprep.subr.mxu0 0.0
      %8743 = vmatpush1.msra.mxu0 0.0
      %8744 = vmatprep.subr.mxu0 0.0
      %8745 = vmatpush1.msra.mxu0 0.0
      %8746 = vmatprep.subr.mxu0 0.0
      %8747 = vmatpush1.msra.mxu0 0.0
      %8748 = vmatprep.subr.mxu0 0.0
      %8749 = vmatpush1.msra.mxu0 0.0
      %8750 = vmatprep.subr.mxu0 0.0
      %8751 = vmatpush1.msra.mxu0 0.0
      %8752 = vmatprep.subr.mxu0 0.0
      %8753 = vmatpush1.msra.mxu0 0.0
      %8754 = vmatprep.subr.mxu0 0.0
      %8755 = vmatpush1.msra.mxu0 0.0
      %8756 = vmatprep.subr.mxu0 0.0
      %8757 = vmatpush1.msra.mxu0 0.0
      %8758 = vmatprep.subr.mxu0 0.0
      %8759 = vmatpush1.msra.mxu0 0.0
      %8760 = vmatprep.subr.mxu0 0.0
      %8761 = vmatpush1.msra.mxu0 0.0
      %8762 = vmatprep.subr.mxu0 0.0
      %8763 = vmatpush1.msra.mxu0 0.0
      %8764 = vmatprep.subr.mxu0 0.0
      %8765 = vmatpush1.msra.mxu0 0.0
      %8766 = vmatprep.subr.mxu0 0.0
      %8767 = vmatpush1.msra.mxu0 0.0
      %8768 = vmatprep.subr.mxu0 0.0
      %8769 = vmatpush1.msra.mxu0 0.0
      %8770 = vmatprep.subr.mxu0 0.0
      %8771 = vmatpush1.msra.mxu0 0.0
      %8772 = vmatprep.subr.mxu0 0.0
      %8773 = vmatpush1.msra.mxu0 0.0
      %8774 = vmatprep.subr.mxu0 0.0
      %8775 = vmatpush1.msra.mxu0 0.0
      %8776 = vmatprep.subr.mxu0 0.0
      %8777 = vmatpush1.msra.mxu0 0.0
      %8778 = vmatprep.subr.mxu0 0.0
      %8779 = vmatpush1.msra.mxu0 0.0
      %8780 = vmatprep.subr.mxu0 0.0
      %8781 = vmatpush1.msra.mxu0 0.0
      %8782 = vmatprep.subr.mxu0 0.0
      %8783 = vmatpush1.msra.mxu0 0.0
      %8784 = vmatprep.subr.mxu0 0.0
      %8785 = vmatpush1.msra.mxu0 0.0
      %8786 = vmatprep.subr.mxu0 0.0
      %8787 = vmatpush1.msra.mxu0 0.0
      %8788 = vmatprep.subr.mxu0 0.0
      %8789 = vmatpush1.msra.mxu0 0.0
      %8790 = vmatprep.subr.mxu0 0.0
      %8791 = vmatpush1.msra.mxu0 0.0
      %8792 = vmatprep.subr.mxu0 0.0
      %8793 = vmatpush1.msra.mxu0 0.0
      %8794 = vmatprep.subr.mxu0 0.0
      %8795 = vmatpush1.msra.mxu0 0.0
      %8796 = vmatprep.mubr.f32.mxu0 0.0
      %8797 = vmatmul.mubr.f32.gmra.mrb[0].mxu0 %v8730
      %v8798 = vpop.f32.mrb[0].mxu0
      %v8799 = vadd.f32 0.0, %v8798
      %v8800 = vpop.f32.mrb[0].mxu0
      %8801 = vdwg.mxu0
      %v8802 = vadd.f32 %v8164, %v8799
      %8803 = vmatprep.subr.mxu0 0.0
      %8804 = vmatpush1.msra.mxu0 %v8723
      %8805 = vmatprep.subr.mxu0 0.0
      %8806 = vmatpush1.msra.mxu0 0.0
      %8807 = vmatprep.subr.mxu0 0.0
      %8808 = vmatpush1.msra.mxu0 0.0
      %8809 = vmatprep.subr.mxu0 0.0
      %8810 = vmatpush1.msra.mxu0 0.0
      %8811 = vmatprep.subr.mxu0 0.0
      %8812 = vmatpush1.msra.mxu0 0.0
      %8813 = vmatprep.subr.mxu0 0.0
      %8814 = vmatpush1.msra.mxu0 0.0
      %8815 = vmatprep.subr.mxu0 0.0
      %8816 = vmatpush1.msra.mxu0 0.0
      %8817 = vmatprep.subr.mxu0 0.0
      %8818 = vmatpush1.msra.mxu0 0.0
      %8819 = vmatprep.subr.mxu0 0.0
      %8820 = vmatpush1.msra.mxu0 0.0
      %8821 = vmatprep.subr.mxu0 0.0
      %8822 = vmatpush1.msra.mxu0 0.0
      %8823 = vmatprep.subr.mxu0 0.0
      %8824 = vmatpush1.msra.mxu0 0.0
      %8825 = vmatprep.subr.mxu0 0.0
      %8826 = vmatpush1.msra.mxu0 0.0
      %8827 = vmatprep.subr.mxu0 0.0
      %8828 = vmatpush1.msra.mxu0 0.0
      %8829 = vmatprep.subr.mxu0 0.0
      %8830 = vmatpush1.msra.mxu0 0.0
      %8831 = vmatprep.subr.mxu0 0.0
      %8832 = vmatpush1.msra.mxu0 0.0
      %8833 = vmatprep.subr.mxu0 0.0
      %8834 = vmatpush1.msra.mxu0 0.0
      %8835 = vmatprep.subr.mxu0 0.0
      %8836 = vmatpush1.msra.mxu0 0.0
      %8837 = vmatprep.subr.mxu0 0.0
      %8838 = vmatpush1.msra.mxu0 0.0
      %8839 = vmatprep.subr.mxu0 0.0
      %8840 = vmatpush1.msra.mxu0 0.0
      %8841 = vmatprep.subr.mxu0 0.0
      %8842 = vmatpush1.msra.mxu0 0.0
      %8843 = vmatprep.subr.mxu0 0.0
      %8844 = vmatpush1.msra.mxu0 0.0
      %8845 = vmatprep.subr.mxu0 0.0
      %8846 = vmatpush1.msra.mxu0 0.0
      %8847 = vmatprep.subr.mxu0 0.0
      %8848 = vmatpush1.msra.mxu0 0.0
      %8849 = vmatprep.subr.mxu0 0.0
      %8850 = vmatpush1.msra.mxu0 0.0
      %8851 = vmatprep.subr.mxu0 0.0
      %8852 = vmatpush1.msra.mxu0 0.0
      %8853 = vmatprep.subr.mxu0 0.0
      %8854 = vmatpush1.msra.mxu0 0.0
      %8855 = vmatprep.subr.mxu0 0.0
      %8856 = vmatpush1.msra.mxu0 0.0
      %8857 = vmatprep.subr.mxu0 0.0
      %8858 = vmatpush1.msra.mxu0 0.0
      %8859 = vmatprep.subr.mxu0 0.0
      %8860 = vmatpush1.msra.mxu0 0.0
      %8861 = vmatprep.subr.mxu0 0.0
      %8862 = vmatpush1.msra.mxu0 0.0
      %8863 = vmatprep.subr.mxu0 0.0
      %8864 = vmatpush1.msra.mxu0 0.0
      %8865 = vmatprep.subr.mxu0 0.0
      %8866 = vmatpush1.msra.mxu0 0.0
      %8867 = vmatprep.mubr.f32.mxu0 0.0
      %8868 = vmatmul.mubr.f32.gmra.mrb[0].mxu0 %v7449
      %v8869 = vpop.f32.mrb[0].mxu0
      %v8870 = vadd.f32 0.0, %v8869
      %v8871 = vpop.f32.mrb[0].mxu0
      %8872 = vdwg.mxu0
      %8873 = vmatprep.subr.mxu0 0.0
      %8874 = vmatpush1.msra.mxu0 %v8870
      %8875 = vmatprep.subr.mxu0 0.0
      %8876 = vmatpush1.msra.mxu0 0.0
      %8877 = vmatprep.subr.mxu0 0.0
      %8878 = vmatpush1.msra.mxu0 0.0
      %8879 = vmatprep.subr.mxu0 0.0
      %8880 = vmatpush1.msra.mxu0 0.0
      %8881 = vmatprep.subr.mxu0 0.0
      %8882 = vmatpush1.msra.mxu0 0.0
      %8883 = vmatprep.subr.mxu0 0.0
      %8884 = vmatpush1.msra.mxu0 0.0
      %8885 = vmatprep.subr.mxu0 0.0
      %8886 = vmatpush1.msra.mxu0 0.0
      %8887 = vmatprep.subr.mxu0 0.0
      %8888 = vmatpush1.msra.mxu0 0.0
      %8889 = vmatprep.subr.mxu0 0.0
      %8890 = vmatpush1.msra.mxu0 0.0
      %8891 = vmatprep.subr.mxu0 0.0
      %8892 = vmatpush1.msra.mxu0 0.0
      %8893 = vmatprep.subr.mxu0 0.0
      %8894 = vmatpush1.msra.mxu0 0.0
      %8895 = vmatprep.subr.mxu0 0.0
      %8896 = vmatpush1.msra.mxu0 0.0
      %8897 = vmatprep.subr.mxu0 0.0
      %8898 = vmatpush1.msra.mxu0 0.0
      %8899 = vmatprep.subr.mxu0 0.0
      %8900 = vmatpush1.msra.mxu0 0.0
      %8901 = vmatprep.subr.mxu0 0.0
      %8902 = vmatpush1.msra.mxu0 0.0
      %8903 = vmatprep.subr.mxu0 0.0
      %8904 = vmatpush1.msra.mxu0 0.0
      %8905 = vmatprep.subr.mxu0 0.0
      %8906 = vmatpush1.msra.mxu0 0.0
      %8907 = vmatprep.subr.mxu0 0.0
      %8908 = vmatpush1.msra.mxu0 0.0
      %8909 = vmatprep.subr.mxu0 0.0
      %8910 = vmatpush1.msra.mxu0 0.0
      %8911 = vmatprep.subr.mxu0 0.0
      %8912 = vmatpush1.msra.mxu0 0.0
      %8913 = vmatprep.subr.mxu0 0.0
      %8914 = vmatpush1.msra.mxu0 0.0
      %8915 = vmatprep.subr.mxu0 0.0
      %8916 = vmatpush1.msra.mxu0 0.0
      %8917 = vmatprep.subr.mxu0 0.0
      %8918 = vmatpush1.msra.mxu0 0.0
      %8919 = vmatprep.subr.mxu0 0.0
      %8920 = vmatpush1.msra.mxu0 0.0
      %8921 = vmatprep.subr.mxu0 0.0
      %8922 = vmatpush1.msra.mxu0 0.0
      %8923 = vmatprep.subr.mxu0 0.0
      %8924 = vmatpush1.msra.mxu0 0.0
      %8925 = vmatprep.subr.mxu0 0.0
      %8926 = vmatpush1.msra.mxu0 0.0
      %8927 = vmatprep.subr.mxu0 0.0
      %8928 = vmatpush1.msra.mxu0 0.0
      %8929 = vmatprep.subr.mxu0 0.0
      %8930 = vmatpush1.msra.mxu0 0.0
      %8931 = vmatprep.subr.mxu0 0.0
      %8932 = vmatpush1.msra.mxu0 0.0
      %8933 = vmatprep.subr.mxu0 0.0
      %8934 = vmatpush1.msra.mxu0 0.0
      %8935 = vmatprep.subr.mxu0 0.0
      %8936 = vmatpush1.msra.mxu0 0.0
      %8937 = vmatprep.mubr.f32.mxu0 0.0
      %8938 = vmatmul.mubr.f32.gmra.mrb[0].mxu0 %v7449
      %v8939 = vpop.f32.mrb[0].mxu0
      %v8940 = vadd.f32 0.0, %v8939
      %v8941 = vpop.f32.mrb[0].mxu0
      %8942 = vdwg.mxu0
      %8943 = vmatprep.subr.mxu0 0.0
      %8944 = vmatpush1.msra.mxu0 %v8723
      %8945 = vmatprep.subr.mxu0 0.0
      %8946 = vmatpush1.msra.mxu0 0.0
      %8947 = vmatprep.subr.mxu0 0.0
      %8948 = vmatpush1.msra.mxu0 0.0
      %8949 = vmatprep.subr.mxu0 0.0
      %8950 = vmatpush1.msra.mxu0 0.0
      %8951 = vmatprep.subr.mxu0 0.0
      %8952 = vmatpush1.msra.mxu0 0.0
      %8953 = vmatprep.subr.mxu0 0.0
      %8954 = vmatpush1.msra.mxu0 0.0
      %8955 = vmatprep.subr.mxu0 0.0
      %8956 = vmatpush1.msra.mxu0 0.0
      %8957 = vmatprep.subr.mxu0 0.0
      %8958 = vmatpush1.msra.mxu0 0.0
      %8959 = vmatprep.subr.mxu0 0.0
      %8960 = vmatpush1.msra.mxu0 0.0
      %8961 = vmatprep.subr.mxu0 0.0
      %8962 = vmatpush1.msra.mxu0 0.0
      %8963 = vmatprep.subr.mxu0 0.0
      %8964 = vmatpush1.msra.mxu0 0.0
      %8965 = vmatprep.subr.mxu0 0.0
      %8966 = vmatpush1.msra.mxu0 0.0
      %8967 = vmatprep.subr.mxu0 0.0
      %8968 = vmatpush1.msra.mxu0 0.0
      %8969 = vmatprep.subr.mxu0 0.0
      %8970 = vmatpush1.msra.mxu0 0.0
      %8971 = vmatprep.subr.mxu0 0.0
      %8972 = vmatpush1.msra.mxu0 0.0
      %8973 = vmatprep.subr.mxu0 0.0
      %8974 = vmatpush1.msra.mxu0 0.0
      %8975 = vmatprep.subr.mxu0 0.0
      %8976 = vmatpush1.msra.mxu0 0.0
      %8977 = vmatprep.subr.mxu0 0.0
      %8978 = vmatpush1.msra.mxu0 0.0
      %8979 = vmatprep.subr.mxu0 0.0
      %8980 = vmatpush1.msra.mxu0 0.0
      %8981 = vmatprep.subr.mxu0 0.0
      %8982 = vmatpush1.msra.mxu0 0.0
      %8983 = vmatprep.subr.mxu0 0.0
      %8984 = vmatpush1.msra.mxu0 0.0
      %8985 = vmatprep.subr.mxu0 0.0
      %8986 = vmatpush1.msra.mxu0 0.0
      %8987 = vmatprep.subr.mxu0 0.0
      %8988 = vmatpush1.msra.mxu0 0.0
      %8989 = vmatprep.subr.mxu0 0.0
      %8990 = vmatpush1.msra.mxu0 0.0
      %8991 = vmatprep.subr.mxu0 0.0
      %8992 = vmatpush1.msra.mxu0 0.0
      %8993 = vmatprep.subr.mxu0 0.0
      %8994 = vmatpush1.msra.mxu0 0.0
      %8995 = vmatprep.subr.mxu0 0.0
      %8996 = vmatpush1.msra.mxu0 0.0
      %8997 = vmatprep.subr.mxu0 0.0
      %8998 = vmatpush1.msra.mxu0 0.0
      %8999 = vmatprep.subr.mxu0 0.0
      %9000 = vmatpush1.msra.mxu0 0.0
      %9001 = vmatprep.subr.mxu0 0.0
      %9002 = vmatpush1.msra.mxu0 0.0
      %9003 = vmatprep.subr.mxu0 0.0
      %9004 = vmatpush1.msra.mxu0 0.0
      %9005 = vmatprep.subr.mxu0 0.0
      %9006 = vmatpush1.msra.mxu0 0.0
      %9007 = vmatprep.mubr.f32.mxu0 0.0
      %9008 = vmatmul.mubr.f32.gmra.mrb[0].mxu0 %v7594
      %v9009 = vpop.f32.mrb[0].mxu0
      %v9010 = vadd.f32 0.0, %v9009
      %v9011 = vpop.f32.mrb[0].mxu0
      %9012 = vdwg.mxu0
      %9013 = vmatprep.subr.mxu0 0.0
      %9014 = vmatpush1.msra.mxu0 %v9010
      %9015 = vmatprep.subr.mxu0 0.0
      %9016 = vmatpush1.msra.mxu0 0.0
      %9017 = vmatprep.subr.mxu0 0.0
      %9018 = vmatpush1.msra.mxu0 0.0
      %9019 = vmatprep.subr.mxu0 0.0
      %9020 = vmatpush1.msra.mxu0 0.0
      %9021 = vmatprep.subr.mxu0 0.0
      %9022 = vmatpush1.msra.mxu0 0.0
      %9023 = vmatprep.subr.mxu0 0.0
      %9024 = vmatpush1.msra.mxu0 0.0
      %9025 = vmatprep.subr.mxu0 0.0
      %9026 = vmatpush1.msra.mxu0 0.0
      %9027 = vmatprep.subr.mxu0 0.0
      %9028 = vmatpush1.msra.mxu0 0.0
      %9029 = vmatprep.subr.mxu0 0.0
      %9030 = vmatpush1.msra.mxu0 0.0
      %9031 = vmatprep.subr.mxu0 0.0
      %9032 = vmatpush1.msra.mxu0 0.0
      %9033 = vmatprep.subr.mxu0 0.0
      %9034 = vmatpush1.msra.mxu0 0.0
      %9035 = vmatprep.subr.mxu0 0.0
      %9036 = vmatpush1.msra.mxu0 0.0
      %9037 = vmatprep.subr.mxu0 0.0
      %9038 = vmatpush1.msra.mxu0 0.0
      %9039 = vmatprep.subr.mxu0 0.0
      %9040 = vmatpush1.msra.mxu0 0.0
      %9041 = vmatprep.subr.mxu0 0.0
      %9042 = vmatpush1.msra.mxu0 0.0
      %9043 = vmatprep.subr.mxu0 0.0
      %9044 = vmatpush1.msra.mxu0 0.0
      %9045 = vmatprep.subr.mxu0 0.0
      %9046 = vmatpush1.msra.mxu0 0.0
      %9047 = vmatprep.subr.mxu0 0.0
      %9048 = vmatpush1.msra.mxu0 0.0
      %9049 = vmatprep.subr.mxu0 0.0
      %9050 = vmatpush1.msra.mxu0 0.0
      %9051 = vmatprep.subr.mxu0 0.0
      %9052 = vmatpush1.msra.mxu0 0.0
      %9053 = vmatprep.subr.mxu0 0.0
      %9054 = vmatpush1.msra.mxu0 0.0
      %9055 = vmatprep.subr.mxu0 0.0
      %9056 = vmatpush1.msra.mxu0 0.0
      %9057 = vmatprep.subr.mxu0 0.0
      %9058 = vmatpush1.msra.mxu0 0.0
      %9059 = vmatprep.subr.mxu0 0.0
      %9060 = vmatpush1.msra.mxu0 0.0
      %9061 = vmatprep.subr.mxu0 0.0
      %9062 = vmatpush1.msra.mxu0 0.0
      %9063 = vmatprep.subr.mxu0 0.0
      %9064 = vmatpush1.msra.mxu0 0.0
      %9065 = vmatprep.subr.mxu0 0.0
      %9066 = vmatpush1.msra.mxu0 0.0
      %9067 = vmatprep.subr.mxu0 0.0
      %9068 = vmatpush1.msra.mxu0 0.0
      %9069 = vmatprep.subr.mxu0 0.0
      %9070 = vmatpush1.msra.mxu0 0.0
      %9071 = vmatprep.subr.mxu0 0.0
      %9072 = vmatpush1.msra.mxu0 0.0
      %9073 = vmatprep.subr.mxu0 0.0
      %9074 = vmatpush1.msra.mxu0 0.0
      %9075 = vmatprep.subr.mxu0 0.0
      %9076 = vmatpush1.msra.mxu0 0.0
      %9077 = vmatprep.mubr.f32.mxu0 0.0
      %9078 = vmatmul.mubr.f32.gmra.mrb[0].mxu0 %v7594
      %v9079 = vpop.f32.mrb[0].mxu0
      %v9080 = vadd.f32 0.0, %v9079
      %v9081 = vpop.f32.mrb[0].mxu0
      %9082 = vdwg.mxu0
      %9083 = vmatprep.subr.mxu0 0.0
      %9084 = vmatpush1.msra.mxu0 %v8723
      %9085 = vmatprep.subr.mxu0 0.0
      %9086 = vmatpush1.msra.mxu0 0.0
      %9087 = vmatprep.subr.mxu0 0.0
      %9088 = vmatpush1.msra.mxu0 0.0
      %9089 = vmatprep.subr.mxu0 0.0
      %9090 = vmatpush1.msra.mxu0 0.0
      %9091 = vmatprep.subr.mxu0 0.0
      %9092 = vmatpush1.msra.mxu0 0.0
      %9093 = vmatprep.subr.mxu0 0.0
      %9094 = vmatpush1.msra.mxu0 0.0
      %9095 = vmatprep.subr.mxu0 0.0
      %9096 = vmatpush1.msra.mxu0 0.0
      %9097 = vmatprep.subr.mxu0 0.0
      %9098 = vmatpush1.msra.mxu0 0.0
      %9099 = vmatprep.subr.mxu0 0.0
      %9100 = vmatpush1.msra.mxu0 0.0
      %9101 = vmatprep.subr.mxu0 0.0
      %9102 = vmatpush1.msra.mxu0 0.0
      %9103 = vmatprep.subr.mxu0 0.0
      %9104 = vmatpush1.msra.mxu0 0.0
      %9105 = vmatprep.subr.mxu0 0.0
      %9106 = vmatpush1.msra.mxu0 0.0
      %9107 = vmatprep.subr.mxu0 0.0
      %9108 = vmatpush1.msra.mxu0 0.0
      %9109 = vmatprep.subr.mxu0 0.0
      %9110 = vmatpush1.msra.mxu0 0.0
      %9111 = vmatprep.subr.mxu0 0.0
      %9112 = vmatpush1.msra.mxu0 0.0
      %9113 = vmatprep.subr.mxu0 0.0
      %9114 = vmatpush1.msra.mxu0 0.0
      %9115 = vmatprep.subr.mxu0 0.0
      %9116 = vmatpush1.msra.mxu0 0.0
      %9117 = vmatprep.subr.mxu0 0.0
      %9118 = vmatpush1.msra.mxu0 0.0
      %9119 = vmatprep.subr.mxu0 0.0
      %9120 = vmatpush1.msra.mxu0 0.0
      %9121 = vmatprep.subr.mxu0 0.0
      %9122 = vmatpush1.msra.mxu0 0.0
      %9123 = vmatprep.subr.mxu0 0.0
      %9124 = vmatpush1.msra.mxu0 0.0
      %9125 = vmatprep.subr.mxu0 0.0
      %9126 = vmatpush1.msra.mxu0 0.0
      %9127 = vmatprep.subr.mxu0 0.0
      %9128 = vmatpush1.msra.mxu0 0.0
      %9129 = vmatprep.subr.mxu0 0.0
      %9130 = vmatpush1.msra.mxu0 0.0
      %9131 = vmatprep.subr.mxu0 0.0
      %9132 = vmatpush1.msra.mxu0 0.0
      %9133 = vmatprep.subr.mxu0 0.0
      %9134 = vmatpush1.msra.mxu0 0.0
      %9135 = vmatprep.subr.mxu0 0.0
      %9136 = vmatpush1.msra.mxu0 0.0
      %9137 = vmatprep.subr.mxu0 0.0
      %9138 = vmatpush1.msra.mxu0 0.0
      %9139 = vmatprep.subr.mxu0 0.0
      %9140 = vmatpush1.msra.mxu0 0.0
      %9141 = vmatprep.subr.mxu0 0.0
      %9142 = vmatpush1.msra.mxu0 0.0
      %9143 = vmatprep.subr.mxu0 0.0
      %9144 = vmatpush1.msra.mxu0 0.0
      %9145 = vmatprep.subr.mxu0 0.0
      %9146 = vmatpush1.msra.mxu0 0.0
      %9147 = vmatprep.mubr.f32.mxu0 0.0
      %9148 = vmatmul.mubr.f32.gmra.mrb[0].mxu0 %v7739
      %v9149 = vpop.f32.mrb[0].mxu0
      %v9150 = vadd.f32 0.0, %v9149
      %v9151 = vpop.f32.mrb[0].mxu0
      %9152 = vdwg.mxu0
      %9153 = vmatprep.subr.mxu0 0.0
      %9154 = vmatpush1.msra.mxu0 %v9150
      %9155 = vmatprep.subr.mxu0 0.0
      %9156 = vmatpush1.msra.mxu0 0.0
      %9157 = vmatprep.subr.mxu0 0.0
      %9158 = vmatpush1.msra.mxu0 0.0
      %9159 = vmatprep.subr.mxu0 0.0
      %9160 = vmatpush1.msra.mxu0 0.0
      %9161 = vmatprep.subr.mxu0 0.0
      %9162 = vmatpush1.msra.mxu0 0.0
      %9163 = vmatprep.subr.mxu0 0.0
      %9164 = vmatpush1.msra.mxu0 0.0
      %9165 = vmatprep.subr.mxu0 0.0
      %9166 = vmatpush1.msra.mxu0 0.0
      %9167 = vmatprep.subr.mxu0 0.0
      %9168 = vmatpush1.msra.mxu0 0.0
      %9169 = vmatprep.subr.mxu0 0.0
      %9170 = vmatpush1.msra.mxu0 0.0
      %9171 = vmatprep.subr.mxu0 0.0
      %9172 = vmatpush1.msra.mxu0 0.0
      %9173 = vmatprep.subr.mxu0 0.0
      %9174 = vmatpush1.msra.mxu0 0.0
      %9175 = vmatprep.subr.mxu0 0.0
      %9176 = vmatpush1.msra.mxu0 0.0
      %9177 = vmatprep.subr.mxu0 0.0
      %9178 = vmatpush1.msra.mxu0 0.0
      %9179 = vmatprep.subr.mxu0 0.0
      %9180 = vmatpush1.msra.mxu0 0.0
      %9181 = vmatprep.subr.mxu0 0.0
      %9182 = vmatpush1.msra.mxu0 0.0
      %9183 = vmatprep.subr.mxu0 0.0
      %9184 = vmatpush1.msra.mxu0 0.0
      %9185 = vmatprep.subr.mxu0 0.0
      %9186 = vmatpush1.msra.mxu0 0.0
      %9187 = vmatprep.subr.mxu0 0.0
      %9188 = vmatpush1.msra.mxu0 0.0
      %9189 = vmatprep.subr.mxu0 0.0
      %9190 = vmatpush1.msra.mxu0 0.0
      %9191 = vmatprep.subr.mxu0 0.0
      %9192 = vmatpush1.msra.mxu0 0.0
      %9193 = vmatprep.subr.mxu0 0.0
      %9194 = vmatpush1.msra.mxu0 0.0
      %9195 = vmatprep.subr.mxu0 0.0
      %9196 = vmatpush1.msra.mxu0 0.0
      %9197 = vmatprep.subr.mxu0 0.0
      %9198 = vmatpush1.msra.mxu0 0.0
      %9199 = vmatprep.subr.mxu0 0.0
      %9200 = vmatpush1.msra.mxu0 0.0
      %9201 = vmatprep.subr.mxu0 0.0
      %9202 = vmatpush1.msra.mxu0 0.0
      %9203 = vmatprep.subr.mxu0 0.0
      %9204 = vmatpush1.msra.mxu0 0.0
      %9205 = vmatprep.subr.mxu0 0.0
      %9206 = vmatpush1.msra.mxu0 0.0
      %9207 = vmatprep.subr.mxu0 0.0
      %9208 = vmatpush1.msra.mxu0 0.0
      %9209 = vmatprep.subr.mxu0 0.0
      %9210 = vmatpush1.msra.mxu0 0.0
      %9211 = vmatprep.subr.mxu0 0.0
      %9212 = vmatpush1.msra.mxu0 0.0
      %9213 = vmatprep.subr.mxu0 0.0
      %9214 = vmatpush1.msra.mxu0 0.0
      %9215 = vmatprep.subr.mxu0 0.0
      %9216 = vmatpush1.msra.mxu0 0.0
      %9217 = vmatprep.mubr.f32.mxu0 0.0
      %9218 = vmatmul.mubr.f32.gmra.mrb[0].mxu0 %v7739
      %v9219 = vpop.f32.mrb[0].mxu0
      %v9220 = vadd.f32 0.0, %v9219
      %v9221 = vpop.f32.mrb[0].mxu0
      %9222 = vdwg.mxu0
      %9224 = vrot.lane.b32.xlu0 %v8870, 32
      %v9225 = vpop.permute.xlu0 %9224
      %9228 = vrot.lane.b32.xlu0 %v8940, 64
      %v9229 = vpop.permute.xlu0 %9228
      %9232 = vrot.lane.b32.xlu0 %v9010, 96
      %v9233 = vpop.permute.xlu0 %9232
      %9236 = vrot.lane.b32.xlu0 %v9150, 32
      %v9237 = vpop.permute.xlu0 %9236
      %9240 = vrot.lane.b32.xlu0 %v9220, 64
      %v9241 = vpop.permute.xlu0 %9240
      %v9243 = vsel %vm1062, %v8723, %v9225
      %v9244 = vsel %vm3973, %v9243, %v9229
      %v9245 = vsel %vm1789, %v9244, %v9233
      %v9246 = vsel %vm1062, %v9080, %v9237
      %v9247 = vsel %vm3973, %v9246, %v9241
      %s9248 = scalar_lea.vmem %s22, 448
      %v9249 = vld [vmem:[%s9248] sm:$0xff]
      %v9250 = vld [vmem:[%s9248 + $0x8] sm:$0xff]
      %v9251 = vld [vmem:[%s9248 + $0x10] sm:$0xff]
      %v9252 = vld [vmem:[%s9248 + $0x18] sm:$0xff]
      %v9253 = vld [vmem:[%s9248 + $0x20] sm:$0xff]
      %v9254 = vld [vmem:[%s9248 + $0x28] sm:$0xff]
      %v9255 = vld [vmem:[%s9248 + $0x30] sm:$0xff]
      %v9256 = vld [vmem:[%s9248 + $0x38] sm:$0xff]
      %v9257 = vld [vmem:[%s9248 + $0x40] sm:$0xff]
      %v9258 = vld [vmem:[%s9248 + $0x48] sm:$0xff]
      %v9259 = vld [vmem:[%s9248 + $0x50] sm:$0xff]
      %v9260 = vld [vmem:[%s9248 + $0x58] sm:$0xff]
      %v9261 = vld [vmem:[%s9248 + $0x60] sm:$0xff]
      %v9262 = vld [vmem:[%s9248 + $0x68] sm:$0xff]
      %v9263 = vld [vmem:[%s9248 + $0x70] sm:$0xff]
      %v9264 = vld [vmem:[%s9248 + $0x78] sm:$0xff]
      %v9265 = vld [vmem:[%s9248 + $0x80] sm:$0xff]
      %v9266 = vld [vmem:[%s9248 + $0x88] sm:$0xff]
      %v9267 = vld [vmem:[%s9248 + $0x90] sm:$0xff]
      %v9268 = vld [vmem:[%s9248 + $0x98] sm:$0xff]
      %v9269 = vld [vmem:[%s9248 + $0xa0] sm:$0xff]
      %v9270 = vld [vmem:[%s9248 + $0xa8] sm:$0xff]
      %v9271 = vld [vmem:[%s9248 + $0xb0] sm:$0xff]
      %v9272 = vld [vmem:[%s9248 + $0xb8] sm:$0xff]
      %v9273 = vld [vmem:[%s9248 + $0xc0] sm:$0xff]
      %v9274 = vld [vmem:[%s9248 + $0xc8] sm:$0xff]
      %v9275 = vld [vmem:[%s9248 + $0xd0] sm:$0xff]
      %v9276 = vld [vmem:[%s9248 + $0xd8] sm:$0xff]
      %s9277 = scalar_lea.vmem %s23, 2
      %v9278 = vld [vmem:[%s9277] sm:$0x1]
      %v9280 = vlaneseq
      %v9281 = vshrl.u32 %v9280, 7
      %v9282 = vsub.s32 0, %v9281
      %v9283 = vrot.slane %v9278, %v9282
      %v9286 = vsel %vm1789, %v9247, 0
      %9288 = vmatprep.subr.mxu0 0.0
      %9289 = vmatpush1.msra.mxu0 %v9249
      %9290 = vmatprep.subr.mxu0 0.0
      %9291 = vmatpush1.msra.mxu0 %v9250
      %9292 = vmatprep.subr.mxu0 0.0
      %9293 = vmatpush1.msra.mxu0 %v9251
      %9294 = vmatprep.subr.mxu0 0.0
      %9295 = vmatpush1.msra.mxu0 %v9252
      %9296 = vmatprep.subr.mxu0 0.0
      %9297 = vmatpush1.msra.mxu0 %v9253
      %9298 = vmatprep.subr.mxu0 0.0
      %9299 = vmatpush1.msra.mxu0 %v9254
      %9300 = vmatprep.subr.mxu0 0.0
      %9301 = vmatpush1.msra.mxu0 %v9255
      %9302 = vmatprep.subr.mxu0 0.0
      %9303 = vmatpush1.msra.mxu0 %v9256
      %9304 = vmatprep.subr.mxu0 0.0
      %9305 = vmatpush1.msra.mxu0 %v9257
      %9306 = vmatprep.subr.mxu0 0.0
      %9307 = vmatpush1.msra.mxu0 %v9258
      %9308 = vmatprep.subr.mxu0 0.0
      %9309 = vmatpush1.msra.mxu0 %v9259
      %9310 = vmatprep.subr.mxu0 0.0
      %9311 = vmatpush1.msra.mxu0 %v9260
      %9312 = vmatprep.subr.mxu0 0.0
      %9313 = vmatpush1.msra.mxu0 %v9261
      %9314 = vmatprep.subr.mxu0 0.0
      %9315 = vmatpush1.msra.mxu0 %v9262
      %9316 = vmatprep.subr.mxu0 0.0
      %9317 = vmatpush1.msra.mxu0 %v9263
      %9318 = vmatprep.subr.mxu0 0.0
      %9319 = vmatpush1.msra.mxu0 %v9264
      %9320 = vmatprep.subr.mxu0 0.0
      %9321 = vmatpush1.msra.mxu0 %v9265
      %9322 = vmatprep.subr.mxu0 0.0
      %9323 = vmatpush1.msra.mxu0 %v9266
      %9324 = vmatprep.subr.mxu0 0.0
      %9325 = vmatpush1.msra.mxu0 %v9267
      %9326 = vmatprep.subr.mxu0 0.0
      %9327 = vmatpush1.msra.mxu0 %v9268
      %9328 = vmatprep.subr.mxu0 0.0
      %9329 = vmatpush1.msra.mxu0 %v9269
      %9330 = vmatprep.subr.mxu0 0.0
      %9331 = vmatpush1.msra.mxu0 %v9270
      %9332 = vmatprep.subr.mxu0 0.0
      %9333 = vmatpush1.msra.mxu0 %v9271
      %9334 = vmatprep.subr.mxu0 0.0
      %9335 = vmatpush1.msra.mxu0 %v9272
      %9336 = vmatprep.subr.mxu0 0.0
      %9337 = vmatpush1.msra.mxu0 %v9273
      %9338 = vmatprep.subr.mxu0 0.0
      %9339 = vmatpush1.msra.mxu0 %v9274
      %9340 = vmatprep.subr.mxu0 0.0
      %9341 = vmatpush1.msra.mxu0 %v9275
      %9342 = vmatprep.subr.mxu0 0.0
      %9343 = vmatpush1.msra.mxu0 %v9276
      %9344 = vmatprep.subr.mxu0 0.0
      %9345 = vmatpush1.msra.mxu0 0.0
      %9346 = vmatprep.subr.mxu0 0.0
      %9347 = vmatpush1.msra.mxu0 0.0
      %9348 = vmatprep.subr.mxu0 0.0
      %9349 = vmatpush1.msra.mxu0 0.0
      %9350 = vmatprep.subr.mxu0 0.0
      %9351 = vmatpush1.msra.mxu0 0.0
      %9352 = vmatprep.mubr.f32.mxu0 %v9286
      %9353 = vmatmul.mubr.f32.gmra.mrb[0].mxu0 %v9245
      %v9354 = vpop.f32.mrb[0].mxu0
      %v9355 = vadd.f32 %v9283, %v9354
      %v9356 = vpop.f32.mrb[0].mxu0
      %9357 = vdwg.mxu0
      %v9358 = vadd.f32 %v9355, %v8723
      %v9359 = vmul.f32 %v9358, 0.999995
      %s9360 = scalar_lea.vmem %s20, 96
      %v9361 = vld [vmem:[%s9360] sm:$0xff]
      %v9362 = vld [vmem:[%s9360 + $0x8] sm:$0xff]
      %v9363 = vld [vmem:[%s9360 + $0x10] sm:$0xff]
      %v9364 = vld [vmem:[%s9360 + $0x18] sm:$0xff]
      %v9366 = vsel %vm1062, %v9359, 0
      %9368 = vmatprep.subr.mxu0 0.0
      %9369 = vmatpush1.msra.mxu0 %v9361
      %9370 = vmatprep.subr.mxu0 0.0
      %9371 = vmatpush1.msra.mxu0 %v9362
      %9372 = vmatprep.subr.mxu0 0.0
      %9373 = vmatpush1.msra.mxu0 %v9363
      %9374 = vmatprep.subr.mxu0 0.0
      %9375 = vmatpush1.msra.mxu0 %v9364
      %9376 = vmatprep.subr.mxu0 0.0
      %9377 = vmatpush1.msra.mxu0 0.0
      %9378 = vmatprep.subr.mxu0 0.0
      %9379 = vmatpush1.msra.mxu0 0.0
      %9380 = vmatprep.subr.mxu0 0.0
      %9381 = vmatpush1.msra.mxu0 0.0
      %9382 = vmatprep.subr.mxu0 0.0
      %9383 = vmatpush1.msra.mxu0 0.0
      %9384 = vmatprep.subr.mxu0 0.0
      %9385 = vmatpush1.msra.mxu0 0.0
      %9386 = vmatprep.subr.mxu0 0.0
      %9387 = vmatpush1.msra.mxu0 0.0
      %9388 = vmatprep.subr.mxu0 0.0
      %9389 = vmatpush1.msra.mxu0 0.0
      %9390 = vmatprep.subr.mxu0 0.0
      %9391 = vmatpush1.msra.mxu0 0.0
      %9392 = vmatprep.subr.mxu0 0.0
      %9393 = vmatpush1.msra.mxu0 0.0
      %9394 = vmatprep.subr.mxu0 0.0
      %9395 = vmatpush1.msra.mxu0 0.0
      %9396 = vmatprep.subr.mxu0 0.0
      %9397 = vmatpush1.msra.mxu0 0.0
      %9398 = vmatprep.subr.mxu0 0.0
      %9399 = vmatpush1.msra.mxu0 0.0
      %9400 = vmatprep.subr.mxu0 0.0
      %9401 = vmatpush1.msra.mxu0 0.0
      %9402 = vmatprep.subr.mxu0 0.0
      %9403 = vmatpush1.msra.mxu0 0.0
      %9404 = vmatprep.subr.mxu0 0.0
      %9405 = vmatpush1.msra.mxu0 0.0
      %9406 = vmatprep.subr.mxu0 0.0
      %9407 = vmatpush1.msra.mxu0 0.0
      %9408 = vmatprep.subr.mxu0 0.0
      %9409 = vmatpush1.msra.mxu0 0.0
      %9410 = vmatprep.subr.mxu0 0.0
      %9411 = vmatpush1.msra.mxu0 0.0
      %9412 = vmatprep.subr.mxu0 0.0
      %9413 = vmatpush1.msra.mxu0 0.0
      %9414 = vmatprep.subr.mxu0 0.0
      %9415 = vmatpush1.msra.mxu0 0.0
      %9416 = vmatprep.subr.mxu0 0.0
      %9417 = vmatpush1.msra.mxu0 0.0
      %9418 = vmatprep.subr.mxu0 0.0
      %9419 = vmatpush1.msra.mxu0 0.0
      %9420 = vmatprep.subr.mxu0 0.0
      %9421 = vmatpush1.msra.mxu0 0.0
      %9422 = vmatprep.subr.mxu0 0.0
      %9423 = vmatpush1.msra.mxu0 0.0
      %9424 = vmatprep.subr.mxu0 0.0
      %9425 = vmatpush1.msra.mxu0 0.0
      %9426 = vmatprep.subr.mxu0 0.0
      %9427 = vmatpush1.msra.mxu0 0.0
      %9428 = vmatprep.subr.mxu0 0.0
      %9429 = vmatpush1.msra.mxu0 0.0
      %9430 = vmatprep.subr.mxu0 0.0
      %9431 = vmatpush1.msra.mxu0 0.0
      %9432 = vmatprep.mubr.f32.mxu0 0.0
      %9433 = vmatmul.mubr.f32.gmra.mrb[0].mxu0 %v9366
      %v9434 = vpop.f32.mrb[0].mxu0
      %v9435 = vadd.f32 0.0, %v9434
      %v9436 = vpop.f32.mrb[0].mxu0
      %9437 = vdwg.mxu0
      %v9438 = vadd.f32 %v8802, %v9435
      %v9439 = vld [vmem:[%s21] sm:$0x1]
      %v9441 = vlaneseq
      %v9442 = vshrl.u32 %v9441, 7
      %v9443 = vsub.s32 0, %v9442
      %v9444 = vrot.slane %v9439, %v9443
      %v9446 = vadd.f32 %v9438, %v9444
      %v9447 = vmul.f32 %v9446, 0.5
      %v9448 = vmul.f32 %v9446, 0.044715
      %v9449 = vmul.f32 %v9448, %v9446
      %v9450 = vmul.f32 %v9449, %v9446
      %v9451 = vadd.f32 %v9446, %v9450
      %v9452 = vmul.f32 %v9451, 0.7978846
      %v9453 = vtanh.pop %v9452
      %v9454 = vadd.f32 %v9453, 1.0
      %v9455 = vmul.f32 %v9447, %v9454
      %v9456 = vld [vmem:[%s24] sm:$0xff]
      %v9457 = vld [vmem:[%s24 + $0x8] sm:$0xff]
      %v9458 = vld [vmem:[%s24 + $0x10] sm:$0xff]
      %v9459 = vld [vmem:[%s24 + $0x18] sm:$0xff]
      %v9460 = vld [vmem:[%s24 + $0x20] sm:$0xff]
      %v9461 = vld [vmem:[%s24 + $0x28] sm:$0xff]
      %v9462 = vld [vmem:[%s24 + $0x30] sm:$0xff]
      %v9463 = vld [vmem:[%s24 + $0x38] sm:$0xff]
      %v9464 = vld [vmem:[%s25] sm:$0x1]
      %v9466 = vlaneseq
      %v9467 = vshrl.u32 %v9466, 7
      %v9468 = vsub.s32 0, %v9467
      %v9469 = vrot.slane %v9464, %v9468
      %v9472 = vsel %vm3973, %v9455, 0
      %9474 = vmatprep.subr.mxu0 0.0
      %9475 = vmatpush1.msra.mxu0 %v9456
      %9476 = vmatprep.subr.mxu0 0.0
      %9477 = vmatpush1.msra.mxu0 %v9457
      %9478 = vmatprep.subr.mxu0 0.0
      %9479 = vmatpush1.msra.mxu0 %v9458
      %9480 = vmatprep.subr.mxu0 0.0
      %9481 = vmatpush1.msra.mxu0 %v9459
      %9482 = vmatprep.subr.mxu0 0.0
      %9483 = vmatpush1.msra.mxu0 %v9460
      %9484 = vmatprep.subr.mxu0 0.0
      %9485 = vmatpush1.msra.mxu0 %v9461
      %9486 = vmatprep.subr.mxu0 0.0
      %9487 = vmatpush1.msra.mxu0 %v9462
      %9488 = vmatprep.subr.mxu0 0.0
      %9489 = vmatpush1.msra.mxu0 %v9463
      %9490 = vmatprep.subr.mxu0 0.0
      %9491 = vmatpush1.msra.mxu0 0.0
      %9492 = vmatprep.subr.mxu0 0.0
      %9493 = vmatpush1.msra.mxu0 0.0
      %9494 = vmatprep.subr.mxu0 0.0
      %9495 = vmatpush1.msra.mxu0 0.0
      %9496 = vmatprep.subr.mxu0 0.0
      %9497 = vmatpush1.msra.mxu0 0.0
      %9498 = vmatprep.subr.mxu0 0.0
      %9499 = vmatpush1.msra.mxu0 0.0
      %9500 = vmatprep.subr.mxu0 0.0
      %9501 = vmatpush1.msra.mxu0 0.0
      %9502 = vmatprep.subr.mxu0 0.0
      %9503 = vmatpush1.msra.mxu0 0.0
      %9504 = vmatprep.subr.mxu0 0.0
      %9505 = vmatpush1.msra.mxu0 0.0
      %9506 = vmatprep.subr.mxu0 0.0
      %9507 = vmatpush1.msra.mxu0 0.0
      %9508 = vmatprep.subr.mxu0 0.0
      %9509 = vmatpush1.msra.mxu0 0.0
      %9510 = vmatprep.subr.mxu0 0.0
      %9511 = vmatpush1.msra.mxu0 0.0
      %9512 = vmatprep.subr.mxu0 0.0
      %9513 = vmatpush1.msra.mxu0 0.0
      %9514 = vmatprep.subr.mxu0 0.0
      %9515 = vmatpush1.msra.mxu0 0.0
      %9516 = vmatprep.subr.mxu0 0.0
      %9517 = vmatpush1.msra.mxu0 0.0
      %9518 = vmatprep.subr.mxu0 0.0
      %9519 = vmatpush1.msra.mxu0 0.0
      %9520 = vmatprep.subr.mxu0 0.0
      %9521 = vmatpush1.msra.mxu0 0.0
      %9522 = vmatprep.subr.mxu0 0.0
      %9523 = vmatpush1.msra.mxu0 0.0
      %9524 = vmatprep.subr.mxu0 0.0
      %9525 = vmatpush1.msra.mxu0 0.0
      %9526 = vmatprep.subr.mxu0 0.0
      %9527 = vmatpush1.msra.mxu0 0.0
      %9528 = vmatprep.subr.mxu0 0.0
      %9529 = vmatpush1.msra.mxu0 0.0
      %9530 = vmatprep.subr.mxu0 0.0
      %9531 = vmatpush1.msra.mxu0 0.0
      %9532 = vmatprep.subr.mxu0 0.0
      %9533 = vmatpush1.msra.mxu0 0.0
      %9534 = vmatprep.subr.mxu0 0.0
      %9535 = vmatpush1.msra.mxu0 0.0
      %9536 = vmatprep.subr.mxu0 0.0
      %9537 = vmatpush1.msra.mxu0 0.0
      %9538 = vmatprep.mubr.f32.mxu0 0.0
      %9539 = vmatmul.mubr.f32.gmra.mrb[0].mxu0 %v9472
      %v9540 = vpop.f32.mrb[0].mxu0
      %v9541 = vadd.f32 %v9469, %v9540
      %v9542 = vpop.f32.mrb[0].mxu0
      %9543 = vdwg.mxu0
      %v9544 = vmul.f32 %v9541, 0.5
      %v9545 = vmul.f32 %v9541, 0.044715
      %v9546 = vmul.f32 %v9545, %v9541
      %v9547 = vmul.f32 %v9546, %v9541
      %v9548 = vadd.f32 %v9541, %v9547
      %v9549 = vmul.f32 %v9548, 0.7978846
      %v9550 = vtanh.pop %v9549
      %v9551 = vadd.f32 %v9550, 1.0
      %v9552 = vmul.f32 %v9544, %v9551
      %v9553 = vld [vmem:[%s26] sm:$0xff]
      %v9554 = vld [vmem:[%s26 + $0x8] sm:$0xf]
      %v9555 = vld [vmem:[%s27] sm:$0xff]
      %v9556 = vld [vmem:[%s27 + $0x8] sm:$0xf]
      %9558 = vset.pattern.permute.xlu0 0
      %9559 = vperm.xlu0 %9558, %v9555
      %v9560 = vpop.permute.xlu0 %9559
      %9563 = vset.pattern.permute.xlu0 0
      %9564 = vperm.xlu0 %9563, %v9556
      %v9565 = vpop.permute.xlu0 %9564
      %9567 = vmatprep.subr.mxu0 0.0
      %9568 = vmatpush1.xpose.msra.mxu0 %v9552
      %9569 = vmatprep.subr.mxu0 0.0
      %9570 = vmatpush1.xpose.msra.mxu0 0.0
      %9571 = vmatprep.subr.mxu0 0.0
      %9572 = vmatpush1.xpose.msra.mxu0 0.0
      %9573 = vmatprep.subr.mxu0 0.0
      %9574 = vmatpush1.xpose.msra.mxu0 0.0
      %9575 = vmatprep.subr.mxu0 0.0
      %9576 = vmatpush1.xpose.msra.mxu0 0.0
      %9577 = vmatprep.subr.mxu0 0.0
      %9578 = vmatpush1.xpose.msra.mxu0 0.0
      %9579 = vmatprep.subr.mxu0 0.0
      %9580 = vmatpush1.xpose.msra.mxu0 0.0
      %9581 = vmatprep.subr.mxu0 0.0
      %9582 = vmatpush1.xpose.msra.mxu0 0.0
      %9583 = vmatprep.subr.mxu0 0.0
      %9584 = vmatpush1.xpose.msra.mxu0 0.0
      %9585 = vmatprep.subr.mxu0 0.0
      %9586 = vmatpush1.xpose.msra.mxu0 0.0
      %9587 = vmatprep.subr.mxu0 0.0
      %9588 = vmatpush1.xpose.msra.mxu0 0.0
      %9589 = vmatprep.subr.mxu0 0.0
      %9590 = vmatpush1.xpose.msra.mxu0 0.0
      %9591 = vmatprep.subr.mxu0 0.0
      %9592 = vmatpush1.xpose.msra.mxu0 0.0
      %9593 = vmatprep.subr.mxu0 0.0
      %9594 = vmatpush1.xpose.msra.mxu0 0.0
      %9595 = vmatprep.subr.mxu0 0.0
      %9596 = vmatpush1.xpose.msra.mxu0 0.0
      %9597 = vmatprep.subr.mxu0 0.0
      %9598 = vmatpush1.xpose.msra.mxu0 0.0
      %9599 = vmatprep.subr.mxu0 0.0
      %9600 = vmatpush1.xpose.msra.mxu0 0.0
      %9601 = vmatprep.subr.mxu0 0.0
      %9602 = vmatpush1.xpose.msra.mxu0 0.0
      %9603 = vmatprep.subr.mxu0 0.0
      %9604 = vmatpush1.xpose.msra.mxu0 0.0
      %9605 = vmatprep.subr.mxu0 0.0
      %9606 = vmatpush1.xpose.msra.mxu0 0.0
      %9607 = vmatprep.subr.mxu0 0.0
      %9608 = vmatpush1.xpose.msra.mxu0 0.0
      %9609 = vmatprep.subr.mxu0 0.0
      %9610 = vmatpush1.xpose.msra.mxu0 0.0
      %9611 = vmatprep.subr.mxu0 0.0
      %9612 = vmatpush1.xpose.msra.mxu0 0.0
      %9613 = vmatprep.subr.mxu0 0.0
      %9614 = vmatpush1.xpose.msra.mxu0 0.0
      %9615 = vmatprep.subr.mxu0 0.0
      %9616 = vmatpush1.xpose.msra.mxu0 0.0
      %9617 = vmatprep.subr.mxu0 0.0
      %9618 = vmatpush1.xpose.msra.mxu0 0.0
      %9619 = vmatprep.subr.mxu0 0.0
      %9620 = vmatpush1.xpose.msra.mxu0 0.0
      %9621 = vmatprep.subr.mxu0 0.0
      %9622 = vmatpush1.xpose.msra.mxu0 0.0
      %9623 = vmatprep.subr.mxu0 0.0
      %9624 = vmatpush1.xpose.msra.mxu0 0.0
      %9625 = vmatprep.subr.mxu0 0.0
      %9626 = vmatpush1.xpose.msra.mxu0 0.0
      %9627 = vmatprep.subr.mxu0 0.0
      %9628 = vmatpush1.xpose.msra.mxu0 0.0
      %9629 = vmatprep.subr.mxu0 0.0
      %9630 = vmatpush1.xpose.msra.mxu0 0.0
      %9631 = vmatprep.mubr.f32.mxu0 0.0
      %9632 = vmatmul.mubr.f32.gmra.mrb[0].mxu0 %v9553
      %v9633 = vpop.f32.mrb[0].mxu0
      %v9634 = vadd.f32 %v9560, %v9633
      %v9635 = vpop.f32.mrb[0].mxu0
      %9636 = vmatprep.mubr.f32.mxu0 0.0
      %9637 = vmatmul.mubr.f32.gmra.mrb[0].mxu0 %v9554
      %v9638 = vpop.f32.mrb[0].mxu0
      %v9639 = vadd.f32 %v9565, %v9638
      %v9640 = vpop.f32.mrb[0].mxu0
      %9641 = vdwg.mxu0
      %9642 = vst.msk [vmem:[%s845] sm:$0xff] %vm871, %v9634
      %vm9643 = vcmask 60416
      %9644 = vst.msk [vmem:[%s845 + $0x8] sm:$0xf] %vm9643, %v9639
      %p9645 = scmp.lt.s32.totalorder %s39, 1
      %s9646 = scalar_select %p9645, %s39, 1
      %s9647 = smul.addr %s9646, 2
      %s9648 = smul.addr %s9647, 8
      %s9649 = scalar_lea.vmem %s28, %s9648
      // Predicated region
      $region133: #{rmgcn_forward.1} parent=131 // pred_check
        %p9650 = pneg %p650
      $region134: #{rmgcn_forward.1} parent=131 // pred_check_branch
        %9652 = sbr.rel (%p9650) target = $region136
      $region135: #{rmgcn_forward.1} parent=131 // pred_region
        _
      $region136: #{rmgcn_forward.1} parent=131 // pred_fallthru
        _
    $region132: #{rmgcn_forward.1} parent=5 // pred_fallthru
      _
    %p9653 = scmp.le.s32.totalorder 2, %s34
    // Predicated region
    $region137: #{rmgcn_forward.1} parent=5 // pred_check
      %p9654 = pneg %p9653
    $region138: #{rmgcn_forward.1} parent=5 // pred_check_branch
      %9656 = sbr.rel (%p9654) target = $region140
    $region139: #{rmgcn_forward.1} parent=5 // pred_region
      %s9657 = ssub.s32 %s34, 2
      // Predicated region
      $region141: #{rmgcn_forward.1} parent=139 // pred_check
        %p9658 = pneg %p656
      $region142: #{rmgcn_forward.1} parent=139 // pred_check_branch
        %9660 = sbr.rel (%p9658) target = $region144
      $region143: #{rmgcn_forward.1} parent=139 // pred_region
        %p9661 = scmp.lt.s32.totalorder %s40, 1
        %s9662 = scalar_select %p9661, %s40, 1
        %s9663 = smul.addr %s9662, 2
        %s9664 = smul.addr %s9663, 8
        %s9665 = scalar_lea.vmem %s28, %s9664
      $region144: #{rmgcn_forward.1} parent=139 // pred_fallthru
        _
    $region140: #{rmgcn_forward.1} parent=5 // pred_fallthru
      _
  $region6: #{rmgcn_forward.1} parent=0 // loop_footer
    %s38 = sadd.s32 1, %s34
  $region7: #{rmgcn_forward.1} parent=0 // loop_footer_branch
    %33 = sbr.rel target = $region3
  $region8: #{rmgcn_forward.1} parent=0 // loop_exit
    _

</llo_original>
